<compile_context>
chip_gen: v6e
topology: v6e:2x2x1
jax: 0.10.0
libtpu: 0.0.40
codegen_flags: <defaults>
</compile_context>

<pallas_src>
import math
import functools

import jax
import jax.numpy as jnp
import numpy as np
from jax.experimental import pallas as pl
from jax.experimental.pallas import tpu as pltpu

_INV_SQRT2 = 1.0 / math.sqrt(2.0)
_VMEM_LIMIT = 40 * 1024 * 1024   # explicit scoped-VMEM limit (v7x has 64 MiB)
_NEG_BIG = -1e30


# ----------------------------------------------------------------------------
# In-kernel math helpers (operate on values already loaded from refs)
# ----------------------------------------------------------------------------

def _row_softmax(s):
    """Row softmax in f32: max-subtract / exp / EUP reciprocal + Newton step."""
    m = jnp.max(s, axis=-1, keepdims=True)
    p = jnp.exp(s - m)
    l = jnp.sum(p, axis=-1, keepdims=True)
    inv = pl.reciprocal(l, approx=True)
    inv = inv * (2.0 - l * inv)          # Newton refinement -> ~f32 accuracy
    return p * inv


def _layernorm(x, gamma, beta, eps=1e-5):
    mu = jnp.mean(x, axis=-1, keepdims=True)
    var = jnp.mean((x - mu) ** 2, axis=-1, keepdims=True)
    return (x - mu) * jax.lax.rsqrt(var + eps) * gamma + beta


def _gelu(x):
    """Exact (erf-based) GELU.  erf via Abramowitz-Stegun 7.1.26
    (|err| < 1.5e-7), so only exp (EUP) + VPU ops are needed in-kernel."""
    z = x * _INV_SQRT2
    az = jnp.abs(z)
    t = 1.0 / (1.0 + 0.3275911 * az)
    poly = ((((1.061405429 * t - 1.453152027) * t + 1.421413741) * t
             - 0.284496736) * t + 0.254829592) * t
    erf_abs = 1.0 - poly * jnp.exp(-az * az)
    erf_z = jnp.where(z < 0.0, -erf_abs, erf_abs)
    return 0.5 * x * (1.0 + erf_z)


def _pick_chunk_elems(n_elem, q_group, kv_group, cap=128):
    """Elements per attention chunk: largest divisor of n_elem whose chunk
    keeps <= `cap` kv rows (bounds the wasted off-diagonal score work to at
    most ~one MXU tile) with 8-aligned chunk row offsets.  Falls back to a
    single chunk covering the tile."""
    cands = [ce for ce in range(1, n_elem + 1)
             if n_elem % ce == 0
             and ce * max(q_group, kv_group) <= cap
             and (ce == n_elem
                  or ((ce * q_group) % 8 == 0 and (ce * kv_group) % 8 == 0))]
    return max(cands) if cands else n_elem


def _attention(q_bf, kv_bf, weights, *, n_heads, n_elem, q_group, kv_group):
    """Multi-head AttentionLayer over a slab of n_elem independent elements.

    q_bf : (n_elem*q_group, d_model) bf16 -- q_group consecutive rows/element
    kv_bf: (n_elem*kv_group, d_model) bf16
    Projections run on the full slab (MXU-friendly 2-D matmuls, per-head
    stacked weights -> no lane slicing); scores/softmax/AV run per chunk of
    elements with an additive block-diagonal bias (linear, not quadratic, in
    the batch tile).  Returns f32 (n_elem*q_group, d_model).
    """
    wq, bq, wk, bk, wv, bv, wo, bo = weights
    H = n_heads
    ce = _pick_chunk_elems(n_elem, q_group, kv_group)
    n_chunks = n_elem // ce
    rq_c, rk_c = ce * q_group, ce * kv_group

    # Full-slab per-head projections (weights bf16, f32 accumulate, scale for
    # Q already folded into wq/bq at prep time).
    Qs, Ks, Vs = [], [], []
    for h in range(H):
        Qs.append((jnp.dot(q_bf, wq[h], preferred_element_type=jnp.float32)
                   + bq[h]).astype(jnp.bfloat16))
        Ks.append((jnp.dot(kv_bf, wk[h], preferred_element_type=jnp.float32)
                   + bk[h]).astype(jnp.bfloat16))
        Vs.append((jnp.dot(kv_bf, wv[h], preferred_element_type=jnp.float32)
                   + bv[h]).astype(jnp.bfloat16))

    # Additive block-diagonal bias for one chunk, built once per call from
    # integer iotas (the +0.5 float trick is exact for chunk-scale indices).
    if ce > 1:
        r = jax.lax.broadcasted_iota(jnp.int32, (rq_c, rk_c), 0)
        c = jax.lax.broadcasted_iota(jnp.int32, (rq_c, rk_c), 1)
        r_id = jnp.floor((r.astype(jnp.float32) + 0.5) * (1.0 / q_group))
        c_id = jnp.floor((c.astype(jnp.float32) + 0.5) * (1.0 / kv_group))
        bias = jnp.where(r_id == c_id, 0.0, _NEG_BIG).astype(jnp.float32)

    chunk_outs = []
    for chunk in range(n_chunks):            # static loop; 1 chunk typical
        q0, k0 = chunk * rq_c, chunk * rk_c
        acc = None
        for h in range(H):                   # static small loop over heads
            Qc = Qs[h][q0:q0 + rq_c, :]
            Kc = Ks[h][k0:k0 + rk_c, :]
            Vc = Vs[h][k0:k0 + rk_c, :]
            s = jax.lax.dot_general(Qc, Kc, (((1,), (1,)), ((), ())),
                                    preferred_element_type=jnp.float32)
            if ce > 1:
                s = s + bias
            a = _row_softmax(s).astype(jnp.bfloat16)
            oh = jnp.dot(a, Vc,
                         preferred_element_type=jnp.float32).astype(jnp.bfloat16)
            part = jnp.dot(oh, wo[h], preferred_element_type=jnp.float32)
            acc = part if acc is None else acc + part
        chunk_outs.append(acc)
    attn = chunk_outs[0] if n_chunks == 1 else jnp.concatenate(chunk_outs, axis=0)
    return attn + bo


def _addnorm_mlp(x, attn, weights):
    """y = LN_a(x + attn); return LN_b(y + GELU-MLP(y)).  Matmuls take bf16
    operands with f32 accumulation; LN/GELU stay f32."""
    g1, be1, w1, b1, w2, b2, g2, be2 = weights
    y = _layernorm(x + attn, g1, be1)
    h = jnp.dot(y.astype(jnp.bfloat16), w1,
                preferred_element_type=jnp.float32) + b1
    h = _gelu(h)
    # TODO(synk): chunk over d_ff tiles for very large d_ff to bound the live
    # (rows, d_ff) intermediate; the bf16 second-matmul operand already halves it.
    z = y + jnp.dot(h.astype(jnp.bfloat16), w2,
                    preferred_element_type=jnp.float32) + b2
    return _layernorm(z, g2, be2)


# ----------------------------------------------------------------------------
# Fused Pallas kernels (one per stage)
# ----------------------------------------------------------------------------

def _stage1_kernel(x_ref, *refs, n_heads, n_elem, seq):
    """Fused: time self-attention + norm1 + MLP1 + norm2 over n_elem elements."""
    o_ref = refs[-1]
    w = [r[...] for r in refs[:-1]]
    attn_w, block_w = tuple(w[:8]), tuple(w[8:16])
    x_bf = x_ref[...]                               # (n_elem*seq, dm) bf16
    x = x_bf.astype(jnp.float32)
    attn = _attention(x_bf, x_bf, attn_w, n_heads=n_heads,
                      n_elem=n_elem, q_group=seq, kv_group=seq)
    o_ref[...] = _addnorm_mlp(x, attn, block_w).astype(o_ref.dtype)


def _stage2_kernel(send_ref, router_ref, *refs, n_heads, n_elem, seq, factor):
    """Fused: router sender + receiver attention + norm3 + MLP2 + norm4."""
    o_ref = refs[-1]
    w = [r[...] for r in refs[:-1]]
    sender_w = tuple(w[:8])
    receiver_w = tuple(w[8:16])
    block_w = tuple(w[16:24])
    send_bf = send_ref[...]                         # (n_elem*seq, dm) bf16
    send = send_bf.astype(jnp.float32)
    rout_bf = router_ref[...].astype(jnp.bfloat16)  # (n_elem*factor, dm)
    # sender output feeds the receiver through registers/VMEM, never HBM
    buf = _attention(rout_bf, send_bf, sender_w, n_heads=n_heads,
                     n_elem=n_elem, q_group=factor, kv_group=seq)
    recv = _attention(send_bf, buf.astype(jnp.bfloat16), receiver_w,
                      n_heads=n_heads, n_elem=n_elem,
                      q_group=seq, kv_group=factor)
    o_ref[...] = _addnorm_mlp(send, recv, block_w).astype(o_ref.dtype)


# ----------------------------------------------------------------------------
# Pallas wrappers
# ----------------------------------------------------------------------------

def _const_index(*_, nd):
    return (0,) * nd


def _weight_spec(w):
    # TODO(synk): pipeline_mode=pl.Buffered(1) on these grid-invariant weight
    # specs would drop their double buffer (VMEM headroom on v7x's 64 MiB).
    return pl.BlockSpec(w.shape, functools.partial(_const_index, nd=w.ndim))


def _pick_tile(n_elem, groups, *, target_rows=256, min_grid=4, outer=1):
    """Pick elements-per-tile.  `groups` is a tuple of (rows_per_elem, align)
    pairs; te must make every rows_per_elem*te a multiple of its sublane
    alignment (16 for bf16 slabs, 8 for f32).  Tiles aim for ~target_rows
    rows, then shrink until the total grid (outer * n_tiles) has >= min_grid
    steps when possible (two v7x TensorCores each want >= 2 pipelined steps).
    Returns (te, n_tiles, padded n_elem); callers zero-pad the flat batch
    instead of falling back to a single whole-slab block."""
    base = 1
    for r, align in groups:
        need = align // math.gcd(int(r), align)
        base = base * need // math.gcd(base, need)
    max_r = max(r for r, _ in groups)
    k = max(1, target_rows // (base * max_r))
    k = min(k, -(-n_elem // base))
    te = base * k
    while te > base and outer * (-(-n_elem // te)) < min_grid:
        te -= base
    n_tiles = -(-n_elem // te)
    return te, n_tiles, te * n_tiles


def _stage1_call(x_flat, seq, te, attn_p, block_p, n_heads):
    rows, dm = x_flat.shape
    block_rows = te * seq
    n_tiles = rows // block_rows
    weights = list(attn_p) + list(block_p)
    kernel = functools.partial(_stage1_kernel, n_heads=n_heads,
                               n_elem=te, seq=seq)
    return pl.pallas_call(
        kernel,
        out_shape=jax.ShapeDtypeStruct((rows, dm), jnp.bfloat16),
        grid=(n_tiles,),
        in_specs=[pl.BlockSpec((block_rows, dm), lambda i: (i, 0))]
                 + [_weight_spec(w) for w in weights],
        out_specs=pl.BlockSpec((block_rows, dm), lambda i: (i, 0)),
        compiler_params=pltpu.CompilerParams(
            dimension_semantics=("parallel",),
            vmem_limit_bytes=_VMEM_LIMIT),
    )(x_flat, *weights)


def _stage2_call(send_flat, router_flat, ts_d, factor, te, seg_pad, batch,
                 sender_p, receiver_p, block_p, n_heads):
    rows, dm = send_flat.shape
    n_seg_tiles = seg_pad // te
    send_rows = te * ts_d
    rout_rows = te * factor
    weights = list(sender_p) + list(receiver_p) + list(block_p)
    kernel = functools.partial(_stage2_kernel, n_heads=n_heads,
                               n_elem=te, seq=ts_d, factor=factor)
    send_idx = lambda ib, is_: (ib * n_seg_tiles + is_, 0)
    rout_idx = lambda ib, is_: (is_, 0)     # router broadcast over batch
    return pl.pallas_call(
        kernel,
        out_shape=jax.ShapeDtypeStruct((rows, dm), jnp.float32),
        grid=(batch, n_seg_tiles),
        in_specs=[pl.BlockSpec((send_rows, dm), send_idx),
                  pl.BlockSpec((rout_rows, dm), rout_idx)]
                 + [_weight_spec(w) for w in weights],
        out_specs=pl.BlockSpec((send_rows, dm), send_idx),
        compiler_params=pltpu.CompilerParams(
            dimension_semantics=("parallel", "parallel"),
            vmem_limit_bytes=_VMEM_LIMIT),
    )(send_flat, router_flat, *weights)


def two_stage_attention(x, kparams, n_heads):
    """TwoStageAttentionLayer.forward (eval mode).  x: [b, ts_d, seg_num, dm]."""
    b, ts_d, seg_num, dm = x.shape
    router = kparams['router']                       # (seg_num, factor, dm) f32
    factor = router.shape[1]
    # TODO(synk): production d_model should be a multiple of 128 (lane-dense
    # stores / full MXU N); the demo uses dm=32 which the spec handles as a
    # full-extent last dim.

    # ---- Stage 1: self-attention over time segments + norm1/MLP1/norm2 ----
    nb1 = b * ts_d
    te1, _, nb1_pad = _pick_tile(nb1, ((seg_num, 16),))
    x_flat = x.reshape(nb1 * seg_num, dm).astype(jnp.bfloat16)
    if nb1_pad > nb1:
        x_flat = jnp.pad(x_flat, ((0, (nb1_pad - nb1) * seg_num), (0, 0)))
    dim_in = _stage1_call(x_flat, seg_num, te1,
                          kparams['time_attn'], kparams['block1'], n_heads)
    dim_in = dim_in[:nb1 * seg_num]

    # ---- Stage 2: router attention across data dims + norm3/MLP2/norm4 ----
    # TODO(synk): absorb this transpose into the stage-2 index_maps once
    # sub-8 second-minor blocks are worth the strided DMA; the round trip is
    # already halved by keeping the inter-stage activations in bf16.
    dim_send = dim_in.reshape(b, ts_d, seg_num, dm).transpose(0, 2, 1, 3)
    te2, _, seg_pad = _pick_tile(seg_num, ((ts_d, 16), (factor, 8)), outer=b)
    if seg_pad > seg_num:
        dim_send = jnp.pad(dim_send,
                           ((0, 0), (0, seg_pad - seg_num), (0, 0), (0, 0)))
        router = jnp.pad(router, ((0, seg_pad - seg_num), (0, 0), (0, 0)))
    send_flat = dim_send.reshape(b * seg_pad * ts_d, dm)
    router_flat = router.reshape(seg_pad * factor, dm)
    out_flat = _stage2_call(send_flat, router_flat, ts_d, factor, te2, seg_pad,
                            b, kparams['sender'], kparams['receiver'],
                            kparams['block2'], n_heads)

    out = out_flat.reshape(b, seg_pad, ts_d, dm)[:, :seg_num]
    return out.transpose(0, 2, 1, 3)


# ----------------------------------------------------------------------------
# Parameter init (PyTorch-equivalent packed layout) + kernel-layout prep
# ----------------------------------------------------------------------------

def _linear(key, fan_in, fan_out):
    kw, kb = jax.random.split(key)
    bound = 1.0 / math.sqrt(fan_in)
    w = jax.random.uniform(kw, (fan_in, fan_out), jnp.float32, -bound, bound)
    b = jax.random.uniform(kb, (1, fan_out), jnp.float32, -bound, bound)
    return w, b


def _attn_params(key, d_model, n_heads):
    dk = d_model // n_heads
    ks = jax.random.split(key, 4)
    wq, bq = _linear(ks[0], d_model, dk * n_heads)
    wk, bk = _linear(ks[1], d_model, dk * n_heads)
    wv, bv = _linear(ks[2], d_model, dk * n_heads)
    wo, bo = _linear(ks[3], dk * n_heads, d_model)
    return (wq, bq, wk, bk, wv, bv, wo, bo)


def _block_params(key, d_model, d_ff):
    k1, k2 = jax.random.split(key)
    w1, b1 = _linear(k1, d_model, d_ff)
    w2, b2 = _linear(k2, d_ff, d_model)
    ones = jnp.ones((1, d_model), jnp.float32)
    zeros = jnp.zeros((1, d_model), jnp.float32)
    return (ones, zeros, w1, b1, w2, b2, ones, zeros)


def init_params(key, seg_num, factor, d_model, n_heads, d_ff):
    ks = jax.random.split(key, 6)
    return {
        'time_attn': _attn_params(ks[0], d_model, n_heads),
        'sender':    _attn_params(ks[1], d_model, n_heads),
        'receiver':  _attn_params(ks[2], d_model, n_heads),
        'router':    jax.random.normal(ks[3], (seg_num, factor, d_model),
                                       jnp.float32),
        'block1':    _block_params(ks[4], d_model, d_ff),
        'block2':    _block_params(ks[5], d_model, d_ff),
    }


def prepare_params(params, n_heads):
    """Convert packed params into the kernel layout: per-head weight stacks,
    bf16 matmul operands, 1/sqrt(E) folded into Wq / bq."""
    def prep_attn(p):
        wq, bq, wk, bk, wv, bv, wo, bo = p
        dm = wq.shape[0]
        e = wq.shape[1] // n_heads
        dh = wv.shape[1] // n_heads
        scale = 1.0 / math.sqrt(e)
        per_head_w = lambda w: w.reshape(dm, n_heads, -1).transpose(1, 0, 2)
        per_head_b = lambda bb: bb.reshape(n_heads, 1, -1)
        return ((per_head_w(wq) * scale).astype(jnp.bfloat16),
                (per_head_b(bq) * scale).astype(jnp.float32),
                per_head_w(wk).astype(jnp.bfloat16),
                per_head_b(bk).astype(jnp.float32),
                per_head_w(wv).astype(jnp.bfloat16),
                per_head_b(bv).astype(jnp.float32),
                wo.reshape(n_heads, dh, dm).astype(jnp.bfloat16),
                bo.astype(jnp.float32))

    def prep_block(p):
        g1, be1, w1, b1, w2, b2, g2, be2 = p
        return (g1, be1, w1.astype(jnp.bfloat16), b1,
                w2.astype(jnp.bfloat16), b2, g2, be2)

    return {
        'time_attn': prep_attn(params['time_attn']),
        'sender':    prep_attn(params['sender']),
        'receiver':  prep_attn(params['receiver']),
        'router':    params['router'].astype(jnp.float32),
        'block1':    prep_block(params['block1']),
        'block2':    prep_block(params['block2']),
    }


# ----------------------------------------------------------------------------
# Pure-JAX reference (mirrors the PyTorch forward exactly) for self-check
# ----------------------------------------------------------------------------

def _ref_attention_layer(q, k, v, p, n_heads):
    wq, bq, wk, bk, wv, bv, wo, bo = p
    B, L, dm = q.shape
    S = k.shape[1]
    H = n_heads
    Q = (q @ wq + bq).reshape(B, L, H, -1)
    K = (k @ wk + bk).reshape(B, S, H, -1)
    V = (v @ wv + bv).reshape(B, S, H, -1)
    scale = 1.0 / math.sqrt(Q.shape[-1])
    scores = jnp.einsum('blhe,bshe->bhls', Q, K)
    A = jax.nn.softmax(scale * scores, axis=-1)
    out = jnp.einsum('bhls,bshd->blhd', A, V).reshape(B, L, -1)
    return out @ wo + bo


def _ref_ln(x, g, b, eps=1e-5):
    mu = x.mean(-1, keepdims=True)
    var = ((x - mu) ** 2).mean(-1, keepdims=True)
    return (x - mu) / jnp.sqrt(var + eps) * g + b


def _ref_block(x, a, p):
    g1, be1, w1, b1, w2, b2, g2, be2 = p
    y = _ref_ln(x + a, g1, be1)
    h = y @ w1 + b1
    h = 0.5 * h * (1.0 + jax.lax.erf(h * _INV_SQRT2))
    return _ref_ln(y + h @ w2 + b2, g2, be2)


def ref_two_stage(x, params, n_heads):
    b, ts_d, seg_num, dm = x.shape
    time_in = x.reshape(b * ts_d, seg_num, dm)
    time_enc = _ref_attention_layer(time_in, time_in, time_in,
                                    params['time_attn'], n_heads)
    dim_in = _ref_block(time_in, time_enc, params['block1'])
    dim_send = (dim_in.reshape(b, ts_d, seg_num, dm)
                .transpose(0, 2, 1, 3).reshape(b * seg_num, ts_d, dm))
    batch_router = jnp.tile(params['router'], (b, 1, 1))
    dim_buffer = _ref_attention_layer(batch_router, dim_send, dim_send,
                                      params['sender'], n_heads)
    dim_receive = _ref_attention_layer(dim_send, dim_buffer, dim_buffer,
                                       params['receiver'], n_heads)
    dim_enc = _ref_block(dim_send, dim_receive, params['block2'])
    return dim_enc.reshape(b, seg_num, ts_d, dm).transpose(0, 2, 1, 3)


# ----------------------------------------------------------------------------

if __name__ == "__main__":
    key = jax.random.PRNGKey(0)
    batch, ts_d, seg_num, d_model = 2, 4, 8, 32
    n_heads, factor = 4, 2
    d_ff = 4 * d_model

    kx, kp = jax.random.split(key)
    x = jax.random.normal(kx, (batch, ts_d, seg_num, d_model), jnp.float32)
    params = init_params(kp, seg_num, factor, d_model, n_heads, d_ff)
    kparams = prepare_params(params, n_heads)

    fwd = jax.jit(functools.partial(two_stage_attention, n_heads=n_heads))
    out = jax.block_until_ready(fwd(x, kparams))
    assert out.shape == (batch, ts_d, seg_num, d_model)

    ref = ref_two_stage(x, params, n_heads)
    # Tolerance relaxed because MXU operands are bf16 (f32 accumulation);
    # structural errors would be O(1), far above this.
    np.testing.assert_allclose(np.asarray(out), np.asarray(ref),
                               rtol=5e-2, atol=5e-2)
    print("KERNEL_OK")
</pallas_src>

<mosaic_0001>
module attributes {stable_mosaic.version = 11 : i64} {
  func.func @_stage1_kernel(%arg0: i32, %arg1: memref<16x32xbf16, #tpu.memory_space<vmem>>, %arg2: memref<4x32x8xbf16, #tpu.memory_space<vmem>>, %arg3: memref<4x1x8xf32, #tpu.memory_space<vmem>>, %arg4: memref<4x32x8xbf16, #tpu.memory_space<vmem>>, %arg5: memref<4x1x8xf32, #tpu.memory_space<vmem>>, %arg6: memref<4x32x8xbf16, #tpu.memory_space<vmem>>, %arg7: memref<4x1x8xf32, #tpu.memory_space<vmem>>, %arg8: memref<4x8x32xbf16, #tpu.memory_space<vmem>>, %arg9: memref<1x32xf32, #tpu.memory_space<vmem>>, %arg10: memref<1x32xf32, #tpu.memory_space<vmem>>, %arg11: memref<1x32xf32, #tpu.memory_space<vmem>>, %arg12: memref<32x128xbf16, #tpu.memory_space<vmem>>, %arg13: memref<1x128xf32, #tpu.memory_space<vmem>>, %arg14: memref<128x32xbf16, #tpu.memory_space<vmem>>, %arg15: memref<1x32xf32, #tpu.memory_space<vmem>>, %arg16: memref<1x32xf32, #tpu.memory_space<vmem>>, %arg17: memref<1x32xf32, #tpu.memory_space<vmem>>, %arg18: memref<16x32xbf16, #tpu.memory_space<vmem>>) attributes {dimension_semantics = [#tpu.dimension_semantics<parallel>], iteration_bounds = array<i64: 4>, scalar_prefetch = 0 : i64, scratch_operands = 0 : i64, tpu.core_type = #tpu.core_type<tc>, window_params = [{transform_indices = @transform_0, window_bounds = array<i64: 16, 32>}, {pipeline_mode = #tpu.pipeline_mode<synchronous>, transform_indices = @transform_1, window_bounds = array<i64: 4, 32, 8>}, {pipeline_mode = #tpu.pipeline_mode<synchronous>, transform_indices = @transform_2, window_bounds = array<i64: 4, 1, 8>}, {pipeline_mode = #tpu.pipeline_mode<synchronous>, transform_indices = @transform_3, window_bounds = array<i64: 4, 32, 8>}, {pipeline_mode = #tpu.pipeline_mode<synchronous>, transform_indices = @transform_4, window_bounds = array<i64: 4, 1, 8>}, {pipeline_mode = #tpu.pipeline_mode<synchronous>, transform_indices = @transform_5, window_bounds = array<i64: 4, 32, 8>}, {pipeline_mode = #tpu.pipeline_mode<synchronous>, transform_indices = @transform_6, window_bounds = array<i64: 4, 1, 8>}, {pipeline_mode = #tpu.pipeline_mode<synchronous>, transform_indices = @transform_7, window_bounds = array<i64: 4, 8, 32>}, {pipeline_mode = #tpu.pipeline_mode<synchronous>, transform_indices = @transform_8, window_bounds = array<i64: 1, 32>}, {pipeline_mode = #tpu.pipeline_mode<synchronous>, transform_indices = @transform_9, window_bounds = array<i64: 1, 32>}, {pipeline_mode = #tpu.pipeline_mode<synchronous>, transform_indices = @transform_10, window_bounds = array<i64: 1, 32>}, {pipeline_mode = #tpu.pipeline_mode<synchronous>, transform_indices = @transform_11, window_bounds = array<i64: 32, 128>}, {pipeline_mode = #tpu.pipeline_mode<synchronous>, transform_indices = @transform_12, window_bounds = array<i64: 1, 128>}, {pipeline_mode = #tpu.pipeline_mode<synchronous>, transform_indices = @transform_13, window_bounds = array<i64: 128, 32>}, {pipeline_mode = #tpu.pipeline_mode<synchronous>, transform_indices = @transform_14, window_bounds = array<i64: 1, 32>}, {pipeline_mode = #tpu.pipeline_mode<synchronous>, transform_indices = @transform_15, window_bounds = array<i64: 1, 32>}, {pipeline_mode = #tpu.pipeline_mode<synchronous>, transform_indices = @transform_16, window_bounds = array<i64: 1, 32>}, {transform_indices = @transform_17, window_bounds = array<i64: 16, 32>}]} {
    %c0 = arith.constant 0 : index
    %c0_0 = arith.constant 0 : index
    %c0_1 = arith.constant 0 : index
    %0 = vector.load %arg2[%c0, %c0_0, %c0_1] : memref<4x32x8xbf16, #tpu.memory_space<vmem>>, vector<4x32x8xbf16>
    %c0_2 = arith.constant 0 : index
    %c0_3 = arith.constant 0 : index
    %c0_4 = arith.constant 0 : index
    %1 = vector.load %arg3[%c0_2, %c0_3, %c0_4] : memref<4x1x8xf32, #tpu.memory_space<vmem>>, vector<4x1x8xf32>
    %c0_5 = arith.constant 0 : index
    %c0_6 = arith.constant 0 : index
    %c0_7 = arith.constant 0 : index
    %2 = vector.load %arg4[%c0_5, %c0_6, %c0_7] : memref<4x32x8xbf16, #tpu.memory_space<vmem>>, vector<4x32x8xbf16>
    %c0_8 = arith.constant 0 : index
    %c0_9 = arith.constant 0 : index
    %c0_10 = arith.constant 0 : index
    %3 = vector.load %arg5[%c0_8, %c0_9, %c0_10] : memref<4x1x8xf32, #tpu.memory_space<vmem>>, vector<4x1x8xf32>
    %c0_11 = arith.constant 0 : index
    %c0_12 = arith.constant 0 : index
    %c0_13 = arith.constant 0 : index
    %4 = vector.load %arg6[%c0_11, %c0_12, %c0_13] : memref<4x32x8xbf16, #tpu.memory_space<vmem>>, vector<4x32x8xbf16>
    %c0_14 = arith.constant 0 : index
    %c0_15 = arith.constant 0 : index
    %c0_16 = arith.constant 0 : index
    %5 = vector.load %arg7[%c0_14, %c0_15, %c0_16] : memref<4x1x8xf32, #tpu.memory_space<vmem>>, vector<4x1x8xf32>
    %c0_17 = arith.constant 0 : index
    %c0_18 = arith.constant 0 : index
    %c0_19 = arith.constant 0 : index
    %6 = vector.load %arg8[%c0_17, %c0_18, %c0_19] : memref<4x8x32xbf16, #tpu.memory_space<vmem>>, vector<4x8x32xbf16>
    %c0_20 = arith.constant 0 : index
    %c0_21 = arith.constant 0 : index
    %7 = vector.load %arg9[%c0_20, %c0_21] : memref<1x32xf32, #tpu.memory_space<vmem>>, vector<1x32xf32>
    %c0_22 = arith.constant 0 : index
    %c0_23 = arith.constant 0 : index
    %8 = vector.load %arg10[%c0_22, %c0_23] : memref<1x32xf32, #tpu.memory_space<vmem>>, vector<1x32xf32>
    %c0_24 = arith.constant 0 : index
    %c0_25 = arith.constant 0 : index
    %9 = vector.load %arg11[%c0_24, %c0_25] : memref<1x32xf32, #tpu.memory_space<vmem>>, vector<1x32xf32>
    %c0_26 = arith.constant 0 : index
    %c0_27 = arith.constant 0 : index
    %10 = vector.load %arg12[%c0_26, %c0_27] : memref<32x128xbf16, #tpu.memory_space<vmem>>, vector<32x128xbf16>
    %c0_28 = arith.constant 0 : index
    %c0_29 = arith.constant 0 : index
    %11 = vector.load %arg13[%c0_28, %c0_29] : memref<1x128xf32, #tpu.memory_space<vmem>>, vector<1x128xf32>
    %c0_30 = arith.constant 0 : index
    %c0_31 = arith.constant 0 : index
    %12 = vector.load %arg14[%c0_30, %c0_31] : memref<128x32xbf16, #tpu.memory_space<vmem>>, vector<128x32xbf16>
    %c0_32 = arith.constant 0 : index
    %c0_33 = arith.constant 0 : index
    %13 = vector.load %arg15[%c0_32, %c0_33] : memref<1x32xf32, #tpu.memory_space<vmem>>, vector<1x32xf32>
    %c0_34 = arith.constant 0 : index
    %c0_35 = arith.constant 0 : index
    %14 = vector.load %arg16[%c0_34, %c0_35] : memref<1x32xf32, #tpu.memory_space<vmem>>, vector<1x32xf32>
    %c0_36 = arith.constant 0 : index
    %c0_37 = arith.constant 0 : index
    %15 = vector.load %arg17[%c0_36, %c0_37] : memref<1x32xf32, #tpu.memory_space<vmem>>, vector<1x32xf32>
    %c0_38 = arith.constant 0 : index
    %c0_39 = arith.constant 0 : index
    %16 = vector.load %arg1[%c0_38, %c0_39] : memref<16x32xbf16, #tpu.memory_space<vmem>>, vector<16x32xbf16>
    %17 = arith.extf %16 : vector<16x32xbf16> to vector<16x32xf32>
    %18 = vector.extract_strided_slice %0 {offsets = [0, 0, 0], sizes = [1, 32, 8], strides = [1, 1, 1]} : vector<4x32x8xbf16> to vector<1x32x8xbf16>
    %19 = vector.shape_cast %18 : vector<1x32x8xbf16> to vector<32x8xbf16>
    %cst = arith.constant dense<0.000000e+00> : vector<16x8xf32>
    %20 = tpu.matmul %16, %19, %cst {dimension_numbers = #tpu.dot_dimension_numbers<[1], [0], [0], [1], [0, 0, 1, 1], [], []>} : vector<16x32xbf16>, vector<32x8xbf16>, vector<16x8xf32> -> vector<16x8xf32>
    %21 = vector.extract_strided_slice %1 {offsets = [0, 0, 0], sizes = [1, 1, 8], strides = [1, 1, 1]} : vector<4x1x8xf32> to vector<1x1x8xf32>
    %22 = vector.shape_cast %21 : vector<1x1x8xf32> to vector<1x8xf32>
    %23 = vector.broadcast %22 : vector<1x8xf32> to vector<16x8xf32>
    %24 = arith.addf %20, %23 : vector<16x8xf32>
    %25 = arith.truncf %24 : vector<16x8xf32> to vector<16x8xbf16>
    %26 = vector.extract_strided_slice %2 {offsets = [0, 0, 0], sizes = [1, 32, 8], strides = [1, 1, 1]} : vector<4x32x8xbf16> to vector<1x32x8xbf16>
    %27 = vector.shape_cast %26 : vector<1x32x8xbf16> to vector<32x8xbf16>
    %cst_40 = arith.constant dense<0.000000e+00> : vector<16x8xf32>
    %28 = tpu.matmul %16, %27, %cst_40 {dimension_numbers = #tpu.dot_dimension_numbers<[1], [0], [0], [1], [0, 0, 1, 1], [], []>} : vector<16x32xbf16>, vector<32x8xbf16>, vector<16x8xf32> -> vector<16x8xf32>
    %29 = vector.extract_strided_slice %3 {offsets = [0, 0, 0], sizes = [1, 1, 8], strides = [1, 1, 1]} : vector<4x1x8xf32> to vector<1x1x8xf32>
    %30 = vector.shape_cast %29 : vector<1x1x8xf32> to vector<1x8xf32>
    %31 = vector.broadcast %30 : vector<1x8xf32> to vector<16x8xf32>
    %32 = arith.addf %28, %31 : vector<16x8xf32>
    %33 = arith.truncf %32 : vector<16x8xf32> to vector<16x8xbf16>
    %34 = vector.extract_strided_slice %4 {offsets = [0, 0, 0], sizes = [1, 32, 8], strides = [1, 1, 1]} : vector<4x32x8xbf16> to vector<1x32x8xbf16>
    %35 = vector.shape_cast %34 : vector<1x32x8xbf16> to vector<32x8xbf16>
    %cst_41 = arith.constant dense<0.000000e+00> : vector<16x8xf32>
    %36 = tpu.matmul %16, %35, %cst_41 {dimension_numbers = #tpu.dot_dimension_numbers<[1], [0], [0], [1], [0, 0, 1, 1], [], []>} : vector<16x32xbf16>, vector<32x8xbf16>, vector<16x8xf32> -> vector<16x8xf32>
    %37 = vector.extract_strided_slice %5 {offsets = [0, 0, 0], sizes = [1, 1, 8], strides = [1, 1, 1]} : vector<4x1x8xf32> to vector<1x1x8xf32>
    %38 = vector.shape_cast %37 : vector<1x1x8xf32> to vector<1x8xf32>
    %39 = vector.broadcast %38 : vector<1x8xf32> to vector<16x8xf32>
    %40 = arith.addf %36, %39 : vector<16x8xf32>
    %41 = arith.truncf %40 : vector<16x8xf32> to vector<16x8xbf16>
    %42 = vector.extract_strided_slice %0 {offsets = [1, 0, 0], sizes = [1, 32, 8], strides = [1, 1, 1]} : vector<4x32x8xbf16> to vector<1x32x8xbf16>
    %43 = vector.shape_cast %42 : vector<1x32x8xbf16> to vector<32x8xbf16>
    %cst_42 = arith.constant dense<0.000000e+00> : vector<16x8xf32>
    %44 = tpu.matmul %16, %43, %cst_42 {dimension_numbers = #tpu.dot_dimension_numbers<[1], [0], [0], [1], [0, 0, 1, 1], [], []>} : vector<16x32xbf16>, vector<32x8xbf16>, vector<16x8xf32> -> vector<16x8xf32>
    %45 = vector.extract_strided_slice %1 {offsets = [1, 0, 0], sizes = [1, 1, 8], strides = [1, 1, 1]} : vector<4x1x8xf32> to vector<1x1x8xf32>
    %46 = vector.shape_cast %45 : vector<1x1x8xf32> to vector<1x8xf32>
    %47 = vector.broadcast %46 : vector<1x8xf32> to vector<16x8xf32>
    %48 = arith.addf %44, %47 : vector<16x8xf32>
    %49 = arith.truncf %48 : vector<16x8xf32> to vector<16x8xbf16>
    %50 = vector.extract_strided_slice %2 {offsets = [1, 0, 0], sizes = [1, 32, 8], strides = [1, 1, 1]} : vector<4x32x8xbf16> to vector<1x32x8xbf16>
    %51 = vector.shape_cast %50 : vector<1x32x8xbf16> to vector<32x8xbf16>
    %cst_43 = arith.constant dense<0.000000e+00> : vector<16x8xf32>
    %52 = tpu.matmul %16, %51, %cst_43 {dimension_numbers = #tpu.dot_dimension_numbers<[1], [0], [0], [1], [0, 0, 1, 1], [], []>} : vector<16x32xbf16>, vector<32x8xbf16>, vector<16x8xf32> -> vector<16x8xf32>
    %53 = vector.extract_strided_slice %3 {offsets = [1, 0, 0], sizes = [1, 1, 8], strides = [1, 1, 1]} : vector<4x1x8xf32> to vector<1x1x8xf32>
    %54 = vector.shape_cast %53 : vector<1x1x8xf32> to vector<1x8xf32>
    %55 = vector.broadcast %54 : vector<1x8xf32> to vector<16x8xf32>
    %56 = arith.addf %52, %55 : vector<16x8xf32>
    %57 = arith.truncf %56 : vector<16x8xf32> to vector<16x8xbf16>
    %58 = vector.extract_strided_slice %4 {offsets = [1, 0, 0], sizes = [1, 32, 8], strides = [1, 1, 1]} : vector<4x32x8xbf16> to vector<1x32x8xbf16>
    %59 = vector.shape_cast %58 : vector<1x32x8xbf16> to vector<32x8xbf16>
    %cst_44 = arith.constant dense<0.000000e+00> : vector<16x8xf32>
    %60 = tpu.matmul %16, %59, %cst_44 {dimension_numbers = #tpu.dot_dimension_numbers<[1], [0], [0], [1], [0, 0, 1, 1], [], []>} : vector<16x32xbf16>, vector<32x8xbf16>, vector<16x8xf32> -> vector<16x8xf32>
    %61 = vector.extract_strided_slice %5 {offsets = [1, 0, 0], sizes = [1, 1, 8], strides = [1, 1, 1]} : vector<4x1x8xf32> to vector<1x1x8xf32>
    %62 = vector.shape_cast %61 : vector<1x1x8xf32> to vector<1x8xf32>
    %63 = vector.broadcast %62 : vector<1x8xf32> to vector<16x8xf32>
    %64 = arith.addf %60, %63 : vector<16x8xf32>
    %65 = arith.truncf %64 : vector<16x8xf32> to vector<16x8xbf16>
    %66 = vector.extract_strided_slice %0 {offsets = [2, 0, 0], sizes = [1, 32, 8], strides = [1, 1, 1]} : vector<4x32x8xbf16> to vector<1x32x8xbf16>
    %67 = vector.shape_cast %66 : vector<1x32x8xbf16> to vector<32x8xbf16>
    %cst_45 = arith.constant dense<0.000000e+00> : vector<16x8xf32>
    %68 = tpu.matmul %16, %67, %cst_45 {dimension_numbers = #tpu.dot_dimension_numbers<[1], [0], [0], [1], [0, 0, 1, 1], [], []>} : vector<16x32xbf16>, vector<32x8xbf16>, vector<16x8xf32> -> vector<16x8xf32>
    %69 = vector.extract_strided_slice %1 {offsets = [2, 0, 0], sizes = [1, 1, 8], strides = [1, 1, 1]} : vector<4x1x8xf32> to vector<1x1x8xf32>
    %70 = vector.shape_cast %69 : vector<1x1x8xf32> to vector<1x8xf32>
    %71 = vector.broadcast %70 : vector<1x8xf32> to vector<16x8xf32>
    %72 = arith.addf %68, %71 : vector<16x8xf32>
    %73 = arith.truncf %72 : vector<16x8xf32> to vector<16x8xbf16>
    %74 = vector.extract_strided_slice %2 {offsets = [2, 0, 0], sizes = [1, 32, 8], strides = [1, 1, 1]} : vector<4x32x8xbf16> to vector<1x32x8xbf16>
    %75 = vector.shape_cast %74 : vector<1x32x8xbf16> to vector<32x8xbf16>
    %cst_46 = arith.constant dense<0.000000e+00> : vector<16x8xf32>
    %76 = tpu.matmul %16, %75, %cst_46 {dimension_numbers = #tpu.dot_dimension_numbers<[1], [0], [0], [1], [0, 0, 1, 1], [], []>} : vector<16x32xbf16>, vector<32x8xbf16>, vector<16x8xf32> -> vector<16x8xf32>
    %77 = vector.extract_strided_slice %3 {offsets = [2, 0, 0], sizes = [1, 1, 8], strides = [1, 1, 1]} : vector<4x1x8xf32> to vector<1x1x8xf32>
    %78 = vector.shape_cast %77 : vector<1x1x8xf32> to vector<1x8xf32>
    %79 = vector.broadcast %78 : vector<1x8xf32> to vector<16x8xf32>
    %80 = arith.addf %76, %79 : vector<16x8xf32>
    %81 = arith.truncf %80 : vector<16x8xf32> to vector<16x8xbf16>
    %82 = vector.extract_strided_slice %4 {offsets = [2, 0, 0], sizes = [1, 32, 8], strides = [1, 1, 1]} : vector<4x32x8xbf16> to vector<1x32x8xbf16>
    %83 = vector.shape_cast %82 : vector<1x32x8xbf16> to vector<32x8xbf16>
    %cst_47 = arith.constant dense<0.000000e+00> : vector<16x8xf32>
    %84 = tpu.matmul %16, %83, %cst_47 {dimension_numbers = #tpu.dot_dimension_numbers<[1], [0], [0], [1], [0, 0, 1, 1], [], []>} : vector<16x32xbf16>, vector<32x8xbf16>, vector<16x8xf32> -> vector<16x8xf32>
    %85 = vector.extract_strided_slice %5 {offsets = [2, 0, 0], sizes = [1, 1, 8], strides = [1, 1, 1]} : vector<4x1x8xf32> to vector<1x1x8xf32>
    %86 = vector.shape_cast %85 : vector<1x1x8xf32> to vector<1x8xf32>
    %87 = vector.broadcast %86 : vector<1x8xf32> to vector<16x8xf32>
    %88 = arith.addf %84, %87 : vector<16x8xf32>
    %89 = arith.truncf %88 : vector<16x8xf32> to vector<16x8xbf16>
    %90 = vector.extract_strided_slice %0 {offsets = [3, 0, 0], sizes = [1, 32, 8], strides = [1, 1, 1]} : vector<4x32x8xbf16> to vector<1x32x8xbf16>
    %91 = vector.shape_cast %90 : vector<1x32x8xbf16> to vector<32x8xbf16>
    %cst_48 = arith.constant dense<0.000000e+00> : vector<16x8xf32>
    %92 = tpu.matmul %16, %91, %cst_48 {dimension_numbers = #tpu.dot_dimension_numbers<[1], [0], [0], [1], [0, 0, 1, 1], [], []>} : vector<16x32xbf16>, vector<32x8xbf16>, vector<16x8xf32> -> vector<16x8xf32>
    %93 = vector.extract_strided_slice %1 {offsets = [3, 0, 0], sizes = [1, 1, 8], strides = [1, 1, 1]} : vector<4x1x8xf32> to vector<1x1x8xf32>
    %94 = vector.shape_cast %93 : vector<1x1x8xf32> to vector<1x8xf32>
    %95 = vector.broadcast %94 : vector<1x8xf32> to vector<16x8xf32>
    %96 = arith.addf %92, %95 : vector<16x8xf32>
    %97 = arith.truncf %96 : vector<16x8xf32> to vector<16x8xbf16>
    %98 = vector.extract_strided_slice %2 {offsets = [3, 0, 0], sizes = [1, 32, 8], strides = [1, 1, 1]} : vector<4x32x8xbf16> to vector<1x32x8xbf16>
    %99 = vector.shape_cast %98 : vector<1x32x8xbf16> to vector<32x8xbf16>
    %cst_49 = arith.constant dense<0.000000e+00> : vector<16x8xf32>
    %100 = tpu.matmul %16, %99, %cst_49 {dimension_numbers = #tpu.dot_dimension_numbers<[1], [0], [0], [1], [0, 0, 1, 1], [], []>} : vector<16x32xbf16>, vector<32x8xbf16>, vector<16x8xf32> -> vector<16x8xf32>
    %101 = vector.extract_strided_slice %3 {offsets = [3, 0, 0], sizes = [1, 1, 8], strides = [1, 1, 1]} : vector<4x1x8xf32> to vector<1x1x8xf32>
    %102 = vector.shape_cast %101 : vector<1x1x8xf32> to vector<1x8xf32>
    %103 = vector.broadcast %102 : vector<1x8xf32> to vector<16x8xf32>
    %104 = arith.addf %100, %103 : vector<16x8xf32>
    %105 = arith.truncf %104 : vector<16x8xf32> to vector<16x8xbf16>
    %106 = vector.extract_strided_slice %4 {offsets = [3, 0, 0], sizes = [1, 32, 8], strides = [1, 1, 1]} : vector<4x32x8xbf16> to vector<1x32x8xbf16>
    %107 = vector.shape_cast %106 : vector<1x32x8xbf16> to vector<32x8xbf16>
    %cst_50 = arith.constant dense<0.000000e+00> : vector<16x8xf32>
    %108 = tpu.matmul %16, %107, %cst_50 {dimension_numbers = #tpu.dot_dimension_numbers<[1], [0], [0], [1], [0, 0, 1, 1], [], []>} : vector<16x32xbf16>, vector<32x8xbf16>, vector<16x8xf32> -> vector<16x8xf32>
    %109 = vector.extract_strided_slice %5 {offsets = [3, 0, 0], sizes = [1, 1, 8], strides = [1, 1, 1]} : vector<4x1x8xf32> to vector<1x1x8xf32>
    %110 = vector.shape_cast %109 : vector<1x1x8xf32> to vector<1x8xf32>
    %111 = vector.broadcast %110 : vector<1x8xf32> to vector<16x8xf32>
    %112 = arith.addf %108, %111 : vector<16x8xf32>
    %113 = arith.truncf %112 : vector<16x8xf32> to vector<16x8xbf16>
    %114 = tpu.iota {dimensions = array<i32: 0>} : vector<16x16xi32>
    %115 = tpu.iota {dimensions = array<i32: 1>} : vector<16x16xi32>
    %116 = arith.sitofp %114 : vector<16x16xi32> to vector<16x16xf32>
    %cst_51 = arith.constant 5.000000e-01 : f32
    %117 = vector.broadcast %cst_51 : f32 to vector<16x16xf32>
    %118 = arith.addf %116, %117 : vector<16x16xf32>
    %cst_52 = arith.constant 1.250000e-01 : f32
    %119 = vector.broadcast %cst_52 : f32 to vector<16x16xf32>
    %120 = arith.mulf %118, %119 : vector<16x16xf32>
    %121 = math.floor %120 : vector<16x16xf32>
    %122 = arith.sitofp %115 : vector<16x16xi32> to vector<16x16xf32>
    %cst_53 = arith.constant 5.000000e-01 : f32
    %123 = vector.broadcast %cst_53 : f32 to vector<16x16xf32>
    %124 = arith.addf %122, %123 : vector<16x16xf32>
    %cst_54 = arith.constant 1.250000e-01 : f32
    %125 = vector.broadcast %cst_54 : f32 to vector<16x16xf32>
    %126 = arith.mulf %124, %125 : vector<16x16xf32>
    %127 = math.floor %126 : vector<16x16xf32>
    %128 = arith.cmpf oeq, %121, %127 : vector<16x16xf32>
    %cst_55 = arith.constant 0.000000e+00 : f32
    %cst_56 = arith.constant -1.000000e+30 : f32
    %129 = vector.broadcast %cst_55 : f32 to vector<16x16xf32>
    %130 = vector.broadcast %cst_56 : f32 to vector<16x16xf32>
    %131 = arith.select %128, %129, %130 : vector<16x16xi1>, vector<16x16xf32>
    %cst_57 = arith.constant dense<0.000000e+00> : vector<16x16xf32>
    %132 = tpu.matmul %25, %33, %cst_57 {dimension_numbers = #tpu.dot_dimension_numbers<[1], [1], [0], [0], [0, 0, 1, 0], [], []>} : vector<16x8xbf16>, vector<16x8xbf16>, vector<16x16xf32> -> vector<16x16xf32>
    %133 = arith.addf %132, %131 : vector<16x16xf32>
    %cst_58 = arith.constant dense<0xFF800000> : vector<16xf32>
    %134 = vector.multi_reduction <maximumf>, %133, %cst_58 [1] : vector<16x16xf32> to vector<16xf32>
    %135 = vector.shape_cast %134 : vector<16xf32> to vector<16x1xf32>
    %136 = vector.broadcast %135 : vector<16x1xf32> to vector<16x16xf32>
    %137 = arith.subf %133, %136 : vector<16x16xf32>
    %138 = math.exp %137 : vector<16x16xf32>
    %cst_59 = arith.constant dense<0.000000e+00> : vector<16xf32>
    %139 = vector.multi_reduction <add>, %138, %cst_59 [1] : vector<16x16xf32> to vector<16xf32>
    %140 = vector.shape_cast %139 : vector<16xf32> to vector<16x1xf32>
    %141 = tpu.reciprocal %140 {approx = true} : vector<16x1xf32> -> vector<16x1xf32>
    %142 = arith.mulf %140, %141 : vector<16x1xf32>
    %cst_60 = arith.constant 2.000000e+00 : f32
    %143 = vector.broadcast %cst_60 : f32 to vector<16x1xf32>
    %144 = arith.subf %143, %142 : vector<16x1xf32>
    %145 = arith.mulf %141, %144 : vector<16x1xf32>
    %146 = vector.broadcast %145 : vector<16x1xf32> to vector<16x16xf32>
    %147 = arith.mulf %138, %146 : vector<16x16xf32>
    %148 = arith.truncf %147 : vector<16x16xf32> to vector<16x16xbf16>
    %cst_61 = arith.constant dense<0.000000e+00> : vector<16x8xf32>
    %149 = tpu.matmul %148, %41, %cst_61 {dimension_numbers = #tpu.dot_dimension_numbers<[1], [0], [0], [1], [0, 0, 1, 1], [], []>} : vector<16x16xbf16>, vector<16x8xbf16>, vector<16x8xf32> -> vector<16x8xf32>
    %150 = arith.truncf %149 : vector<16x8xf32> to vector<16x8xbf16>
    %151 = vector.extract_strided_slice %6 {offsets = [0, 0, 0], sizes = [1, 8, 32], strides = [1, 1, 1]} : vector<4x8x32xbf16> to vector<1x8x32xbf16>
    %152 = vector.shape_cast %151 : vector<1x8x32xbf16> to vector<8x32xbf16>
    %cst_62 = arith.constant dense<0.000000e+00> : vector<16x32xf32>
    %153 = tpu.matmul %150, %152, %cst_62 {dimension_numbers = #tpu.dot_dimension_numbers<[1], [0], [0], [1], [0, 0, 1, 1], [], []>} : vector<16x8xbf16>, vector<8x32xbf16>, vector<16x32xf32> -> vector<16x32xf32>
    %cst_63 = arith.constant dense<0.000000e+00> : vector<16x16xf32>
    %154 = tpu.matmul %49, %57, %cst_63 {dimension_numbers = #tpu.dot_dimension_numbers<[1], [1], [0], [0], [0, 0, 1, 0], [], []>} : vector<16x8xbf16>, vector<16x8xbf16>, vector<16x16xf32> -> vector<16x16xf32>
    %155 = arith.addf %154, %131 : vector<16x16xf32>
    %cst_64 = arith.constant dense<0xFF800000> : vector<16xf32>
    %156 = vector.multi_reduction <maximumf>, %155, %cst_64 [1] : vector<16x16xf32> to vector<16xf32>
    %157 = vector.shape_cast %156 : vector<16xf32> to vector<16x1xf32>
    %158 = vector.broadcast %157 : vector<16x1xf32> to vector<16x16xf32>
    %159 = arith.subf %155, %158 : vector<16x16xf32>
    %160 = math.exp %159 : vector<16x16xf32>
    %cst_65 = arith.constant dense<0.000000e+00> : vector<16xf32>
    %161 = vector.multi_reduction <add>, %160, %cst_65 [1] : vector<16x16xf32> to vector<16xf32>
    %162 = vector.shape_cast %161 : vector<16xf32> to vector<16x1xf32>
    %163 = tpu.reciprocal %162 {approx = true} : vector<16x1xf32> -> vector<16x1xf32>
    %164 = arith.mulf %162, %163 : vector<16x1xf32>
    %cst_66 = arith.constant 2.000000e+00 : f32
    %165 = vector.broadcast %cst_66 : f32 to vector<16x1xf32>
    %166 = arith.subf %165, %164 : vector<16x1xf32>
    %167 = arith.mulf %163, %166 : vector<16x1xf32>
    %168 = vector.broadcast %167 : vector<16x1xf32> to vector<16x16xf32>
    %169 = arith.mulf %160, %168 : vector<16x16xf32>
    %170 = arith.truncf %169 : vector<16x16xf32> to vector<16x16xbf16>
    %cst_67 = arith.constant dense<0.000000e+00> : vector<16x8xf32>
    %171 = tpu.matmul %170, %65, %cst_67 {dimension_numbers = #tpu.dot_dimension_numbers<[1], [0], [0], [1], [0, 0, 1, 1], [], []>} : vector<16x16xbf16>, vector<16x8xbf16>, vector<16x8xf32> -> vector<16x8xf32>
    %172 = arith.truncf %171 : vector<16x8xf32> to vector<16x8xbf16>
    %173 = vector.extract_strided_slice %6 {offsets = [1, 0, 0], sizes = [1, 8, 32], strides = [1, 1, 1]} : vector<4x8x32xbf16> to vector<1x8x32xbf16>
    %174 = vector.shape_cast %173 : vector<1x8x32xbf16> to vector<8x32xbf16>
    %cst_68 = arith.constant dense<0.000000e+00> : vector<16x32xf32>
    %175 = tpu.matmul %172, %174, %cst_68 {dimension_numbers = #tpu.dot_dimension_numbers<[1], [0], [0], [1], [0, 0, 1, 1], [], []>} : vector<16x8xbf16>, vector<8x32xbf16>, vector<16x32xf32> -> vector<16x32xf32>
    %176 = arith.addf %153, %175 : vector<16x32xf32>
    %cst_69 = arith.constant dense<0.000000e+00> : vector<16x16xf32>
    %177 = tpu.matmul %73, %81, %cst_69 {dimension_numbers = #tpu.dot_dimension_numbers<[1], [1], [0], [0], [0, 0, 1, 0], [], []>} : vector<16x8xbf16>, vector<16x8xbf16>, vector<16x16xf32> -> vector<16x16xf32>
    %178 = arith.addf %177, %131 : vector<16x16xf32>
    %cst_70 = arith.constant dense<0xFF800000> : vector<16xf32>
    %179 = vector.multi_reduction <maximumf>, %178, %cst_70 [1] : vector<16x16xf32> to vector<16xf32>
    %180 = vector.shape_cast %179 : vector<16xf32> to vector<16x1xf32>
    %181 = vector.broadcast %180 : vector<16x1xf32> to vector<16x16xf32>
    %182 = arith.subf %178, %181 : vector<16x16xf32>
    %183 = math.exp %182 : vector<16x16xf32>
    %cst_71 = arith.constant dense<0.000000e+00> : vector<16xf32>
    %184 = vector.multi_reduction <add>, %183, %cst_71 [1] : vector<16x16xf32> to vector<16xf32>
    %185 = vector.shape_cast %184 : vector<16xf32> to vector<16x1xf32>
    %186 = tpu.reciprocal %185 {approx = true} : vector<16x1xf32> -> vector<16x1xf32>
    %187 = arith.mulf %185, %186 : vector<16x1xf32>
    %cst_72 = arith.constant 2.000000e+00 : f32
    %188 = vector.broadcast %cst_72 : f32 to vector<16x1xf32>
    %189 = arith.subf %188, %187 : vector<16x1xf32>
    %190 = arith.mulf %186, %189 : vector<16x1xf32>
    %191 = vector.broadcast %190 : vector<16x1xf32> to vector<16x16xf32>
    %192 = arith.mulf %183, %191 : vector<16x16xf32>
    %193 = arith.truncf %192 : vector<16x16xf32> to vector<16x16xbf16>
    %cst_73 = arith.constant dense<0.000000e+00> : vector<16x8xf32>
    %194 = tpu.matmul %193, %89, %cst_73 {dimension_numbers = #tpu.dot_dimension_numbers<[1], [0], [0], [1], [0, 0, 1, 1], [], []>} : vector<16x16xbf16>, vector<16x8xbf16>, vector<16x8xf32> -> vector<16x8xf32>
    %195 = arith.truncf %194 : vector<16x8xf32> to vector<16x8xbf16>
    %196 = vector.extract_strided_slice %6 {offsets = [2, 0, 0], sizes = [1, 8, 32], strides = [1, 1, 1]} : vector<4x8x32xbf16> to vector<1x8x32xbf16>
    %197 = vector.shape_cast %196 : vector<1x8x32xbf16> to vector<8x32xbf16>
    %cst_74 = arith.constant dense<0.000000e+00> : vector<16x32xf32>
    %198 = tpu.matmul %195, %197, %cst_74 {dimension_numbers = #tpu.dot_dimension_numbers<[1], [0], [0], [1], [0, 0, 1, 1], [], []>} : vector<16x8xbf16>, vector<8x32xbf16>, vector<16x32xf32> -> vector<16x32xf32>
    %199 = arith.addf %176, %198 : vector<16x32xf32>
    %cst_75 = arith.constant dense<0.000000e+00> : vector<16x16xf32>
    %200 = tpu.matmul %97, %105, %cst_75 {dimension_numbers = #tpu.dot_dimension_numbers<[1], [1], [0], [0], [0, 0, 1, 0], [], []>} : vector<16x8xbf16>, vector<16x8xbf16>, vector<16x16xf32> -> vector<16x16xf32>
    %201 = arith.addf %200, %131 : vector<16x16xf32>
    %cst_76 = arith.constant dense<0xFF800000> : vector<16xf32>
    %202 = vector.multi_reduction <maximumf>, %201, %cst_76 [1] : vector<16x16xf32> to vector<16xf32>
    %203 = vector.shape_cast %202 : vector<16xf32> to vector<16x1xf32>
    %204 = vector.broadcast %203 : vector<16x1xf32> to vector<16x16xf32>
    %205 = arith.subf %201, %204 : vector<16x16xf32>
    %206 = math.exp %205 : vector<16x16xf32>
    %cst_77 = arith.constant dense<0.000000e+00> : vector<16xf32>
    %207 = vector.multi_reduction <add>, %206, %cst_77 [1] : vector<16x16xf32> to vector<16xf32>
    %208 = vector.shape_cast %207 : vector<16xf32> to vector<16x1xf32>
    %209 = tpu.reciprocal %208 {approx = true} : vector<16x1xf32> -> vector<16x1xf32>
    %210 = arith.mulf %208, %209 : vector<16x1xf32>
    %cst_78 = arith.constant 2.000000e+00 : f32
    %211 = vector.broadcast %cst_78 : f32 to vector<16x1xf32>
    %212 = arith.subf %211, %210 : vector<16x1xf32>
    %213 = arith.mulf %209, %212 : vector<16x1xf32>
    %214 = vector.broadcast %213 : vector<16x1xf32> to vector<16x16xf32>
    %215 = arith.mulf %206, %214 : vector<16x16xf32>
    %216 = arith.truncf %215 : vector<16x16xf32> to vector<16x16xbf16>
    %cst_79 = arith.constant dense<0.000000e+00> : vector<16x8xf32>
    %217 = tpu.matmul %216, %113, %cst_79 {dimension_numbers = #tpu.dot_dimension_numbers<[1], [0], [0], [1], [0, 0, 1, 1], [], []>} : vector<16x16xbf16>, vector<16x8xbf16>, vector<16x8xf32> -> vector<16x8xf32>
    %218 = arith.truncf %217 : vector<16x8xf32> to vector<16x8xbf16>
    %219 = vector.extract_strided_slice %6 {offsets = [3, 0, 0], sizes = [1, 8, 32], strides = [1, 1, 1]} : vector<4x8x32xbf16> to vector<1x8x32xbf16>
    %220 = vector.shape_cast %219 : vector<1x8x32xbf16> to vector<8x32xbf16>
    %cst_80 = arith.constant dense<0.000000e+00> : vector<16x32xf32>
    %221 = tpu.matmul %218, %220, %cst_80 {dimension_numbers = #tpu.dot_dimension_numbers<[1], [0], [0], [1], [0, 0, 1, 1], [], []>} : vector<16x8xbf16>, vector<8x32xbf16>, vector<16x32xf32> -> vector<16x32xf32>
    %222 = arith.addf %199, %221 : vector<16x32xf32>
    %223 = vector.broadcast %7 : vector<1x32xf32> to vector<16x32xf32>
    %224 = arith.addf %222, %223 : vector<16x32xf32>
    %225 = arith.addf %17, %224 : vector<16x32xf32>
    %cst_81 = arith.constant dense<0.000000e+00> : vector<16xf32>
    %226 = vector.multi_reduction <add>, %225, %cst_81 [1] : vector<16x32xf32> to vector<16xf32>
    %227 = vector.shape_cast %226 : vector<16xf32> to vector<16x1xf32>
    %cst_82 = arith.constant 3.200000e+01 : f32
    %228 = vector.broadcast %cst_82 : f32 to vector<16x1xf32>
    %229 = arith.divf %227, %228 : vector<16x1xf32>
    %230 = vector.broadcast %229 : vector<16x1xf32> to vector<16x32xf32>
    %231 = arith.subf %225, %230 : vector<16x32xf32>
    %232 = arith.mulf %231, %231 : vector<16x32xf32>
    %cst_83 = arith.constant dense<0.000000e+00> : vector<16xf32>
    %233 = vector.multi_reduction <add>, %232, %cst_83 [1] : vector<16x32xf32> to vector<16xf32>
    %234 = vector.shape_cast %233 : vector<16xf32> to vector<16x1xf32>
    %cst_84 = arith.constant 3.200000e+01 : f32
    %235 = vector.broadcast %cst_84 : f32 to vector<16x1xf32>
    %236 = arith.divf %234, %235 : vector<16x1xf32>
    %237 = vector.broadcast %229 : vector<16x1xf32> to vector<16x32xf32>
    %238 = arith.subf %225, %237 : vector<16x32xf32>
    %cst_85 = arith.constant 9.99999974E-6 : f32
    %239 = vector.broadcast %cst_85 : f32 to vector<16x1xf32>
    %240 = arith.addf %236, %239 : vector<16x1xf32>
    %241 = math.rsqrt %240 : vector<16x1xf32>
    %242 = vector.broadcast %241 : vector<16x1xf32> to vector<16x32xf32>
    %243 = arith.mulf %238, %242 : vector<16x32xf32>
    %244 = vector.broadcast %8 : vector<1x32xf32> to vector<16x32xf32>
    %245 = arith.mulf %243, %244 : vector<16x32xf32>
    %246 = vector.broadcast %9 : vector<1x32xf32> to vector<16x32xf32>
    %247 = arith.addf %245, %246 : vector<16x32xf32>
    %248 = arith.truncf %247 : vector<16x32xf32> to vector<16x32xbf16>
    %cst_86 = arith.constant dense<0.000000e+00> : vector<16x128xf32>
    %249 = tpu.matmul %248, %10, %cst_86 {dimension_numbers = #tpu.dot_dimension_numbers<[1], [0], [0], [1], [0, 0, 1, 1], [], []>} : vector<16x32xbf16>, vector<32x128xbf16>, vector<16x128xf32> -> vector<16x128xf32>
    %250 = vector.broadcast %11 : vector<1x128xf32> to vector<16x128xf32>
    %251 = arith.addf %249, %250 : vector<16x128xf32>
    %cst_87 = arith.constant 0.707106769 : f32
    %252 = vector.broadcast %cst_87 : f32 to vector<16x128xf32>
    %253 = arith.mulf %251, %252 : vector<16x128xf32>
    %254 = math.absf %253 : vector<16x128xf32>
    %cst_88 = arith.constant 0.327591091 : f32
    %255 = vector.broadcast %cst_88 : f32 to vector<16x128xf32>
    %256 = arith.mulf %255, %254 : vector<16x128xf32>
    %cst_89 = arith.constant 1.000000e+00 : f32
    %257 = vector.broadcast %cst_89 : f32 to vector<16x128xf32>
    %258 = arith.addf %257, %256 : vector<16x128xf32>
    %cst_90 = arith.constant 1.000000e+00 : f32
    %259 = vector.broadcast %cst_90 : f32 to vector<16x128xf32>
    %260 = arith.divf %259, %258 : vector<16x128xf32>
    %cst_91 = arith.constant 1.06140542 : f32
    %261 = vector.broadcast %cst_91 : f32 to vector<16x128xf32>
    %262 = arith.mulf %261, %260 : vector<16x128xf32>
    %cst_92 = arith.constant 1.45315206 : f32
    %263 = vector.broadcast %cst_92 : f32 to vector<16x128xf32>
    %264 = arith.subf %262, %263 : vector<16x128xf32>
    %265 = arith.mulf %264, %260 : vector<16x128xf32>
    %cst_93 = arith.constant 1.42141378 : f32
    %266 = vector.broadcast %cst_93 : f32 to vector<16x128xf32>
    %267 = arith.addf %265, %266 : vector<16x128xf32>
    %268 = arith.mulf %267, %260 : vector<16x128xf32>
    %cst_94 = arith.constant 0.284496725 : f32
    %269 = vector.broadcast %cst_94 : f32 to vector<16x128xf32>
    %270 = arith.subf %268, %269 : vector<16x128xf32>
    %271 = arith.mulf %270, %260 : vector<16x128xf32>
    %cst_95 = arith.constant 0.254829586 : f32
    %272 = vector.broadcast %cst_95 : f32 to vector<16x128xf32>
    %273 = arith.addf %271, %272 : vector<16x128xf32>
    %274 = arith.mulf %273, %260 : vector<16x128xf32>
    %cst_96 = arith.constant 0.000000e+00 : f32
    %275 = vector.broadcast %cst_96 : f32 to vector<16x128xf32>
    %276 = arith.subf %275, %254 : vector<16x128xf32>
    %277 = arith.mulf %276, %254 : vector<16x128xf32>
    %278 = math.exp %277 : vector<16x128xf32>
    %279 = arith.mulf %274, %278 : vector<16x128xf32>
    %cst_97 = arith.constant 1.000000e+00 : f32
    %280 = vector.broadcast %cst_97 : f32 to vector<16x128xf32>
    %281 = arith.subf %280, %279 : vector<16x128xf32>
    %cst_98 = arith.constant 0.000000e+00 : f32
    %282 = vector.broadcast %cst_98 : f32 to vector<16x128xf32>
    %283 = arith.cmpf olt, %253, %282 : vector<16x128xf32>
    %cst_99 = arith.constant 0.000000e+00 : f32
    %284 = vector.broadcast %cst_99 : f32 to vector<16x128xf32>
    %285 = arith.subf %284, %281 : vector<16x128xf32>
    %286 = arith.select %283, %285, %281 : vector<16x128xi1>, vector<16x128xf32>
    %cst_100 = arith.constant 5.000000e-01 : f32
    %287 = vector.broadcast %cst_100 : f32 to vector<16x128xf32>
    %288 = arith.mulf %287, %251 : vector<16x128xf32>
    %cst_101 = arith.constant 1.000000e+00 : f32
    %289 = vector.broadcast %cst_101 : f32 to vector<16x128xf32>
    %290 = arith.addf %289, %286 : vector<16x128xf32>
    %291 = arith.mulf %288, %290 : vector<16x128xf32>
    %292 = arith.truncf %291 : vector<16x128xf32> to vector<16x128xbf16>
    %cst_102 = arith.constant dense<0.000000e+00> : vector<16x32xf32>
    %293 = tpu.matmul %292, %12, %cst_102 {dimension_numbers = #tpu.dot_dimension_numbers<[1], [0], [0], [1], [0, 0, 1, 1], [], []>} : vector<16x128xbf16>, vector<128x32xbf16>, vector<16x32xf32> -> vector<16x32xf32>
    %294 = arith.addf %247, %293 : vector<16x32xf32>
    %295 = vector.broadcast %13 : vector<1x32xf32> to vector<16x32xf32>
    %296 = arith.addf %294, %295 : vector<16x32xf32>
    %cst_103 = arith.constant dense<0.000000e+00> : vector<16xf32>
    %297 = vector.multi_reduction <add>, %296, %cst_103 [1] : vector<16x32xf32> to vector<16xf32>
    %298 = vector.shape_cast %297 : vector<16xf32> to vector<16x1xf32>
    %cst_104 = arith.constant 3.200000e+01 : f32
    %299 = vector.broadcast %cst_104 : f32 to vector<16x1xf32>
    %300 = arith.divf %298, %299 : vector<16x1xf32>
    %301 = vector.broadcast %300 : vector<16x1xf32> to vector<16x32xf32>
    %302 = arith.subf %296, %301 : vector<16x32xf32>
    %303 = arith.mulf %302, %302 : vector<16x32xf32>
    %cst_105 = arith.constant dense<0.000000e+00> : vector<16xf32>
    %304 = vector.multi_reduction <add>, %303, %cst_105 [1] : vector<16x32xf32> to vector<16xf32>
    %305 = vector.shape_cast %304 : vector<16xf32> to vector<16x1xf32>
    %cst_106 = arith.constant 3.200000e+01 : f32
    %306 = vector.broadcast %cst_106 : f32 to vector<16x1xf32>
    %307 = arith.divf %305, %306 : vector<16x1xf32>
    %308 = vector.broadcast %300 : vector<16x1xf32> to vector<16x32xf32>
    %309 = arith.subf %296, %308 : vector<16x32xf32>
    %cst_107 = arith.constant 9.99999974E-6 : f32
    %310 = vector.broadcast %cst_107 : f32 to vector<16x1xf32>
    %311 = arith.addf %307, %310 : vector<16x1xf32>
    %312 = math.rsqrt %311 : vector<16x1xf32>
    %313 = vector.broadcast %312 : vector<16x1xf32> to vector<16x32xf32>
    %314 = arith.mulf %309, %313 : vector<16x32xf32>
    %315 = vector.broadcast %14 : vector<1x32xf32> to vector<16x32xf32>
    %316 = arith.mulf %314, %315 : vector<16x32xf32>
    %317 = vector.broadcast %15 : vector<1x32xf32> to vector<16x32xf32>
    %318 = arith.addf %316, %317 : vector<16x32xf32>
    %319 = arith.truncf %318 : vector<16x32xf32> to vector<16x32xbf16>
    %c0_108 = arith.constant 0 : index
    %c0_109 = arith.constant 0 : index
    %320 = vector.load %arg18[%c0_108, %c0_109] : memref<16x32xbf16, #tpu.memory_space<vmem>>, vector<16x32xbf16>
    tpu.vector_store %arg18[%c0_108, %c0_109], %319 {strides = array<i32>} : memref<16x32xbf16, #tpu.memory_space<vmem>>, vector<16x32xbf16>,
    return
  }
  func.func @transform_0(%arg0: i32) -> (i32, i32) {
    %c0_i32 = arith.constant 0 : i32
    %c0_i32_0 = arith.constant 0 : i32
    return %arg0, %c0_i32 : i32, i32
  }
  func.func @transform_1(%arg0: i32) -> (i32, i32, i32) {
    %c0_i32 = arith.constant 0 : i32
    %c0_i32_0 = arith.constant 0 : i32
    %c0_i32_1 = arith.constant 0 : i32
    %c0_i32_2 = arith.constant 0 : i32
    return %c0_i32, %c0_i32_0, %c0_i32_1 : i32, i32, i32
  }
  func.func @transform_2(%arg0: i32) -> (i32, i32, i32) {
    %c0_i32 = arith.constant 0 : i32
    %c0_i32_0 = arith.constant 0 : i32
    %c0_i32_1 = arith.constant 0 : i32
    %c0_i32_2 = arith.constant 0 : i32
    return %c0_i32, %c0_i32_0, %c0_i32_1 : i32, i32, i32
  }
  func.func @transform_3(%arg0: i32) -> (i32, i32, i32) {
    %c0_i32 = arith.constant 0 : i32
    %c0_i32_0 = arith.constant 0 : i32
    %c0_i32_1 = arith.constant 0 : i32
    %c0_i32_2 = arith.constant 0 : i32
    return %c0_i32, %c0_i32_0, %c0_i32_1 : i32, i32, i32
  }
  func.func @transform_4(%arg0: i32) -> (i32, i32, i32) {
    %c0_i32 = arith.constant 0 : i32
    %c0_i32_0 = arith.constant 0 : i32
    %c0_i32_1 = arith.constant 0 : i32
    %c0_i32_2 = arith.constant 0 : i32
    return %c0_i32, %c0_i32_0, %c0_i32_1 : i32, i32, i32
  }
  func.func @transform_5(%arg0: i32) -> (i32, i32, i32) {
    %c0_i32 = arith.constant 0 : i32
    %c0_i32_0 = arith.constant 0 : i32
    %c0_i32_1 = arith.constant 0 : i32
    %c0_i32_2 = arith.constant 0 : i32
    return %c0_i32, %c0_i32_0, %c0_i32_1 : i32, i32, i32
  }
  func.func @transform_6(%arg0: i32) -> (i32, i32, i32) {
    %c0_i32 = arith.constant 0 : i32
    %c0_i32_0 = arith.constant 0 : i32
    %c0_i32_1 = arith.constant 0 : i32
    %c0_i32_2 = arith.constant 0 : i32
    return %c0_i32, %c0_i32_0, %c0_i32_1 : i32, i32, i32
  }
  func.func @transform_7(%arg0: i32) -> (i32, i32, i32) {
    %c0_i32 = arith.constant 0 : i32
    %c0_i32_0 = arith.constant 0 : i32
    %c0_i32_1 = arith.constant 0 : i32
    %c0_i32_2 = arith.constant 0 : i32
    return %c0_i32, %c0_i32_0, %c0_i32_1 : i32, i32, i32
  }
  func.func @transform_8(%arg0: i32) -> (i32, i32) {
    %c0_i32 = arith.constant 0 : i32
    %c0_i32_0 = arith.constant 0 : i32
    %c0_i32_1 = arith.constant 0 : i32
    return %c0_i32, %c0_i32_0 : i32, i32
  }
  func.func @transform_9(%arg0: i32) -> (i32, i32) {
    %c0_i32 = arith.constant 0 : i32
    %c0_i32_0 = arith.constant 0 : i32
    %c0_i32_1 = arith.constant 0 : i32
    return %c0_i32, %c0_i32_0 : i32, i32
  }
  func.func @transform_10(%arg0: i32) -> (i32, i32) {
    %c0_i32 = arith.constant 0 : i32
    %c0_i32_0 = arith.constant 0 : i32
    %c0_i32_1 = arith.constant 0 : i32
    return %c0_i32, %c0_i32_0 : i32, i32
  }
  func.func @transform_11(%arg0: i32) -> (i32, i32) {
    %c0_i32 = arith.constant 0 : i32
    %c0_i32_0 = arith.constant 0 : i32
    %c0_i32_1 = arith.constant 0 : i32
    return %c0_i32, %c0_i32_0 : i32, i32
  }
  func.func @transform_12(%arg0: i32) -> (i32, i32) {
    %c0_i32 = arith.constant 0 : i32
    %c0_i32_0 = arith.constant 0 : i32
    %c0_i32_1 = arith.constant 0 : i32
    return %c0_i32, %c0_i32_0 : i32, i32
  }
  func.func @transform_13(%arg0: i32) -> (i32, i32) {
    %c0_i32 = arith.constant 0 : i32
    %c0_i32_0 = arith.constant 0 : i32
    %c0_i32_1 = arith.constant 0 : i32
    return %c0_i32, %c0_i32_0 : i32, i32
  }
  func.func @transform_14(%arg0: i32) -> (i32, i32) {
    %c0_i32 = arith.constant 0 : i32
    %c0_i32_0 = arith.constant 0 : i32
    %c0_i32_1 = arith.constant 0 : i32
    return %c0_i32, %c0_i32_0 : i32, i32
  }
  func.func @transform_15(%arg0: i32) -> (i32, i32) {
    %c0_i32 = arith.constant 0 : i32
    %c0_i32_0 = arith.constant 0 : i32
    %c0_i32_1 = arith.constant 0 : i32
    return %c0_i32, %c0_i32_0 : i32, i32
  }
  func.func @transform_16(%arg0: i32) -> (i32, i32) {
    %c0_i32 = arith.constant 0 : i32
    %c0_i32_0 = arith.constant 0 : i32
    %c0_i32_1 = arith.constant 0 : i32
    return %c0_i32, %c0_i32_0 : i32, i32
  }
  func.func @transform_17(%arg0: i32) -> (i32, i32) {
    %c0_i32 = arith.constant 0 : i32
    %c0_i32_0 = arith.constant 0 : i32
    return %arg0, %c0_i32 : i32, i32
  }
}

module attributes {stable_mosaic.version = 11 : i64} {
  func.func @_stage2_kernel(%arg0: i32, %arg1: i32, %arg2: memref<16x32xbf16, #tpu.memory_space<vmem>>, %arg3: memref<8x32xf32, #tpu.memory_space<vmem>>, %arg4: memref<4x32x8xbf16, #tpu.memory_space<vmem>>, %arg5: memref<4x1x8xf32, #tpu.memory_space<vmem>>, %arg6: memref<4x32x8xbf16, #tpu.memory_space<vmem>>, %arg7: memref<4x1x8xf32, #tpu.memory_space<vmem>>, %arg8: memref<4x32x8xbf16, #tpu.memory_space<vmem>>, %arg9: memref<4x1x8xf32, #tpu.memory_space<vmem>>, %arg10: memref<4x8x32xbf16, #tpu.memory_space<vmem>>, %arg11: memref<1x32xf32, #tpu.memory_space<vmem>>, %arg12: memref<4x32x8xbf16, #tpu.memory_space<vmem>>, %arg13: memref<4x1x8xf32, #tpu.memory_space<vmem>>, %arg14: memref<4x32x8xbf16, #tpu.memory_space<vmem>>, %arg15: memref<4x1x8xf32, #tpu.memory_space<vmem>>, %arg16: memref<4x32x8xbf16, #tpu.memory_space<vmem>>, %arg17: memref<4x1x8xf32, #tpu.memory_space<vmem>>, %arg18: memref<4x8x32xbf16, #tpu.memory_space<vmem>>, %arg19: memref<1x32xf32, #tpu.memory_space<vmem>>, %arg20: memref<1x32xf32, #tpu.memory_space<vmem>>, %arg21: memref<1x32xf32, #tpu.memory_space<vmem>>, %arg22: memref<32x128xbf16, #tpu.memory_space<vmem>>, %arg23: memref<1x128xf32, #tpu.memory_space<vmem>>, %arg24: memref<128x32xbf16, #tpu.memory_space<vmem>>, %arg25: memref<1x32xf32, #tpu.memory_space<vmem>>, %arg26: memref<1x32xf32, #tpu.memory_space<vmem>>, %arg27: memref<1x32xf32, #tpu.memory_space<vmem>>, %arg28: memref<16x32xf32, #tpu.memory_space<vmem>>) attributes {dimension_semantics = [#tpu.dimension_semantics<parallel>, #tpu.dimension_semantics<parallel>], iteration_bounds = array<i64: 2, 2>, scalar_prefetch = 0 : i64, scratch_operands = 0 : i64, tpu.core_type = #tpu.core_type<tc>, window_params = [{transform_indices = @transform_0, window_bounds = array<i64: 16, 32>}, {transform_indices = @transform_1, window_bounds = array<i64: 8, 32>}, {pipeline_mode = #tpu.pipeline_mode<synchronous>, transform_indices = @transform_2, window_bounds = array<i64: 4, 32, 8>}, {pipeline_mode = #tpu.pipeline_mode<synchronous>, transform_indices = @transform_3, window_bounds = array<i64: 4, 1, 8>}, {pipeline_mode = #tpu.pipeline_mode<synchronous>, transform_indices = @transform_4, window_bounds = array<i64: 4, 32, 8>}, {pipeline_mode = #tpu.pipeline_mode<synchronous>, transform_indices = @transform_5, window_bounds = array<i64: 4, 1, 8>}, {pipeline_mode = #tpu.pipeline_mode<synchronous>, transform_indices = @transform_6, window_bounds = array<i64: 4, 32, 8>}, {pipeline_mode = #tpu.pipeline_mode<synchronous>, transform_indices = @transform_7, window_bounds = array<i64: 4, 1, 8>}, {pipeline_mode = #tpu.pipeline_mode<synchronous>, transform_indices = @transform_8, window_bounds = array<i64: 4, 8, 32>}, {pipeline_mode = #tpu.pipeline_mode<synchronous>, transform_indices = @transform_9, window_bounds = array<i64: 1, 32>}, {pipeline_mode = #tpu.pipeline_mode<synchronous>, transform_indices = @transform_10, window_bounds = array<i64: 4, 32, 8>}, {pipeline_mode = #tpu.pipeline_mode<synchronous>, transform_indices = @transform_11, window_bounds = array<i64: 4, 1, 8>}, {pipeline_mode = #tpu.pipeline_mode<synchronous>, transform_indices = @transform_12, window_bounds = array<i64: 4, 32, 8>}, {pipeline_mode = #tpu.pipeline_mode<synchronous>, transform_indices = @transform_13, window_bounds = array<i64: 4, 1, 8>}, {pipeline_mode = #tpu.pipeline_mode<synchronous>, transform_indices = @transform_14, window_bounds = array<i64: 4, 32, 8>}, {pipeline_mode = #tpu.pipeline_mode<synchronous>, transform_indices = @transform_15, window_bounds = array<i64: 4, 1, 8>}, {pipeline_mode = #tpu.pipeline_mode<synchronous>, transform_indices = @transform_16, window_bounds = array<i64: 4, 8, 32>}, {pipeline_mode = #tpu.pipeline_mode<synchronous>, transform_indices = @transform_17, window_bounds = array<i64: 1, 32>}, {pipeline_mode = #tpu.pipeline_mode<synchronous>, transform_indices = @transform_18, window_bounds = array<i64: 1, 32>}, {pipeline_mode = #tpu.pipeline_mode<synchronous>, transform_indices = @transform_19, window_bounds = array<i64: 1, 32>}, {pipeline_mode = #tpu.pipeline_mode<synchronous>, transform_indices = @transform_20, window_bounds = array<i64: 32, 128>}, {pipeline_mode = #tpu.pipeline_mode<synchronous>, transform_indices = @transform_21, window_bounds = array<i64: 1, 128>}, {pipeline_mode = #tpu.pipeline_mode<synchronous>, transform_indices = @transform_22, window_bounds = array<i64: 128, 32>}, {pipeline_mode = #tpu.pipeline_mode<synchronous>, transform_indices = @transform_23, window_bounds = array<i64: 1, 32>}, {pipeline_mode = #tpu.pipeline_mode<synchronous>, transform_indices = @transform_24, window_bounds = array<i64: 1, 32>}, {pipeline_mode = #tpu.pipeline_mode<synchronous>, transform_indices = @transform_25, window_bounds = array<i64: 1, 32>}, {transform_indices = @transform_26, window_bounds = array<i64: 16, 32>}]} {
    %c0 = arith.constant 0 : index
    %c0_0 = arith.constant 0 : index
    %c0_1 = arith.constant 0 : index
    %0 = vector.load %arg4[%c0, %c0_0, %c0_1] : memref<4x32x8xbf16, #tpu.memory_space<vmem>>, vector<4x32x8xbf16>
    %c0_2 = arith.constant 0 : index
    %c0_3 = arith.constant 0 : index
    %c0_4 = arith.constant 0 : index
    %1 = vector.load %arg5[%c0_2, %c0_3, %c0_4] : memref<4x1x8xf32, #tpu.memory_space<vmem>>, vector<4x1x8xf32>
    %c0_5 = arith.constant 0 : index
    %c0_6 = arith.constant 0 : index
    %c0_7 = arith.constant 0 : index
    %2 = vector.load %arg6[%c0_5, %c0_6, %c0_7] : memref<4x32x8xbf16, #tpu.memory_space<vmem>>, vector<4x32x8xbf16>
    %c0_8 = arith.constant 0 : index
    %c0_9 = arith.constant 0 : index
    %c0_10 = arith.constant 0 : index
    %3 = vector.load %arg7[%c0_8, %c0_9, %c0_10] : memref<4x1x8xf32, #tpu.memory_space<vmem>>, vector<4x1x8xf32>
    %c0_11 = arith.constant 0 : index
    %c0_12 = arith.constant 0 : index
    %c0_13 = arith.constant 0 : index
    %4 = vector.load %arg8[%c0_11, %c0_12, %c0_13] : memref<4x32x8xbf16, #tpu.memory_space<vmem>>, vector<4x32x8xbf16>
    %c0_14 = arith.constant 0 : index
    %c0_15 = arith.constant 0 : index
    %c0_16 = arith.constant 0 : index
    %5 = vector.load %arg9[%c0_14, %c0_15, %c0_16] : memref<4x1x8xf32, #tpu.memory_space<vmem>>, vector<4x1x8xf32>
    %c0_17 = arith.constant 0 : index
    %c0_18 = arith.constant 0 : index
    %c0_19 = arith.constant 0 : index
    %6 = vector.load %arg10[%c0_17, %c0_18, %c0_19] : memref<4x8x32xbf16, #tpu.memory_space<vmem>>, vector<4x8x32xbf16>
    %c0_20 = arith.constant 0 : index
    %c0_21 = arith.constant 0 : index
    %7 = vector.load %arg11[%c0_20, %c0_21] : memref<1x32xf32, #tpu.memory_space<vmem>>, vector<1x32xf32>
    %c0_22 = arith.constant 0 : index
    %c0_23 = arith.constant 0 : index
    %c0_24 = arith.constant 0 : index
    %8 = vector.load %arg12[%c0_22, %c0_23, %c0_24] : memref<4x32x8xbf16, #tpu.memory_space<vmem>>, vector<4x32x8xbf16>
    %c0_25 = arith.constant 0 : index
    %c0_26 = arith.constant 0 : index
    %c0_27 = arith.constant 0 : index
    %9 = vector.load %arg13[%c0_25, %c0_26, %c0_27] : memref<4x1x8xf32, #tpu.memory_space<vmem>>, vector<4x1x8xf32>
    %c0_28 = arith.constant 0 : index
    %c0_29 = arith.constant 0 : index
    %c0_30 = arith.constant 0 : index
    %10 = vector.load %arg14[%c0_28, %c0_29, %c0_30] : memref<4x32x8xbf16, #tpu.memory_space<vmem>>, vector<4x32x8xbf16>
    %c0_31 = arith.constant 0 : index
    %c0_32 = arith.constant 0 : index
    %c0_33 = arith.constant 0 : index
    %11 = vector.load %arg15[%c0_31, %c0_32, %c0_33] : memref<4x1x8xf32, #tpu.memory_space<vmem>>, vector<4x1x8xf32>
    %c0_34 = arith.constant 0 : index
    %c0_35 = arith.constant 0 : index
    %c0_36 = arith.constant 0 : index
    %12 = vector.load %arg16[%c0_34, %c0_35, %c0_36] : memref<4x32x8xbf16, #tpu.memory_space<vmem>>, vector<4x32x8xbf16>
    %c0_37 = arith.constant 0 : index
    %c0_38 = arith.constant 0 : index
    %c0_39 = arith.constant 0 : index
    %13 = vector.load %arg17[%c0_37, %c0_38, %c0_39] : memref<4x1x8xf32, #tpu.memory_space<vmem>>, vector<4x1x8xf32>
    %c0_40 = arith.constant 0 : index
    %c0_41 = arith.constant 0 : index
    %c0_42 = arith.constant 0 : index
    %14 = vector.load %arg18[%c0_40, %c0_41, %c0_42] : memref<4x8x32xbf16, #tpu.memory_space<vmem>>, vector<4x8x32xbf16>
    %c0_43 = arith.constant 0 : index
    %c0_44 = arith.constant 0 : index
    %15 = vector.load %arg19[%c0_43, %c0_44] : memref<1x32xf32, #tpu.memory_space<vmem>>, vector<1x32xf32>
    %c0_45 = arith.constant 0 : index
    %c0_46 = arith.constant 0 : index
    %16 = vector.load %arg20[%c0_45, %c0_46] : memref<1x32xf32, #tpu.memory_space<vmem>>, vector<1x32xf32>
    %c0_47 = arith.constant 0 : index
    %c0_48 = arith.constant 0 : index
    %17 = vector.load %arg21[%c0_47, %c0_48] : memref<1x32xf32, #tpu.memory_space<vmem>>, vector<1x32xf32>
    %c0_49 = arith.constant 0 : index
    %c0_50 = arith.constant 0 : index
    %18 = vector.load %arg22[%c0_49, %c0_50] : memref<32x128xbf16, #tpu.memory_space<vmem>>, vector<32x128xbf16>
    %c0_51 = arith.constant 0 : index
    %c0_52 = arith.constant 0 : index
    %19 = vector.load %arg23[%c0_51, %c0_52] : memref<1x128xf32, #tpu.memory_space<vmem>>, vector<1x128xf32>
    %c0_53 = arith.constant 0 : index
    %c0_54 = arith.constant 0 : index
    %20 = vector.load %arg24[%c0_53, %c0_54] : memref<128x32xbf16, #tpu.memory_space<vmem>>, vector<128x32xbf16>
    %c0_55 = arith.constant 0 : index
    %c0_56 = arith.constant 0 : index
    %21 = vector.load %arg25[%c0_55, %c0_56] : memref<1x32xf32, #tpu.memory_space<vmem>>, vector<1x32xf32>
    %c0_57 = arith.constant 0 : index
    %c0_58 = arith.constant 0 : index
    %22 = vector.load %arg26[%c0_57, %c0_58] : memref<1x32xf32, #tpu.memory_space<vmem>>, vector<1x32xf32>
    %c0_59 = arith.constant 0 : index
    %c0_60 = arith.constant 0 : index
    %23 = vector.load %arg27[%c0_59, %c0_60] : memref<1x32xf32, #tpu.memory_space<vmem>>, vector<1x32xf32>
    %c0_61 = arith.constant 0 : index
    %c0_62 = arith.constant 0 : index
    %24 = vector.load %arg2[%c0_61, %c0_62] : memref<16x32xbf16, #tpu.memory_space<vmem>>, vector<16x32xbf16>
    %25 = arith.extf %24 : vector<16x32xbf16> to vector<16x32xf32>
    %c0_63 = arith.constant 0 : index
    %c0_64 = arith.constant 0 : index
    %26 = vector.load %arg3[%c0_63, %c0_64] : memref<8x32xf32, #tpu.memory_space<vmem>>, vector<8x32xf32>
    %27 = arith.truncf %26 : vector<8x32xf32> to vector<8x32xbf16>
    %28 = vector.extract_strided_slice %0 {offsets = [0, 0, 0], sizes = [1, 32, 8], strides = [1, 1, 1]} : vector<4x32x8xbf16> to vector<1x32x8xbf16>
    %29 = vector.shape_cast %28 : vector<1x32x8xbf16> to vector<32x8xbf16>
    %cst = arith.constant dense<0.000000e+00> : vector<8x8xf32>
    %30 = tpu.matmul %27, %29, %cst {dimension_numbers = #tpu.dot_dimension_numbers<[1], [0], [0], [1], [0, 0, 1, 1], [], []>} : vector<8x32xbf16>, vector<32x8xbf16>, vector<8x8xf32> -> vector<8x8xf32>
    %31 = vector.extract_strided_slice %1 {offsets = [0, 0, 0], sizes = [1, 1, 8], strides = [1, 1, 1]} : vector<4x1x8xf32> to vector<1x1x8xf32>
    %32 = vector.shape_cast %31 : vector<1x1x8xf32> to vector<1x8xf32>
    %33 = vector.broadcast %32 : vector<1x8xf32> to vector<8x8xf32>
    %34 = arith.addf %30, %33 : vector<8x8xf32>
    %35 = arith.truncf %34 : vector<8x8xf32> to vector<8x8xbf16>
    %36 = vector.extract_strided_slice %2 {offsets = [0, 0, 0], sizes = [1, 32, 8], strides = [1, 1, 1]} : vector<4x32x8xbf16> to vector<1x32x8xbf16>
    %37 = vector.shape_cast %36 : vector<1x32x8xbf16> to vector<32x8xbf16>
    %cst_65 = arith.constant dense<0.000000e+00> : vector<16x8xf32>
    %38 = tpu.matmul %24, %37, %cst_65 {dimension_numbers = #tpu.dot_dimension_numbers<[1], [0], [0], [1], [0, 0, 1, 1], [], []>} : vector<16x32xbf16>, vector<32x8xbf16>, vector<16x8xf32> -> vector<16x8xf32>
    %39 = vector.extract_strided_slice %3 {offsets = [0, 0, 0], sizes = [1, 1, 8], strides = [1, 1, 1]} : vector<4x1x8xf32> to vector<1x1x8xf32>
    %40 = vector.shape_cast %39 : vector<1x1x8xf32> to vector<1x8xf32>
    %41 = vector.broadcast %40 : vector<1x8xf32> to vector<16x8xf32>
    %42 = arith.addf %38, %41 : vector<16x8xf32>
    %43 = arith.truncf %42 : vector<16x8xf32> to vector<16x8xbf16>
    %44 = vector.extract_strided_slice %4 {offsets = [0, 0, 0], sizes = [1, 32, 8], strides = [1, 1, 1]} : vector<4x32x8xbf16> to vector<1x32x8xbf16>
    %45 = vector.shape_cast %44 : vector<1x32x8xbf16> to vector<32x8xbf16>
    %cst_66 = arith.constant dense<0.000000e+00> : vector<16x8xf32>
    %46 = tpu.matmul %24, %45, %cst_66 {dimension_numbers = #tpu.dot_dimension_numbers<[1], [0], [0], [1], [0, 0, 1, 1], [], []>} : vector<16x32xbf16>, vector<32x8xbf16>, vector<16x8xf32> -> vector<16x8xf32>
    %47 = vector.extract_strided_slice %5 {offsets = [0, 0, 0], sizes = [1, 1, 8], strides = [1, 1, 1]} : vector<4x1x8xf32> to vector<1x1x8xf32>
    %48 = vector.shape_cast %47 : vector<1x1x8xf32> to vector<1x8xf32>
    %49 = vector.broadcast %48 : vector<1x8xf32> to vector<16x8xf32>
    %50 = arith.addf %46, %49 : vector<16x8xf32>
    %51 = arith.truncf %50 : vector<16x8xf32> to vector<16x8xbf16>
    %52 = vector.extract_strided_slice %0 {offsets = [1, 0, 0], sizes = [1, 32, 8], strides = [1, 1, 1]} : vector<4x32x8xbf16> to vector<1x32x8xbf16>
    %53 = vector.shape_cast %52 : vector<1x32x8xbf16> to vector<32x8xbf16>
    %cst_67 = arith.constant dense<0.000000e+00> : vector<8x8xf32>
    %54 = tpu.matmul %27, %53, %cst_67 {dimension_numbers = #tpu.dot_dimension_numbers<[1], [0], [0], [1], [0, 0, 1, 1], [], []>} : vector<8x32xbf16>, vector<32x8xbf16>, vector<8x8xf32> -> vector<8x8xf32>
    %55 = vector.extract_strided_slice %1 {offsets = [1, 0, 0], sizes = [1, 1, 8], strides = [1, 1, 1]} : vector<4x1x8xf32> to vector<1x1x8xf32>
    %56 = vector.shape_cast %55 : vector<1x1x8xf32> to vector<1x8xf32>
    %57 = vector.broadcast %56 : vector<1x8xf32> to vector<8x8xf32>
    %58 = arith.addf %54, %57 : vector<8x8xf32>
    %59 = arith.truncf %58 : vector<8x8xf32> to vector<8x8xbf16>
    %60 = vector.extract_strided_slice %2 {offsets = [1, 0, 0], sizes = [1, 32, 8], strides = [1, 1, 1]} : vector<4x32x8xbf16> to vector<1x32x8xbf16>
    %61 = vector.shape_cast %60 : vector<1x32x8xbf16> to vector<32x8xbf16>
    %cst_68 = arith.constant dense<0.000000e+00> : vector<16x8xf32>
    %62 = tpu.matmul %24, %61, %cst_68 {dimension_numbers = #tpu.dot_dimension_numbers<[1], [0], [0], [1], [0, 0, 1, 1], [], []>} : vector<16x32xbf16>, vector<32x8xbf16>, vector<16x8xf32> -> vector<16x8xf32>
    %63 = vector.extract_strided_slice %3 {offsets = [1, 0, 0], sizes = [1, 1, 8], strides = [1, 1, 1]} : vector<4x1x8xf32> to vector<1x1x8xf32>
    %64 = vector.shape_cast %63 : vector<1x1x8xf32> to vector<1x8xf32>
    %65 = vector.broadcast %64 : vector<1x8xf32> to vector<16x8xf32>
    %66 = arith.addf %62, %65 : vector<16x8xf32>
    %67 = arith.truncf %66 : vector<16x8xf32> to vector<16x8xbf16>
    %68 = vector.extract_strided_slice %4 {offsets = [1, 0, 0], sizes = [1, 32, 8], strides = [1, 1, 1]} : vector<4x32x8xbf16> to vector<1x32x8xbf16>
    %69 = vector.shape_cast %68 : vector<1x32x8xbf16> to vector<32x8xbf16>
    %cst_69 = arith.constant dense<0.000000e+00> : vector<16x8xf32>
    %70 = tpu.matmul %24, %69, %cst_69 {dimension_numbers = #tpu.dot_dimension_numbers<[1], [0], [0], [1], [0, 0, 1, 1], [], []>} : vector<16x32xbf16>, vector<32x8xbf16>, vector<16x8xf32> -> vector<16x8xf32>
    %71 = vector.extract_strided_slice %5 {offsets = [1, 0, 0], sizes = [1, 1, 8], strides = [1, 1, 1]} : vector<4x1x8xf32> to vector<1x1x8xf32>
    %72 = vector.shape_cast %71 : vector<1x1x8xf32> to vector<1x8xf32>
    %73 = vector.broadcast %72 : vector<1x8xf32> to vector<16x8xf32>
    %74 = arith.addf %70, %73 : vector<16x8xf32>
    %75 = arith.truncf %74 : vector<16x8xf32> to vector<16x8xbf16>
    %76 = vector.extract_strided_slice %0 {offsets = [2, 0, 0], sizes = [1, 32, 8], strides = [1, 1, 1]} : vector<4x32x8xbf16> to vector<1x32x8xbf16>
    %77 = vector.shape_cast %76 : vector<1x32x8xbf16> to vector<32x8xbf16>
    %cst_70 = arith.constant dense<0.000000e+00> : vector<8x8xf32>
    %78 = tpu.matmul %27, %77, %cst_70 {dimension_numbers = #tpu.dot_dimension_numbers<[1], [0], [0], [1], [0, 0, 1, 1], [], []>} : vector<8x32xbf16>, vector<32x8xbf16>, vector<8x8xf32> -> vector<8x8xf32>
    %79 = vector.extract_strided_slice %1 {offsets = [2, 0, 0], sizes = [1, 1, 8], strides = [1, 1, 1]} : vector<4x1x8xf32> to vector<1x1x8xf32>
    %80 = vector.shape_cast %79 : vector<1x1x8xf32> to vector<1x8xf32>
    %81 = vector.broadcast %80 : vector<1x8xf32> to vector<8x8xf32>
    %82 = arith.addf %78, %81 : vector<8x8xf32>
    %83 = arith.truncf %82 : vector<8x8xf32> to vector<8x8xbf16>
    %84 = vector.extract_strided_slice %2 {offsets = [2, 0, 0], sizes = [1, 32, 8], strides = [1, 1, 1]} : vector<4x32x8xbf16> to vector<1x32x8xbf16>
    %85 = vector.shape_cast %84 : vector<1x32x8xbf16> to vector<32x8xbf16>
    %cst_71 = arith.constant dense<0.000000e+00> : vector<16x8xf32>
    %86 = tpu.matmul %24, %85, %cst_71 {dimension_numbers = #tpu.dot_dimension_numbers<[1], [0], [0], [1], [0, 0, 1, 1], [], []>} : vector<16x32xbf16>, vector<32x8xbf16>, vector<16x8xf32> -> vector<16x8xf32>
    %87 = vector.extract_strided_slice %3 {offsets = [2, 0, 0], sizes = [1, 1, 8], strides = [1, 1, 1]} : vector<4x1x8xf32> to vector<1x1x8xf32>
    %88 = vector.shape_cast %87 : vector<1x1x8xf32> to vector<1x8xf32>
    %89 = vector.broadcast %88 : vector<1x8xf32> to vector<16x8xf32>
    %90 = arith.addf %86, %89 : vector<16x8xf32>
    %91 = arith.truncf %90 : vector<16x8xf32> to vector<16x8xbf16>
    %92 = vector.extract_strided_slice %4 {offsets = [2, 0, 0], sizes = [1, 32, 8], strides = [1, 1, 1]} : vector<4x32x8xbf16> to vector<1x32x8xbf16>
    %93 = vector.shape_cast %92 : vector<1x32x8xbf16> to vector<32x8xbf16>
    %cst_72 = arith.constant dense<0.000000e+00> : vector<16x8xf32>
    %94 = tpu.matmul %24, %93, %cst_72 {dimension_numbers = #tpu.dot_dimension_numbers<[1], [0], [0], [1], [0, 0, 1, 1], [], []>} : vector<16x32xbf16>, vector<32x8xbf16>, vector<16x8xf32> -> vector<16x8xf32>
    %95 = vector.extract_strided_slice %5 {offsets = [2, 0, 0], sizes = [1, 1, 8], strides = [1, 1, 1]} : vector<4x1x8xf32> to vector<1x1x8xf32>
    %96 = vector.shape_cast %95 : vector<1x1x8xf32> to vector<1x8xf32>
    %97 = vector.broadcast %96 : vector<1x8xf32> to vector<16x8xf32>
    %98 = arith.addf %94, %97 : vector<16x8xf32>
    %99 = arith.truncf %98 : vector<16x8xf32> to vector<16x8xbf16>
    %100 = vector.extract_strided_slice %0 {offsets = [3, 0, 0], sizes = [1, 32, 8], strides = [1, 1, 1]} : vector<4x32x8xbf16> to vector<1x32x8xbf16>
    %101 = vector.shape_cast %100 : vector<1x32x8xbf16> to vector<32x8xbf16>
    %cst_73 = arith.constant dense<0.000000e+00> : vector<8x8xf32>
    %102 = tpu.matmul %27, %101, %cst_73 {dimension_numbers = #tpu.dot_dimension_numbers<[1], [0], [0], [1], [0, 0, 1, 1], [], []>} : vector<8x32xbf16>, vector<32x8xbf16>, vector<8x8xf32> -> vector<8x8xf32>
    %103 = vector.extract_strided_slice %1 {offsets = [3, 0, 0], sizes = [1, 1, 8], strides = [1, 1, 1]} : vector<4x1x8xf32> to vector<1x1x8xf32>
    %104 = vector.shape_cast %103 : vector<1x1x8xf32> to vector<1x8xf32>
    %105 = vector.broadcast %104 : vector<1x8xf32> to vector<8x8xf32>
    %106 = arith.addf %102, %105 : vector<8x8xf32>
    %107 = arith.truncf %106 : vector<8x8xf32> to vector<8x8xbf16>
    %108 = vector.extract_strided_slice %2 {offsets = [3, 0, 0], sizes = [1, 32, 8], strides = [1, 1, 1]} : vector<4x32x8xbf16> to vector<1x32x8xbf16>
    %109 = vector.shape_cast %108 : vector<1x32x8xbf16> to vector<32x8xbf16>
    %cst_74 = arith.constant dense<0.000000e+00> : vector<16x8xf32>
    %110 = tpu.matmul %24, %109, %cst_74 {dimension_numbers = #tpu.dot_dimension_numbers<[1], [0], [0], [1], [0, 0, 1, 1], [], []>} : vector<16x32xbf16>, vector<32x8xbf16>, vector<16x8xf32> -> vector<16x8xf32>
    %111 = vector.extract_strided_slice %3 {offsets = [3, 0, 0], sizes = [1, 1, 8], strides = [1, 1, 1]} : vector<4x1x8xf32> to vector<1x1x8xf32>
    %112 = vector.shape_cast %111 : vector<1x1x8xf32> to vector<1x8xf32>
    %113 = vector.broadcast %112 : vector<1x8xf32> to vector<16x8xf32>
    %114 = arith.addf %110, %113 : vector<16x8xf32>
    %115 = arith.truncf %114 : vector<16x8xf32> to vector<16x8xbf16>
    %116 = vector.extract_strided_slice %4 {offsets = [3, 0, 0], sizes = [1, 32, 8], strides = [1, 1, 1]} : vector<4x32x8xbf16> to vector<1x32x8xbf16>
    %117 = vector.shape_cast %116 : vector<1x32x8xbf16> to vector<32x8xbf16>
    %cst_75 = arith.constant dense<0.000000e+00> : vector<16x8xf32>
    %118 = tpu.matmul %24, %117, %cst_75 {dimension_numbers = #tpu.dot_dimension_numbers<[1], [0], [0], [1], [0, 0, 1, 1], [], []>} : vector<16x32xbf16>, vector<32x8xbf16>, vector<16x8xf32> -> vector<16x8xf32>
    %119 = vector.extract_strided_slice %5 {offsets = [3, 0, 0], sizes = [1, 1, 8], strides = [1, 1, 1]} : vector<4x1x8xf32> to vector<1x1x8xf32>
    %120 = vector.shape_cast %119 : vector<1x1x8xf32> to vector<1x8xf32>
    %121 = vector.broadcast %120 : vector<1x8xf32> to vector<16x8xf32>
    %122 = arith.addf %118, %121 : vector<16x8xf32>
    %123 = arith.truncf %122 : vector<16x8xf32> to vector<16x8xbf16>
    %124 = tpu.iota {dimensions = array<i32: 0>} : vector<8x16xi32>
    %125 = tpu.iota {dimensions = array<i32: 1>} : vector<8x16xi32>
    %126 = arith.sitofp %124 : vector<8x16xi32> to vector<8x16xf32>
    %cst_76 = arith.constant 5.000000e-01 : f32
    %127 = vector.broadcast %cst_76 : f32 to vector<8x16xf32>
    %128 = arith.addf %126, %127 : vector<8x16xf32>
    %cst_77 = arith.constant 5.000000e-01 : f32
    %129 = vector.broadcast %cst_77 : f32 to vector<8x16xf32>
    %130 = arith.mulf %128, %129 : vector<8x16xf32>
    %131 = math.floor %130 : vector<8x16xf32>
    %132 = arith.sitofp %125 : vector<8x16xi32> to vector<8x16xf32>
    %cst_78 = arith.constant 5.000000e-01 : f32
    %133 = vector.broadcast %cst_78 : f32 to vector<8x16xf32>
    %134 = arith.addf %132, %133 : vector<8x16xf32>
    %cst_79 = arith.constant 2.500000e-01 : f32
    %135 = vector.broadcast %cst_79 : f32 to vector<8x16xf32>
    %136 = arith.mulf %134, %135 : vector<8x16xf32>
    %137 = math.floor %136 : vector<8x16xf32>
    %138 = arith.cmpf oeq, %131, %137 : vector<8x16xf32>
    %cst_80 = arith.constant 0.000000e+00 : f32
    %cst_81 = arith.constant -1.000000e+30 : f32
    %139 = vector.broadcast %cst_80 : f32 to vector<8x16xf32>
    %140 = vector.broadcast %cst_81 : f32 to vector<8x16xf32>
    %141 = arith.select %138, %139, %140 : vector<8x16xi1>, vector<8x16xf32>
    %cst_82 = arith.constant dense<0.000000e+00> : vector<8x16xf32>
    %142 = tpu.matmul %35, %43, %cst_82 {dimension_numbers = #tpu.dot_dimension_numbers<[1], [1], [0], [0], [0, 0, 1, 0], [], []>} : vector<8x8xbf16>, vector<16x8xbf16>, vector<8x16xf32> -> vector<8x16xf32>
    %143 = arith.addf %142, %141 : vector<8x16xf32>
    %cst_83 = arith.constant dense<0xFF800000> : vector<8xf32>
    %144 = vector.multi_reduction <maximumf>, %143, %cst_83 [1] : vector<8x16xf32> to vector<8xf32>
    %145 = vector.shape_cast %144 : vector<8xf32> to vector<8x1xf32>
    %146 = vector.broadcast %145 : vector<8x1xf32> to vector<8x16xf32>
    %147 = arith.subf %143, %146 : vector<8x16xf32>
    %148 = math.exp %147 : vector<8x16xf32>
    %cst_84 = arith.constant dense<0.000000e+00> : vector<8xf32>
    %149 = vector.multi_reduction <add>, %148, %cst_84 [1] : vector<8x16xf32> to vector<8xf32>
    %150 = vector.shape_cast %149 : vector<8xf32> to vector<8x1xf32>
    %151 = tpu.reciprocal %150 {approx = true} : vector<8x1xf32> -> vector<8x1xf32>
    %152 = arith.mulf %150, %151 : vector<8x1xf32>
    %cst_85 = arith.constant 2.000000e+00 : f32
    %153 = vector.broadcast %cst_85 : f32 to vector<8x1xf32>
    %154 = arith.subf %153, %152 : vector<8x1xf32>
    %155 = arith.mulf %151, %154 : vector<8x1xf32>
    %156 = vector.broadcast %155 : vector<8x1xf32> to vector<8x16xf32>
    %157 = arith.mulf %148, %156 : vector<8x16xf32>
    %158 = arith.truncf %157 : vector<8x16xf32> to vector<8x16xbf16>
    %cst_86 = arith.constant dense<0.000000e+00> : vector<8x8xf32>
    %159 = tpu.matmul %158, %51, %cst_86 {dimension_numbers = #tpu.dot_dimension_numbers<[1], [0], [0], [1], [0, 0, 1, 1], [], []>} : vector<8x16xbf16>, vector<16x8xbf16>, vector<8x8xf32> -> vector<8x8xf32>
    %160 = arith.truncf %159 : vector<8x8xf32> to vector<8x8xbf16>
    %161 = vector.extract_strided_slice %6 {offsets = [0, 0, 0], sizes = [1, 8, 32], strides = [1, 1, 1]} : vector<4x8x32xbf16> to vector<1x8x32xbf16>
    %162 = vector.shape_cast %161 : vector<1x8x32xbf16> to vector<8x32xbf16>
    %cst_87 = arith.constant dense<0.000000e+00> : vector<8x32xf32>
    %163 = tpu.matmul %160, %162, %cst_87 {dimension_numbers = #tpu.dot_dimension_numbers<[1], [0], [0], [1], [0, 0, 1, 1], [], []>} : vector<8x8xbf16>, vector<8x32xbf16>, vector<8x32xf32> -> vector<8x32xf32>
    %cst_88 = arith.constant dense<0.000000e+00> : vector<8x16xf32>
    %164 = tpu.matmul %59, %67, %cst_88 {dimension_numbers = #tpu.dot_dimension_numbers<[1], [1], [0], [0], [0, 0, 1, 0], [], []>} : vector<8x8xbf16>, vector<16x8xbf16>, vector<8x16xf32> -> vector<8x16xf32>
    %165 = arith.addf %164, %141 : vector<8x16xf32>
    %cst_89 = arith.constant dense<0xFF800000> : vector<8xf32>
    %166 = vector.multi_reduction <maximumf>, %165, %cst_89 [1] : vector<8x16xf32> to vector<8xf32>
    %167 = vector.shape_cast %166 : vector<8xf32> to vector<8x1xf32>
    %168 = vector.broadcast %167 : vector<8x1xf32> to vector<8x16xf32>
    %169 = arith.subf %165, %168 : vector<8x16xf32>
    %170 = math.exp %169 : vector<8x16xf32>
    %cst_90 = arith.constant dense<0.000000e+00> : vector<8xf32>
    %171 = vector.multi_reduction <add>, %170, %cst_90 [1] : vector<8x16xf32> to vector<8xf32>
    %172 = vector.shape_cast %171 : vector<8xf32> to vector<8x1xf32>
    %173 = tpu.reciprocal %172 {approx = true} : vector<8x1xf32> -> vector<8x1xf32>
    %174 = arith.mulf %172, %173 : vector<8x1xf32>
    %cst_91 = arith.constant 2.000000e+00 : f32
    %175 = vector.broadcast %cst_91 : f32 to vector<8x1xf32>
    %176 = arith.subf %175, %174 : vector<8x1xf32>
    %177 = arith.mulf %173, %176 : vector<8x1xf32>
    %178 = vector.broadcast %177 : vector<8x1xf32> to vector<8x16xf32>
    %179 = arith.mulf %170, %178 : vector<8x16xf32>
    %180 = arith.truncf %179 : vector<8x16xf32> to vector<8x16xbf16>
    %cst_92 = arith.constant dense<0.000000e+00> : vector<8x8xf32>
    %181 = tpu.matmul %180, %75, %cst_92 {dimension_numbers = #tpu.dot_dimension_numbers<[1], [0], [0], [1], [0, 0, 1, 1], [], []>} : vector<8x16xbf16>, vector<16x8xbf16>, vector<8x8xf32> -> vector<8x8xf32>
    %182 = arith.truncf %181 : vector<8x8xf32> to vector<8x8xbf16>
    %183 = vector.extract_strided_slice %6 {offsets = [1, 0, 0], sizes = [1, 8, 32], strides = [1, 1, 1]} : vector<4x8x32xbf16> to vector<1x8x32xbf16>
    %184 = vector.shape_cast %183 : vector<1x8x32xbf16> to vector<8x32xbf16>
    %cst_93 = arith.constant dense<0.000000e+00> : vector<8x32xf32>
    %185 = tpu.matmul %182, %184, %cst_93 {dimension_numbers = #tpu.dot_dimension_numbers<[1], [0], [0], [1], [0, 0, 1, 1], [], []>} : vector<8x8xbf16>, vector<8x32xbf16>, vector<8x32xf32> -> vector<8x32xf32>
    %186 = arith.addf %163, %185 : vector<8x32xf32>
    %cst_94 = arith.constant dense<0.000000e+00> : vector<8x16xf32>
    %187 = tpu.matmul %83, %91, %cst_94 {dimension_numbers = #tpu.dot_dimension_numbers<[1], [1], [0], [0], [0, 0, 1, 0], [], []>} : vector<8x8xbf16>, vector<16x8xbf16>, vector<8x16xf32> -> vector<8x16xf32>
    %188 = arith.addf %187, %141 : vector<8x16xf32>
    %cst_95 = arith.constant dense<0xFF800000> : vector<8xf32>
    %189 = vector.multi_reduction <maximumf>, %188, %cst_95 [1] : vector<8x16xf32> to vector<8xf32>
    %190 = vector.shape_cast %189 : vector<8xf32> to vector<8x1xf32>
    %191 = vector.broadcast %190 : vector<8x1xf32> to vector<8x16xf32>
    %192 = arith.subf %188, %191 : vector<8x16xf32>
    %193 = math.exp %192 : vector<8x16xf32>
    %cst_96 = arith.constant dense<0.000000e+00> : vector<8xf32>
    %194 = vector.multi_reduction <add>, %193, %cst_96 [1] : vector<8x16xf32> to vector<8xf32>
    %195 = vector.shape_cast %194 : vector<8xf32> to vector<8x1xf32>
    %196 = tpu.reciprocal %195 {approx = true} : vector<8x1xf32> -> vector<8x1xf32>
    %197 = arith.mulf %195, %196 : vector<8x1xf32>
    %cst_97 = arith.constant 2.000000e+00 : f32
    %198 = vector.broadcast %cst_97 : f32 to vector<8x1xf32>
    %199 = arith.subf %198, %197 : vector<8x1xf32>
    %200 = arith.mulf %196, %199 : vector<8x1xf32>
    %201 = vector.broadcast %200 : vector<8x1xf32> to vector<8x16xf32>
    %202 = arith.mulf %193, %201 : vector<8x16xf32>
    %203 = arith.truncf %202 : vector<8x16xf32> to vector<8x16xbf16>
    %cst_98 = arith.constant dense<0.000000e+00> : vector<8x8xf32>
    %204 = tpu.matmul %203, %99, %cst_98 {dimension_numbers = #tpu.dot_dimension_numbers<[1], [0], [0], [1], [0, 0, 1, 1], [], []>} : vector<8x16xbf16>, vector<16x8xbf16>, vector<8x8xf32> -> vector<8x8xf32>
    %205 = arith.truncf %204 : vector<8x8xf32> to vector<8x8xbf16>
    %206 = vector.extract_strided_slice %6 {offsets = [2, 0, 0], sizes = [1, 8, 32], strides = [1, 1, 1]} : vector<4x8x32xbf16> to vector<1x8x32xbf16>
    %207 = vector.shape_cast %206 : vector<1x8x32xbf16> to vector<8x32xbf16>
    %cst_99 = arith.constant dense<0.000000e+00> : vector<8x32xf32>
    %208 = tpu.matmul %205, %207, %cst_99 {dimension_numbers = #tpu.dot_dimension_numbers<[1], [0], [0], [1], [0, 0, 1, 1], [], []>} : vector<8x8xbf16>, vector<8x32xbf16>, vector<8x32xf32> -> vector<8x32xf32>
    %209 = arith.addf %186, %208 : vector<8x32xf32>
    %cst_100 = arith.constant dense<0.000000e+00> : vector<8x16xf32>
    %210 = tpu.matmul %107, %115, %cst_100 {dimension_numbers = #tpu.dot_dimension_numbers<[1], [1], [0], [0], [0, 0, 1, 0], [], []>} : vector<8x8xbf16>, vector<16x8xbf16>, vector<8x16xf32> -> vector<8x16xf32>
    %211 = arith.addf %210, %141 : vector<8x16xf32>
    %cst_101 = arith.constant dense<0xFF800000> : vector<8xf32>
    %212 = vector.multi_reduction <maximumf>, %211, %cst_101 [1] : vector<8x16xf32> to vector<8xf32>
    %213 = vector.shape_cast %212 : vector<8xf32> to vector<8x1xf32>
    %214 = vector.broadcast %213 : vector<8x1xf32> to vector<8x16xf32>
    %215 = arith.subf %211, %214 : vector<8x16xf32>
    %216 = math.exp %215 : vector<8x16xf32>
    %cst_102 = arith.constant dense<0.000000e+00> : vector<8xf32>
    %217 = vector.multi_reduction <add>, %216, %cst_102 [1] : vector<8x16xf32> to vector<8xf32>
    %218 = vector.shape_cast %217 : vector<8xf32> to vector<8x1xf32>
    %219 = tpu.reciprocal %218 {approx = true} : vector<8x1xf32> -> vector<8x1xf32>
    %220 = arith.mulf %218, %219 : vector<8x1xf32>
    %cst_103 = arith.constant 2.000000e+00 : f32
    %221 = vector.broadcast %cst_103 : f32 to vector<8x1xf32>
    %222 = arith.subf %221, %220 : vector<8x1xf32>
    %223 = arith.mulf %219, %222 : vector<8x1xf32>
    %224 = vector.broadcast %223 : vector<8x1xf32> to vector<8x16xf32>
    %225 = arith.mulf %216, %224 : vector<8x16xf32>
    %226 = arith.truncf %225 : vector<8x16xf32> to vector<8x16xbf16>
    %cst_104 = arith.constant dense<0.000000e+00> : vector<8x8xf32>
    %227 = tpu.matmul %226, %123, %cst_104 {dimension_numbers = #tpu.dot_dimension_numbers<[1], [0], [0], [1], [0, 0, 1, 1], [], []>} : vector<8x16xbf16>, vector<16x8xbf16>, vector<8x8xf32> -> vector<8x8xf32>
    %228 = arith.truncf %227 : vector<8x8xf32> to vector<8x8xbf16>
    %229 = vector.extract_strided_slice %6 {offsets = [3, 0, 0], sizes = [1, 8, 32], strides = [1, 1, 1]} : vector<4x8x32xbf16> to vector<1x8x32xbf16>
    %230 = vector.shape_cast %229 : vector<1x8x32xbf16> to vector<8x32xbf16>
    %cst_105 = arith.constant dense<0.000000e+00> : vector<8x32xf32>
    %231 = tpu.matmul %228, %230, %cst_105 {dimension_numbers = #tpu.dot_dimension_numbers<[1], [0], [0], [1], [0, 0, 1, 1], [], []>} : vector<8x8xbf16>, vector<8x32xbf16>, vector<8x32xf32> -> vector<8x32xf32>
    %232 = arith.addf %209, %231 : vector<8x32xf32>
    %233 = vector.broadcast %7 : vector<1x32xf32> to vector<8x32xf32>
    %234 = arith.addf %232, %233 : vector<8x32xf32>
    %235 = arith.truncf %234 : vector<8x32xf32> to vector<8x32xbf16>
    %236 = vector.extract_strided_slice %8 {offsets = [0, 0, 0], sizes = [1, 32, 8], strides = [1, 1, 1]} : vector<4x32x8xbf16> to vector<1x32x8xbf16>
    %237 = vector.shape_cast %236 : vector<1x32x8xbf16> to vector<32x8xbf16>
    %cst_106 = arith.constant dense<0.000000e+00> : vector<16x8xf32>
    %238 = tpu.matmul %24, %237, %cst_106 {dimension_numbers = #tpu.dot_dimension_numbers<[1], [0], [0], [1], [0, 0, 1, 1], [], []>} : vector<16x32xbf16>, vector<32x8xbf16>, vector<16x8xf32> -> vector<16x8xf32>
    %239 = vector.extract_strided_slice %9 {offsets = [0, 0, 0], sizes = [1, 1, 8], strides = [1, 1, 1]} : vector<4x1x8xf32> to vector<1x1x8xf32>
    %240 = vector.shape_cast %239 : vector<1x1x8xf32> to vector<1x8xf32>
    %241 = vector.broadcast %240 : vector<1x8xf32> to vector<16x8xf32>
    %242 = arith.addf %238, %241 : vector<16x8xf32>
    %243 = arith.truncf %242 : vector<16x8xf32> to vector<16x8xbf16>
    %244 = vector.extract_strided_slice %10 {offsets = [0, 0, 0], sizes = [1, 32, 8], strides = [1, 1, 1]} : vector<4x32x8xbf16> to vector<1x32x8xbf16>
    %245 = vector.shape_cast %244 : vector<1x32x8xbf16> to vector<32x8xbf16>
    %cst_107 = arith.constant dense<0.000000e+00> : vector<8x8xf32>
    %246 = tpu.matmul %235, %245, %cst_107 {dimension_numbers = #tpu.dot_dimension_numbers<[1], [0], [0], [1], [0, 0, 1, 1], [], []>} : vector<8x32xbf16>, vector<32x8xbf16>, vector<8x8xf32> -> vector<8x8xf32>
    %247 = vector.extract_strided_slice %11 {offsets = [0, 0, 0], sizes = [1, 1, 8], strides = [1, 1, 1]} : vector<4x1x8xf32> to vector<1x1x8xf32>
    %248 = vector.shape_cast %247 : vector<1x1x8xf32> to vector<1x8xf32>
    %249 = vector.broadcast %248 : vector<1x8xf32> to vector<8x8xf32>
    %250 = arith.addf %246, %249 : vector<8x8xf32>
    %251 = arith.truncf %250 : vector<8x8xf32> to vector<8x8xbf16>
    %252 = vector.extract_strided_slice %12 {offsets = [0, 0, 0], sizes = [1, 32, 8], strides = [1, 1, 1]} : vector<4x32x8xbf16> to vector<1x32x8xbf16>
    %253 = vector.shape_cast %252 : vector<1x32x8xbf16> to vector<32x8xbf16>
    %cst_108 = arith.constant dense<0.000000e+00> : vector<8x8xf32>
    %254 = tpu.matmul %235, %253, %cst_108 {dimension_numbers = #tpu.dot_dimension_numbers<[1], [0], [0], [1], [0, 0, 1, 1], [], []>} : vector<8x32xbf16>, vector<32x8xbf16>, vector<8x8xf32> -> vector<8x8xf32>
    %255 = vector.extract_strided_slice %13 {offsets = [0, 0, 0], sizes = [1, 1, 8], strides = [1, 1, 1]} : vector<4x1x8xf32> to vector<1x1x8xf32>
    %256 = vector.shape_cast %255 : vector<1x1x8xf32> to vector<1x8xf32>
    %257 = vector.broadcast %256 : vector<1x8xf32> to vector<8x8xf32>
    %258 = arith.addf %254, %257 : vector<8x8xf32>
    %259 = arith.truncf %258 : vector<8x8xf32> to vector<8x8xbf16>
    %260 = vector.extract_strided_slice %8 {offsets = [1, 0, 0], sizes = [1, 32, 8], strides = [1, 1, 1]} : vector<4x32x8xbf16> to vector<1x32x8xbf16>
    %261 = vector.shape_cast %260 : vector<1x32x8xbf16> to vector<32x8xbf16>
    %cst_109 = arith.constant dense<0.000000e+00> : vector<16x8xf32>
    %262 = tpu.matmul %24, %261, %cst_109 {dimension_numbers = #tpu.dot_dimension_numbers<[1], [0], [0], [1], [0, 0, 1, 1], [], []>} : vector<16x32xbf16>, vector<32x8xbf16>, vector<16x8xf32> -> vector<16x8xf32>
    %263 = vector.extract_strided_slice %9 {offsets = [1, 0, 0], sizes = [1, 1, 8], strides = [1, 1, 1]} : vector<4x1x8xf32> to vector<1x1x8xf32>
    %264 = vector.shape_cast %263 : vector<1x1x8xf32> to vector<1x8xf32>
    %265 = vector.broadcast %264 : vector<1x8xf32> to vector<16x8xf32>
    %266 = arith.addf %262, %265 : vector<16x8xf32>
    %267 = arith.truncf %266 : vector<16x8xf32> to vector<16x8xbf16>
    %268 = vector.extract_strided_slice %10 {offsets = [1, 0, 0], sizes = [1, 32, 8], strides = [1, 1, 1]} : vector<4x32x8xbf16> to vector<1x32x8xbf16>
    %269 = vector.shape_cast %268 : vector<1x32x8xbf16> to vector<32x8xbf16>
    %cst_110 = arith.constant dense<0.000000e+00> : vector<8x8xf32>
    %270 = tpu.matmul %235, %269, %cst_110 {dimension_numbers = #tpu.dot_dimension_numbers<[1], [0], [0], [1], [0, 0, 1, 1], [], []>} : vector<8x32xbf16>, vector<32x8xbf16>, vector<8x8xf32> -> vector<8x8xf32>
    %271 = vector.extract_strided_slice %11 {offsets = [1, 0, 0], sizes = [1, 1, 8], strides = [1, 1, 1]} : vector<4x1x8xf32> to vector<1x1x8xf32>
    %272 = vector.shape_cast %271 : vector<1x1x8xf32> to vector<1x8xf32>
    %273 = vector.broadcast %272 : vector<1x8xf32> to vector<8x8xf32>
    %274 = arith.addf %270, %273 : vector<8x8xf32>
    %275 = arith.truncf %274 : vector<8x8xf32> to vector<8x8xbf16>
    %276 = vector.extract_strided_slice %12 {offsets = [1, 0, 0], sizes = [1, 32, 8], strides = [1, 1, 1]} : vector<4x32x8xbf16> to vector<1x32x8xbf16>
    %277 = vector.shape_cast %276 : vector<1x32x8xbf16> to vector<32x8xbf16>
    %cst_111 = arith.constant dense<0.000000e+00> : vector<8x8xf32>
    %278 = tpu.matmul %235, %277, %cst_111 {dimension_numbers = #tpu.dot_dimension_numbers<[1], [0], [0], [1], [0, 0, 1, 1], [], []>} : vector<8x32xbf16>, vector<32x8xbf16>, vector<8x8xf32> -> vector<8x8xf32>
    %279 = vector.extract_strided_slice %13 {offsets = [1, 0, 0], sizes = [1, 1, 8], strides = [1, 1, 1]} : vector<4x1x8xf32> to vector<1x1x8xf32>
    %280 = vector.shape_cast %279 : vector<1x1x8xf32> to vector<1x8xf32>
    %281 = vector.broadcast %280 : vector<1x8xf32> to vector<8x8xf32>
    %282 = arith.addf %278, %281 : vector<8x8xf32>
    %283 = arith.truncf %282 : vector<8x8xf32> to vector<8x8xbf16>
    %284 = vector.extract_strided_slice %8 {offsets = [2, 0, 0], sizes = [1, 32, 8], strides = [1, 1, 1]} : vector<4x32x8xbf16> to vector<1x32x8xbf16>
    %285 = vector.shape_cast %284 : vector<1x32x8xbf16> to vector<32x8xbf16>
    %cst_112 = arith.constant dense<0.000000e+00> : vector<16x8xf32>
    %286 = tpu.matmul %24, %285, %cst_112 {dimension_numbers = #tpu.dot_dimension_numbers<[1], [0], [0], [1], [0, 0, 1, 1], [], []>} : vector<16x32xbf16>, vector<32x8xbf16>, vector<16x8xf32> -> vector<16x8xf32>
    %287 = vector.extract_strided_slice %9 {offsets = [2, 0, 0], sizes = [1, 1, 8], strides = [1, 1, 1]} : vector<4x1x8xf32> to vector<1x1x8xf32>
    %288 = vector.shape_cast %287 : vector<1x1x8xf32> to vector<1x8xf32>
    %289 = vector.broadcast %288 : vector<1x8xf32> to vector<16x8xf32>
    %290 = arith.addf %286, %289 : vector<16x8xf32>
    %291 = arith.truncf %290 : vector<16x8xf32> to vector<16x8xbf16>
    %292 = vector.extract_strided_slice %10 {offsets = [2, 0, 0], sizes = [1, 32, 8], strides = [1, 1, 1]} : vector<4x32x8xbf16> to vector<1x32x8xbf16>
    %293 = vector.shape_cast %292 : vector<1x32x8xbf16> to vector<32x8xbf16>
    %cst_113 = arith.constant dense<0.000000e+00> : vector<8x8xf32>
    %294 = tpu.matmul %235, %293, %cst_113 {dimension_numbers = #tpu.dot_dimension_numbers<[1], [0], [0], [1], [0, 0, 1, 1], [], []>} : vector<8x32xbf16>, vector<32x8xbf16>, vector<8x8xf32> -> vector<8x8xf32>
    %295 = vector.extract_strided_slice %11 {offsets = [2, 0, 0], sizes = [1, 1, 8], strides = [1, 1, 1]} : vector<4x1x8xf32> to vector<1x1x8xf32>
    %296 = vector.shape_cast %295 : vector<1x1x8xf32> to vector<1x8xf32>
    %297 = vector.broadcast %296 : vector<1x8xf32> to vector<8x8xf32>
    %298 = arith.addf %294, %297 : vector<8x8xf32>
    %299 = arith.truncf %298 : vector<8x8xf32> to vector<8x8xbf16>
    %300 = vector.extract_strided_slice %12 {offsets = [2, 0, 0], sizes = [1, 32, 8], strides = [1, 1, 1]} : vector<4x32x8xbf16> to vector<1x32x8xbf16>
    %301 = vector.shape_cast %300 : vector<1x32x8xbf16> to vector<32x8xbf16>
    %cst_114 = arith.constant dense<0.000000e+00> : vector<8x8xf32>
    %302 = tpu.matmul %235, %301, %cst_114 {dimension_numbers = #tpu.dot_dimension_numbers<[1], [0], [0], [1], [0, 0, 1, 1], [], []>} : vector<8x32xbf16>, vector<32x8xbf16>, vector<8x8xf32> -> vector<8x8xf32>
    %303 = vector.extract_strided_slice %13 {offsets = [2, 0, 0], sizes = [1, 1, 8], strides = [1, 1, 1]} : vector<4x1x8xf32> to vector<1x1x8xf32>
    %304 = vector.shape_cast %303 : vector<1x1x8xf32> to vector<1x8xf32>
    %305 = vector.broadcast %304 : vector<1x8xf32> to vector<8x8xf32>
    %306 = arith.addf %302, %305 : vector<8x8xf32>
    %307 = arith.truncf %306 : vector<8x8xf32> to vector<8x8xbf16>
    %308 = vector.extract_strided_slice %8 {offsets = [3, 0, 0], sizes = [1, 32, 8], strides = [1, 1, 1]} : vector<4x32x8xbf16> to vector<1x32x8xbf16>
    %309 = vector.shape_cast %308 : vector<1x32x8xbf16> to vector<32x8xbf16>
    %cst_115 = arith.constant dense<0.000000e+00> : vector<16x8xf32>
    %310 = tpu.matmul %24, %309, %cst_115 {dimension_numbers = #tpu.dot_dimension_numbers<[1], [0], [0], [1], [0, 0, 1, 1], [], []>} : vector<16x32xbf16>, vector<32x8xbf16>, vector<16x8xf32> -> vector<16x8xf32>
    %311 = vector.extract_strided_slice %9 {offsets = [3, 0, 0], sizes = [1, 1, 8], strides = [1, 1, 1]} : vector<4x1x8xf32> to vector<1x1x8xf32>
    %312 = vector.shape_cast %311 : vector<1x1x8xf32> to vector<1x8xf32>
    %313 = vector.broadcast %312 : vector<1x8xf32> to vector<16x8xf32>
    %314 = arith.addf %310, %313 : vector<16x8xf32>
    %315 = arith.truncf %314 : vector<16x8xf32> to vector<16x8xbf16>
    %316 = vector.extract_strided_slice %10 {offsets = [3, 0, 0], sizes = [1, 32, 8], strides = [1, 1, 1]} : vector<4x32x8xbf16> to vector<1x32x8xbf16>
    %317 = vector.shape_cast %316 : vector<1x32x8xbf16> to vector<32x8xbf16>
    %cst_116 = arith.constant dense<0.000000e+00> : vector<8x8xf32>
    %318 = tpu.matmul %235, %317, %cst_116 {dimension_numbers = #tpu.dot_dimension_numbers<[1], [0], [0], [1], [0, 0, 1, 1], [], []>} : vector<8x32xbf16>, vector<32x8xbf16>, vector<8x8xf32> -> vector<8x8xf32>
    %319 = vector.extract_strided_slice %11 {offsets = [3, 0, 0], sizes = [1, 1, 8], strides = [1, 1, 1]} : vector<4x1x8xf32> to vector<1x1x8xf32>
    %320 = vector.shape_cast %319 : vector<1x1x8xf32> to vector<1x8xf32>
    %321 = vector.broadcast %320 : vector<1x8xf32> to vector<8x8xf32>
    %322 = arith.addf %318, %321 : vector<8x8xf32>
    %323 = arith.truncf %322 : vector<8x8xf32> to vector<8x8xbf16>
    %324 = vector.extract_strided_slice %12 {offsets = [3, 0, 0], sizes = [1, 32, 8], strides = [1, 1, 1]} : vector<4x32x8xbf16> to vector<1x32x8xbf16>
    %325 = vector.shape_cast %324 : vector<1x32x8xbf16> to vector<32x8xbf16>
    %cst_117 = arith.constant dense<0.000000e+00> : vector<8x8xf32>
    %326 = tpu.matmul %235, %325, %cst_117 {dimension_numbers = #tpu.dot_dimension_numbers<[1], [0], [0], [1], [0, 0, 1, 1], [], []>} : vector<8x32xbf16>, vector<32x8xbf16>, vector<8x8xf32> -> vector<8x8xf32>
    %327 = vector.extract_strided_slice %13 {offsets = [3, 0, 0], sizes = [1, 1, 8], strides = [1, 1, 1]} : vector<4x1x8xf32> to vector<1x1x8xf32>
    %328 = vector.shape_cast %327 : vector<1x1x8xf32> to vector<1x8xf32>
    %329 = vector.broadcast %328 : vector<1x8xf32> to vector<8x8xf32>
    %330 = arith.addf %326, %329 : vector<8x8xf32>
    %331 = arith.truncf %330 : vector<8x8xf32> to vector<8x8xbf16>
    %332 = tpu.iota {dimensions = array<i32: 0>} : vector<16x8xi32>
    %333 = tpu.iota {dimensions = array<i32: 1>} : vector<16x8xi32>
    %334 = arith.sitofp %332 : vector<16x8xi32> to vector<16x8xf32>
    %cst_118 = arith.constant 5.000000e-01 : f32
    %335 = vector.broadcast %cst_118 : f32 to vector<16x8xf32>
    %336 = arith.addf %334, %335 : vector<16x8xf32>
    %cst_119 = arith.constant 2.500000e-01 : f32
    %337 = vector.broadcast %cst_119 : f32 to vector<16x8xf32>
    %338 = arith.mulf %336, %337 : vector<16x8xf32>
    %339 = math.floor %338 : vector<16x8xf32>
    %340 = arith.sitofp %333 : vector<16x8xi32> to vector<16x8xf32>
    %cst_120 = arith.constant 5.000000e-01 : f32
    %341 = vector.broadcast %cst_120 : f32 to vector<16x8xf32>
    %342 = arith.addf %340, %341 : vector<16x8xf32>
    %cst_121 = arith.constant 5.000000e-01 : f32
    %343 = vector.broadcast %cst_121 : f32 to vector<16x8xf32>
    %344 = arith.mulf %342, %343 : vector<16x8xf32>
    %345 = math.floor %344 : vector<16x8xf32>
    %346 = arith.cmpf oeq, %339, %345 : vector<16x8xf32>
    %cst_122 = arith.constant 0.000000e+00 : f32
    %cst_123 = arith.constant -1.000000e+30 : f32
    %347 = vector.broadcast %cst_122 : f32 to vector<16x8xf32>
    %348 = vector.broadcast %cst_123 : f32 to vector<16x8xf32>
    %349 = arith.select %346, %347, %348 : vector<16x8xi1>, vector<16x8xf32>
    %cst_124 = arith.constant dense<0.000000e+00> : vector<16x8xf32>
    %350 = tpu.matmul %243, %251, %cst_124 {dimension_numbers = #tpu.dot_dimension_numbers<[1], [1], [0], [0], [0, 0, 1, 0], [], []>} : vector<16x8xbf16>, vector<8x8xbf16>, vector<16x8xf32> -> vector<16x8xf32>
    %351 = arith.addf %350, %349 : vector<16x8xf32>
    %cst_125 = arith.constant dense<0xFF800000> : vector<16xf32>
    %352 = vector.multi_reduction <maximumf>, %351, %cst_125 [1] : vector<16x8xf32> to vector<16xf32>
    %353 = vector.shape_cast %352 : vector<16xf32> to vector<16x1xf32>
    %354 = vector.broadcast %353 : vector<16x1xf32> to vector<16x8xf32>
    %355 = arith.subf %351, %354 : vector<16x8xf32>
    %356 = math.exp %355 : vector<16x8xf32>
    %cst_126 = arith.constant dense<0.000000e+00> : vector<16xf32>
    %357 = vector.multi_reduction <add>, %356, %cst_126 [1] : vector<16x8xf32> to vector<16xf32>
    %358 = vector.shape_cast %357 : vector<16xf32> to vector<16x1xf32>
    %359 = tpu.reciprocal %358 {approx = true} : vector<16x1xf32> -> vector<16x1xf32>
    %360 = arith.mulf %358, %359 : vector<16x1xf32>
    %cst_127 = arith.constant 2.000000e+00 : f32
    %361 = vector.broadcast %cst_127 : f32 to vector<16x1xf32>
    %362 = arith.subf %361, %360 : vector<16x1xf32>
    %363 = arith.mulf %359, %362 : vector<16x1xf32>
    %364 = vector.broadcast %363 : vector<16x1xf32> to vector<16x8xf32>
    %365 = arith.mulf %356, %364 : vector<16x8xf32>
    %366 = arith.truncf %365 : vector<16x8xf32> to vector<16x8xbf16>
    %cst_128 = arith.constant dense<0.000000e+00> : vector<16x8xf32>
    %367 = tpu.matmul %366, %259, %cst_128 {dimension_numbers = #tpu.dot_dimension_numbers<[1], [0], [0], [1], [0, 0, 1, 1], [], []>} : vector<16x8xbf16>, vector<8x8xbf16>, vector<16x8xf32> -> vector<16x8xf32>
    %368 = arith.truncf %367 : vector<16x8xf32> to vector<16x8xbf16>
    %369 = vector.extract_strided_slice %14 {offsets = [0, 0, 0], sizes = [1, 8, 32], strides = [1, 1, 1]} : vector<4x8x32xbf16> to vector<1x8x32xbf16>
    %370 = vector.shape_cast %369 : vector<1x8x32xbf16> to vector<8x32xbf16>
    %cst_129 = arith.constant dense<0.000000e+00> : vector<16x32xf32>
    %371 = tpu.matmul %368, %370, %cst_129 {dimension_numbers = #tpu.dot_dimension_numbers<[1], [0], [0], [1], [0, 0, 1, 1], [], []>} : vector<16x8xbf16>, vector<8x32xbf16>, vector<16x32xf32> -> vector<16x32xf32>
    %cst_130 = arith.constant dense<0.000000e+00> : vector<16x8xf32>
    %372 = tpu.matmul %267, %275, %cst_130 {dimension_numbers = #tpu.dot_dimension_numbers<[1], [1], [0], [0], [0, 0, 1, 0], [], []>} : vector<16x8xbf16>, vector<8x8xbf16>, vector<16x8xf32> -> vector<16x8xf32>
    %373 = arith.addf %372, %349 : vector<16x8xf32>
    %cst_131 = arith.constant dense<0xFF800000> : vector<16xf32>
    %374 = vector.multi_reduction <maximumf>, %373, %cst_131 [1] : vector<16x8xf32> to vector<16xf32>
    %375 = vector.shape_cast %374 : vector<16xf32> to vector<16x1xf32>
    %376 = vector.broadcast %375 : vector<16x1xf32> to vector<16x8xf32>
    %377 = arith.subf %373, %376 : vector<16x8xf32>
    %378 = math.exp %377 : vector<16x8xf32>
    %cst_132 = arith.constant dense<0.000000e+00> : vector<16xf32>
    %379 = vector.multi_reduction <add>, %378, %cst_132 [1] : vector<16x8xf32> to vector<16xf32>
    %380 = vector.shape_cast %379 : vector<16xf32> to vector<16x1xf32>
    %381 = tpu.reciprocal %380 {approx = true} : vector<16x1xf32> -> vector<16x1xf32>
    %382 = arith.mulf %380, %381 : vector<16x1xf32>
    %cst_133 = arith.constant 2.000000e+00 : f32
    %383 = vector.broadcast %cst_133 : f32 to vector<16x1xf32>
    %384 = arith.subf %383, %382 : vector<16x1xf32>
    %385 = arith.mulf %381, %384 : vector<16x1xf32>
    %386 = vector.broadcast %385 : vector<16x1xf32> to vector<16x8xf32>
    %387 = arith.mulf %378, %386 : vector<16x8xf32>
    %388 = arith.truncf %387 : vector<16x8xf32> to vector<16x8xbf16>
    %cst_134 = arith.constant dense<0.000000e+00> : vector<16x8xf32>
    %389 = tpu.matmul %388, %283, %cst_134 {dimension_numbers = #tpu.dot_dimension_numbers<[1], [0], [0], [1], [0, 0, 1, 1], [], []>} : vector<16x8xbf16>, vector<8x8xbf16>, vector<16x8xf32> -> vector<16x8xf32>
    %390 = arith.truncf %389 : vector<16x8xf32> to vector<16x8xbf16>
    %391 = vector.extract_strided_slice %14 {offsets = [1, 0, 0], sizes = [1, 8, 32], strides = [1, 1, 1]} : vector<4x8x32xbf16> to vector<1x8x32xbf16>
    %392 = vector.shape_cast %391 : vector<1x8x32xbf16> to vector<8x32xbf16>
    %cst_135 = arith.constant dense<0.000000e+00> : vector<16x32xf32>
    %393 = tpu.matmul %390, %392, %cst_135 {dimension_numbers = #tpu.dot_dimension_numbers<[1], [0], [0], [1], [0, 0, 1, 1], [], []>} : vector<16x8xbf16>, vector<8x32xbf16>, vector<16x32xf32> -> vector<16x32xf32>
    %394 = arith.addf %371, %393 : vector<16x32xf32>
    %cst_136 = arith.constant dense<0.000000e+00> : vector<16x8xf32>
    %395 = tpu.matmul %291, %299, %cst_136 {dimension_numbers = #tpu.dot_dimension_numbers<[1], [1], [0], [0], [0, 0, 1, 0], [], []>} : vector<16x8xbf16>, vector<8x8xbf16>, vector<16x8xf32> -> vector<16x8xf32>
    %396 = arith.addf %395, %349 : vector<16x8xf32>
    %cst_137 = arith.constant dense<0xFF800000> : vector<16xf32>
    %397 = vector.multi_reduction <maximumf>, %396, %cst_137 [1] : vector<16x8xf32> to vector<16xf32>
    %398 = vector.shape_cast %397 : vector<16xf32> to vector<16x1xf32>
    %399 = vector.broadcast %398 : vector<16x1xf32> to vector<16x8xf32>
    %400 = arith.subf %396, %399 : vector<16x8xf32>
    %401 = math.exp %400 : vector<16x8xf32>
    %cst_138 = arith.constant dense<0.000000e+00> : vector<16xf32>
    %402 = vector.multi_reduction <add>, %401, %cst_138 [1] : vector<16x8xf32> to vector<16xf32>
    %403 = vector.shape_cast %402 : vector<16xf32> to vector<16x1xf32>
    %404 = tpu.reciprocal %403 {approx = true} : vector<16x1xf32> -> vector<16x1xf32>
    %405 = arith.mulf %403, %404 : vector<16x1xf32>
    %cst_139 = arith.constant 2.000000e+00 : f32
    %406 = vector.broadcast %cst_139 : f32 to vector<16x1xf32>
    %407 = arith.subf %406, %405 : vector<16x1xf32>
    %408 = arith.mulf %404, %407 : vector<16x1xf32>
    %409 = vector.broadcast %408 : vector<16x1xf32> to vector<16x8xf32>
    %410 = arith.mulf %401, %409 : vector<16x8xf32>
    %411 = arith.truncf %410 : vector<16x8xf32> to vector<16x8xbf16>
    %cst_140 = arith.constant dense<0.000000e+00> : vector<16x8xf32>
    %412 = tpu.matmul %411, %307, %cst_140 {dimension_numbers = #tpu.dot_dimension_numbers<[1], [0], [0], [1], [0, 0, 1, 1], [], []>} : vector<16x8xbf16>, vector<8x8xbf16>, vector<16x8xf32> -> vector<16x8xf32>
    %413 = arith.truncf %412 : vector<16x8xf32> to vector<16x8xbf16>
    %414 = vector.extract_strided_slice %14 {offsets = [2, 0, 0], sizes = [1, 8, 32], strides = [1, 1, 1]} : vector<4x8x32xbf16> to vector<1x8x32xbf16>
    %415 = vector.shape_cast %414 : vector<1x8x32xbf16> to vector<8x32xbf16>
    %cst_141 = arith.constant dense<0.000000e+00> : vector<16x32xf32>
    %416 = tpu.matmul %413, %415, %cst_141 {dimension_numbers = #tpu.dot_dimension_numbers<[1], [0], [0], [1], [0, 0, 1, 1], [], []>} : vector<16x8xbf16>, vector<8x32xbf16>, vector<16x32xf32> -> vector<16x32xf32>
    %417 = arith.addf %394, %416 : vector<16x32xf32>
    %cst_142 = arith.constant dense<0.000000e+00> : vector<16x8xf32>
    %418 = tpu.matmul %315, %323, %cst_142 {dimension_numbers = #tpu.dot_dimension_numbers<[1], [1], [0], [0], [0, 0, 1, 0], [], []>} : vector<16x8xbf16>, vector<8x8xbf16>, vector<16x8xf32> -> vector<16x8xf32>
    %419 = arith.addf %418, %349 : vector<16x8xf32>
    %cst_143 = arith.constant dense<0xFF800000> : vector<16xf32>
    %420 = vector.multi_reduction <maximumf>, %419, %cst_143 [1] : vector<16x8xf32> to vector<16xf32>
    %421 = vector.shape_cast %420 : vector<16xf32> to vector<16x1xf32>
    %422 = vector.broadcast %421 : vector<16x1xf32> to vector<16x8xf32>
    %423 = arith.subf %419, %422 : vector<16x8xf32>
    %424 = math.exp %423 : vector<16x8xf32>
    %cst_144 = arith.constant dense<0.000000e+00> : vector<16xf32>
    %425 = vector.multi_reduction <add>, %424, %cst_144 [1] : vector<16x8xf32> to vector<16xf32>
    %426 = vector.shape_cast %425 : vector<16xf32> to vector<16x1xf32>
    %427 = tpu.reciprocal %426 {approx = true} : vector<16x1xf32> -> vector<16x1xf32>
    %428 = arith.mulf %426, %427 : vector<16x1xf32>
    %cst_145 = arith.constant 2.000000e+00 : f32
    %429 = vector.broadcast %cst_145 : f32 to vector<16x1xf32>
    %430 = arith.subf %429, %428 : vector<16x1xf32>
    %431 = arith.mulf %427, %430 : vector<16x1xf32>
    %432 = vector.broadcast %431 : vector<16x1xf32> to vector<16x8xf32>
    %433 = arith.mulf %424, %432 : vector<16x8xf32>
    %434 = arith.truncf %433 : vector<16x8xf32> to vector<16x8xbf16>
    %cst_146 = arith.constant dense<0.000000e+00> : vector<16x8xf32>
    %435 = tpu.matmul %434, %331, %cst_146 {dimension_numbers = #tpu.dot_dimension_numbers<[1], [0], [0], [1], [0, 0, 1, 1], [], []>} : vector<16x8xbf16>, vector<8x8xbf16>, vector<16x8xf32> -> vector<16x8xf32>
    %436 = arith.truncf %435 : vector<16x8xf32> to vector<16x8xbf16>
    %437 = vector.extract_strided_slice %14 {offsets = [3, 0, 0], sizes = [1, 8, 32], strides = [1, 1, 1]} : vector<4x8x32xbf16> to vector<1x8x32xbf16>
    %438 = vector.shape_cast %437 : vector<1x8x32xbf16> to vector<8x32xbf16>
    %cst_147 = arith.constant dense<0.000000e+00> : vector<16x32xf32>
    %439 = tpu.matmul %436, %438, %cst_147 {dimension_numbers = #tpu.dot_dimension_numbers<[1], [0], [0], [1], [0, 0, 1, 1], [], []>} : vector<16x8xbf16>, vector<8x32xbf16>, vector<16x32xf32> -> vector<16x32xf32>
    %440 = arith.addf %417, %439 : vector<16x32xf32>
    %441 = vector.broadcast %15 : vector<1x32xf32> to vector<16x32xf32>
    %442 = arith.addf %440, %441 : vector<16x32xf32>
    %443 = arith.addf %25, %442 : vector<16x32xf32>
    %cst_148 = arith.constant dense<0.000000e+00> : vector<16xf32>
    %444 = vector.multi_reduction <add>, %443, %cst_148 [1] : vector<16x32xf32> to vector<16xf32>
    %445 = vector.shape_cast %444 : vector<16xf32> to vector<16x1xf32>
    %cst_149 = arith.constant 3.200000e+01 : f32
    %446 = vector.broadcast %cst_149 : f32 to vector<16x1xf32>
    %447 = arith.divf %445, %446 : vector<16x1xf32>
    %448 = vector.broadcast %447 : vector<16x1xf32> to vector<16x32xf32>
    %449 = arith.subf %443, %448 : vector<16x32xf32>
    %450 = arith.mulf %449, %449 : vector<16x32xf32>
    %cst_150 = arith.constant dense<0.000000e+00> : vector<16xf32>
    %451 = vector.multi_reduction <add>, %450, %cst_150 [1] : vector<16x32xf32> to vector<16xf32>
    %452 = vector.shape_cast %451 : vector<16xf32> to vector<16x1xf32>
    %cst_151 = arith.constant 3.200000e+01 : f32
    %453 = vector.broadcast %cst_151 : f32 to vector<16x1xf32>
    %454 = arith.divf %452, %453 : vector<16x1xf32>
    %455 = vector.broadcast %447 : vector<16x1xf32> to vector<16x32xf32>
    %456 = arith.subf %443, %455 : vector<16x32xf32>
    %cst_152 = arith.constant 9.99999974E-6 : f32
    %457 = vector.broadcast %cst_152 : f32 to vector<16x1xf32>
    %458 = arith.addf %454, %457 : vector<16x1xf32>
    %459 = math.rsqrt %458 : vector<16x1xf32>
    %460 = vector.broadcast %459 : vector<16x1xf32> to vector<16x32xf32>
    %461 = arith.mulf %456, %460 : vector<16x32xf32>
    %462 = vector.broadcast %16 : vector<1x32xf32> to vector<16x32xf32>
    %463 = arith.mulf %461, %462 : vector<16x32xf32>
    %464 = vector.broadcast %17 : vector<1x32xf32> to vector<16x32xf32>
    %465 = arith.addf %463, %464 : vector<16x32xf32>
    %466 = arith.truncf %465 : vector<16x32xf32> to vector<16x32xbf16>
    %cst_153 = arith.constant dense<0.000000e+00> : vector<16x128xf32>
    %467 = tpu.matmul %466, %18, %cst_153 {dimension_numbers = #tpu.dot_dimension_numbers<[1], [0], [0], [1], [0, 0, 1, 1], [], []>} : vector<16x32xbf16>, vector<32x128xbf16>, vector<16x128xf32> -> vector<16x128xf32>
    %468 = vector.broadcast %19 : vector<1x128xf32> to vector<16x128xf32>
    %469 = arith.addf %467, %468 : vector<16x128xf32>
    %cst_154 = arith.constant 0.707106769 : f32
    %470 = vector.broadcast %cst_154 : f32 to vector<16x128xf32>
    %471 = arith.mulf %469, %470 : vector<16x128xf32>
    %472 = math.absf %471 : vector<16x128xf32>
    %cst_155 = arith.constant 0.327591091 : f32
    %473 = vector.broadcast %cst_155 : f32 to vector<16x128xf32>
    %474 = arith.mulf %473, %472 : vector<16x128xf32>
    %cst_156 = arith.constant 1.000000e+00 : f32
    %475 = vector.broadcast %cst_156 : f32 to vector<16x128xf32>
    %476 = arith.addf %475, %474 : vector<16x128xf32>
    %cst_157 = arith.constant 1.000000e+00 : f32
    %477 = vector.broadcast %cst_157 : f32 to vector<16x128xf32>
    %478 = arith.divf %477, %476 : vector<16x128xf32>
    %cst_158 = arith.constant 1.06140542 : f32
    %479 = vector.broadcast %cst_158 : f32 to vector<16x128xf32>
    %480 = arith.mulf %479, %478 : vector<16x128xf32>
    %cst_159 = arith.constant 1.45315206 : f32
    %481 = vector.broadcast %cst_159 : f32 to vector<16x128xf32>
    %482 = arith.subf %480, %481 : vector<16x128xf32>
    %483 = arith.mulf %482, %478 : vector<16x128xf32>
    %cst_160 = arith.constant 1.42141378 : f32
    %484 = vector.broadcast %cst_160 : f32 to vector<16x128xf32>
    %485 = arith.addf %483, %484 : vector<16x128xf32>
    %486 = arith.mulf %485, %478 : vector<16x128xf32>
    %cst_161 = arith.constant 0.284496725 : f32
    %487 = vector.broadcast %cst_161 : f32 to vector<16x128xf32>
    %488 = arith.subf %486, %487 : vector<16x128xf32>
    %489 = arith.mulf %488, %478 : vector<16x128xf32>
    %cst_162 = arith.constant 0.254829586 : f32
    %490 = vector.broadcast %cst_162 : f32 to vector<16x128xf32>
    %491 = arith.addf %489, %490 : vector<16x128xf32>
    %492 = arith.mulf %491, %478 : vector<16x128xf32>
    %cst_163 = arith.constant 0.000000e+00 : f32
    %493 = vector.broadcast %cst_163 : f32 to vector<16x128xf32>
    %494 = arith.subf %493, %472 : vector<16x128xf32>
    %495 = arith.mulf %494, %472 : vector<16x128xf32>
    %496 = math.exp %495 : vector<16x128xf32>
    %497 = arith.mulf %492, %496 : vector<16x128xf32>
    %cst_164 = arith.constant 1.000000e+00 : f32
    %498 = vector.broadcast %cst_164 : f32 to vector<16x128xf32>
    %499 = arith.subf %498, %497 : vector<16x128xf32>
    %cst_165 = arith.constant 0.000000e+00 : f32
    %500 = vector.broadcast %cst_165 : f32 to vector<16x128xf32>
    %501 = arith.cmpf olt, %471, %500 : vector<16x128xf32>
    %cst_166 = arith.constant 0.000000e+00 : f32
    %502 = vector.broadcast %cst_166 : f32 to vector<16x128xf32>
    %503 = arith.subf %502, %499 : vector<16x128xf32>
    %504 = arith.select %501, %503, %499 : vector<16x128xi1>, vector<16x128xf32>
    %cst_167 = arith.constant 5.000000e-01 : f32
    %505 = vector.broadcast %cst_167 : f32 to vector<16x128xf32>
    %506 = arith.mulf %505, %469 : vector<16x128xf32>
    %cst_168 = arith.constant 1.000000e+00 : f32
    %507 = vector.broadcast %cst_168 : f32 to vector<16x128xf32>
    %508 = arith.addf %507, %504 : vector<16x128xf32>
    %509 = arith.mulf %506, %508 : vector<16x128xf32>
    %510 = arith.truncf %509 : vector<16x128xf32> to vector<16x128xbf16>
    %cst_169 = arith.constant dense<0.000000e+00> : vector<16x32xf32>
    %511 = tpu.matmul %510, %20, %cst_169 {dimension_numbers = #tpu.dot_dimension_numbers<[1], [0], [0], [1], [0, 0, 1, 1], [], []>} : vector<16x128xbf16>, vector<128x32xbf16>, vector<16x32xf32> -> vector<16x32xf32>
    %512 = arith.addf %465, %511 : vector<16x32xf32>
    %513 = vector.broadcast %21 : vector<1x32xf32> to vector<16x32xf32>
    %514 = arith.addf %512, %513 : vector<16x32xf32>
    %cst_170 = arith.constant dense<0.000000e+00> : vector<16xf32>
    %515 = vector.multi_reduction <add>, %514, %cst_170 [1] : vector<16x32xf32> to vector<16xf32>
    %516 = vector.shape_cast %515 : vector<16xf32> to vector<16x1xf32>
    %cst_171 = arith.constant 3.200000e+01 : f32
    %517 = vector.broadcast %cst_171 : f32 to vector<16x1xf32>
    %518 = arith.divf %516, %517 : vector<16x1xf32>
    %519 = vector.broadcast %518 : vector<16x1xf32> to vector<16x32xf32>
    %520 = arith.subf %514, %519 : vector<16x32xf32>
    %521 = arith.mulf %520, %520 : vector<16x32xf32>
    %cst_172 = arith.constant dense<0.000000e+00> : vector<16xf32>
    %522 = vector.multi_reduction <add>, %521, %cst_172 [1] : vector<16x32xf32> to vector<16xf32>
    %523 = vector.shape_cast %522 : vector<16xf32> to vector<16x1xf32>
    %cst_173 = arith.constant 3.200000e+01 : f32
    %524 = vector.broadcast %cst_173 : f32 to vector<16x1xf32>
    %525 = arith.divf %523, %524 : vector<16x1xf32>
    %526 = vector.broadcast %518 : vector<16x1xf32> to vector<16x32xf32>
    %527 = arith.subf %514, %526 : vector<16x32xf32>
    %cst_174 = arith.constant 9.99999974E-6 : f32
    %528 = vector.broadcast %cst_174 : f32 to vector<16x1xf32>
    %529 = arith.addf %525, %528 : vector<16x1xf32>
    %530 = math.rsqrt %529 : vector<16x1xf32>
    %531 = vector.broadcast %530 : vector<16x1xf32> to vector<16x32xf32>
    %532 = arith.mulf %527, %531 : vector<16x32xf32>
    %533 = vector.broadcast %22 : vector<1x32xf32> to vector<16x32xf32>
    %534 = arith.mulf %532, %533 : vector<16x32xf32>
    %535 = vector.broadcast %23 : vector<1x32xf32> to vector<16x32xf32>
    %536 = arith.addf %534, %535 : vector<16x32xf32>
    %c0_175 = arith.constant 0 : index
    %c0_176 = arith.constant 0 : index
    %537 = vector.load %arg28[%c0_175, %c0_176] : memref<16x32xf32, #tpu.memory_space<vmem>>, vector<16x32xf32>
    tpu.vector_store %arg28[%c0_175, %c0_176], %536 {strides = array<i32>} : memref<16x32xf32, #tpu.memory_space<vmem>>, vector<16x32xf32>,
    return
  }
  func.func @transform_0(%arg0: i32, %arg1: i32) -> (i32, i32) {
    %c2_i32 = arith.constant 2 : i32
    %0 = arith.muli %arg0, %c2_i32 : i32
    %1 = arith.addi %0, %arg1 : i32
    %c0_i32 = arith.constant 0 : i32
    %c0_i32_0 = arith.constant 0 : i32
    return %1, %c0_i32 : i32, i32
  }
  func.func @transform_1(%arg0: i32, %arg1: i32) -> (i32, i32) {
    %c0_i32 = arith.constant 0 : i32
    %c0_i32_0 = arith.constant 0 : i32
    return %arg1, %c0_i32 : i32, i32
  }
  func.func @transform_2(%arg0: i32, %arg1: i32) -> (i32, i32, i32) {
    %c0_i32 = arith.constant 0 : i32
    %c0_i32_0 = arith.constant 0 : i32
    %c0_i32_1 = arith.constant 0 : i32
    %c0_i32_2 = arith.constant 0 : i32
    return %c0_i32, %c0_i32_0, %c0_i32_1 : i32, i32, i32
  }
  func.func @transform_3(%arg0: i32, %arg1: i32) -> (i32, i32, i32) {
    %c0_i32 = arith.constant 0 : i32
    %c0_i32_0 = arith.constant 0 : i32
    %c0_i32_1 = arith.constant 0 : i32
    %c0_i32_2 = arith.constant 0 : i32
    return %c0_i32, %c0_i32_0, %c0_i32_1 : i32, i32, i32
  }
  func.func @transform_4(%arg0: i32, %arg1: i32) -> (i32, i32, i32) {
    %c0_i32 = arith.constant 0 : i32
    %c0_i32_0 = arith.constant 0 : i32
    %c0_i32_1 = arith.constant 0 : i32
    %c0_i32_2 = arith.constant 0 : i32
    return %c0_i32, %c0_i32_0, %c0_i32_1 : i32, i32, i32
  }
  func.func @transform_5(%arg0: i32, %arg1: i32) -> (i32, i32, i32) {
    %c0_i32 = arith.constant 0 : i32
    %c0_i32_0 = arith.constant 0 : i32
    %c0_i32_1 = arith.constant 0 : i32
    %c0_i32_2 = arith.constant 0 : i32
    return %c0_i32, %c0_i32_0, %c0_i32_1 : i32, i32, i32
  }
  func.func @transform_6(%arg0: i32, %arg1: i32) -> (i32, i32, i32) {
    %c0_i32 = arith.constant 0 : i32
    %c0_i32_0 = arith.constant 0 : i32
    %c0_i32_1 = arith.constant 0 : i32
    %c0_i32_2 = arith.constant 0 : i32
    return %c0_i32, %c0_i32_0, %c0_i32_1 : i32, i32, i32
  }
  func.func @transform_7(%arg0: i32, %arg1: i32) -> (i32, i32, i32) {
    %c0_i32 = arith.constant 0 : i32
    %c0_i32_0 = arith.constant 0 : i32
    %c0_i32_1 = arith.constant 0 : i32
    %c0_i32_2 = arith.constant 0 : i32
    return %c0_i32, %c0_i32_0, %c0_i32_1 : i32, i32, i32
  }
  func.func @transform_8(%arg0: i32, %arg1: i32) -> (i32, i32, i32) {
    %c0_i32 = arith.constant 0 : i32
    %c0_i32_0 = arith.constant 0 : i32
    %c0_i32_1 = arith.constant 0 : i32
    %c0_i32_2 = arith.constant 0 : i32
    return %c0_i32, %c0_i32_0, %c0_i32_1 : i32, i32, i32
  }
  func.func @transform_9(%arg0: i32, %arg1: i32) -> (i32, i32) {
    %c0_i32 = arith.constant 0 : i32
    %c0_i32_0 = arith.constant 0 : i32
    %c0_i32_1 = arith.constant 0 : i32
    return %c0_i32, %c0_i32_0 : i32, i32
  }
  func.func @transform_10(%arg0: i32, %arg1: i32) -> (i32, i32, i32) {
    %c0_i32 = arith.constant 0 : i32
    %c0_i32_0 = arith.constant 0 : i32
    %c0_i32_1 = arith.constant 0 : i32
    %c0_i32_2 = arith.constant 0 : i32
    return %c0_i32, %c0_i32_0, %c0_i32_1 : i32, i32, i32
  }
  func.func @transform_11(%arg0: i32, %arg1: i32) -> (i32, i32, i32) {
    %c0_i32 = arith.constant 0 : i32
    %c0_i32_0 = arith.constant 0 : i32
    %c0_i32_1 = arith.constant 0 : i32
    %c0_i32_2 = arith.constant 0 : i32
    return %c0_i32, %c0_i32_0, %c0_i32_1 : i32, i32, i32
  }
  func.func @transform_12(%arg0: i32, %arg1: i32) -> (i32, i32, i32) {
    %c0_i32 = arith.constant 0 : i32
    %c0_i32_0 = arith.constant 0 : i32
    %c0_i32_1 = arith.constant 0 : i32
    %c0_i32_2 = arith.constant 0 : i32
    return %c0_i32, %c0_i32_0, %c0_i32_1 : i32, i32, i32
  }
  func.func @transform_13(%arg0: i32, %arg1: i32) -> (i32, i32, i32) {
    %c0_i32 = arith.constant 0 : i32
    %c0_i32_0 = arith.constant 0 : i32
    %c0_i32_1 = arith.constant 0 : i32
    %c0_i32_2 = arith.constant 0 : i32
    return %c0_i32, %c0_i32_0, %c0_i32_1 : i32, i32, i32
  }
  func.func @transform_14(%arg0: i32, %arg1: i32) -> (i32, i32, i32) {
    %c0_i32 = arith.constant 0 : i32
    %c0_i32_0 = arith.constant 0 : i32
    %c0_i32_1 = arith.constant 0 : i32
    %c0_i32_2 = arith.constant 0 : i32
    return %c0_i32, %c0_i32_0, %c0_i32_1 : i32, i32, i32
  }
  func.func @transform_15(%arg0: i32, %arg1: i32) -> (i32, i32, i32) {
    %c0_i32 = arith.constant 0 : i32
    %c0_i32_0 = arith.constant 0 : i32
    %c0_i32_1 = arith.constant 0 : i32
    %c0_i32_2 = arith.constant 0 : i32
    return %c0_i32, %c0_i32_0, %c0_i32_1 : i32, i32, i32
  }
  func.func @transform_16(%arg0: i32, %arg1: i32) -> (i32, i32, i32) {
    %c0_i32 = arith.constant 0 : i32
    %c0_i32_0 = arith.constant 0 : i32
    %c0_i32_1 = arith.constant 0 : i32
    %c0_i32_2 = arith.constant 0 : i32
    return %c0_i32, %c0_i32_0, %c0_i32_1 : i32, i32, i32
  }
  func.func @transform_17(%arg0: i32, %arg1: i32) -> (i32, i32) {
    %c0_i32 = arith.constant 0 : i32
    %c0_i32_0 = arith.constant 0 : i32
    %c0_i32_1 = arith.constant 0 : i32
    return %c0_i32, %c0_i32_0 : i32, i32
  }
  func.func @transform_18(%arg0: i32, %arg1: i32) -> (i32, i32) {
    %c0_i32 = arith.constant 0 : i32
    %c0_i32_0 = arith.constant 0 : i32
    %c0_i32_1 = arith.constant 0 : i32
    return %c0_i32, %c0_i32_0 : i32, i32
  }
  func.func @transform_19(%arg0: i32, %arg1: i32) -> (i32, i32) {
    %c0_i32 = arith.constant 0 : i32
    %c0_i32_0 = arith.constant 0 : i32
    %c0_i32_1 = arith.constant 0 : i32
    return %c0_i32, %c0_i32_0 : i32, i32
  }
  func.func @transform_20(%arg0: i32, %arg1: i32) -> (i32, i32) {
    %c0_i32 = arith.constant 0 : i32
    %c0_i32_0 = arith.constant 0 : i32
    %c0_i32_1 = arith.constant 0 : i32
    return %c0_i32, %c0_i32_0 : i32, i32
  }
  func.func @transform_21(%arg0: i32, %arg1: i32) -> (i32, i32) {
    %c0_i32 = arith.constant 0 : i32
    %c0_i32_0 = arith.constant 0 : i32
    %c0_i32_1 = arith.constant 0 : i32
    return %c0_i32, %c0_i32_0 : i32, i32
  }
  func.func @transform_22(%arg0: i32, %arg1: i32) -> (i32, i32) {
    %c0_i32 = arith.constant 0 : i32
    %c0_i32_0 = arith.constant 0 : i32
    %c0_i32_1 = arith.constant 0 : i32
    return %c0_i32, %c0_i32_0 : i32, i32
  }
  func.func @transform_23(%arg0: i32, %arg1: i32) -> (i32, i32) {
    %c0_i32 = arith.constant 0 : i32
    %c0_i32_0 = arith.constant 0 : i32
    %c0_i32_1 = arith.constant 0 : i32
    return %c0_i32, %c0_i32_0 : i32, i32
  }
  func.func @transform_24(%arg0: i32, %arg1: i32) -> (i32, i32) {
    %c0_i32 = arith.constant 0 : i32
    %c0_i32_0 = arith.constant 0 : i32
    %c0_i32_1 = arith.constant 0 : i32
    return %c0_i32, %c0_i32_0 : i32, i32
  }
  func.func @transform_25(%arg0: i32, %arg1: i32) -> (i32, i32) {
    %c0_i32 = arith.constant 0 : i32
    %c0_i32_0 = arith.constant 0 : i32
    %c0_i32_1 = arith.constant 0 : i32
    return %c0_i32, %c0_i32_0 : i32, i32
  }
  func.func @transform_26(%arg0: i32, %arg1: i32) -> (i32, i32) {
    %c2_i32 = arith.constant 2 : i32
    %0 = arith.muli %arg0, %c2_i32 : i32
    %1 = arith.addi %0, %arg1 : i32
    %c0_i32 = arith.constant 0 : i32
    %c0_i32_0 = arith.constant 0 : i32
    return %1, %c0_i32 : i32, i32
  }
}

</mosaic_0001>

<llo_original>
// kernel: two_stage_attention.2
$region0: #{two_stage_attention.2}
  #allocation0 [shape = 'u32[]', space=smem, size = 0x4, offset = 0x4, fixed_abs, tag = 'smem constant byte address 0x4 - core index']
  #allocation1 [shape = 'u32[144,128]{1,0:T(1,128)}', space=vmem, size = 0x12000, scoped, tag = 'internal scratch']
  %s0 = inlined_call_operand.vmem [shape: bf16[64,32], index: 0, kind: input, shape index: {}]
  %s1 = inlined_call_operand.vmem [shape: bf16[4,32,8], index: 1, kind: input, shape index: {}]
  %s2 = inlined_call_operand.vmem [shape: f32[4,1,8], index: 2, kind: input, shape index: {}]
  %s3 = inlined_call_operand.vmem [shape: bf16[4,32,8], index: 3, kind: input, shape index: {}]
  %s4 = inlined_call_operand.vmem [shape: f32[4,1,8], index: 4, kind: input, shape index: {}]
  %s5 = inlined_call_operand.vmem [shape: bf16[4,32,8], index: 5, kind: input, shape index: {}]
  %s6 = inlined_call_operand.vmem [shape: f32[4,1,8], index: 6, kind: input, shape index: {}]
  %s7 = inlined_call_operand.vmem [shape: bf16[4,8,32], index: 7, kind: input, shape index: {}]
  %s8 = inlined_call_operand.vmem [shape: f32[1,32], index: 8, kind: input, shape index: {}]
  %s9 = inlined_call_operand.vmem [shape: f32[1,32], index: 9, kind: input, shape index: {}]
  %s10 = inlined_call_operand.vmem [shape: f32[1,32], index: 10, kind: input, shape index: {}]
  %s11 = inlined_call_operand.vmem [shape: bf16[32,128], index: 11, kind: input, shape index: {}]
  %s12 = inlined_call_operand.vmem [shape: f32[1,128], index: 12, kind: input, shape index: {}]
  %s13 = inlined_call_operand.vmem [shape: bf16[128,32], index: 13, kind: input, shape index: {}]
  %s14 = inlined_call_operand.vmem [shape: f32[1,32], index: 14, kind: input, shape index: {}]
  %s15 = inlined_call_operand.vmem [shape: f32[1,32], index: 15, kind: input, shape index: {}]
  %s16 = inlined_call_operand.vmem [shape: f32[1,32], index: 16, kind: input, shape index: {}]
  %s17 = inlined_call_operand.vmem [shape: bf16[64,32], index: 17, kind: output, shape index: {}]
  %s18 = sld [smem:[#allocation0]]
  $region101: #{two_stage_attention.2} parent=0
    _
  %s20 = ssub.s32 1, %s18
  %s21 = scalar_select 0, %s20, %s18
  loop: start=0, step=1, limit=6
  $region2: #{two_stage_attention.2} parent=0 // loop_pre_header
    _
  $region3: #{two_stage_attention.2} parent=0 // loop_header
    %s23 = sphi 0, %s27
    %p24 = scmp.ge.s32.totalorder %s23, 6
    %s33 = sphi 0, %s35
    %s36 = sphi 0, %s33
    %s37 = sphi 0, %s36
    %s53 = sphi 0, %s37
    %s57 = sphi 0, %s57
    %s59 = sphi 0, %s57
    %s60 = sphi 0, %s59
    %s74 = sphi 0, %s60
    %s78 = sphi 0, %s78
    %s80 = sphi 0, %s78
    %s81 = sphi 0, %s80
    %s95 = sphi 0, %s81
    %s99 = sphi 0, %s99
    %s101 = sphi 0, %s99
    %s102 = sphi 0, %s101
    %s116 = sphi 0, %s102
    %s120 = sphi 0, %s120
    %s122 = sphi 0, %s120
    %s123 = sphi 0, %s122
    %s137 = sphi 0, %s123
    %s141 = sphi 0, %s141
    %s143 = sphi 0, %s141
    %s144 = sphi 0, %s143
    %s158 = sphi 0, %s144
    %s162 = sphi 0, %s162
    %s164 = sphi 0, %s162
    %s165 = sphi 0, %s164
    %s179 = sphi 0, %s165
    %s183 = sphi 0, %s183
    %s185 = sphi 0, %s183
    %s186 = sphi 0, %s185
    %s200 = sphi 0, %s186
    %s204 = sphi 0, %s204
    %s206 = sphi 0, %s204
    %s207 = sphi 0, %s206
    %s221 = sphi 0, %s207
    %s225 = sphi 0, %s225
    %s227 = sphi 0, %s225
    %s228 = sphi 0, %s227
    %s242 = sphi 0, %s228
    %s246 = sphi 0, %s246
    %s248 = sphi 0, %s246
    %s249 = sphi 0, %s248
    %s263 = sphi 0, %s249
    %s267 = sphi 0, %s267
    %s269 = sphi 0, %s267
    %s270 = sphi 0, %s269
    %s284 = sphi 0, %s270
    %s288 = sphi 0, %s288
    %s290 = sphi 0, %s288
    %s291 = sphi 0, %s290
    %s305 = sphi 0, %s291
    %s309 = sphi 0, %s309
    %s311 = sphi 0, %s309
    %s312 = sphi 0, %s311
    %s326 = sphi 0, %s312
    %s330 = sphi 0, %s330
    %s332 = sphi 0, %s330
    %s333 = sphi 0, %s332
    %s347 = sphi 0, %s333
    %s351 = sphi 0, %s351
    %s353 = sphi 0, %s351
    %s354 = sphi 0, %s353
    %s368 = sphi 0, %s354
    %s372 = sphi 0, %s372
    %s374 = sphi 0, %s372
    %s375 = sphi 0, %s374
    %s389 = sphi 0, %s375
    %s395 = sphi 0, %s397
    %s398 = sphi 0, %s395
    %s399 = sphi 0, %s398
    %s415 = sphi 0, %s399
  $region4: #{two_stage_attention.2} parent=0 // loop_header_branch
    %26 = sbr.rel (%p24) target = $region8
  $region5: #{two_stage_attention.2} parent=0 // loop_body
    %s28 = ssub.s32 %s23, 1
    %s29 = ssub.s32 %s23, 2
    %s30 = sadd.s32 %s23, 1
    %s31 = ssub.s32 %s23, %s30
    %p32 = scmp.eq.s32.totalorder %s31, 0
    %s34 = sadd.s32 %s33, 1
    %s35 = scalar_select %p32, %s33, %s34
    %p38 = pneg %p32
    %p39 = scmp.eq.s32.totalorder %s23, 3
    %p40 = por %p38, %p39
    %p41 = scmp.ne.s32.totalorder %s33, %s36
    %p42 = scmp.eq.s32.totalorder %s23, 0
    %p43 = por %p41, %p42
    %p44 = scmp.ne.s32.totalorder %s33, %s36
    %p45 = scmp.eq.s32.totalorder %s28, 3
    %p46 = por %p44, %p45
    %p47 = scmp.ne.s32.totalorder %s36, %s37
    %p48 = scmp.eq.s32.totalorder %s28, 0
    %p49 = por %p47, %p48
    %p50 = scmp.ne.s32.totalorder %s36, %s37
    %p51 = scmp.eq.s32.totalorder %s29, 3
    %p52 = por %p50, %p51
    %p54 = scmp.ne.s32.totalorder %s37, %s53
    %p55 = scmp.eq.s32.totalorder %s29, 0
    %p56 = por %p54, %p55
    %s58 = sadd.s32 %s57, 1
    %p61 = scmp.eq.s32.totalorder %s23, 3
    %p62 = scmp.ne.s32.totalorder %s57, %s59
    %p63 = scmp.eq.s32.totalorder %s23, 0
    %p64 = por %p62, %p63
    %p65 = scmp.ne.s32.totalorder %s57, %s59
    %p66 = scmp.eq.s32.totalorder %s28, 3
    %p67 = por %p65, %p66
    %p68 = scmp.ne.s32.totalorder %s59, %s60
    %p69 = scmp.eq.s32.totalorder %s28, 0
    %p70 = por %p68, %p69
    %p71 = scmp.ne.s32.totalorder %s59, %s60
    %p72 = scmp.eq.s32.totalorder %s29, 3
    %p73 = por %p71, %p72
    %p75 = scmp.ne.s32.totalorder %s60, %s74
    %p76 = scmp.eq.s32.totalorder %s29, 0
    %p77 = por %p75, %p76
    %s79 = sadd.s32 %s78, 1
    %p82 = scmp.eq.s32.totalorder %s23, 3
    %p83 = scmp.ne.s32.totalorder %s78, %s80
    %p84 = scmp.eq.s32.totalorder %s23, 0
    %p85 = por %p83, %p84
    %p86 = scmp.ne.s32.totalorder %s78, %s80
    %p87 = scmp.eq.s32.totalorder %s28, 3
    %p88 = por %p86, %p87
    %p89 = scmp.ne.s32.totalorder %s80, %s81
    %p90 = scmp.eq.s32.totalorder %s28, 0
    %p91 = por %p89, %p90
    %p92 = scmp.ne.s32.totalorder %s80, %s81
    %p93 = scmp.eq.s32.totalorder %s29, 3
    %p94 = por %p92, %p93
    %p96 = scmp.ne.s32.totalorder %s81, %s95
    %p97 = scmp.eq.s32.totalorder %s29, 0
    %p98 = por %p96, %p97
    %s100 = sadd.s32 %s99, 1
    %p103 = scmp.eq.s32.totalorder %s23, 3
    %p104 = scmp.ne.s32.totalorder %s99, %s101
    %p105 = scmp.eq.s32.totalorder %s23, 0
    %p106 = por %p104, %p105
    %p107 = scmp.ne.s32.totalorder %s99, %s101
    %p108 = scmp.eq.s32.totalorder %s28, 3
    %p109 = por %p107, %p108
    %p110 = scmp.ne.s32.totalorder %s101, %s102
    %p111 = scmp.eq.s32.totalorder %s28, 0
    %p112 = por %p110, %p111
    %p113 = scmp.ne.s32.totalorder %s101, %s102
    %p114 = scmp.eq.s32.totalorder %s29, 3
    %p115 = por %p113, %p114
    %p117 = scmp.ne.s32.totalorder %s102, %s116
    %p118 = scmp.eq.s32.totalorder %s29, 0
    %p119 = por %p117, %p118
    %s121 = sadd.s32 %s120, 1
    %p124 = scmp.eq.s32.totalorder %s23, 3
    %p125 = scmp.ne.s32.totalorder %s120, %s122
    %p126 = scmp.eq.s32.totalorder %s23, 0
    %p127 = por %p125, %p126
    %p128 = scmp.ne.s32.totalorder %s120, %s122
    %p129 = scmp.eq.s32.totalorder %s28, 3
    %p130 = por %p128, %p129
    %p131 = scmp.ne.s32.totalorder %s122, %s123
    %p132 = scmp.eq.s32.totalorder %s28, 0
    %p133 = por %p131, %p132
    %p134 = scmp.ne.s32.totalorder %s122, %s123
    %p135 = scmp.eq.s32.totalorder %s29, 3
    %p136 = por %p134, %p135
    %p138 = scmp.ne.s32.totalorder %s123, %s137
    %p139 = scmp.eq.s32.totalorder %s29, 0
    %p140 = por %p138, %p139
    %s142 = sadd.s32 %s141, 1
    %p145 = scmp.eq.s32.totalorder %s23, 3
    %p146 = scmp.ne.s32.totalorder %s141, %s143
    %p147 = scmp.eq.s32.totalorder %s23, 0
    %p148 = por %p146, %p147
    %p149 = scmp.ne.s32.totalorder %s141, %s143
    %p150 = scmp.eq.s32.totalorder %s28, 3
    %p151 = por %p149, %p150
    %p152 = scmp.ne.s32.totalorder %s143, %s144
    %p153 = scmp.eq.s32.totalorder %s28, 0
    %p154 = por %p152, %p153
    %p155 = scmp.ne.s32.totalorder %s143, %s144
    %p156 = scmp.eq.s32.totalorder %s29, 3
    %p157 = por %p155, %p156
    %p159 = scmp.ne.s32.totalorder %s144, %s158
    %p160 = scmp.eq.s32.totalorder %s29, 0
    %p161 = por %p159, %p160
    %s163 = sadd.s32 %s162, 1
    %p166 = scmp.eq.s32.totalorder %s23, 3
    %p167 = scmp.ne.s32.totalorder %s162, %s164
    %p168 = scmp.eq.s32.totalorder %s23, 0
    %p169 = por %p167, %p168
    %p170 = scmp.ne.s32.totalorder %s162, %s164
    %p171 = scmp.eq.s32.totalorder %s28, 3
    %p172 = por %p170, %p171
    %p173 = scmp.ne.s32.totalorder %s164, %s165
    %p174 = scmp.eq.s32.totalorder %s28, 0
    %p175 = por %p173, %p174
    %p176 = scmp.ne.s32.totalorder %s164, %s165
    %p177 = scmp.eq.s32.totalorder %s29, 3
    %p178 = por %p176, %p177
    %p180 = scmp.ne.s32.totalorder %s165, %s179
    %p181 = scmp.eq.s32.totalorder %s29, 0
    %p182 = por %p180, %p181
    %s184 = sadd.s32 %s183, 1
    %p187 = scmp.eq.s32.totalorder %s23, 3
    %p188 = scmp.ne.s32.totalorder %s183, %s185
    %p189 = scmp.eq.s32.totalorder %s23, 0
    %p190 = por %p188, %p189
    %p191 = scmp.ne.s32.totalorder %s183, %s185
    %p192 = scmp.eq.s32.totalorder %s28, 3
    %p193 = por %p191, %p192
    %p194 = scmp.ne.s32.totalorder %s185, %s186
    %p195 = scmp.eq.s32.totalorder %s28, 0
    %p196 = por %p194, %p195
    %p197 = scmp.ne.s32.totalorder %s185, %s186
    %p198 = scmp.eq.s32.totalorder %s29, 3
    %p199 = por %p197, %p198
    %p201 = scmp.ne.s32.totalorder %s186, %s200
    %p202 = scmp.eq.s32.totalorder %s29, 0
    %p203 = por %p201, %p202
    %s205 = sadd.s32 %s204, 1
    %p208 = scmp.eq.s32.totalorder %s23, 3
    %p209 = scmp.ne.s32.totalorder %s204, %s206
    %p210 = scmp.eq.s32.totalorder %s23, 0
    %p211 = por %p209, %p210
    %p212 = scmp.ne.s32.totalorder %s204, %s206
    %p213 = scmp.eq.s32.totalorder %s28, 3
    %p214 = por %p212, %p213
    %p215 = scmp.ne.s32.totalorder %s206, %s207
    %p216 = scmp.eq.s32.totalorder %s28, 0
    %p217 = por %p215, %p216
    %p218 = scmp.ne.s32.totalorder %s206, %s207
    %p219 = scmp.eq.s32.totalorder %s29, 3
    %p220 = por %p218, %p219
    %p222 = scmp.ne.s32.totalorder %s207, %s221
    %p223 = scmp.eq.s32.totalorder %s29, 0
    %p224 = por %p222, %p223
    %s226 = sadd.s32 %s225, 1
    %p229 = scmp.eq.s32.totalorder %s23, 3
    %p230 = scmp.ne.s32.totalorder %s225, %s227
    %p231 = scmp.eq.s32.totalorder %s23, 0
    %p232 = por %p230, %p231
    %p233 = scmp.ne.s32.totalorder %s225, %s227
    %p234 = scmp.eq.s32.totalorder %s28, 3
    %p235 = por %p233, %p234
    %p236 = scmp.ne.s32.totalorder %s227, %s228
    %p237 = scmp.eq.s32.totalorder %s28, 0
    %p238 = por %p236, %p237
    %p239 = scmp.ne.s32.totalorder %s227, %s228
    %p240 = scmp.eq.s32.totalorder %s29, 3
    %p241 = por %p239, %p240
    %p243 = scmp.ne.s32.totalorder %s228, %s242
    %p244 = scmp.eq.s32.totalorder %s29, 0
    %p245 = por %p243, %p244
    %s247 = sadd.s32 %s246, 1
    %p250 = scmp.eq.s32.totalorder %s23, 3
    %p251 = scmp.ne.s32.totalorder %s246, %s248
    %p252 = scmp.eq.s32.totalorder %s23, 0
    %p253 = por %p251, %p252
    %p254 = scmp.ne.s32.totalorder %s246, %s248
    %p255 = scmp.eq.s32.totalorder %s28, 3
    %p256 = por %p254, %p255
    %p257 = scmp.ne.s32.totalorder %s248, %s249
    %p258 = scmp.eq.s32.totalorder %s28, 0
    %p259 = por %p257, %p258
    %p260 = scmp.ne.s32.totalorder %s248, %s249
    %p261 = scmp.eq.s32.totalorder %s29, 3
    %p262 = por %p260, %p261
    %p264 = scmp.ne.s32.totalorder %s249, %s263
    %p265 = scmp.eq.s32.totalorder %s29, 0
    %p266 = por %p264, %p265
    %s268 = sadd.s32 %s267, 1
    %p271 = scmp.eq.s32.totalorder %s23, 3
    %p272 = scmp.ne.s32.totalorder %s267, %s269
    %p273 = scmp.eq.s32.totalorder %s23, 0
    %p274 = por %p272, %p273
    %p275 = scmp.ne.s32.totalorder %s267, %s269
    %p276 = scmp.eq.s32.totalorder %s28, 3
    %p277 = por %p275, %p276
    %p278 = scmp.ne.s32.totalorder %s269, %s270
    %p279 = scmp.eq.s32.totalorder %s28, 0
    %p280 = por %p278, %p279
    %p281 = scmp.ne.s32.totalorder %s269, %s270
    %p282 = scmp.eq.s32.totalorder %s29, 3
    %p283 = por %p281, %p282
    %p285 = scmp.ne.s32.totalorder %s270, %s284
    %p286 = scmp.eq.s32.totalorder %s29, 0
    %p287 = por %p285, %p286
    %s289 = sadd.s32 %s288, 1
    %p292 = scmp.eq.s32.totalorder %s23, 3
    %p293 = scmp.ne.s32.totalorder %s288, %s290
    %p294 = scmp.eq.s32.totalorder %s23, 0
    %p295 = por %p293, %p294
    %p296 = scmp.ne.s32.totalorder %s288, %s290
    %p297 = scmp.eq.s32.totalorder %s28, 3
    %p298 = por %p296, %p297
    %p299 = scmp.ne.s32.totalorder %s290, %s291
    %p300 = scmp.eq.s32.totalorder %s28, 0
    %p301 = por %p299, %p300
    %p302 = scmp.ne.s32.totalorder %s290, %s291
    %p303 = scmp.eq.s32.totalorder %s29, 3
    %p304 = por %p302, %p303
    %p306 = scmp.ne.s32.totalorder %s291, %s305
    %p307 = scmp.eq.s32.totalorder %s29, 0
    %p308 = por %p306, %p307
    %s310 = sadd.s32 %s309, 1
    %p313 = scmp.eq.s32.totalorder %s23, 3
    %p314 = scmp.ne.s32.totalorder %s309, %s311
    %p315 = scmp.eq.s32.totalorder %s23, 0
    %p316 = por %p314, %p315
    %p317 = scmp.ne.s32.totalorder %s309, %s311
    %p318 = scmp.eq.s32.totalorder %s28, 3
    %p319 = por %p317, %p318
    %p320 = scmp.ne.s32.totalorder %s311, %s312
    %p321 = scmp.eq.s32.totalorder %s28, 0
    %p322 = por %p320, %p321
    %p323 = scmp.ne.s32.totalorder %s311, %s312
    %p324 = scmp.eq.s32.totalorder %s29, 3
    %p325 = por %p323, %p324
    %p327 = scmp.ne.s32.totalorder %s312, %s326
    %p328 = scmp.eq.s32.totalorder %s29, 0
    %p329 = por %p327, %p328
    %s331 = sadd.s32 %s330, 1
    %p334 = scmp.eq.s32.totalorder %s23, 3
    %p335 = scmp.ne.s32.totalorder %s330, %s332
    %p336 = scmp.eq.s32.totalorder %s23, 0
    %p337 = por %p335, %p336
    %p338 = scmp.ne.s32.totalorder %s330, %s332
    %p339 = scmp.eq.s32.totalorder %s28, 3
    %p340 = por %p338, %p339
    %p341 = scmp.ne.s32.totalorder %s332, %s333
    %p342 = scmp.eq.s32.totalorder %s28, 0
    %p343 = por %p341, %p342
    %p344 = scmp.ne.s32.totalorder %s332, %s333
    %p345 = scmp.eq.s32.totalorder %s29, 3
    %p346 = por %p344, %p345
    %p348 = scmp.ne.s32.totalorder %s333, %s347
    %p349 = scmp.eq.s32.totalorder %s29, 0
    %p350 = por %p348, %p349
    %s352 = sadd.s32 %s351, 1
    %p355 = scmp.eq.s32.totalorder %s23, 3
    %p356 = scmp.ne.s32.totalorder %s351, %s353
    %p357 = scmp.eq.s32.totalorder %s23, 0
    %p358 = por %p356, %p357
    %p359 = scmp.ne.s32.totalorder %s351, %s353
    %p360 = scmp.eq.s32.totalorder %s28, 3
    %p361 = por %p359, %p360
    %p362 = scmp.ne.s32.totalorder %s353, %s354
    %p363 = scmp.eq.s32.totalorder %s28, 0
    %p364 = por %p362, %p363
    %p365 = scmp.ne.s32.totalorder %s353, %s354
    %p366 = scmp.eq.s32.totalorder %s29, 3
    %p367 = por %p365, %p366
    %p369 = scmp.ne.s32.totalorder %s354, %s368
    %p370 = scmp.eq.s32.totalorder %s29, 0
    %p371 = por %p369, %p370
    %s373 = sadd.s32 %s372, 1
    %p376 = scmp.eq.s32.totalorder %s23, 3
    %p377 = scmp.ne.s32.totalorder %s372, %s374
    %p378 = scmp.eq.s32.totalorder %s23, 0
    %p379 = por %p377, %p378
    %p380 = scmp.ne.s32.totalorder %s372, %s374
    %p381 = scmp.eq.s32.totalorder %s28, 3
    %p382 = por %p380, %p381
    %p383 = scmp.ne.s32.totalorder %s374, %s375
    %p384 = scmp.eq.s32.totalorder %s28, 0
    %p385 = por %p383, %p384
    %p386 = scmp.ne.s32.totalorder %s374, %s375
    %p387 = scmp.eq.s32.totalorder %s29, 3
    %p388 = por %p386, %p387
    %p390 = scmp.ne.s32.totalorder %s375, %s389
    %p391 = scmp.eq.s32.totalorder %s29, 0
    %p392 = por %p390, %p391
    %s393 = ssub.s32 %s23, %s30
    %p394 = scmp.eq.s32.totalorder %s393, 0
    %s396 = sadd.s32 %s395, 1
    %s397 = scalar_select %p394, %s395, %s396
    %p400 = pneg %p394
    %p401 = scmp.eq.s32.totalorder %s23, 3
    %p402 = por %p400, %p401
    %p403 = scmp.ne.s32.totalorder %s395, %s398
    %p404 = scmp.eq.s32.totalorder %s23, 0
    %p405 = por %p403, %p404
    %p406 = scmp.ne.s32.totalorder %s395, %s398
    %p407 = scmp.eq.s32.totalorder %s28, 3
    %p408 = por %p406, %p407
    %p409 = scmp.ne.s32.totalorder %s398, %s399
    %p410 = scmp.eq.s32.totalorder %s28, 0
    %p411 = por %p409, %p410
    %p412 = scmp.ne.s32.totalorder %s398, %s399
    %p413 = scmp.eq.s32.totalorder %s29, 3
    %p414 = por %p412, %p413
    %p416 = scmp.ne.s32.totalorder %s399, %s415
    %p417 = scmp.eq.s32.totalorder %s29, 0
    %p418 = por %p416, %p417
    %p419 = scmp.le.s32.totalorder 1, %s23
    %p420 = scmp.lt.s32.totalorder %s23, 5
    %p421 = pnand %p419, %p420
    %p422 = pneg %p421
    // Predicated region
    $region9: #{two_stage_attention.2} parent=5 // pred_check
      _
    $region10: #{two_stage_attention.2} parent=5 // pred_check_branch
      %424 = sbr.rel (%p421) target = $region12
    $region11: #{two_stage_attention.2} parent=5 // pred_region
      %s425 = ssub.s32 %s23, 1
      // Predicated region
      $region13: #{two_stage_attention.2} parent=11 // pred_check
        %p426 = pneg %p70
      $region14: #{two_stage_attention.2} parent=11 // pred_check_branch
        %428 = sbr.rel (%p426) target = $region16
      $region15: #{two_stage_attention.2} parent=11 // pred_region
        _
      $region16: #{two_stage_attention.2} parent=11 // pred_fallthru
        _
      // Predicated region
      $region17: #{two_stage_attention.2} parent=11 // pred_check
        %p429 = pneg %p91
      $region18: #{two_stage_attention.2} parent=11 // pred_check_branch
        %431 = sbr.rel (%p429) target = $region20
      $region19: #{two_stage_attention.2} parent=11 // pred_region
        _
      $region20: #{two_stage_attention.2} parent=11 // pred_fallthru
        _
      // Predicated region
      $region21: #{two_stage_attention.2} parent=11 // pred_check
        %p432 = pneg %p112
      $region22: #{two_stage_attention.2} parent=11 // pred_check_branch
        %434 = sbr.rel (%p432) target = $region24
      $region23: #{two_stage_attention.2} parent=11 // pred_region
        _
      $region24: #{two_stage_attention.2} parent=11 // pred_fallthru
        _
      // Predicated region
      $region25: #{two_stage_attention.2} parent=11 // pred_check
        %p435 = pneg %p133
      $region26: #{two_stage_attention.2} parent=11 // pred_check_branch
        %437 = sbr.rel (%p435) target = $region28
      $region27: #{two_stage_attention.2} parent=11 // pred_region
        _
      $region28: #{two_stage_attention.2} parent=11 // pred_fallthru
        _
      // Predicated region
      $region29: #{two_stage_attention.2} parent=11 // pred_check
        %p438 = pneg %p154
      $region30: #{two_stage_attention.2} parent=11 // pred_check_branch
        %440 = sbr.rel (%p438) target = $region32
      $region31: #{two_stage_attention.2} parent=11 // pred_region
        _
      $region32: #{two_stage_attention.2} parent=11 // pred_fallthru
        _
      // Predicated region
      $region33: #{two_stage_attention.2} parent=11 // pred_check
        %p441 = pneg %p175
      $region34: #{two_stage_attention.2} parent=11 // pred_check_branch
        %443 = sbr.rel (%p441) target = $region36
      $region35: #{two_stage_attention.2} parent=11 // pred_region
        _
      $region36: #{two_stage_attention.2} parent=11 // pred_fallthru
        _
      // Predicated region
      $region37: #{two_stage_attention.2} parent=11 // pred_check
        %p444 = pneg %p196
      $region38: #{two_stage_attention.2} parent=11 // pred_check_branch
        %446 = sbr.rel (%p444) target = $region40
      $region39: #{two_stage_attention.2} parent=11 // pred_region
        _
      $region40: #{two_stage_attention.2} parent=11 // pred_fallthru
        _
      // Predicated region
      $region41: #{two_stage_attention.2} parent=11 // pred_check
        %p447 = pneg %p217
      $region42: #{two_stage_attention.2} parent=11 // pred_check_branch
        %449 = sbr.rel (%p447) target = $region44
      $region43: #{two_stage_attention.2} parent=11 // pred_region
        _
      $region44: #{two_stage_attention.2} parent=11 // pred_fallthru
        _
      // Predicated region
      $region45: #{two_stage_attention.2} parent=11 // pred_check
        %p450 = pneg %p238
      $region46: #{two_stage_attention.2} parent=11 // pred_check_branch
        %452 = sbr.rel (%p450) target = $region48
      $region47: #{two_stage_attention.2} parent=11 // pred_region
        _
      $region48: #{two_stage_attention.2} parent=11 // pred_fallthru
        _
      // Predicated region
      $region49: #{two_stage_attention.2} parent=11 // pred_check
        %p453 = pneg %p259
      $region50: #{two_stage_attention.2} parent=11 // pred_check_branch
        %455 = sbr.rel (%p453) target = $region52
      $region51: #{two_stage_attention.2} parent=11 // pred_region
        _
      $region52: #{two_stage_attention.2} parent=11 // pred_fallthru
        _
      // Predicated region
      $region53: #{two_stage_attention.2} parent=11 // pred_check
        %p456 = pneg %p280
      $region54: #{two_stage_attention.2} parent=11 // pred_check_branch
        %458 = sbr.rel (%p456) target = $region56
      $region55: #{two_stage_attention.2} parent=11 // pred_region
        _
      $region56: #{two_stage_attention.2} parent=11 // pred_fallthru
        _
      // Predicated region
      $region57: #{two_stage_attention.2} parent=11 // pred_check
        %p459 = pneg %p301
      $region58: #{two_stage_attention.2} parent=11 // pred_check_branch
        %461 = sbr.rel (%p459) target = $region60
      $region59: #{two_stage_attention.2} parent=11 // pred_region
        _
      $region60: #{two_stage_attention.2} parent=11 // pred_fallthru
        _
      // Predicated region
      $region61: #{two_stage_attention.2} parent=11 // pred_check
        %p462 = pneg %p322
      $region62: #{two_stage_attention.2} parent=11 // pred_check_branch
        %464 = sbr.rel (%p462) target = $region64
      $region63: #{two_stage_attention.2} parent=11 // pred_region
        _
      $region64: #{two_stage_attention.2} parent=11 // pred_fallthru
        _
      // Predicated region
      $region65: #{two_stage_attention.2} parent=11 // pred_check
        %p465 = pneg %p343
      $region66: #{two_stage_attention.2} parent=11 // pred_check_branch
        %467 = sbr.rel (%p465) target = $region68
      $region67: #{two_stage_attention.2} parent=11 // pred_region
        _
      $region68: #{two_stage_attention.2} parent=11 // pred_fallthru
        _
      // Predicated region
      $region69: #{two_stage_attention.2} parent=11 // pred_check
        %p468 = pneg %p364
      $region70: #{two_stage_attention.2} parent=11 // pred_check_branch
        %470 = sbr.rel (%p468) target = $region72
      $region71: #{two_stage_attention.2} parent=11 // pred_region
        _
      $region72: #{two_stage_attention.2} parent=11 // pred_fallthru
        _
      // Predicated region
      $region73: #{two_stage_attention.2} parent=11 // pred_check
        %p471 = pneg %p385
      $region74: #{two_stage_attention.2} parent=11 // pred_check_branch
        %473 = sbr.rel (%p471) target = $region76
      $region75: #{two_stage_attention.2} parent=11 // pred_region
        _
      $region76: #{two_stage_attention.2} parent=11 // pred_fallthru
        _
    $region12: #{two_stage_attention.2} parent=5 // pred_fallthru
      _
    %p474 = scmp.lt.s32.totalorder %s23, 4
    // Predicated region
    $region77: #{two_stage_attention.2} parent=5 // pred_check
      %p475 = pneg %p474
    $region78: #{two_stage_attention.2} parent=5 // pred_check_branch
      %477 = sbr.rel (%p475) target = $region80
    $region79: #{two_stage_attention.2} parent=5 // pred_region
      // Predicated region
      $region81: #{two_stage_attention.2} parent=79 // pred_check
        %p478 = pneg %p43
      $region82: #{two_stage_attention.2} parent=79 // pred_check_branch
        %480 = sbr.rel (%p478) target = $region84
      $region83: #{two_stage_attention.2} parent=79 // pred_region
        %s481 = smul.u32 2, %s23
        %p482 = scmp.lt.s32.totalorder %s481, 7
        %s483 = scalar_select %p482, %s481, 7
        %s484 = smul.addr %s483, 4
        %s485 = scalar_lea.vmem %s0, %s484
        %s486 = smul.u32 2, %s23
      $region84: #{two_stage_attention.2} parent=79 // pred_fallthru
        _
    $region80: #{two_stage_attention.2} parent=5 // pred_fallthru
      _
    %p487 = scmp.le.s32.totalorder 1, %s23
    %p488 = scmp.lt.s32.totalorder %s23, 5
    %p489 = pnand %p487, %p488
    %p490 = pneg %p489
    // Predicated region
    $region85: #{two_stage_attention.2} parent=5 // pred_check
      _
    $region86: #{two_stage_attention.2} parent=5 // pred_check_branch
      %492 = sbr.rel (%p489) target = $region88
    $region87: #{two_stage_attention.2} parent=5 // pred_region
      %s493 = ssub.s32 %s23, 1
      %s494 = smul.u32 2, %s28
      %p495 = scmp.lt.s32.totalorder %s494, 7
      %s496 = scalar_select %p495, %s494, 7
      %s497 = smul.addr %s496, 4
      %s498 = scalar_lea.vmem %s0, %s497
      %p499 = pneg %p49
      %p500 = pneg %p46
      %p501 = pneg %p70
      %p502 = pneg %p67
      %p503 = pneg %p91
      %p504 = pneg %p88
      %p505 = pneg %p112
      %p506 = pneg %p109
      %p507 = pneg %p133
      %p508 = pneg %p130
      %p509 = pneg %p154
      %p510 = pneg %p151
      %p511 = pneg %p175
      %p512 = pneg %p172
      %p513 = pneg %p196
      %p514 = pneg %p193
      %p515 = pneg %p217
      %p516 = pneg %p214
      %p517 = pneg %p238
      %p518 = pneg %p235
      %p519 = pneg %p259
      %p520 = pneg %p256
      %p521 = pneg %p280
      %p522 = pneg %p277
      %p523 = pneg %p301
      %p524 = pneg %p298
      %p525 = pneg %p322
      %p526 = pneg %p319
      %p527 = pneg %p343
      %p528 = pneg %p340
      %p529 = pneg %p364
      %p530 = pneg %p361
      %p531 = pneg %p385
      %p532 = pneg %p382
      %p533 = pneg %p411
      %p534 = pneg %p408
      %s535 = smul.u32 2, %s28
      %p536 = scmp.lt.s32.totalorder %s535, 7
      %s537 = scalar_select %p536, %s535, 7
      %s538 = smul.addr %s537, 4
      %s539 = scalar_lea.vmem %s17, %s538
      %s540 = smul.u32 2, %s28
      %p541 = scmp.lt.s32.totalorder %s540, 7
      %s542 = scalar_select %p541, %s540, 7
      %s543 = smul.addr %s542, 4
      %s544 = scalar_lea.vmem %s0, %s543
      %s545 = smul.u32 2, %s28
      %s546 = smul.u32 2, %s28
      %p547 = scmp.lt.s32.totalorder %s546, 7
      %s548 = scalar_select %p547, %s546, 7
      %s549 = smul.addr %s548, 4
      %s550 = scalar_lea.vmem %s17, %s549
      %s551 = smul.u32 2, %s28
      %v553 = vld [vmem:[%s1] sm:$0xf]
      %v554 = vld [vmem:[%s1 + $0x4] sm:$0xf]
      %v555 = vld [vmem:[%s1 + $0x8] sm:$0xf]
      %v556 = vld [vmem:[%s1 + $0xc] sm:$0xf]
      %v557 = vld [vmem:[%s1 + $0x10] sm:$0xf]
      %v558 = vld [vmem:[%s1 + $0x14] sm:$0xf]
      %v559 = vld [vmem:[%s1 + $0x18] sm:$0xf]
      %v560 = vld [vmem:[%s1 + $0x1c] sm:$0xf]
      %v561 = vld [vmem:[%s1 + $0x20] sm:$0xf]
      %v562 = vld [vmem:[%s1 + $0x24] sm:$0xf]
      %v563 = vld [vmem:[%s1 + $0x28] sm:$0xf]
      %v564 = vld [vmem:[%s1 + $0x2c] sm:$0xf]
      %v565 = vld [vmem:[%s1 + $0x30] sm:$0xf]
      %v566 = vld [vmem:[%s1 + $0x34] sm:$0xf]
      %v567 = vld [vmem:[%s1 + $0x38] sm:$0xf]
      %v568 = vld [vmem:[%s1 + $0x3c] sm:$0xf]
      %v569 = vld [vmem:[%s2] sm:$0x1]
      %v570 = vld [vmem:[%s2 + $0x1] sm:$0x1]
      %v571 = vld [vmem:[%s2 + $0x2] sm:$0x1]
      %v572 = vld [vmem:[%s2 + $0x3] sm:$0x1]
      %v573 = vld [vmem:[%s3] sm:$0xf]
      %v574 = vld [vmem:[%s3 + $0x4] sm:$0xf]
      %v575 = vld [vmem:[%s3 + $0x8] sm:$0xf]
      %v576 = vld [vmem:[%s3 + $0xc] sm:$0xf]
      %v577 = vld [vmem:[%s3 + $0x10] sm:$0xf]
      %v578 = vld [vmem:[%s3 + $0x14] sm:$0xf]
      %v579 = vld [vmem:[%s3 + $0x18] sm:$0xf]
      %v580 = vld [vmem:[%s3 + $0x1c] sm:$0xf]
      %v581 = vld [vmem:[%s3 + $0x20] sm:$0xf]
      %v582 = vld [vmem:[%s3 + $0x24] sm:$0xf]
      %v583 = vld [vmem:[%s3 + $0x28] sm:$0xf]
      %v584 = vld [vmem:[%s3 + $0x2c] sm:$0xf]
      %v585 = vld [vmem:[%s3 + $0x30] sm:$0xf]
      %v586 = vld [vmem:[%s3 + $0x34] sm:$0xf]
      %v587 = vld [vmem:[%s3 + $0x38] sm:$0xf]
      %v588 = vld [vmem:[%s3 + $0x3c] sm:$0xf]
      %v589 = vld [vmem:[%s4] sm:$0x1]
      %v590 = vld [vmem:[%s4 + $0x1] sm:$0x1]
      %v591 = vld [vmem:[%s4 + $0x2] sm:$0x1]
      %v592 = vld [vmem:[%s4 + $0x3] sm:$0x1]
      %v593 = vld [vmem:[%s5] sm:$0xf]
      %v594 = vld [vmem:[%s5 + $0x4] sm:$0xf]
      %v595 = vld [vmem:[%s5 + $0x8] sm:$0xf]
      %v596 = vld [vmem:[%s5 + $0xc] sm:$0xf]
      %v597 = vld [vmem:[%s5 + $0x10] sm:$0xf]
      %v598 = vld [vmem:[%s5 + $0x14] sm:$0xf]
      %v599 = vld [vmem:[%s5 + $0x18] sm:$0xf]
      %v600 = vld [vmem:[%s5 + $0x1c] sm:$0xf]
      %v601 = vld [vmem:[%s5 + $0x20] sm:$0xf]
      %v602 = vld [vmem:[%s5 + $0x24] sm:$0xf]
      %v603 = vld [vmem:[%s5 + $0x28] sm:$0xf]
      %v604 = vld [vmem:[%s5 + $0x2c] sm:$0xf]
      %v605 = vld [vmem:[%s5 + $0x30] sm:$0xf]
      %v606 = vld [vmem:[%s5 + $0x34] sm:$0xf]
      %v607 = vld [vmem:[%s5 + $0x38] sm:$0xf]
      %v608 = vld [vmem:[%s5 + $0x3c] sm:$0xf]
      %v609 = vld [vmem:[%s6] sm:$0x1]
      %v610 = vld [vmem:[%s6 + $0x1] sm:$0x1]
      %v611 = vld [vmem:[%s6 + $0x2] sm:$0x1]
      %v612 = vld [vmem:[%s6 + $0x3] sm:$0x1]
      %v613 = vld [vmem:[%s7] sm:$0xf]
      %v614 = vld [vmem:[%s7 + $0x4] sm:$0xf]
      %v615 = vld [vmem:[%s7 + $0x8] sm:$0xf]
      %v616 = vld [vmem:[%s7 + $0xc] sm:$0xf]
      %v617 = vld [vmem:[%s8] sm:$0x1]
      %v618 = vld [vmem:[%s9] sm:$0x1]
      %v619 = vld [vmem:[%s10] sm:$0x1]
      %v620 = vld [vmem:[%s11] sm:$0xf]
      %v621 = vld [vmem:[%s11 + $0x4] sm:$0xf]
      %v622 = vld [vmem:[%s11 + $0x8] sm:$0xf]
      %v623 = vld [vmem:[%s11 + $0xc] sm:$0xf]
      %v624 = vld [vmem:[%s12] sm:$0x1]
      %v625 = vld [vmem:[%s13] sm:$0xf]
      %v626 = vld [vmem:[%s13 + $0x4] sm:$0xf]
      %v627 = vld [vmem:[%s13 + $0x8] sm:$0xf]
      %v628 = vld [vmem:[%s13 + $0xc] sm:$0xf]
      %v629 = vld [vmem:[%s13 + $0x10] sm:$0xf]
      %v630 = vld [vmem:[%s13 + $0x14] sm:$0xf]
      %v631 = vld [vmem:[%s13 + $0x18] sm:$0xf]
      %v632 = vld [vmem:[%s13 + $0x1c] sm:$0xf]
      %v633 = vld [vmem:[%s13 + $0x20] sm:$0xf]
      %v634 = vld [vmem:[%s13 + $0x24] sm:$0xf]
      %v635 = vld [vmem:[%s13 + $0x28] sm:$0xf]
      %v636 = vld [vmem:[%s13 + $0x2c] sm:$0xf]
      %v637 = vld [vmem:[%s13 + $0x30] sm:$0xf]
      %v638 = vld [vmem:[%s13 + $0x34] sm:$0xf]
      %v639 = vld [vmem:[%s13 + $0x38] sm:$0xf]
      %v640 = vld [vmem:[%s13 + $0x3c] sm:$0xf]
      %v641 = vld [vmem:[%s14] sm:$0x1]
      %v642 = vld [vmem:[%s15] sm:$0x1]
      %v643 = vld [vmem:[%s16] sm:$0x1]
      %v644 = vld [vmem:[%s544] sm:$0xf]
      %v645 = vld [vmem:[%s544 + $0x4] sm:$0xf]
      %v646 = vunpack.c.l.bf16 %v644
      %v647 = vunpack.c.l.bf16 %v645
      %v649 = vlaneseq
      %v650 = vshrl.u32 %v649, 7
      %v651 = vsub.s32 0, %v650
      %v652 = vrot.slane %v569, %v651
      %v656 = vunpack.c.l.b16 %v644
      %v657 = vunpack.c.l.b16 %v645
      %v658 = vpack.c.b16 %v657, %v656
      %v663 = vunpack.c.l.b16 %v553
      %v664 = vunpack.c.l.b16 %v554
      %v665 = vunpack.c.l.b16 %v555
      %v666 = vunpack.c.l.b16 %v556
      %v667 = vpack.c.b16 %v664, %v663
      %v668 = vpack.c.b16 %v666, %v665
      %vm671 = vcmask 261120
      %v673 = vsel %vm671, %v658, 0
      %675 = vmatprep.subr.bf16.mxu0 0
      %676 = vmatpush1.bf16.msra.mxu0 0
      %677 = vmatprep.subr.bf16.mxu0 0
      %678 = vmatpush1.bf16.msra.mxu0 0
      %679 = vmatprep.subr.bf16.mxu0 0
      %680 = vmatpush1.bf16.msra.mxu0 0
      %681 = vmatprep.subr.bf16.mxu0 0
      %682 = vmatpush1.bf16.msra.mxu0 0
      %683 = vmatprep.subr.bf16.mxu0 0
      %684 = vmatpush1.bf16.msra.mxu0 0
      %685 = vmatprep.subr.bf16.mxu0 0
      %686 = vmatpush1.bf16.msra.mxu0 0
      %687 = vmatprep.subr.bf16.mxu0 0
      %688 = vmatpush1.bf16.msra.mxu0 %v668
      %689 = vmatprep.subr.bf16.mxu0 0
      %690 = vmatpush1.bf16.msra.mxu0 %v667
      %691 = vmatprep.subr.bf16.mxu0 0
      %692 = vmatpush2.bf16.msra.mxu0 0
      %693 = vmatprep.subr.bf16.mxu0 0
      %694 = vmatpush2.bf16.msra.mxu0 0
      %695 = vmatprep.subr.bf16.mxu0 0
      %696 = vmatpush2.bf16.msra.mxu0 0
      %697 = vmatprep.subr.bf16.mxu0 0
      %698 = vmatpush2.bf16.msra.mxu0 0
      %699 = vmatprep.subr.bf16.mxu0 0
      %700 = vmatpush2.bf16.msra.mxu0 0
      %701 = vmatprep.subr.bf16.mxu0 0
      %702 = vmatpush2.bf16.msra.mxu0 0
      %703 = vmatprep.subr.bf16.mxu0 0
      %704 = vmatpush2.bf16.msra.mxu0 0
      %705 = vmatprep.subr.bf16.mxu0 0
      %706 = vmatpush2.bf16.msra.mxu0 0
      %707 = vmatprep.mubr.bf16.mxu0 0
      %708 = vmatmul.mubr.bf16.gmra.mxu0 %v673
      %v709 = vpop.f32.mrf.mxu0
      %v710 = vadd.f32 %v652, %v709
      %v711 = vpop.f32.mrf.mxu0
      %v712 = vpop.f32.mrf.mxu0
      %v713 = vadd.f32 %v652, %v712
      %v714 = vpop.f32.mrf.mxu0
      %715 = vdwg.mxu0
      %v716 = vpack.c.bf16 %v713, %v710
      %v718 = vlaneseq
      %v719 = vshrl.u32 %v718, 7
      %v720 = vsub.s32 0, %v719
      %v721 = vrot.slane %v589, %v720
      %v727 = vunpack.c.l.b16 %v573
      %v728 = vunpack.c.l.b16 %v574
      %v729 = vunpack.c.l.b16 %v575
      %v730 = vunpack.c.l.b16 %v576
      %v731 = vpack.c.b16 %v728, %v727
      %v732 = vpack.c.b16 %v730, %v729
      %735 = vmatprep.subr.bf16.mxu0 0
      %736 = vmatpush1.bf16.msra.mxu0 0
      %737 = vmatprep.subr.bf16.mxu0 0
      %738 = vmatpush1.bf16.msra.mxu0 0
      %739 = vmatprep.subr.bf16.mxu0 0
      %740 = vmatpush1.bf16.msra.mxu0 0
      %741 = vmatprep.subr.bf16.mxu0 0
      %742 = vmatpush1.bf16.msra.mxu0 0
      %743 = vmatprep.subr.bf16.mxu0 0
      %744 = vmatpush1.bf16.msra.mxu0 0
      %745 = vmatprep.subr.bf16.mxu0 0
      %746 = vmatpush1.bf16.msra.mxu0 0
      %747 = vmatprep.subr.bf16.mxu0 0
      %748 = vmatpush1.bf16.msra.mxu0 %v732
      %749 = vmatprep.subr.bf16.mxu0 0
      %750 = vmatpush1.bf16.msra.mxu0 %v731
      %751 = vmatprep.subr.bf16.mxu0 0
      %752 = vmatpush2.bf16.msra.mxu0 0
      %753 = vmatprep.subr.bf16.mxu0 0
      %754 = vmatpush2.bf16.msra.mxu0 0
      %755 = vmatprep.subr.bf16.mxu0 0
      %756 = vmatpush2.bf16.msra.mxu0 0
      %757 = vmatprep.subr.bf16.mxu0 0
      %758 = vmatpush2.bf16.msra.mxu0 0
      %759 = vmatprep.subr.bf16.mxu0 0
      %760 = vmatpush2.bf16.msra.mxu0 0
      %761 = vmatprep.subr.bf16.mxu0 0
      %762 = vmatpush2.bf16.msra.mxu0 0
      %763 = vmatprep.subr.bf16.mxu0 0
      %764 = vmatpush2.bf16.msra.mxu0 0
      %765 = vmatprep.subr.bf16.mxu0 0
      %766 = vmatpush2.bf16.msra.mxu0 0
      %767 = vmatprep.mubr.bf16.mxu0 0
      %768 = vmatmul.mubr.bf16.gmra.mxu0 %v673
      %v769 = vpop.f32.mrf.mxu0
      %v770 = vadd.f32 %v721, %v769
      %v771 = vpop.f32.mrf.mxu0
      %v772 = vpop.f32.mrf.mxu0
      %v773 = vadd.f32 %v721, %v772
      %v774 = vpop.f32.mrf.mxu0
      %775 = vdwg.mxu0
      %v776 = vpack.c.bf16 %v773, %v770
      %v778 = vlaneseq
      %v779 = vshrl.u32 %v778, 7
      %v780 = vsub.s32 0, %v779
      %v781 = vrot.slane %v609, %v780
      %v787 = vunpack.c.l.b16 %v593
      %v788 = vunpack.c.l.b16 %v594
      %v789 = vunpack.c.l.b16 %v595
      %v790 = vunpack.c.l.b16 %v596
      %v791 = vpack.c.b16 %v788, %v787
      %v792 = vpack.c.b16 %v790, %v789
      %795 = vmatprep.subr.bf16.mxu0 0
      %796 = vmatpush1.bf16.msra.mxu0 0
      %797 = vmatprep.subr.bf16.mxu0 0
      %798 = vmatpush1.bf16.msra.mxu0 0
      %799 = vmatprep.subr.bf16.mxu0 0
      %800 = vmatpush1.bf16.msra.mxu0 0
      %801 = vmatprep.subr.bf16.mxu0 0
      %802 = vmatpush1.bf16.msra.mxu0 0
      %803 = vmatprep.subr.bf16.mxu0 0
      %804 = vmatpush1.bf16.msra.mxu0 0
      %805 = vmatprep.subr.bf16.mxu0 0
      %806 = vmatpush1.bf16.msra.mxu0 0
      %807 = vmatprep.subr.bf16.mxu0 0
      %808 = vmatpush1.bf16.msra.mxu0 %v792
      %809 = vmatprep.subr.bf16.mxu0 0
      %810 = vmatpush1.bf16.msra.mxu0 %v791
      %811 = vmatprep.subr.bf16.mxu0 0
      %812 = vmatpush2.bf16.msra.mxu0 0
      %813 = vmatprep.subr.bf16.mxu0 0
      %814 = vmatpush2.bf16.msra.mxu0 0
      %815 = vmatprep.subr.bf16.mxu0 0
      %816 = vmatpush2.bf16.msra.mxu0 0
      %817 = vmatprep.subr.bf16.mxu0 0
      %818 = vmatpush2.bf16.msra.mxu0 0
      %819 = vmatprep.subr.bf16.mxu0 0
      %820 = vmatpush2.bf16.msra.mxu0 0
      %821 = vmatprep.subr.bf16.mxu0 0
      %822 = vmatpush2.bf16.msra.mxu0 0
      %823 = vmatprep.subr.bf16.mxu0 0
      %824 = vmatpush2.bf16.msra.mxu0 0
      %825 = vmatprep.subr.bf16.mxu0 0
      %826 = vmatpush2.bf16.msra.mxu0 0
      %827 = vmatprep.mubr.bf16.mxu0 0
      %828 = vmatmul.mubr.bf16.gmra.mxu0 %v673
      %v829 = vpop.f32.mrf.mxu0
      %v830 = vadd.f32 %v781, %v829
      %v831 = vpop.f32.mrf.mxu0
      %v832 = vpop.f32.mrf.mxu0
      %v833 = vadd.f32 %v781, %v832
      %v834 = vpop.f32.mrf.mxu0
      %835 = vdwg.mxu0
      %v836 = vpack.c.bf16 %v833, %v830
      %v838 = vlaneseq
      %v839 = vshrl.u32 %v838, 7
      %v840 = vsub.s32 0, %v839
      %v841 = vrot.slane %v570, %v840
      %v847 = vunpack.c.l.b16 %v557
      %v848 = vunpack.c.l.b16 %v558
      %v849 = vunpack.c.l.b16 %v559
      %v850 = vunpack.c.l.b16 %v560
      %v851 = vpack.c.b16 %v848, %v847
      %v852 = vpack.c.b16 %v850, %v849
      %855 = vmatprep.subr.bf16.mxu0 0
      %856 = vmatpush1.bf16.msra.mxu0 0
      %857 = vmatprep.subr.bf16.mxu0 0
      %858 = vmatpush1.bf16.msra.mxu0 0
      %859 = vmatprep.subr.bf16.mxu0 0
      %860 = vmatpush1.bf16.msra.mxu0 0
      %861 = vmatprep.subr.bf16.mxu0 0
      %862 = vmatpush1.bf16.msra.mxu0 0
      %863 = vmatprep.subr.bf16.mxu0 0
      %864 = vmatpush1.bf16.msra.mxu0 0
      %865 = vmatprep.subr.bf16.mxu0 0
      %866 = vmatpush1.bf16.msra.mxu0 0
      %867 = vmatprep.subr.bf16.mxu0 0
      %868 = vmatpush1.bf16.msra.mxu0 %v852
      %869 = vmatprep.subr.bf16.mxu0 0
      %870 = vmatpush1.bf16.msra.mxu0 %v851
      %871 = vmatprep.subr.bf16.mxu0 0
      %872 = vmatpush2.bf16.msra.mxu0 0
      %873 = vmatprep.subr.bf16.mxu0 0
      %874 = vmatpush2.bf16.msra.mxu0 0
      %875 = vmatprep.subr.bf16.mxu0 0
      %876 = vmatpush2.bf16.msra.mxu0 0
      %877 = vmatprep.subr.bf16.mxu0 0
      %878 = vmatpush2.bf16.msra.mxu0 0
      %879 = vmatprep.subr.bf16.mxu0 0
      %880 = vmatpush2.bf16.msra.mxu0 0
      %881 = vmatprep.subr.bf16.mxu0 0
      %882 = vmatpush2.bf16.msra.mxu0 0
      %883 = vmatprep.subr.bf16.mxu0 0
      %884 = vmatpush2.bf16.msra.mxu0 0
      %885 = vmatprep.subr.bf16.mxu0 0
      %886 = vmatpush2.bf16.msra.mxu0 0
      %887 = vmatprep.mubr.bf16.mxu0 0
      %888 = vmatmul.mubr.bf16.gmra.mxu0 %v673
      %v889 = vpop.f32.mrf.mxu0
      %v890 = vadd.f32 %v841, %v889
      %v891 = vpop.f32.mrf.mxu0
      %v892 = vpop.f32.mrf.mxu0
      %v893 = vadd.f32 %v841, %v892
      %v894 = vpop.f32.mrf.mxu0
      %895 = vdwg.mxu0
      %v896 = vpack.c.bf16 %v893, %v890
      %v898 = vlaneseq
      %v899 = vshrl.u32 %v898, 7
      %v900 = vsub.s32 0, %v899
      %v901 = vrot.slane %v590, %v900
      %v907 = vunpack.c.l.b16 %v577
      %v908 = vunpack.c.l.b16 %v578
      %v909 = vunpack.c.l.b16 %v579
      %v910 = vunpack.c.l.b16 %v580
      %v911 = vpack.c.b16 %v908, %v907
      %v912 = vpack.c.b16 %v910, %v909
      %915 = vmatprep.subr.bf16.mxu0 0
      %916 = vmatpush1.bf16.msra.mxu0 0
      %917 = vmatprep.subr.bf16.mxu0 0
      %918 = vmatpush1.bf16.msra.mxu0 0
      %919 = vmatprep.subr.bf16.mxu0 0
      %920 = vmatpush1.bf16.msra.mxu0 0
      %921 = vmatprep.subr.bf16.mxu0 0
      %922 = vmatpush1.bf16.msra.mxu0 0
      %923 = vmatprep.subr.bf16.mxu0 0
      %924 = vmatpush1.bf16.msra.mxu0 0
      %925 = vmatprep.subr.bf16.mxu0 0
      %926 = vmatpush1.bf16.msra.mxu0 0
      %927 = vmatprep.subr.bf16.mxu0 0
      %928 = vmatpush1.bf16.msra.mxu0 %v912
      %929 = vmatprep.subr.bf16.mxu0 0
      %930 = vmatpush1.bf16.msra.mxu0 %v911
      %931 = vmatprep.subr.bf16.mxu0 0
      %932 = vmatpush2.bf16.msra.mxu0 0
      %933 = vmatprep.subr.bf16.mxu0 0
      %934 = vmatpush2.bf16.msra.mxu0 0
      %935 = vmatprep.subr.bf16.mxu0 0
      %936 = vmatpush2.bf16.msra.mxu0 0
      %937 = vmatprep.subr.bf16.mxu0 0
      %938 = vmatpush2.bf16.msra.mxu0 0
      %939 = vmatprep.subr.bf16.mxu0 0
      %940 = vmatpush2.bf16.msra.mxu0 0
      %941 = vmatprep.subr.bf16.mxu0 0
      %942 = vmatpush2.bf16.msra.mxu0 0
      %943 = vmatprep.subr.bf16.mxu0 0
      %944 = vmatpush2.bf16.msra.mxu0 0
      %945 = vmatprep.subr.bf16.mxu0 0
      %946 = vmatpush2.bf16.msra.mxu0 0
      %947 = vmatprep.mubr.bf16.mxu0 0
      %948 = vmatmul.mubr.bf16.gmra.mxu0 %v673
      %v949 = vpop.f32.mrf.mxu0
      %v950 = vadd.f32 %v901, %v949
      %v951 = vpop.f32.mrf.mxu0
      %v952 = vpop.f32.mrf.mxu0
      %v953 = vadd.f32 %v901, %v952
      %v954 = vpop.f32.mrf.mxu0
      %955 = vdwg.mxu0
      %v956 = vpack.c.bf16 %v953, %v950
      %v958 = vlaneseq
      %v959 = vshrl.u32 %v958, 7
      %v960 = vsub.s32 0, %v959
      %v961 = vrot.slane %v610, %v960
      %v967 = vunpack.c.l.b16 %v597
      %v968 = vunpack.c.l.b16 %v598
      %v969 = vunpack.c.l.b16 %v599
      %v970 = vunpack.c.l.b16 %v600
      %v971 = vpack.c.b16 %v968, %v967
      %v972 = vpack.c.b16 %v970, %v969
      %975 = vmatprep.subr.bf16.mxu0 0
      %976 = vmatpush1.bf16.msra.mxu0 0
      %977 = vmatprep.subr.bf16.mxu0 0
      %978 = vmatpush1.bf16.msra.mxu0 0
      %979 = vmatprep.subr.bf16.mxu0 0
      %980 = vmatpush1.bf16.msra.mxu0 0
      %981 = vmatprep.subr.bf16.mxu0 0
      %982 = vmatpush1.bf16.msra.mxu0 0
      %983 = vmatprep.subr.bf16.mxu0 0
      %984 = vmatpush1.bf16.msra.mxu0 0
      %985 = vmatprep.subr.bf16.mxu0 0
      %986 = vmatpush1.bf16.msra.mxu0 0
      %987 = vmatprep.subr.bf16.mxu0 0
      %988 = vmatpush1.bf16.msra.mxu0 %v972
      %989 = vmatprep.subr.bf16.mxu0 0
      %990 = vmatpush1.bf16.msra.mxu0 %v971
      %991 = vmatprep.subr.bf16.mxu0 0
      %992 = vmatpush2.bf16.msra.mxu0 0
      %993 = vmatprep.subr.bf16.mxu0 0
      %994 = vmatpush2.bf16.msra.mxu0 0
      %995 = vmatprep.subr.bf16.mxu0 0
      %996 = vmatpush2.bf16.msra.mxu0 0
      %997 = vmatprep.subr.bf16.mxu0 0
      %998 = vmatpush2.bf16.msra.mxu0 0
      %999 = vmatprep.subr.bf16.mxu0 0
      %1000 = vmatpush2.bf16.msra.mxu0 0
      %1001 = vmatprep.subr.bf16.mxu0 0
      %1002 = vmatpush2.bf16.msra.mxu0 0
      %1003 = vmatprep.subr.bf16.mxu0 0
      %1004 = vmatpush2.bf16.msra.mxu0 0
      %1005 = vmatprep.subr.bf16.mxu0 0
      %1006 = vmatpush2.bf16.msra.mxu0 0
      %1007 = vmatprep.mubr.bf16.mxu0 0
      %1008 = vmatmul.mubr.bf16.gmra.mxu0 %v673
      %v1009 = vpop.f32.mrf.mxu0
      %v1010 = vadd.f32 %v961, %v1009
      %v1011 = vpop.f32.mrf.mxu0
      %v1012 = vpop.f32.mrf.mxu0
      %v1013 = vadd.f32 %v961, %v1012
      %v1014 = vpop.f32.mrf.mxu0
      %1015 = vdwg.mxu0
      %v1016 = vpack.c.bf16 %v1013, %v1010
      %v1018 = vlaneseq
      %v1019 = vshrl.u32 %v1018, 7
      %v1020 = vsub.s32 0, %v1019
      %v1021 = vrot.slane %v571, %v1020
      %v1027 = vunpack.c.l.b16 %v561
      %v1028 = vunpack.c.l.b16 %v562
      %v1029 = vunpack.c.l.b16 %v563
      %v1030 = vunpack.c.l.b16 %v564
      %v1031 = vpack.c.b16 %v1028, %v1027
      %v1032 = vpack.c.b16 %v1030, %v1029
      %1035 = vmatprep.subr.bf16.mxu0 0
      %1036 = vmatpush1.bf16.msra.mxu0 0
      %1037 = vmatprep.subr.bf16.mxu0 0
      %1038 = vmatpush1.bf16.msra.mxu0 0
      %1039 = vmatprep.subr.bf16.mxu0 0
      %1040 = vmatpush1.bf16.msra.mxu0 0
      %1041 = vmatprep.subr.bf16.mxu0 0
      %1042 = vmatpush1.bf16.msra.mxu0 0
      %1043 = vmatprep.subr.bf16.mxu0 0
      %1044 = vmatpush1.bf16.msra.mxu0 0
      %1045 = vmatprep.subr.bf16.mxu0 0
      %1046 = vmatpush1.bf16.msra.mxu0 0
      %1047 = vmatprep.subr.bf16.mxu0 0
      %1048 = vmatpush1.bf16.msra.mxu0 %v1032
      %1049 = vmatprep.subr.bf16.mxu0 0
      %1050 = vmatpush1.bf16.msra.mxu0 %v1031
      %1051 = vmatprep.subr.bf16.mxu0 0
      %1052 = vmatpush2.bf16.msra.mxu0 0
      %1053 = vmatprep.subr.bf16.mxu0 0
      %1054 = vmatpush2.bf16.msra.mxu0 0
      %1055 = vmatprep.subr.bf16.mxu0 0
      %1056 = vmatpush2.bf16.msra.mxu0 0
      %1057 = vmatprep.subr.bf16.mxu0 0
      %1058 = vmatpush2.bf16.msra.mxu0 0
      %1059 = vmatprep.subr.bf16.mxu0 0
      %1060 = vmatpush2.bf16.msra.mxu0 0
      %1061 = vmatprep.subr.bf16.mxu0 0
      %1062 = vmatpush2.bf16.msra.mxu0 0
      %1063 = vmatprep.subr.bf16.mxu0 0
      %1064 = vmatpush2.bf16.msra.mxu0 0
      %1065 = vmatprep.subr.bf16.mxu0 0
      %1066 = vmatpush2.bf16.msra.mxu0 0
      %1067 = vmatprep.mubr.bf16.mxu0 0
      %1068 = vmatmul.mubr.bf16.gmra.mxu0 %v673
      %v1069 = vpop.f32.mrf.mxu0
      %v1070 = vadd.f32 %v1021, %v1069
      %v1071 = vpop.f32.mrf.mxu0
      %v1072 = vpop.f32.mrf.mxu0
      %v1073 = vadd.f32 %v1021, %v1072
      %v1074 = vpop.f32.mrf.mxu0
      %1075 = vdwg.mxu0
      %v1076 = vpack.c.bf16 %v1073, %v1070
      %v1078 = vlaneseq
      %v1079 = vshrl.u32 %v1078, 7
      %v1080 = vsub.s32 0, %v1079
      %v1081 = vrot.slane %v591, %v1080
      %v1087 = vunpack.c.l.b16 %v581
      %v1088 = vunpack.c.l.b16 %v582
      %v1089 = vunpack.c.l.b16 %v583
      %v1090 = vunpack.c.l.b16 %v584
      %v1091 = vpack.c.b16 %v1088, %v1087
      %v1092 = vpack.c.b16 %v1090, %v1089
      %1095 = vmatprep.subr.bf16.mxu0 0
      %1096 = vmatpush1.bf16.msra.mxu0 0
      %1097 = vmatprep.subr.bf16.mxu0 0
      %1098 = vmatpush1.bf16.msra.mxu0 0
      %1099 = vmatprep.subr.bf16.mxu0 0
      %1100 = vmatpush1.bf16.msra.mxu0 0
      %1101 = vmatprep.subr.bf16.mxu0 0
      %1102 = vmatpush1.bf16.msra.mxu0 0
      %1103 = vmatprep.subr.bf16.mxu0 0
      %1104 = vmatpush1.bf16.msra.mxu0 0
      %1105 = vmatprep.subr.bf16.mxu0 0
      %1106 = vmatpush1.bf16.msra.mxu0 0
      %1107 = vmatprep.subr.bf16.mxu0 0
      %1108 = vmatpush1.bf16.msra.mxu0 %v1092
      %1109 = vmatprep.subr.bf16.mxu0 0
      %1110 = vmatpush1.bf16.msra.mxu0 %v1091
      %1111 = vmatprep.subr.bf16.mxu0 0
      %1112 = vmatpush2.bf16.msra.mxu0 0
      %1113 = vmatprep.subr.bf16.mxu0 0
      %1114 = vmatpush2.bf16.msra.mxu0 0
      %1115 = vmatprep.subr.bf16.mxu0 0
      %1116 = vmatpush2.bf16.msra.mxu0 0
      %1117 = vmatprep.subr.bf16.mxu0 0
      %1118 = vmatpush2.bf16.msra.mxu0 0
      %1119 = vmatprep.subr.bf16.mxu0 0
      %1120 = vmatpush2.bf16.msra.mxu0 0
      %1121 = vmatprep.subr.bf16.mxu0 0
      %1122 = vmatpush2.bf16.msra.mxu0 0
      %1123 = vmatprep.subr.bf16.mxu0 0
      %1124 = vmatpush2.bf16.msra.mxu0 0
      %1125 = vmatprep.subr.bf16.mxu0 0
      %1126 = vmatpush2.bf16.msra.mxu0 0
      %1127 = vmatprep.mubr.bf16.mxu0 0
      %1128 = vmatmul.mubr.bf16.gmra.mxu0 %v673
      %v1129 = vpop.f32.mrf.mxu0
      %v1130 = vadd.f32 %v1081, %v1129
      %v1131 = vpop.f32.mrf.mxu0
      %v1132 = vpop.f32.mrf.mxu0
      %v1133 = vadd.f32 %v1081, %v1132
      %v1134 = vpop.f32.mrf.mxu0
      %1135 = vdwg.mxu0
      %v1136 = vpack.c.bf16 %v1133, %v1130
      %v1138 = vlaneseq
      %v1139 = vshrl.u32 %v1138, 7
      %v1140 = vsub.s32 0, %v1139
      %v1141 = vrot.slane %v611, %v1140
      %v1147 = vunpack.c.l.b16 %v601
      %v1148 = vunpack.c.l.b16 %v602
      %v1149 = vunpack.c.l.b16 %v603
      %v1150 = vunpack.c.l.b16 %v604
      %v1151 = vpack.c.b16 %v1148, %v1147
      %v1152 = vpack.c.b16 %v1150, %v1149
      %1155 = vmatprep.subr.bf16.mxu0 0
      %1156 = vmatpush1.bf16.msra.mxu0 0
      %1157 = vmatprep.subr.bf16.mxu0 0
      %1158 = vmatpush1.bf16.msra.mxu0 0
      %1159 = vmatprep.subr.bf16.mxu0 0
      %1160 = vmatpush1.bf16.msra.mxu0 0
      %1161 = vmatprep.subr.bf16.mxu0 0
      %1162 = vmatpush1.bf16.msra.mxu0 0
      %1163 = vmatprep.subr.bf16.mxu0 0
      %1164 = vmatpush1.bf16.msra.mxu0 0
      %1165 = vmatprep.subr.bf16.mxu0 0
      %1166 = vmatpush1.bf16.msra.mxu0 0
      %1167 = vmatprep.subr.bf16.mxu0 0
      %1168 = vmatpush1.bf16.msra.mxu0 %v1152
      %1169 = vmatprep.subr.bf16.mxu0 0
      %1170 = vmatpush1.bf16.msra.mxu0 %v1151
      %1171 = vmatprep.subr.bf16.mxu0 0
      %1172 = vmatpush2.bf16.msra.mxu0 0
      %1173 = vmatprep.subr.bf16.mxu0 0
      %1174 = vmatpush2.bf16.msra.mxu0 0
      %1175 = vmatprep.subr.bf16.mxu0 0
      %1176 = vmatpush2.bf16.msra.mxu0 0
      %1177 = vmatprep.subr.bf16.mxu0 0
      %1178 = vmatpush2.bf16.msra.mxu0 0
      %1179 = vmatprep.subr.bf16.mxu0 0
      %1180 = vmatpush2.bf16.msra.mxu0 0
      %1181 = vmatprep.subr.bf16.mxu0 0
      %1182 = vmatpush2.bf16.msra.mxu0 0
      %1183 = vmatprep.subr.bf16.mxu0 0
      %1184 = vmatpush2.bf16.msra.mxu0 0
      %1185 = vmatprep.subr.bf16.mxu0 0
      %1186 = vmatpush2.bf16.msra.mxu0 0
      %1187 = vmatprep.mubr.bf16.mxu0 0
      %1188 = vmatmul.mubr.bf16.gmra.mxu0 %v673
      %v1189 = vpop.f32.mrf.mxu0
      %v1190 = vadd.f32 %v1141, %v1189
      %v1191 = vpop.f32.mrf.mxu0
      %v1192 = vpop.f32.mrf.mxu0
      %v1193 = vadd.f32 %v1141, %v1192
      %v1194 = vpop.f32.mrf.mxu0
      %1195 = vdwg.mxu0
      %v1196 = vpack.c.bf16 %v1193, %v1190
      %v1198 = vlaneseq
      %v1199 = vshrl.u32 %v1198, 7
      %v1200 = vsub.s32 0, %v1199
      %v1201 = vrot.slane %v572, %v1200
      %v1207 = vunpack.c.l.b16 %v565
      %v1208 = vunpack.c.l.b16 %v566
      %v1209 = vunpack.c.l.b16 %v567
      %v1210 = vunpack.c.l.b16 %v568
      %v1211 = vpack.c.b16 %v1208, %v1207
      %v1212 = vpack.c.b16 %v1210, %v1209
      %1215 = vmatprep.subr.bf16.mxu0 0
      %1216 = vmatpush1.bf16.msra.mxu0 0
      %1217 = vmatprep.subr.bf16.mxu0 0
      %1218 = vmatpush1.bf16.msra.mxu0 0
      %1219 = vmatprep.subr.bf16.mxu0 0
      %1220 = vmatpush1.bf16.msra.mxu0 0
      %1221 = vmatprep.subr.bf16.mxu0 0
      %1222 = vmatpush1.bf16.msra.mxu0 0
      %1223 = vmatprep.subr.bf16.mxu0 0
      %1224 = vmatpush1.bf16.msra.mxu0 0
      %1225 = vmatprep.subr.bf16.mxu0 0
      %1226 = vmatpush1.bf16.msra.mxu0 0
      %1227 = vmatprep.subr.bf16.mxu0 0
      %1228 = vmatpush1.bf16.msra.mxu0 %v1212
      %1229 = vmatprep.subr.bf16.mxu0 0
      %1230 = vmatpush1.bf16.msra.mxu0 %v1211
      %1231 = vmatprep.subr.bf16.mxu0 0
      %1232 = vmatpush2.bf16.msra.mxu0 0
      %1233 = vmatprep.subr.bf16.mxu0 0
      %1234 = vmatpush2.bf16.msra.mxu0 0
      %1235 = vmatprep.subr.bf16.mxu0 0
      %1236 = vmatpush2.bf16.msra.mxu0 0
      %1237 = vmatprep.subr.bf16.mxu0 0
      %1238 = vmatpush2.bf16.msra.mxu0 0
      %1239 = vmatprep.subr.bf16.mxu0 0
      %1240 = vmatpush2.bf16.msra.mxu0 0
      %1241 = vmatprep.subr.bf16.mxu0 0
      %1242 = vmatpush2.bf16.msra.mxu0 0
      %1243 = vmatprep.subr.bf16.mxu0 0
      %1244 = vmatpush2.bf16.msra.mxu0 0
      %1245 = vmatprep.subr.bf16.mxu0 0
      %1246 = vmatpush2.bf16.msra.mxu0 0
      %1247 = vmatprep.mubr.bf16.mxu0 0
      %1248 = vmatmul.mubr.bf16.gmra.mxu0 %v673
      %v1249 = vpop.f32.mrf.mxu0
      %v1250 = vadd.f32 %v1201, %v1249
      %v1251 = vpop.f32.mrf.mxu0
      %v1252 = vpop.f32.mrf.mxu0
      %v1253 = vadd.f32 %v1201, %v1252
      %v1254 = vpop.f32.mrf.mxu0
      %1255 = vdwg.mxu0
      %v1256 = vpack.c.bf16 %v1253, %v1250
      %v1258 = vlaneseq
      %v1259 = vshrl.u32 %v1258, 7
      %v1260 = vsub.s32 0, %v1259
      %v1261 = vrot.slane %v592, %v1260
      %v1267 = vunpack.c.l.b16 %v585
      %v1268 = vunpack.c.l.b16 %v586
      %v1269 = vunpack.c.l.b16 %v587
      %v1270 = vunpack.c.l.b16 %v588
      %v1271 = vpack.c.b16 %v1268, %v1267
      %v1272 = vpack.c.b16 %v1270, %v1269
      %1275 = vmatprep.subr.bf16.mxu0 0
      %1276 = vmatpush1.bf16.msra.mxu0 0
      %1277 = vmatprep.subr.bf16.mxu0 0
      %1278 = vmatpush1.bf16.msra.mxu0 0
      %1279 = vmatprep.subr.bf16.mxu0 0
      %1280 = vmatpush1.bf16.msra.mxu0 0
      %1281 = vmatprep.subr.bf16.mxu0 0
      %1282 = vmatpush1.bf16.msra.mxu0 0
      %1283 = vmatprep.subr.bf16.mxu0 0
      %1284 = vmatpush1.bf16.msra.mxu0 0
      %1285 = vmatprep.subr.bf16.mxu0 0
      %1286 = vmatpush1.bf16.msra.mxu0 0
      %1287 = vmatprep.subr.bf16.mxu0 0
      %1288 = vmatpush1.bf16.msra.mxu0 %v1272
      %1289 = vmatprep.subr.bf16.mxu0 0
      %1290 = vmatpush1.bf16.msra.mxu0 %v1271
      %1291 = vmatprep.subr.bf16.mxu0 0
      %1292 = vmatpush2.bf16.msra.mxu0 0
      %1293 = vmatprep.subr.bf16.mxu0 0
      %1294 = vmatpush2.bf16.msra.mxu0 0
      %1295 = vmatprep.subr.bf16.mxu0 0
      %1296 = vmatpush2.bf16.msra.mxu0 0
      %1297 = vmatprep.subr.bf16.mxu0 0
      %1298 = vmatpush2.bf16.msra.mxu0 0
      %1299 = vmatprep.subr.bf16.mxu0 0
      %1300 = vmatpush2.bf16.msra.mxu0 0
      %1301 = vmatprep.subr.bf16.mxu0 0
      %1302 = vmatpush2.bf16.msra.mxu0 0
      %1303 = vmatprep.subr.bf16.mxu0 0
      %1304 = vmatpush2.bf16.msra.mxu0 0
      %1305 = vmatprep.subr.bf16.mxu0 0
      %1306 = vmatpush2.bf16.msra.mxu0 0
      %1307 = vmatprep.mubr.bf16.mxu0 0
      %1308 = vmatmul.mubr.bf16.gmra.mxu0 %v673
      %v1309 = vpop.f32.mrf.mxu0
      %v1310 = vadd.f32 %v1261, %v1309
      %v1311 = vpop.f32.mrf.mxu0
      %v1312 = vpop.f32.mrf.mxu0
      %v1313 = vadd.f32 %v1261, %v1312
      %v1314 = vpop.f32.mrf.mxu0
      %1315 = vdwg.mxu0
      %v1316 = vpack.c.bf16 %v1313, %v1310
      %v1318 = vlaneseq
      %v1319 = vshrl.u32 %v1318, 7
      %v1320 = vsub.s32 0, %v1319
      %v1321 = vrot.slane %v612, %v1320
      %v1327 = vunpack.c.l.b16 %v605
      %v1328 = vunpack.c.l.b16 %v606
      %v1329 = vunpack.c.l.b16 %v607
      %v1330 = vunpack.c.l.b16 %v608
      %v1331 = vpack.c.b16 %v1328, %v1327
      %v1332 = vpack.c.b16 %v1330, %v1329
      %1335 = vmatprep.subr.bf16.mxu0 0
      %1336 = vmatpush1.bf16.msra.mxu0 0
      %1337 = vmatprep.subr.bf16.mxu0 0
      %1338 = vmatpush1.bf16.msra.mxu0 0
      %1339 = vmatprep.subr.bf16.mxu0 0
      %1340 = vmatpush1.bf16.msra.mxu0 0
      %1341 = vmatprep.subr.bf16.mxu0 0
      %1342 = vmatpush1.bf16.msra.mxu0 0
      %1343 = vmatprep.subr.bf16.mxu0 0
      %1344 = vmatpush1.bf16.msra.mxu0 0
      %1345 = vmatprep.subr.bf16.mxu0 0
      %1346 = vmatpush1.bf16.msra.mxu0 0
      %1347 = vmatprep.subr.bf16.mxu0 0
      %1348 = vmatpush1.bf16.msra.mxu0 %v1332
      %1349 = vmatprep.subr.bf16.mxu0 0
      %1350 = vmatpush1.bf16.msra.mxu0 %v1331
      %1351 = vmatprep.subr.bf16.mxu0 0
      %1352 = vmatpush2.bf16.msra.mxu0 0
      %1353 = vmatprep.subr.bf16.mxu0 0
      %1354 = vmatpush2.bf16.msra.mxu0 0
      %1355 = vmatprep.subr.bf16.mxu0 0
      %1356 = vmatpush2.bf16.msra.mxu0 0
      %1357 = vmatprep.subr.bf16.mxu0 0
      %1358 = vmatpush2.bf16.msra.mxu0 0
      %1359 = vmatprep.subr.bf16.mxu0 0
      %1360 = vmatpush2.bf16.msra.mxu0 0
      %1361 = vmatprep.subr.bf16.mxu0 0
      %1362 = vmatpush2.bf16.msra.mxu0 0
      %1363 = vmatprep.subr.bf16.mxu0 0
      %1364 = vmatpush2.bf16.msra.mxu0 0
      %1365 = vmatprep.subr.bf16.mxu0 0
      %1366 = vmatpush2.bf16.msra.mxu0 0
      %1367 = vmatprep.mubr.bf16.mxu0 0
      %1368 = vmatmul.mubr.bf16.gmra.mxu0 %v673
      %v1369 = vpop.f32.mrf.mxu0
      %v1370 = vadd.f32 %v1321, %v1369
      %v1371 = vpop.f32.mrf.mxu0
      %v1372 = vpop.f32.mrf.mxu0
      %v1373 = vadd.f32 %v1321, %v1372
      %v1374 = vpop.f32.mrf.mxu0
      %1375 = vdwg.mxu0
      %v1376 = vpack.c.bf16 %v1373, %v1370
      %v1377 = vlaneseq
      %v1378 = vshrl.u32 %v1377, 7
      %v1379 = vadd.s32 %v1378, 8
      %v1380 = vlaneseq
      %v1381 = vand.u32 %v1380, 127
      %v1382 = vcvt.s32.f32 %v1378
      %v1383 = vcvt.s32.f32 %v1379
      %v1384 = vadd.f32 %v1382, 0.5
      %v1385 = vadd.f32 %v1383, 0.5
      %v1386 = vmul.f32 %v1384, 0.125
      %v1387 = vmul.f32 %v1385, 0.125
      %v1388 = vfloor.f32 %v1386
      %v1389 = vfloor.f32 %v1387
      %v1390 = vcvt.s32.f32 %v1381
      %v1391 = vadd.f32 %v1390, 0.5
      %v1392 = vmul.f32 %v1391, 0.125
      %v1393 = vfloor.f32 %v1392
      %vm1394 = vcmp.eq.f32.partialorder %v1388, %v1393
      %vm1395 = vcmp.eq.f32.partialorder %v1389, %v1393
      %v1396 = vsel %vm1394, 0.0, -1e+30
      %v1397 = vsel %vm1395, 0.0, -1e+30
      %vm1398 = vcmask 64512
      %v1400 = vsel %vm1398, %v716, 0
      %v1403 = vsel %vm1398, %v776, 0
      %1405 = vmatprep.subr.bf16.mxu0 0
      %1406 = vmatpush1.bf16.xpose.msra.mxu0 0
      %1407 = vmatprep.subr.bf16.mxu0 0
      %1408 = vmatpush1.bf16.xpose.msra.mxu0 0
      %1409 = vmatprep.subr.bf16.mxu0 0
      %1410 = vmatpush1.bf16.xpose.msra.mxu0 0
      %1411 = vmatprep.subr.bf16.mxu0 0
      %1412 = vmatpush1.bf16.xpose.msra.mxu0 0
      %1413 = vmatprep.subr.bf16.mxu0 0
      %1414 = vmatpush1.bf16.xpose.msra.mxu0 0
      %1415 = vmatprep.subr.bf16.mxu0 0
      %1416 = vmatpush1.bf16.xpose.msra.mxu0 0
      %1417 = vmatprep.subr.bf16.mxu0 0
      %1418 = vmatpush1.bf16.xpose.msra.mxu0 0
      %1419 = vmatprep.subr.bf16.mxu0 0
      %1420 = vmatpush1.bf16.xpose.msra.mxu0 %v1403
      %1421 = vmatprep.subr.bf16.mxu0 0
      %1422 = vmatpush2.bf16.xpose.msra.mxu0 0
      %1423 = vmatprep.subr.bf16.mxu0 0
      %1424 = vmatpush2.bf16.xpose.msra.mxu0 0
      %1425 = vmatprep.subr.bf16.mxu0 0
      %1426 = vmatpush2.bf16.xpose.msra.mxu0 0
      %1427 = vmatprep.subr.bf16.mxu0 0
      %1428 = vmatpush2.bf16.xpose.msra.mxu0 0
      %1429 = vmatprep.subr.bf16.mxu0 0
      %1430 = vmatpush2.bf16.xpose.msra.mxu0 0
      %1431 = vmatprep.subr.bf16.mxu0 0
      %1432 = vmatpush2.bf16.xpose.msra.mxu0 0
      %1433 = vmatprep.subr.bf16.mxu0 0
      %1434 = vmatpush2.bf16.xpose.msra.mxu0 0
      %1435 = vmatprep.subr.bf16.mxu0 0
      %1436 = vmatpush2.bf16.xpose.msra.mxu0 0
      %1437 = vmatprep.mubr.bf16.mxu0 0
      %1438 = vmatmul.mubr.bf16.gmra.mxu0 %v1400
      %v1439 = vpop.f32.mrf.mxu0
      %v1440 = vadd.f32 %v1396, %v1439
      %v1441 = vpop.f32.mrf.mxu0
      %v1442 = vpop.f32.mrf.mxu0
      %v1443 = vadd.f32 %v1397, %v1442
      %v1444 = vpop.f32.mrf.mxu0
      %1445 = vdwg.mxu0
      %vm1446 = vcmask 130048
      %v1447 = vsel %vm1446, %v1440, -inf
      %1448 = vmax.xlane.f32.xlu0 %v1447
      %v1449 = vpop.xlane.xlu0 %1448
      %v1450 = vsel %vm1446, %v1443, -inf
      %1451 = vmax.xlane.f32.xlu0 %v1450
      %v1452 = vpop.xlane.xlu0 %1451
      %v1453 = vsub.f32 %v1440, %v1449
      %v1454 = vsub.f32 %v1443, %v1452
      %v1455 = vmul.f32 %v1453, 1.442695
      %v1456 = vpow.pop %v1455
      %v1457 = vmul.f32 %v1454, 1.442695
      %v1458 = vpow.pop %v1457
      %v1459 = vsel %vm1446, %v1456, 0.0
      %1460 = vadd.xlane.f32.xlu0 %v1459
      %v1461 = vpop.xlane.xlu0 %1460
      %v1462 = vsel %vm1446, %v1458, 0.0
      %1463 = vadd.xlane.f32.xlu0 %v1462
      %v1464 = vpop.xlane.xlu0 %1463
      %v1465 = vrcp.pop %v1461
      %v1466 = vrcp.pop %v1464
      %v1467 = vmul.f32 %v1461, %v1465
      %v1468 = vmul.f32 %v1464, %v1466
      %v1469 = vsub.f32 2.0, %v1467
      %v1470 = vsub.f32 2.0, %v1468
      %v1471 = vmul.f32 %v1465, %v1469
      %v1472 = vmul.f32 %v1466, %v1470
      %v1473 = vmul.f32 %v1456, %v1471
      %v1474 = vmul.f32 %v1458, %v1472
      %v1475 = vpack.c.bf16 %v1474, %v1473
      %v1477 = vsel %vm1446, %v1475, 0
      %1479 = vmatprep.subr.bf16.mxu0 0
      %1480 = vmatpush1.bf16.msra.mxu0 0
      %1481 = vmatprep.subr.bf16.mxu0 0
      %1482 = vmatpush1.bf16.msra.mxu0 0
      %1483 = vmatprep.subr.bf16.mxu0 0
      %1484 = vmatpush1.bf16.msra.mxu0 0
      %1485 = vmatprep.subr.bf16.mxu0 0
      %1486 = vmatpush1.bf16.msra.mxu0 0
      %1487 = vmatprep.subr.bf16.mxu0 0
      %1488 = vmatpush1.bf16.msra.mxu0 0
      %1489 = vmatprep.subr.bf16.mxu0 0
      %1490 = vmatpush1.bf16.msra.mxu0 0
      %1491 = vmatprep.subr.bf16.mxu0 0
      %1492 = vmatpush1.bf16.msra.mxu0 0
      %1493 = vmatprep.subr.bf16.mxu0 0
      %1494 = vmatpush1.bf16.msra.mxu0 %v836
      %1495 = vmatprep.subr.bf16.mxu0 0
      %1496 = vmatpush2.bf16.msra.mxu0 0
      %1497 = vmatprep.subr.bf16.mxu0 0
      %1498 = vmatpush2.bf16.msra.mxu0 0
      %1499 = vmatprep.subr.bf16.mxu0 0
      %1500 = vmatpush2.bf16.msra.mxu0 0
      %1501 = vmatprep.subr.bf16.mxu0 0
      %1502 = vmatpush2.bf16.msra.mxu0 0
      %1503 = vmatprep.subr.bf16.mxu0 0
      %1504 = vmatpush2.bf16.msra.mxu0 0
      %1505 = vmatprep.subr.bf16.mxu0 0
      %1506 = vmatpush2.bf16.msra.mxu0 0
      %1507 = vmatprep.subr.bf16.mxu0 0
      %1508 = vmatpush2.bf16.msra.mxu0 0
      %1509 = vmatprep.subr.bf16.mxu0 0
      %1510 = vmatpush2.bf16.msra.mxu0 0
      %1511 = vmatprep.mubr.bf16.mxu0 0
      %1512 = vmatmul.mubr.bf16.gmra.mxu0 %v1477
      %v1513 = vpop.f32.mrf.mxu0
      %v1514 = vadd.f32 0.0, %v1513
      %v1515 = vpop.f32.mrf.mxu0
      %v1516 = vpop.f32.mrf.mxu0
      %v1517 = vadd.f32 0.0, %v1516
      %v1518 = vpop.f32.mrf.mxu0
      %1519 = vdwg.mxu0
      %v1520 = vpack.c.bf16 %v1517, %v1514
      %v1522 = vsel %vm1398, %v896, 0
      %v1525 = vsel %vm1398, %v956, 0
      %1527 = vmatprep.subr.bf16.mxu0 0
      %1528 = vmatpush1.bf16.xpose.msra.mxu0 0
      %1529 = vmatprep.subr.bf16.mxu0 0
      %1530 = vmatpush1.bf16.xpose.msra.mxu0 0
      %1531 = vmatprep.subr.bf16.mxu0 0
      %1532 = vmatpush1.bf16.xpose.msra.mxu0 0
      %1533 = vmatprep.subr.bf16.mxu0 0
      %1534 = vmatpush1.bf16.xpose.msra.mxu0 0
      %1535 = vmatprep.subr.bf16.mxu0 0
      %1536 = vmatpush1.bf16.xpose.msra.mxu0 0
      %1537 = vmatprep.subr.bf16.mxu0 0
      %1538 = vmatpush1.bf16.xpose.msra.mxu0 0
      %1539 = vmatprep.subr.bf16.mxu0 0
      %1540 = vmatpush1.bf16.xpose.msra.mxu0 0
      %1541 = vmatprep.subr.bf16.mxu0 0
      %1542 = vmatpush1.bf16.xpose.msra.mxu0 %v1525
      %1543 = vmatprep.subr.bf16.mxu0 0
      %1544 = vmatpush2.bf16.xpose.msra.mxu0 0
      %1545 = vmatprep.subr.bf16.mxu0 0
      %1546 = vmatpush2.bf16.xpose.msra.mxu0 0
      %1547 = vmatprep.subr.bf16.mxu0 0
      %1548 = vmatpush2.bf16.xpose.msra.mxu0 0
      %1549 = vmatprep.subr.bf16.mxu0 0
      %1550 = vmatpush2.bf16.xpose.msra.mxu0 0
      %1551 = vmatprep.subr.bf16.mxu0 0
      %1552 = vmatpush2.bf16.xpose.msra.mxu0 0
      %1553 = vmatprep.subr.bf16.mxu0 0
      %1554 = vmatpush2.bf16.xpose.msra.mxu0 0
      %1555 = vmatprep.subr.bf16.mxu0 0
      %1556 = vmatpush2.bf16.xpose.msra.mxu0 0
      %1557 = vmatprep.subr.bf16.mxu0 0
      %1558 = vmatpush2.bf16.xpose.msra.mxu0 0
      %1559 = vmatprep.mubr.bf16.mxu0 0
      %1560 = vmatmul.mubr.bf16.gmra.mxu0 %v1522
      %v1561 = vpop.f32.mrf.mxu0
      %v1562 = vadd.f32 %v1396, %v1561
      %v1563 = vpop.f32.mrf.mxu0
      %v1564 = vpop.f32.mrf.mxu0
      %v1565 = vadd.f32 %v1397, %v1564
      %v1566 = vpop.f32.mrf.mxu0
      %1567 = vdwg.mxu0
      %v1568 = vsel %vm1446, %v1562, -inf
      %1569 = vmax.xlane.f32.xlu0 %v1568
      %v1570 = vpop.xlane.xlu0 %1569
      %v1571 = vsel %vm1446, %v1565, -inf
      %1572 = vmax.xlane.f32.xlu0 %v1571
      %v1573 = vpop.xlane.xlu0 %1572
      %v1574 = vsub.f32 %v1562, %v1570
      %v1575 = vsub.f32 %v1565, %v1573
      %v1576 = vmul.f32 %v1574, 1.442695
      %v1577 = vpow.pop %v1576
      %v1578 = vmul.f32 %v1575, 1.442695
      %v1579 = vpow.pop %v1578
      %v1580 = vsel %vm1446, %v1577, 0.0
      %1581 = vadd.xlane.f32.xlu0 %v1580
      %v1582 = vpop.xlane.xlu0 %1581
      %v1583 = vsel %vm1446, %v1579, 0.0
      %1584 = vadd.xlane.f32.xlu0 %v1583
      %v1585 = vpop.xlane.xlu0 %1584
      %v1586 = vrcp.pop %v1582
      %v1587 = vrcp.pop %v1585
      %v1588 = vmul.f32 %v1582, %v1586
      %v1589 = vmul.f32 %v1585, %v1587
      %v1590 = vsub.f32 2.0, %v1588
      %v1591 = vsub.f32 2.0, %v1589
      %v1592 = vmul.f32 %v1586, %v1590
      %v1593 = vmul.f32 %v1587, %v1591
      %v1594 = vmul.f32 %v1577, %v1592
      %v1595 = vmul.f32 %v1579, %v1593
      %v1596 = vpack.c.bf16 %v1595, %v1594
      %v1598 = vsel %vm1446, %v1596, 0
      %1600 = vmatprep.subr.bf16.mxu0 0
      %1601 = vmatpush1.bf16.msra.mxu0 0
      %1602 = vmatprep.subr.bf16.mxu0 0
      %1603 = vmatpush1.bf16.msra.mxu0 0
      %1604 = vmatprep.subr.bf16.mxu0 0
      %1605 = vmatpush1.bf16.msra.mxu0 0
      %1606 = vmatprep.subr.bf16.mxu0 0
      %1607 = vmatpush1.bf16.msra.mxu0 0
      %1608 = vmatprep.subr.bf16.mxu0 0
      %1609 = vmatpush1.bf16.msra.mxu0 0
      %1610 = vmatprep.subr.bf16.mxu0 0
      %1611 = vmatpush1.bf16.msra.mxu0 0
      %1612 = vmatprep.subr.bf16.mxu0 0
      %1613 = vmatpush1.bf16.msra.mxu0 0
      %1614 = vmatprep.subr.bf16.mxu0 0
      %1615 = vmatpush1.bf16.msra.mxu0 %v1016
      %1616 = vmatprep.subr.bf16.mxu0 0
      %1617 = vmatpush2.bf16.msra.mxu0 0
      %1618 = vmatprep.subr.bf16.mxu0 0
      %1619 = vmatpush2.bf16.msra.mxu0 0
      %1620 = vmatprep.subr.bf16.mxu0 0
      %1621 = vmatpush2.bf16.msra.mxu0 0
      %1622 = vmatprep.subr.bf16.mxu0 0
      %1623 = vmatpush2.bf16.msra.mxu0 0
      %1624 = vmatprep.subr.bf16.mxu0 0
      %1625 = vmatpush2.bf16.msra.mxu0 0
      %1626 = vmatprep.subr.bf16.mxu0 0
      %1627 = vmatpush2.bf16.msra.mxu0 0
      %1628 = vmatprep.subr.bf16.mxu0 0
      %1629 = vmatpush2.bf16.msra.mxu0 0
      %1630 = vmatprep.subr.bf16.mxu0 0
      %1631 = vmatpush2.bf16.msra.mxu0 0
      %1632 = vmatprep.mubr.bf16.mxu0 0
      %1633 = vmatmul.mubr.bf16.gmra.mxu0 %v1598
      %v1634 = vpop.f32.mrf.mxu0
      %v1635 = vadd.f32 0.0, %v1634
      %v1636 = vpop.f32.mrf.mxu0
      %v1637 = vpop.f32.mrf.mxu0
      %v1638 = vadd.f32 0.0, %v1637
      %v1639 = vpop.f32.mrf.mxu0
      %1640 = vdwg.mxu0
      %v1641 = vpack.c.bf16 %v1638, %v1635
      %v1643 = vsel %vm1398, %v1641, 0
      %vm1645 = vcmask 1043456
      %v1647 = vsel %vm1645, %v614, 0
      %1649 = vmatprep.subr.bf16.mxu0 0
      %1650 = vmatpush1.bf16.msra.mxu0 0
      %1651 = vmatprep.subr.bf16.mxu0 0
      %1652 = vmatpush1.bf16.msra.mxu0 0
      %1653 = vmatprep.subr.bf16.mxu0 0
      %1654 = vmatpush1.bf16.msra.mxu0 0
      %1655 = vmatprep.subr.bf16.mxu0 0
      %1656 = vmatpush1.bf16.msra.mxu0 0
      %1657 = vmatprep.subr.bf16.mxu0 0
      %1658 = vmatpush1.bf16.msra.mxu0 0
      %1659 = vmatprep.subr.bf16.mxu0 0
      %1660 = vmatpush1.bf16.msra.mxu0 0
      %1661 = vmatprep.subr.bf16.mxu0 0
      %1662 = vmatpush1.bf16.msra.mxu0 0
      %1663 = vmatprep.subr.bf16.mxu0 0
      %1664 = vmatpush1.bf16.msra.mxu0 %v1647
      %1665 = vmatprep.subr.bf16.mxu0 0
      %1666 = vmatpush2.bf16.msra.mxu0 0
      %1667 = vmatprep.subr.bf16.mxu0 0
      %1668 = vmatpush2.bf16.msra.mxu0 0
      %1669 = vmatprep.subr.bf16.mxu0 0
      %1670 = vmatpush2.bf16.msra.mxu0 0
      %1671 = vmatprep.subr.bf16.mxu0 0
      %1672 = vmatpush2.bf16.msra.mxu0 0
      %1673 = vmatprep.subr.bf16.mxu0 0
      %1674 = vmatpush2.bf16.msra.mxu0 0
      %1675 = vmatprep.subr.bf16.mxu0 0
      %1676 = vmatpush2.bf16.msra.mxu0 0
      %1677 = vmatprep.subr.bf16.mxu0 0
      %1678 = vmatpush2.bf16.msra.mxu0 0
      %1679 = vmatprep.subr.bf16.mxu0 0
      %1680 = vmatpush2.bf16.msra.mxu0 0
      %1681 = vmatprep.mubr.bf16.mxu0 0
      %1682 = vmatmul.mubr.bf16.gmra.mxu0 %v1643
      %v1683 = vpop.f32.mrf.mxu0
      %v1684 = vadd.f32 0.0, %v1683
      %v1685 = vpop.f32.mrf.mxu0
      %v1686 = vpop.f32.mrf.mxu0
      %v1687 = vadd.f32 0.0, %v1686
      %v1688 = vpop.f32.mrf.mxu0
      %1689 = vdwg.mxu0
      %v1691 = vsel %vm1398, %v1520, 0
      %v1694 = vsel %vm1645, %v613, 0
      %1696 = vmatprep.subr.bf16.mxu0 0
      %1697 = vmatpush1.bf16.msra.mxu0 0
      %1698 = vmatprep.subr.bf16.mxu0 0
      %1699 = vmatpush1.bf16.msra.mxu0 0
      %1700 = vmatprep.subr.bf16.mxu0 0
      %1701 = vmatpush1.bf16.msra.mxu0 0
      %1702 = vmatprep.subr.bf16.mxu0 0
      %1703 = vmatpush1.bf16.msra.mxu0 0
      %1704 = vmatprep.subr.bf16.mxu0 0
      %1705 = vmatpush1.bf16.msra.mxu0 0
      %1706 = vmatprep.subr.bf16.mxu0 0
      %1707 = vmatpush1.bf16.msra.mxu0 0
      %1708 = vmatprep.subr.bf16.mxu0 0
      %1709 = vmatpush1.bf16.msra.mxu0 0
      %1710 = vmatprep.subr.bf16.mxu0 0
      %1711 = vmatpush1.bf16.msra.mxu0 %v1694
      %1712 = vmatprep.subr.bf16.mxu0 0
      %1713 = vmatpush2.bf16.msra.mxu0 0
      %1714 = vmatprep.subr.bf16.mxu0 0
      %1715 = vmatpush2.bf16.msra.mxu0 0
      %1716 = vmatprep.subr.bf16.mxu0 0
      %1717 = vmatpush2.bf16.msra.mxu0 0
      %1718 = vmatprep.subr.bf16.mxu0 0
      %1719 = vmatpush2.bf16.msra.mxu0 0
      %1720 = vmatprep.subr.bf16.mxu0 0
      %1721 = vmatpush2.bf16.msra.mxu0 0
      %1722 = vmatprep.subr.bf16.mxu0 0
      %1723 = vmatpush2.bf16.msra.mxu0 0
      %1724 = vmatprep.subr.bf16.mxu0 0
      %1725 = vmatpush2.bf16.msra.mxu0 0
      %1726 = vmatprep.subr.bf16.mxu0 0
      %1727 = vmatpush2.bf16.msra.mxu0 0
      %1728 = vmatprep.mubr.bf16.mxu0 0
      %1729 = vmatmul.mubr.bf16.gmra.mxu0 %v1691
      %v1730 = vpop.f32.mrf.mxu0
      %v1731 = vadd.f32 %v1684, %v1730
      %v1732 = vpop.f32.mrf.mxu0
      %v1733 = vpop.f32.mrf.mxu0
      %v1734 = vadd.f32 %v1687, %v1733
      %v1735 = vpop.f32.mrf.mxu0
      %1736 = vdwg.mxu0
      %v1738 = vsel %vm1398, %v1076, 0
      %v1741 = vsel %vm1398, %v1136, 0
      %1743 = vmatprep.subr.bf16.mxu0 0
      %1744 = vmatpush1.bf16.xpose.msra.mxu0 0
      %1745 = vmatprep.subr.bf16.mxu0 0
      %1746 = vmatpush1.bf16.xpose.msra.mxu0 0
      %1747 = vmatprep.subr.bf16.mxu0 0
      %1748 = vmatpush1.bf16.xpose.msra.mxu0 0
      %1749 = vmatprep.subr.bf16.mxu0 0
      %1750 = vmatpush1.bf16.xpose.msra.mxu0 0
      %1751 = vmatprep.subr.bf16.mxu0 0
      %1752 = vmatpush1.bf16.xpose.msra.mxu0 0
      %1753 = vmatprep.subr.bf16.mxu0 0
      %1754 = vmatpush1.bf16.xpose.msra.mxu0 0
      %1755 = vmatprep.subr.bf16.mxu0 0
      %1756 = vmatpush1.bf16.xpose.msra.mxu0 0
      %1757 = vmatprep.subr.bf16.mxu0 0
      %1758 = vmatpush1.bf16.xpose.msra.mxu0 %v1741
      %1759 = vmatprep.subr.bf16.mxu0 0
      %1760 = vmatpush2.bf16.xpose.msra.mxu0 0
      %1761 = vmatprep.subr.bf16.mxu0 0
      %1762 = vmatpush2.bf16.xpose.msra.mxu0 0
      %1763 = vmatprep.subr.bf16.mxu0 0
      %1764 = vmatpush2.bf16.xpose.msra.mxu0 0
      %1765 = vmatprep.subr.bf16.mxu0 0
      %1766 = vmatpush2.bf16.xpose.msra.mxu0 0
      %1767 = vmatprep.subr.bf16.mxu0 0
      %1768 = vmatpush2.bf16.xpose.msra.mxu0 0
      %1769 = vmatprep.subr.bf16.mxu0 0
      %1770 = vmatpush2.bf16.xpose.msra.mxu0 0
      %1771 = vmatprep.subr.bf16.mxu0 0
      %1772 = vmatpush2.bf16.xpose.msra.mxu0 0
      %1773 = vmatprep.subr.bf16.mxu0 0
      %1774 = vmatpush2.bf16.xpose.msra.mxu0 0
      %1775 = vmatprep.mubr.bf16.mxu0 0
      %1776 = vmatmul.mubr.bf16.gmra.mxu0 %v1738
      %v1777 = vpop.f32.mrf.mxu0
      %v1778 = vadd.f32 %v1396, %v1777
      %v1779 = vpop.f32.mrf.mxu0
      %v1780 = vpop.f32.mrf.mxu0
      %v1781 = vadd.f32 %v1397, %v1780
      %v1782 = vpop.f32.mrf.mxu0
      %1783 = vdwg.mxu0
      %v1784 = vsel %vm1446, %v1778, -inf
      %1785 = vmax.xlane.f32.xlu0 %v1784
      %v1786 = vpop.xlane.xlu0 %1785
      %v1787 = vsel %vm1446, %v1781, -inf
      %1788 = vmax.xlane.f32.xlu0 %v1787
      %v1789 = vpop.xlane.xlu0 %1788
      %v1790 = vsub.f32 %v1778, %v1786
      %v1791 = vsub.f32 %v1781, %v1789
      %v1792 = vmul.f32 %v1790, 1.442695
      %v1793 = vpow.pop %v1792
      %v1794 = vmul.f32 %v1791, 1.442695
      %v1795 = vpow.pop %v1794
      %v1796 = vsel %vm1446, %v1793, 0.0
      %1797 = vadd.xlane.f32.xlu0 %v1796
      %v1798 = vpop.xlane.xlu0 %1797
      %v1799 = vsel %vm1446, %v1795, 0.0
      %1800 = vadd.xlane.f32.xlu0 %v1799
      %v1801 = vpop.xlane.xlu0 %1800
      %v1802 = vrcp.pop %v1798
      %v1803 = vrcp.pop %v1801
      %v1804 = vmul.f32 %v1798, %v1802
      %v1805 = vmul.f32 %v1801, %v1803
      %v1806 = vsub.f32 2.0, %v1804
      %v1807 = vsub.f32 2.0, %v1805
      %v1808 = vmul.f32 %v1802, %v1806
      %v1809 = vmul.f32 %v1803, %v1807
      %v1810 = vmul.f32 %v1793, %v1808
      %v1811 = vmul.f32 %v1795, %v1809
      %v1812 = vpack.c.bf16 %v1811, %v1810
      %v1814 = vsel %vm1446, %v1812, 0
      %1816 = vmatprep.subr.bf16.mxu0 0
      %1817 = vmatpush1.bf16.msra.mxu0 0
      %1818 = vmatprep.subr.bf16.mxu0 0
      %1819 = vmatpush1.bf16.msra.mxu0 0
      %1820 = vmatprep.subr.bf16.mxu0 0
      %1821 = vmatpush1.bf16.msra.mxu0 0
      %1822 = vmatprep.subr.bf16.mxu0 0
      %1823 = vmatpush1.bf16.msra.mxu0 0
      %1824 = vmatprep.subr.bf16.mxu0 0
      %1825 = vmatpush1.bf16.msra.mxu0 0
      %1826 = vmatprep.subr.bf16.mxu0 0
      %1827 = vmatpush1.bf16.msra.mxu0 0
      %1828 = vmatprep.subr.bf16.mxu0 0
      %1829 = vmatpush1.bf16.msra.mxu0 0
      %1830 = vmatprep.subr.bf16.mxu0 0
      %1831 = vmatpush1.bf16.msra.mxu0 %v1196
      %1832 = vmatprep.subr.bf16.mxu0 0
      %1833 = vmatpush2.bf16.msra.mxu0 0
      %1834 = vmatprep.subr.bf16.mxu0 0
      %1835 = vmatpush2.bf16.msra.mxu0 0
      %1836 = vmatprep.subr.bf16.mxu0 0
      %1837 = vmatpush2.bf16.msra.mxu0 0
      %1838 = vmatprep.subr.bf16.mxu0 0
      %1839 = vmatpush2.bf16.msra.mxu0 0
      %1840 = vmatprep.subr.bf16.mxu0 0
      %1841 = vmatpush2.bf16.msra.mxu0 0
      %1842 = vmatprep.subr.bf16.mxu0 0
      %1843 = vmatpush2.bf16.msra.mxu0 0
      %1844 = vmatprep.subr.bf16.mxu0 0
      %1845 = vmatpush2.bf16.msra.mxu0 0
      %1846 = vmatprep.subr.bf16.mxu0 0
      %1847 = vmatpush2.bf16.msra.mxu0 0
      %1848 = vmatprep.mubr.bf16.mxu0 0
      %1849 = vmatmul.mubr.bf16.gmra.mxu0 %v1814
      %v1850 = vpop.f32.mrf.mxu0
      %v1851 = vadd.f32 0.0, %v1850
      %v1852 = vpop.f32.mrf.mxu0
      %v1853 = vpop.f32.mrf.mxu0
      %v1854 = vadd.f32 0.0, %v1853
      %v1855 = vpop.f32.mrf.mxu0
      %1856 = vdwg.mxu0
      %v1857 = vpack.c.bf16 %v1854, %v1851
      %v1859 = vsel %vm1398, %v1857, 0
      %v1862 = vsel %vm1645, %v615, 0
      %1864 = vmatprep.subr.bf16.mxu0 0
      %1865 = vmatpush1.bf16.msra.mxu0 0
      %1866 = vmatprep.subr.bf16.mxu0 0
      %1867 = vmatpush1.bf16.msra.mxu0 0
      %1868 = vmatprep.subr.bf16.mxu0 0
      %1869 = vmatpush1.bf16.msra.mxu0 0
      %1870 = vmatprep.subr.bf16.mxu0 0
      %1871 = vmatpush1.bf16.msra.mxu0 0
      %1872 = vmatprep.subr.bf16.mxu0 0
      %1873 = vmatpush1.bf16.msra.mxu0 0
      %1874 = vmatprep.subr.bf16.mxu0 0
      %1875 = vmatpush1.bf16.msra.mxu0 0
      %1876 = vmatprep.subr.bf16.mxu0 0
      %1877 = vmatpush1.bf16.msra.mxu0 0
      %1878 = vmatprep.subr.bf16.mxu0 0
      %1879 = vmatpush1.bf16.msra.mxu0 %v1862
      %1880 = vmatprep.subr.bf16.mxu0 0
      %1881 = vmatpush2.bf16.msra.mxu0 0
      %1882 = vmatprep.subr.bf16.mxu0 0
      %1883 = vmatpush2.bf16.msra.mxu0 0
      %1884 = vmatprep.subr.bf16.mxu0 0
      %1885 = vmatpush2.bf16.msra.mxu0 0
      %1886 = vmatprep.subr.bf16.mxu0 0
      %1887 = vmatpush2.bf16.msra.mxu0 0
      %1888 = vmatprep.subr.bf16.mxu0 0
      %1889 = vmatpush2.bf16.msra.mxu0 0
      %1890 = vmatprep.subr.bf16.mxu0 0
      %1891 = vmatpush2.bf16.msra.mxu0 0
      %1892 = vmatprep.subr.bf16.mxu0 0
      %1893 = vmatpush2.bf16.msra.mxu0 0
      %1894 = vmatprep.subr.bf16.mxu0 0
      %1895 = vmatpush2.bf16.msra.mxu0 0
      %1896 = vmatprep.mubr.bf16.mxu0 0
      %1897 = vmatmul.mubr.bf16.gmra.mxu0 %v1859
      %v1898 = vpop.f32.mrf.mxu0
      %v1899 = vadd.f32 0.0, %v1898
      %v1900 = vpop.f32.mrf.mxu0
      %v1901 = vpop.f32.mrf.mxu0
      %v1902 = vadd.f32 0.0, %v1901
      %v1903 = vpop.f32.mrf.mxu0
      %1904 = vdwg.mxu0
      %v1905 = vadd.f32 %v1731, %v1899
      %v1906 = vadd.f32 %v1734, %v1902
      %v1908 = vsel %vm1398, %v1256, 0
      %v1911 = vsel %vm1398, %v1316, 0
      %1913 = vmatprep.subr.bf16.mxu0 0
      %1914 = vmatpush1.bf16.xpose.msra.mxu0 0
      %1915 = vmatprep.subr.bf16.mxu0 0
      %1916 = vmatpush1.bf16.xpose.msra.mxu0 0
      %1917 = vmatprep.subr.bf16.mxu0 0
      %1918 = vmatpush1.bf16.xpose.msra.mxu0 0
      %1919 = vmatprep.subr.bf16.mxu0 0
      %1920 = vmatpush1.bf16.xpose.msra.mxu0 0
      %1921 = vmatprep.subr.bf16.mxu0 0
      %1922 = vmatpush1.bf16.xpose.msra.mxu0 0
      %1923 = vmatprep.subr.bf16.mxu0 0
      %1924 = vmatpush1.bf16.xpose.msra.mxu0 0
      %1925 = vmatprep.subr.bf16.mxu0 0
      %1926 = vmatpush1.bf16.xpose.msra.mxu0 0
      %1927 = vmatprep.subr.bf16.mxu0 0
      %1928 = vmatpush1.bf16.xpose.msra.mxu0 %v1911
      %1929 = vmatprep.subr.bf16.mxu0 0
      %1930 = vmatpush2.bf16.xpose.msra.mxu0 0
      %1931 = vmatprep.subr.bf16.mxu0 0
      %1932 = vmatpush2.bf16.xpose.msra.mxu0 0
      %1933 = vmatprep.subr.bf16.mxu0 0
      %1934 = vmatpush2.bf16.xpose.msra.mxu0 0
      %1935 = vmatprep.subr.bf16.mxu0 0
      %1936 = vmatpush2.bf16.xpose.msra.mxu0 0
      %1937 = vmatprep.subr.bf16.mxu0 0
      %1938 = vmatpush2.bf16.xpose.msra.mxu0 0
      %1939 = vmatprep.subr.bf16.mxu0 0
      %1940 = vmatpush2.bf16.xpose.msra.mxu0 0
      %1941 = vmatprep.subr.bf16.mxu0 0
      %1942 = vmatpush2.bf16.xpose.msra.mxu0 0
      %1943 = vmatprep.subr.bf16.mxu0 0
      %1944 = vmatpush2.bf16.xpose.msra.mxu0 0
      %1945 = vmatprep.mubr.bf16.mxu0 0
      %1946 = vmatmul.mubr.bf16.gmra.mxu0 %v1908
      %v1947 = vpop.f32.mrf.mxu0
      %v1948 = vadd.f32 %v1396, %v1947
      %v1949 = vpop.f32.mrf.mxu0
      %v1950 = vpop.f32.mrf.mxu0
      %v1951 = vadd.f32 %v1397, %v1950
      %v1952 = vpop.f32.mrf.mxu0
      %1953 = vdwg.mxu0
      %v1954 = vsel %vm1446, %v1948, -inf
      %1955 = vmax.xlane.f32.xlu0 %v1954
      %v1956 = vpop.xlane.xlu0 %1955
      %v1957 = vsel %vm1446, %v1951, -inf
      %1958 = vmax.xlane.f32.xlu0 %v1957
      %v1959 = vpop.xlane.xlu0 %1958
      %v1960 = vsub.f32 %v1948, %v1956
      %v1961 = vsub.f32 %v1951, %v1959
      %v1962 = vmul.f32 %v1960, 1.442695
      %v1963 = vpow.pop %v1962
      %v1964 = vmul.f32 %v1961, 1.442695
      %v1965 = vpow.pop %v1964
      %v1966 = vsel %vm1446, %v1963, 0.0
      %1967 = vadd.xlane.f32.xlu0 %v1966
      %v1968 = vpop.xlane.xlu0 %1967
      %v1969 = vsel %vm1446, %v1965, 0.0
      %1970 = vadd.xlane.f32.xlu0 %v1969
      %v1971 = vpop.xlane.xlu0 %1970
      %v1972 = vrcp.pop %v1968
      %v1973 = vrcp.pop %v1971
      %v1974 = vmul.f32 %v1968, %v1972
      %v1975 = vmul.f32 %v1971, %v1973
      %v1976 = vsub.f32 2.0, %v1974
      %v1977 = vsub.f32 2.0, %v1975
      %v1978 = vmul.f32 %v1972, %v1976
      %v1979 = vmul.f32 %v1973, %v1977
      %v1980 = vmul.f32 %v1963, %v1978
      %v1981 = vmul.f32 %v1965, %v1979
      %v1982 = vpack.c.bf16 %v1981, %v1980
      %v1984 = vsel %vm1446, %v1982, 0
      %1986 = vmatprep.subr.bf16.mxu0 0
      %1987 = vmatpush1.bf16.msra.mxu0 0
      %1988 = vmatprep.subr.bf16.mxu0 0
      %1989 = vmatpush1.bf16.msra.mxu0 0
      %1990 = vmatprep.subr.bf16.mxu0 0
      %1991 = vmatpush1.bf16.msra.mxu0 0
      %1992 = vmatprep.subr.bf16.mxu0 0
      %1993 = vmatpush1.bf16.msra.mxu0 0
      %1994 = vmatprep.subr.bf16.mxu0 0
      %1995 = vmatpush1.bf16.msra.mxu0 0
      %1996 = vmatprep.subr.bf16.mxu0 0
      %1997 = vmatpush1.bf16.msra.mxu0 0
      %1998 = vmatprep.subr.bf16.mxu0 0
      %1999 = vmatpush1.bf16.msra.mxu0 0
      %2000 = vmatprep.subr.bf16.mxu0 0
      %2001 = vmatpush1.bf16.msra.mxu0 %v1376
      %2002 = vmatprep.subr.bf16.mxu0 0
      %2003 = vmatpush2.bf16.msra.mxu0 0
      %2004 = vmatprep.subr.bf16.mxu0 0
      %2005 = vmatpush2.bf16.msra.mxu0 0
      %2006 = vmatprep.subr.bf16.mxu0 0
      %2007 = vmatpush2.bf16.msra.mxu0 0
      %2008 = vmatprep.subr.bf16.mxu0 0
      %2009 = vmatpush2.bf16.msra.mxu0 0
      %2010 = vmatprep.subr.bf16.mxu0 0
      %2011 = vmatpush2.bf16.msra.mxu0 0
      %2012 = vmatprep.subr.bf16.mxu0 0
      %2013 = vmatpush2.bf16.msra.mxu0 0
      %2014 = vmatprep.subr.bf16.mxu0 0
      %2015 = vmatpush2.bf16.msra.mxu0 0
      %2016 = vmatprep.subr.bf16.mxu0 0
      %2017 = vmatpush2.bf16.msra.mxu0 0
      %2018 = vmatprep.mubr.bf16.mxu0 0
      %2019 = vmatmul.mubr.bf16.gmra.mxu0 %v1984
      %v2020 = vpop.f32.mrf.mxu0
      %v2021 = vadd.f32 0.0, %v2020
      %v2022 = vpop.f32.mrf.mxu0
      %v2023 = vpop.f32.mrf.mxu0
      %v2024 = vadd.f32 0.0, %v2023
      %v2025 = vpop.f32.mrf.mxu0
      %2026 = vdwg.mxu0
      %v2027 = vpack.c.bf16 %v2024, %v2021
      %v2029 = vsel %vm1398, %v2027, 0
      %v2032 = vsel %vm1645, %v616, 0
      %2034 = vmatprep.subr.bf16.mxu0 0
      %2035 = vmatpush1.bf16.msra.mxu0 0
      %2036 = vmatprep.subr.bf16.mxu0 0
      %2037 = vmatpush1.bf16.msra.mxu0 0
      %2038 = vmatprep.subr.bf16.mxu0 0
      %2039 = vmatpush1.bf16.msra.mxu0 0
      %2040 = vmatprep.subr.bf16.mxu0 0
      %2041 = vmatpush1.bf16.msra.mxu0 0
      %2042 = vmatprep.subr.bf16.mxu0 0
      %2043 = vmatpush1.bf16.msra.mxu0 0
      %2044 = vmatprep.subr.bf16.mxu0 0
      %2045 = vmatpush1.bf16.msra.mxu0 0
      %2046 = vmatprep.subr.bf16.mxu0 0
      %2047 = vmatpush1.bf16.msra.mxu0 0
      %2048 = vmatprep.subr.bf16.mxu0 0
      %2049 = vmatpush1.bf16.msra.mxu0 %v2032
      %2050 = vmatprep.subr.bf16.mxu0 0
      %2051 = vmatpush2.bf16.msra.mxu0 0
      %2052 = vmatprep.subr.bf16.mxu0 0
      %2053 = vmatpush2.bf16.msra.mxu0 0
      %2054 = vmatprep.subr.bf16.mxu0 0
      %2055 = vmatpush2.bf16.msra.mxu0 0
      %2056 = vmatprep.subr.bf16.mxu0 0
      %2057 = vmatpush2.bf16.msra.mxu0 0
      %2058 = vmatprep.subr.bf16.mxu0 0
      %2059 = vmatpush2.bf16.msra.mxu0 0
      %2060 = vmatprep.subr.bf16.mxu0 0
      %2061 = vmatpush2.bf16.msra.mxu0 0
      %2062 = vmatprep.subr.bf16.mxu0 0
      %2063 = vmatpush2.bf16.msra.mxu0 0
      %2064 = vmatprep.subr.bf16.mxu0 0
      %2065 = vmatpush2.bf16.msra.mxu0 0
      %2066 = vmatprep.mubr.bf16.mxu0 0
      %2067 = vmatmul.mubr.bf16.gmra.mxu0 %v2029
      %v2068 = vpop.f32.mrf.mxu0
      %v2069 = vadd.f32 0.0, %v2068
      %v2070 = vpop.f32.mrf.mxu0
      %v2071 = vpop.f32.mrf.mxu0
      %v2072 = vadd.f32 0.0, %v2071
      %v2073 = vpop.f32.mrf.mxu0
      %2074 = vdwg.mxu0
      %v2075 = vadd.f32 %v1905, %v2069
      %v2076 = vadd.f32 %v1906, %v2072
      %v2078 = vlaneseq
      %v2079 = vshrl.u32 %v2078, 7
      %v2080 = vsub.s32 0, %v2079
      %v2081 = vrot.slane %v617, %v2080
      %v2083 = vadd.f32 %v2075, %v2081
      %v2084 = vadd.f32 %v2076, %v2081
      %v2085 = vadd.f32 %v646, %v2083
      %v2086 = vadd.f32 %v647, %v2084
      %v2087 = vsel %vm671, %v2085, 0.0
      %2088 = vadd.xlane.f32.xlu0 %v2087
      %v2089 = vpop.xlane.xlu0 %2088
      %v2090 = vsel %vm671, %v2086, 0.0
      %2091 = vadd.xlane.f32.xlu0 %v2090
      %v2092 = vpop.xlane.xlu0 %2091
      %v2093 = vrcp.pop 32.0
      %v2094 = vmul.f32 %v2089, %v2093
      %v2095 = vmul.f32 %v2092, %v2093
      %v2096 = vsub.f32 %v2085, %v2094
      %v2097 = vsub.f32 %v2086, %v2095
      %v2098 = vmul.f32 %v2096, %v2096
      %v2099 = vmul.f32 %v2097, %v2097
      %v2100 = vsel %vm671, %v2098, 0.0
      %2101 = vadd.xlane.f32.xlu0 %v2100
      %v2102 = vpop.xlane.xlu0 %2101
      %v2103 = vsel %vm671, %v2099, 0.0
      %2104 = vadd.xlane.f32.xlu0 %v2103
      %v2105 = vpop.xlane.xlu0 %2104
      %v2106 = vmul.f32 %v2102, %v2093
      %v2107 = vmul.f32 %v2105, %v2093
      %v2108 = vadd.f32 %v2106, 1e-05
      %v2109 = vadd.f32 %v2107, 1e-05
      %v2110 = vrsqrt.pop %v2108
      %v2111 = vrsqrt.pop %v2109
      %v2112 = vmul.f32 %v2096, %v2110
      %v2113 = vmul.f32 %v2097, %v2111
      %v2115 = vlaneseq
      %v2116 = vshrl.u32 %v2115, 7
      %v2117 = vsub.s32 0, %v2116
      %v2118 = vrot.slane %v618, %v2117
      %v2120 = vmul.f32 %v2112, %v2118
      %v2121 = vmul.f32 %v2113, %v2118
      %v2123 = vlaneseq
      %v2124 = vshrl.u32 %v2123, 7
      %v2125 = vsub.s32 0, %v2124
      %v2126 = vrot.slane %v619, %v2125
      %v2128 = vadd.f32 %v2120, %v2126
      %v2129 = vadd.f32 %v2121, %v2126
      %v2130 = vpack.c.bf16 %v2129, %v2128
      %v2132 = vlaneseq
      %v2133 = vshrl.u32 %v2132, 7
      %v2134 = vsub.s32 0, %v2133
      %v2135 = vrot.slane %v624, %v2134
      %v2141 = vunpack.c.l.b16 %v620
      %v2142 = vunpack.c.l.b16 %v621
      %v2143 = vunpack.c.l.b16 %v622
      %v2144 = vunpack.c.l.b16 %v623
      %v2145 = vpack.c.b16 %v2142, %v2141
      %v2146 = vpack.c.b16 %v2144, %v2143
      %v2150 = vsel %vm671, %v2130, 0
      %2152 = vmatprep.subr.bf16.mxu0 0
      %2153 = vmatpush1.bf16.msra.mxu0 0
      %2154 = vmatprep.subr.bf16.mxu0 0
      %2155 = vmatpush1.bf16.msra.mxu0 0
      %2156 = vmatprep.subr.bf16.mxu0 0
      %2157 = vmatpush1.bf16.msra.mxu0 0
      %2158 = vmatprep.subr.bf16.mxu0 0
      %2159 = vmatpush1.bf16.msra.mxu0 0
      %2160 = vmatprep.subr.bf16.mxu0 0
      %2161 = vmatpush1.bf16.msra.mxu0 0
      %2162 = vmatprep.subr.bf16.mxu0 0
      %2163 = vmatpush1.bf16.msra.mxu0 0
      %2164 = vmatprep.subr.bf16.mxu0 0
      %2165 = vmatpush1.bf16.msra.mxu0 %v2146
      %2166 = vmatprep.subr.bf16.mxu0 0
      %2167 = vmatpush1.bf16.msra.mxu0 %v2145
      %2168 = vmatprep.subr.bf16.mxu0 0
      %2169 = vmatpush2.bf16.msra.mxu0 0
      %2170 = vmatprep.subr.bf16.mxu0 0
      %2171 = vmatpush2.bf16.msra.mxu0 0
      %2172 = vmatprep.subr.bf16.mxu0 0
      %2173 = vmatpush2.bf16.msra.mxu0 0
      %2174 = vmatprep.subr.bf16.mxu0 0
      %2175 = vmatpush2.bf16.msra.mxu0 0
      %2176 = vmatprep.subr.bf16.mxu0 0
      %2177 = vmatpush2.bf16.msra.mxu0 0
      %2178 = vmatprep.subr.bf16.mxu0 0
      %2179 = vmatpush2.bf16.msra.mxu0 0
      %2180 = vmatprep.subr.bf16.mxu0 0
      %2181 = vmatpush2.bf16.msra.mxu0 0
      %2182 = vmatprep.subr.bf16.mxu0 0
      %2183 = vmatpush2.bf16.msra.mxu0 0
      %2184 = vmatprep.mubr.bf16.mxu0 0
      %2185 = vmatmul.mubr.bf16.gmra.mxu0 %v2150
      %v2186 = vpop.f32.mrf.mxu0
      %v2187 = vadd.f32 %v2135, %v2186
      %v2188 = vpop.f32.mrf.mxu0
      %v2189 = vpop.f32.mrf.mxu0
      %v2190 = vadd.f32 %v2135, %v2189
      %v2191 = vpop.f32.mrf.mxu0
      %2192 = vdwg.mxu0
      %v2193 = vmul.f32 %v2187, 0.70710677
      %v2194 = vmul.f32 %v2190, 0.70710677
      %v2195 = vand.u32 2147483647, %v2193
      %v2196 = vand.u32 2147483647, %v2194
      %v2197 = vmul.f32 %v2195, 0.3275911
      %v2198 = vmul.f32 %v2196, 0.3275911
      %v2199 = vadd.f32 %v2197, 1.0
      %v2200 = vadd.f32 %v2198, 1.0
      %v2201 = vrcp.pop %v2199
      %v2202 = vmul.f32 1.0, %v2201
      %v2203 = vrcp.pop %v2200
      %v2204 = vmul.f32 1.0, %v2203
      %v2205 = vmul.f32 %v2202, 1.0614054
      %v2206 = vmul.f32 %v2204, 1.0614054
      %v2207 = vsub.f32 %v2205, 1.4531521
      %v2208 = vsub.f32 %v2206, 1.4531521
      %v2209 = vmul.f32 %v2207, %v2202
      %v2210 = vmul.f32 %v2208, %v2204
      %v2211 = vadd.f32 %v2209, 1.4214138
      %v2212 = vadd.f32 %v2210, 1.4214138
      %v2213 = vmul.f32 %v2211, %v2202
      %v2214 = vmul.f32 %v2212, %v2204
      %v2215 = vsub.f32 %v2213, 0.28449672
      %v2216 = vsub.f32 %v2214, 0.28449672
      %v2217 = vmul.f32 %v2215, %v2202
      %v2218 = vmul.f32 %v2216, %v2204
      %v2219 = vadd.f32 %v2217, 0.2548296
      %v2220 = vadd.f32 %v2218, 0.2548296
      %v2221 = vmul.f32 %v2219, %v2202
      %v2222 = vmul.f32 %v2220, %v2204
      %v2223 = vsub.f32 0.0, %v2195
      %v2224 = vsub.f32 0.0, %v2196
      %v2225 = vmul.f32 %v2223, %v2195
      %v2226 = vmul.f32 %v2224, %v2196
      %v2227 = vmul.f32 %v2225, 1.442695
      %v2228 = vpow.pop %v2227
      %v2229 = vmul.f32 %v2226, 1.442695
      %v2230 = vpow.pop %v2229
      %v2231 = vmul.f32 %v2221, %v2228
      %v2232 = vmul.f32 %v2222, %v2230
      %v2233 = vsub.f32 1.0, %v2231
      %v2234 = vsub.f32 1.0, %v2232
      %vm2235 = vcmp.lt.f32.partialorder %v2193, 0.0
      %vm2236 = vcmp.lt.f32.partialorder %v2194, 0.0
      %v2237 = vsub.f32 0.0, %v2233
      %v2238 = vsub.f32 0.0, %v2234
      %v2239 = vsel %vm2235, %v2237, %v2233
      %v2240 = vsel %vm2236, %v2238, %v2234
      %v2241 = vmul.f32 %v2187, 0.5
      %v2242 = vmul.f32 %v2190, 0.5
      %v2243 = vadd.f32 %v2239, 1.0
      %v2244 = vadd.f32 %v2240, 1.0
      %v2245 = vmul.f32 %v2241, %v2243
      %v2246 = vmul.f32 %v2242, %v2244
      %v2247 = vpack.c.bf16 %v2246, %v2245
      %v2264 = vunpack.c.l.b16 %v625
      %v2265 = vunpack.c.l.b16 %v626
      %v2266 = vunpack.c.l.b16 %v627
      %v2267 = vunpack.c.l.b16 %v628
      %v2268 = vunpack.c.l.b16 %v629
      %v2269 = vunpack.c.l.b16 %v630
      %v2270 = vunpack.c.l.b16 %v631
      %v2271 = vunpack.c.l.b16 %v632
      %v2272 = vunpack.c.l.b16 %v633
      %v2273 = vunpack.c.l.b16 %v634
      %v2274 = vunpack.c.l.b16 %v635
      %v2275 = vunpack.c.l.b16 %v636
      %v2276 = vunpack.c.l.b16 %v637
      %v2277 = vunpack.c.l.b16 %v638
      %v2278 = vunpack.c.l.b16 %v639
      %v2279 = vunpack.c.l.b16 %v640
      %v2280 = vpack.c.b16 %v2265, %v2264
      %v2281 = vpack.c.b16 %v2267, %v2266
      %v2282 = vpack.c.b16 %v2269, %v2268
      %v2283 = vpack.c.b16 %v2271, %v2270
      %v2284 = vpack.c.b16 %v2273, %v2272
      %v2285 = vpack.c.b16 %v2275, %v2274
      %v2286 = vpack.c.b16 %v2277, %v2276
      %v2287 = vpack.c.b16 %v2279, %v2278
      %2296 = vmatprep.subr.bf16.mxu0 0
      %2297 = vmatpush1.bf16.msra.mxu0 %v2287
      %2298 = vmatprep.subr.bf16.mxu0 0
      %2299 = vmatpush1.bf16.msra.mxu0 %v2286
      %2300 = vmatprep.subr.bf16.mxu0 0
      %2301 = vmatpush1.bf16.msra.mxu0 %v2285
      %2302 = vmatprep.subr.bf16.mxu0 0
      %2303 = vmatpush1.bf16.msra.mxu0 %v2284
      %2304 = vmatprep.subr.bf16.mxu0 0
      %2305 = vmatpush1.bf16.msra.mxu0 %v2283
      %2306 = vmatprep.subr.bf16.mxu0 0
      %2307 = vmatpush1.bf16.msra.mxu0 %v2282
      %2308 = vmatprep.subr.bf16.mxu0 0
      %2309 = vmatpush1.bf16.msra.mxu0 %v2281
      %2310 = vmatprep.subr.bf16.mxu0 0
      %2311 = vmatpush1.bf16.msra.mxu0 %v2280
      %2312 = vmatprep.subr.bf16.mxu0 0
      %2313 = vmatpush2.bf16.msra.mxu0 0
      %2314 = vmatprep.subr.bf16.mxu0 0
      %2315 = vmatpush2.bf16.msra.mxu0 0
      %2316 = vmatprep.subr.bf16.mxu0 0
      %2317 = vmatpush2.bf16.msra.mxu0 0
      %2318 = vmatprep.subr.bf16.mxu0 0
      %2319 = vmatpush2.bf16.msra.mxu0 0
      %2320 = vmatprep.subr.bf16.mxu0 0
      %2321 = vmatpush2.bf16.msra.mxu0 0
      %2322 = vmatprep.subr.bf16.mxu0 0
      %2323 = vmatpush2.bf16.msra.mxu0 0
      %2324 = vmatprep.subr.bf16.mxu0 0
      %2325 = vmatpush2.bf16.msra.mxu0 0
      %2326 = vmatprep.subr.bf16.mxu0 0
      %2327 = vmatpush2.bf16.msra.mxu0 0
      %2328 = vmatprep.mubr.bf16.mxu0 0
      %2329 = vmatmul.mubr.bf16.gmra.mxu0 %v2247
      %v2330 = vpop.f32.mrf.mxu0
      %v2331 = vadd.f32 0.0, %v2330
      %v2332 = vpop.f32.mrf.mxu0
      %v2333 = vpop.f32.mrf.mxu0
      %v2334 = vadd.f32 0.0, %v2333
      %v2335 = vpop.f32.mrf.mxu0
      %2336 = vdwg.mxu0
      %v2337 = vadd.f32 %v2128, %v2331
      %v2338 = vadd.f32 %v2129, %v2334
      %v2340 = vlaneseq
      %v2341 = vshrl.u32 %v2340, 7
      %v2342 = vsub.s32 0, %v2341
      %v2343 = vrot.slane %v641, %v2342
      %v2345 = vadd.f32 %v2337, %v2343
      %v2346 = vadd.f32 %v2338, %v2343
      %v2347 = vsel %vm671, %v2345, 0.0
      %2348 = vadd.xlane.f32.xlu0 %v2347
      %v2349 = vpop.xlane.xlu0 %2348
      %v2350 = vsel %vm671, %v2346, 0.0
      %2351 = vadd.xlane.f32.xlu0 %v2350
      %v2352 = vpop.xlane.xlu0 %2351
      %v2353 = vmul.f32 %v2349, %v2093
      %v2354 = vmul.f32 %v2352, %v2093
      %v2355 = vsub.f32 %v2345, %v2353
      %v2356 = vsub.f32 %v2346, %v2354
      %v2357 = vmul.f32 %v2355, %v2355
      %v2358 = vmul.f32 %v2356, %v2356
      %v2359 = vsel %vm671, %v2357, 0.0
      %2360 = vadd.xlane.f32.xlu0 %v2359
      %v2361 = vpop.xlane.xlu0 %2360
      %v2362 = vsel %vm671, %v2358, 0.0
      %2363 = vadd.xlane.f32.xlu0 %v2362
      %v2364 = vpop.xlane.xlu0 %2363
      %v2365 = vmul.f32 %v2361, %v2093
      %v2366 = vmul.f32 %v2364, %v2093
      %v2367 = vadd.f32 %v2365, 1e-05
      %v2368 = vadd.f32 %v2366, 1e-05
      %v2369 = vrsqrt.pop %v2367
      %v2370 = vrsqrt.pop %v2368
      %v2371 = vmul.f32 %v2355, %v2369
      %v2372 = vmul.f32 %v2356, %v2370
      %v2374 = vlaneseq
      %v2375 = vshrl.u32 %v2374, 7
      %v2376 = vsub.s32 0, %v2375
      %v2377 = vrot.slane %v642, %v2376
      %v2379 = vmul.f32 %v2371, %v2377
      %v2380 = vmul.f32 %v2372, %v2377
      %v2382 = vlaneseq
      %v2383 = vshrl.u32 %v2382, 7
      %v2384 = vsub.s32 0, %v2383
      %v2385 = vrot.slane %v643, %v2384
      %v2387 = vadd.f32 %v2379, %v2385
      %v2388 = vadd.f32 %v2380, %v2385
      %v2389 = vpack.c.bf16 %v2388, %v2387
      %v2391 = vunpack.c.l.b16 %v2389
      %v2392 = vunpack.c.h.b16 %v2389
      %v2393 = vpack.c.b16 %v2391, %v2391
      %v2394 = vpack.c.b16 %v2392, %v2392
      %vm2397 = vcmask 257024
      %2398 = vst.msk [vmem:[%s550] sm:$0xf] %vm2397, %v2393
      %2399 = vst.msk [vmem:[%s550 + $0x4] sm:$0xf] %vm2397, %v2394
      %s2400 = smul.u32 2, %s28
      %p2401 = scmp.lt.s32.totalorder %s2400, 7
      %s2402 = scalar_select %p2401, %s2400, 7
      %s2403 = smul.addr %s2402, 4
      %s2404 = scalar_lea.vmem %s17, %s2403
      // Predicated region
      $region89: #{two_stage_attention.2} parent=87 // pred_check
        %p2405 = pneg %p408
      $region90: #{two_stage_attention.2} parent=87 // pred_check_branch
        %2407 = sbr.rel (%p2405) target = $region92
      $region91: #{two_stage_attention.2} parent=87 // pred_region
        %s2408 = smul.u32 2, %s28
      $region92: #{two_stage_attention.2} parent=87 // pred_fallthru
        _
    $region88: #{two_stage_attention.2} parent=5 // pred_fallthru
      _
    %p2409 = scmp.le.s32.totalorder 2, %s23
    // Predicated region
    $region93: #{two_stage_attention.2} parent=5 // pred_check
      %p2410 = pneg %p2409
    $region94: #{two_stage_attention.2} parent=5 // pred_check_branch
      %2412 = sbr.rel (%p2410) target = $region96
    $region95: #{two_stage_attention.2} parent=5 // pred_region
      %s2413 = ssub.s32 %s23, 2
      // Predicated region
      $region97: #{two_stage_attention.2} parent=95 // pred_check
        %p2414 = pneg %p414
      $region98: #{two_stage_attention.2} parent=95 // pred_check_branch
        %2416 = sbr.rel (%p2414) target = $region100
      $region99: #{two_stage_attention.2} parent=95 // pred_region
        %s2417 = smul.u32 2, %s29
        %p2418 = scmp.lt.s32.totalorder %s2417, 7
        %s2419 = scalar_select %p2418, %s2417, 7
        %s2420 = smul.addr %s2419, 4
        %s2421 = scalar_lea.vmem %s17, %s2420
      $region100: #{two_stage_attention.2} parent=95 // pred_fallthru
        _
    $region96: #{two_stage_attention.2} parent=5 // pred_fallthru
      _
  $region6: #{two_stage_attention.2} parent=0 // loop_footer
    %s27 = sadd.s32 1, %s23
  $region7: #{two_stage_attention.2} parent=0 // loop_footer_branch
    %22 = sbr.rel target = $region3
  $region8: #{two_stage_attention.2} parent=0 // loop_exit
    _

// kernel: two_stage_attention.3
$region0: #{two_stage_attention.3}
  #allocation0 [shape = 'u32[]', space=smem, size = 0x4, offset = 0x4, fixed_abs, tag = 'smem constant byte address 0x4 - core index']
  #allocation1 [shape = 'u32[144,128]{1,0:T(1,128)}', space=vmem, size = 0x12000, scoped, tag = 'internal scratch']
  %s0 = inlined_call_operand.vmem [shape: bf16[64,32], index: 0, kind: input, shape index: {}]
  %s1 = inlined_call_operand.vmem [shape: f32[16,32], index: 1, kind: input, shape index: {}]
  %s2 = inlined_call_operand.vmem [shape: bf16[4,32,8], index: 2, kind: input, shape index: {}]
  %s3 = inlined_call_operand.vmem [shape: f32[4,1,8], index: 3, kind: input, shape index: {}]
  %s4 = inlined_call_operand.vmem [shape: bf16[4,32,8], index: 4, kind: input, shape index: {}]
  %s5 = inlined_call_operand.vmem [shape: f32[4,1,8], index: 5, kind: input, shape index: {}]
  %s6 = inlined_call_operand.vmem [shape: bf16[4,32,8], index: 6, kind: input, shape index: {}]
  %s7 = inlined_call_operand.vmem [shape: f32[4,1,8], index: 7, kind: input, shape index: {}]
  %s8 = inlined_call_operand.vmem [shape: bf16[4,8,32], index: 8, kind: input, shape index: {}]
  %s9 = inlined_call_operand.vmem [shape: f32[1,32], index: 9, kind: input, shape index: {}]
  %s10 = inlined_call_operand.vmem [shape: bf16[4,32,8], index: 10, kind: input, shape index: {}]
  %s11 = inlined_call_operand.vmem [shape: f32[4,1,8], index: 11, kind: input, shape index: {}]
  %s12 = inlined_call_operand.vmem [shape: bf16[4,32,8], index: 12, kind: input, shape index: {}]
  %s13 = inlined_call_operand.vmem [shape: f32[4,1,8], index: 13, kind: input, shape index: {}]
  %s14 = inlined_call_operand.vmem [shape: bf16[4,32,8], index: 14, kind: input, shape index: {}]
  %s15 = inlined_call_operand.vmem [shape: f32[4,1,8], index: 15, kind: input, shape index: {}]
  %s16 = inlined_call_operand.vmem [shape: bf16[4,8,32], index: 16, kind: input, shape index: {}]
  %s17 = inlined_call_operand.vmem [shape: f32[1,32], index: 17, kind: input, shape index: {}]
  %s18 = inlined_call_operand.vmem [shape: f32[1,32], index: 18, kind: input, shape index: {}]
  %s19 = inlined_call_operand.vmem [shape: f32[1,32], index: 19, kind: input, shape index: {}]
  %s20 = inlined_call_operand.vmem [shape: bf16[32,128], index: 20, kind: input, shape index: {}]
  %s21 = inlined_call_operand.vmem [shape: f32[1,128], index: 21, kind: input, shape index: {}]
  %s22 = inlined_call_operand.vmem [shape: bf16[128,32], index: 22, kind: input, shape index: {}]
  %s23 = inlined_call_operand.vmem [shape: f32[1,32], index: 23, kind: input, shape index: {}]
  %s24 = inlined_call_operand.vmem [shape: f32[1,32], index: 24, kind: input, shape index: {}]
  %s25 = inlined_call_operand.vmem [shape: f32[1,32], index: 25, kind: input, shape index: {}]
  %s26 = inlined_call_operand.vmem [shape: f32[64,32], index: 26, kind: output, shape index: {}]
  %s27 = sld [smem:[#allocation0]]
  $region137: #{two_stage_attention.3} parent=0
    _
  %s29 = ssub.s32 1, %s27
  %s30 = scalar_select 0, %s29, %s27
  loop: start=0, step=1, limit=6
  $region2: #{two_stage_attention.3} parent=0 // loop_pre_header
    _
  $region3: #{two_stage_attention.3} parent=0 // loop_header
    %s32 = sphi 0, %s36
    %p33 = scmp.ge.s32.totalorder %s32, 6
    %s39 = sphi 0, %s51
    %s40 = sphi 0, %s47
    %s41 = sphi 0, %s39
    %s42 = sphi 0, %s40
    %s43 = sphi 0, %s41
    %s44 = sphi 0, %s42
    %s58 = sphi 0, %s60
    %s61 = sphi 0, %s58
    %s62 = sphi 0, %s61
    %s78 = sphi 0, %s62
    %s84 = sphi 0, %s86
    %s87 = sphi 0, %s84
    %s88 = sphi 0, %s87
    %s104 = sphi 0, %s88
    %s108 = sphi 0, %s108
    %s110 = sphi 0, %s108
    %s111 = sphi 0, %s110
    %s125 = sphi 0, %s111
    %s129 = sphi 0, %s129
    %s131 = sphi 0, %s129
    %s132 = sphi 0, %s131
    %s146 = sphi 0, %s132
    %s150 = sphi 0, %s150
    %s152 = sphi 0, %s150
    %s153 = sphi 0, %s152
    %s167 = sphi 0, %s153
    %s171 = sphi 0, %s171
    %s173 = sphi 0, %s171
    %s174 = sphi 0, %s173
    %s188 = sphi 0, %s174
    %s192 = sphi 0, %s192
    %s194 = sphi 0, %s192
    %s195 = sphi 0, %s194
    %s209 = sphi 0, %s195
    %s213 = sphi 0, %s213
    %s215 = sphi 0, %s213
    %s216 = sphi 0, %s215
    %s230 = sphi 0, %s216
    %s234 = sphi 0, %s234
    %s236 = sphi 0, %s234
    %s237 = sphi 0, %s236
    %s251 = sphi 0, %s237
    %s255 = sphi 0, %s255
    %s257 = sphi 0, %s255
    %s258 = sphi 0, %s257
    %s272 = sphi 0, %s258
    %s276 = sphi 0, %s276
    %s278 = sphi 0, %s276
    %s279 = sphi 0, %s278
    %s293 = sphi 0, %s279
    %s297 = sphi 0, %s297
    %s299 = sphi 0, %s297
    %s300 = sphi 0, %s299
    %s314 = sphi 0, %s300
    %s318 = sphi 0, %s318
    %s320 = sphi 0, %s318
    %s321 = sphi 0, %s320
    %s335 = sphi 0, %s321
    %s339 = sphi 0, %s339
    %s341 = sphi 0, %s339
    %s342 = sphi 0, %s341
    %s356 = sphi 0, %s342
    %s360 = sphi 0, %s360
    %s362 = sphi 0, %s360
    %s363 = sphi 0, %s362
    %s377 = sphi 0, %s363
    %s381 = sphi 0, %s381
    %s383 = sphi 0, %s381
    %s384 = sphi 0, %s383
    %s398 = sphi 0, %s384
    %s402 = sphi 0, %s402
    %s404 = sphi 0, %s402
    %s405 = sphi 0, %s404
    %s419 = sphi 0, %s405
    %s423 = sphi 0, %s423
    %s425 = sphi 0, %s423
    %s426 = sphi 0, %s425
    %s440 = sphi 0, %s426
    %s444 = sphi 0, %s444
    %s446 = sphi 0, %s444
    %s447 = sphi 0, %s446
    %s461 = sphi 0, %s447
    %s465 = sphi 0, %s465
    %s467 = sphi 0, %s465
    %s468 = sphi 0, %s467
    %s482 = sphi 0, %s468
    %s486 = sphi 0, %s486
    %s488 = sphi 0, %s486
    %s489 = sphi 0, %s488
    %s503 = sphi 0, %s489
    %s507 = sphi 0, %s507
    %s509 = sphi 0, %s507
    %s510 = sphi 0, %s509
    %s524 = sphi 0, %s510
    %s528 = sphi 0, %s528
    %s530 = sphi 0, %s528
    %s531 = sphi 0, %s530
    %s545 = sphi 0, %s531
    %s549 = sphi 0, %s549
    %s551 = sphi 0, %s549
    %s552 = sphi 0, %s551
    %s566 = sphi 0, %s552
    %s570 = sphi 0, %s570
    %s572 = sphi 0, %s570
    %s573 = sphi 0, %s572
    %s587 = sphi 0, %s573
    %s591 = sphi 0, %s591
    %s593 = sphi 0, %s591
    %s594 = sphi 0, %s593
    %s608 = sphi 0, %s594
    %s618 = sphi 0, %s620
    %s621 = sphi 0, %s618
    %s622 = sphi 0, %s621
    %s638 = sphi 0, %s622
  $region4: #{two_stage_attention.3} parent=0 // loop_header_branch
    %35 = sbr.rel (%p33) target = $region8
  $region5: #{two_stage_attention.3} parent=0 // loop_body
    %s37 = ssub.s32 %s32, 1
    %s38 = ssub.s32 %s32, 2
    %s45 = sadd.s32 1, %s40
    %p46 = scmp.ge.s32.totalorder %s45, 2
    %s47 = scalar_select %p46, 0, %s45
    %s48 = sadd.s32 1, %s39
    %s49 = scalar_select %p46, %s48, %s39
    %p50 = scmp.ge.s32.totalorder %s49, 2
    %s51 = scalar_select %p50, 0, %s49
    %s52 = smul.u32 %s39, 2
    %s53 = sadd.s32 %s52, %s40
    %s54 = smul.u32 %s51, 2
    %s55 = sadd.s32 %s54, %s47
    %s56 = ssub.s32 %s53, %s55
    %p57 = scmp.eq.s32.totalorder %s56, 0
    %s59 = sadd.s32 %s58, 1
    %s60 = scalar_select %p57, %s58, %s59
    %p63 = pneg %p57
    %p64 = scmp.eq.s32.totalorder %s32, 3
    %p65 = por %p63, %p64
    %p66 = scmp.ne.s32.totalorder %s58, %s61
    %p67 = scmp.eq.s32.totalorder %s32, 0
    %p68 = por %p66, %p67
    %p69 = scmp.ne.s32.totalorder %s58, %s61
    %p70 = scmp.eq.s32.totalorder %s37, 3
    %p71 = por %p69, %p70
    %p72 = scmp.ne.s32.totalorder %s61, %s62
    %p73 = scmp.eq.s32.totalorder %s37, 0
    %p74 = por %p72, %p73
    %p75 = scmp.ne.s32.totalorder %s61, %s62
    %p76 = scmp.eq.s32.totalorder %s38, 3
    %p77 = por %p75, %p76
    %p79 = scmp.ne.s32.totalorder %s62, %s78
    %p80 = scmp.eq.s32.totalorder %s38, 0
    %p81 = por %p79, %p80
    %s82 = ssub.s32 %s40, %s47
    %p83 = scmp.eq.s32.totalorder %s82, 0
    %s85 = sadd.s32 %s84, 1
    %s86 = scalar_select %p83, %s84, %s85
    %p89 = pneg %p83
    %p90 = scmp.eq.s32.totalorder %s32, 3
    %p91 = por %p89, %p90
    %p92 = scmp.ne.s32.totalorder %s84, %s87
    %p93 = scmp.eq.s32.totalorder %s32, 0
    %p94 = por %p92, %p93
    %p95 = scmp.ne.s32.totalorder %s84, %s87
    %p96 = scmp.eq.s32.totalorder %s37, 3
    %p97 = por %p95, %p96
    %p98 = scmp.ne.s32.totalorder %s87, %s88
    %p99 = scmp.eq.s32.totalorder %s37, 0
    %p100 = por %p98, %p99
    %p101 = scmp.ne.s32.totalorder %s87, %s88
    %p102 = scmp.eq.s32.totalorder %s38, 3
    %p103 = por %p101, %p102
    %p105 = scmp.ne.s32.totalorder %s88, %s104
    %p106 = scmp.eq.s32.totalorder %s38, 0
    %p107 = por %p105, %p106
    %s109 = sadd.s32 %s108, 1
    %p112 = scmp.eq.s32.totalorder %s32, 3
    %p113 = scmp.ne.s32.totalorder %s108, %s110
    %p114 = scmp.eq.s32.totalorder %s32, 0
    %p115 = por %p113, %p114
    %p116 = scmp.ne.s32.totalorder %s108, %s110
    %p117 = scmp.eq.s32.totalorder %s37, 3
    %p118 = por %p116, %p117
    %p119 = scmp.ne.s32.totalorder %s110, %s111
    %p120 = scmp.eq.s32.totalorder %s37, 0
    %p121 = por %p119, %p120
    %p122 = scmp.ne.s32.totalorder %s110, %s111
    %p123 = scmp.eq.s32.totalorder %s38, 3
    %p124 = por %p122, %p123
    %p126 = scmp.ne.s32.totalorder %s111, %s125
    %p127 = scmp.eq.s32.totalorder %s38, 0
    %p128 = por %p126, %p127
    %s130 = sadd.s32 %s129, 1
    %p133 = scmp.eq.s32.totalorder %s32, 3
    %p134 = scmp.ne.s32.totalorder %s129, %s131
    %p135 = scmp.eq.s32.totalorder %s32, 0
    %p136 = por %p134, %p135
    %p137 = scmp.ne.s32.totalorder %s129, %s131
    %p138 = scmp.eq.s32.totalorder %s37, 3
    %p139 = por %p137, %p138
    %p140 = scmp.ne.s32.totalorder %s131, %s132
    %p141 = scmp.eq.s32.totalorder %s37, 0
    %p142 = por %p140, %p141
    %p143 = scmp.ne.s32.totalorder %s131, %s132
    %p144 = scmp.eq.s32.totalorder %s38, 3
    %p145 = por %p143, %p144
    %p147 = scmp.ne.s32.totalorder %s132, %s146
    %p148 = scmp.eq.s32.totalorder %s38, 0
    %p149 = por %p147, %p148
    %s151 = sadd.s32 %s150, 1
    %p154 = scmp.eq.s32.totalorder %s32, 3
    %p155 = scmp.ne.s32.totalorder %s150, %s152
    %p156 = scmp.eq.s32.totalorder %s32, 0
    %p157 = por %p155, %p156
    %p158 = scmp.ne.s32.totalorder %s150, %s152
    %p159 = scmp.eq.s32.totalorder %s37, 3
    %p160 = por %p158, %p159
    %p161 = scmp.ne.s32.totalorder %s152, %s153
    %p162 = scmp.eq.s32.totalorder %s37, 0
    %p163 = por %p161, %p162
    %p164 = scmp.ne.s32.totalorder %s152, %s153
    %p165 = scmp.eq.s32.totalorder %s38, 3
    %p166 = por %p164, %p165
    %p168 = scmp.ne.s32.totalorder %s153, %s167
    %p169 = scmp.eq.s32.totalorder %s38, 0
    %p170 = por %p168, %p169
    %s172 = sadd.s32 %s171, 1
    %p175 = scmp.eq.s32.totalorder %s32, 3
    %p176 = scmp.ne.s32.totalorder %s171, %s173
    %p177 = scmp.eq.s32.totalorder %s32, 0
    %p178 = por %p176, %p177
    %p179 = scmp.ne.s32.totalorder %s171, %s173
    %p180 = scmp.eq.s32.totalorder %s37, 3
    %p181 = por %p179, %p180
    %p182 = scmp.ne.s32.totalorder %s173, %s174
    %p183 = scmp.eq.s32.totalorder %s37, 0
    %p184 = por %p182, %p183
    %p185 = scmp.ne.s32.totalorder %s173, %s174
    %p186 = scmp.eq.s32.totalorder %s38, 3
    %p187 = por %p185, %p186
    %p189 = scmp.ne.s32.totalorder %s174, %s188
    %p190 = scmp.eq.s32.totalorder %s38, 0
    %p191 = por %p189, %p190
    %s193 = sadd.s32 %s192, 1
    %p196 = scmp.eq.s32.totalorder %s32, 3
    %p197 = scmp.ne.s32.totalorder %s192, %s194
    %p198 = scmp.eq.s32.totalorder %s32, 0
    %p199 = por %p197, %p198
    %p200 = scmp.ne.s32.totalorder %s192, %s194
    %p201 = scmp.eq.s32.totalorder %s37, 3
    %p202 = por %p200, %p201
    %p203 = scmp.ne.s32.totalorder %s194, %s195
    %p204 = scmp.eq.s32.totalorder %s37, 0
    %p205 = por %p203, %p204
    %p206 = scmp.ne.s32.totalorder %s194, %s195
    %p207 = scmp.eq.s32.totalorder %s38, 3
    %p208 = por %p206, %p207
    %p210 = scmp.ne.s32.totalorder %s195, %s209
    %p211 = scmp.eq.s32.totalorder %s38, 0
    %p212 = por %p210, %p211
    %s214 = sadd.s32 %s213, 1
    %p217 = scmp.eq.s32.totalorder %s32, 3
    %p218 = scmp.ne.s32.totalorder %s213, %s215
    %p219 = scmp.eq.s32.totalorder %s32, 0
    %p220 = por %p218, %p219
    %p221 = scmp.ne.s32.totalorder %s213, %s215
    %p222 = scmp.eq.s32.totalorder %s37, 3
    %p223 = por %p221, %p222
    %p224 = scmp.ne.s32.totalorder %s215, %s216
    %p225 = scmp.eq.s32.totalorder %s37, 0
    %p226 = por %p224, %p225
    %p227 = scmp.ne.s32.totalorder %s215, %s216
    %p228 = scmp.eq.s32.totalorder %s38, 3
    %p229 = por %p227, %p228
    %p231 = scmp.ne.s32.totalorder %s216, %s230
    %p232 = scmp.eq.s32.totalorder %s38, 0
    %p233 = por %p231, %p232
    %s235 = sadd.s32 %s234, 1
    %p238 = scmp.eq.s32.totalorder %s32, 3
    %p239 = scmp.ne.s32.totalorder %s234, %s236
    %p240 = scmp.eq.s32.totalorder %s32, 0
    %p241 = por %p239, %p240
    %p242 = scmp.ne.s32.totalorder %s234, %s236
    %p243 = scmp.eq.s32.totalorder %s37, 3
    %p244 = por %p242, %p243
    %p245 = scmp.ne.s32.totalorder %s236, %s237
    %p246 = scmp.eq.s32.totalorder %s37, 0
    %p247 = por %p245, %p246
    %p248 = scmp.ne.s32.totalorder %s236, %s237
    %p249 = scmp.eq.s32.totalorder %s38, 3
    %p250 = por %p248, %p249
    %p252 = scmp.ne.s32.totalorder %s237, %s251
    %p253 = scmp.eq.s32.totalorder %s38, 0
    %p254 = por %p252, %p253
    %s256 = sadd.s32 %s255, 1
    %p259 = scmp.eq.s32.totalorder %s32, 3
    %p260 = scmp.ne.s32.totalorder %s255, %s257
    %p261 = scmp.eq.s32.totalorder %s32, 0
    %p262 = por %p260, %p261
    %p263 = scmp.ne.s32.totalorder %s255, %s257
    %p264 = scmp.eq.s32.totalorder %s37, 3
    %p265 = por %p263, %p264
    %p266 = scmp.ne.s32.totalorder %s257, %s258
    %p267 = scmp.eq.s32.totalorder %s37, 0
    %p268 = por %p266, %p267
    %p269 = scmp.ne.s32.totalorder %s257, %s258
    %p270 = scmp.eq.s32.totalorder %s38, 3
    %p271 = por %p269, %p270
    %p273 = scmp.ne.s32.totalorder %s258, %s272
    %p274 = scmp.eq.s32.totalorder %s38, 0
    %p275 = por %p273, %p274
    %s277 = sadd.s32 %s276, 1
    %p280 = scmp.eq.s32.totalorder %s32, 3
    %p281 = scmp.ne.s32.totalorder %s276, %s278
    %p282 = scmp.eq.s32.totalorder %s32, 0
    %p283 = por %p281, %p282
    %p284 = scmp.ne.s32.totalorder %s276, %s278
    %p285 = scmp.eq.s32.totalorder %s37, 3
    %p286 = por %p284, %p285
    %p287 = scmp.ne.s32.totalorder %s278, %s279
    %p288 = scmp.eq.s32.totalorder %s37, 0
    %p289 = por %p287, %p288
    %p290 = scmp.ne.s32.totalorder %s278, %s279
    %p291 = scmp.eq.s32.totalorder %s38, 3
    %p292 = por %p290, %p291
    %p294 = scmp.ne.s32.totalorder %s279, %s293
    %p295 = scmp.eq.s32.totalorder %s38, 0
    %p296 = por %p294, %p295
    %s298 = sadd.s32 %s297, 1
    %p301 = scmp.eq.s32.totalorder %s32, 3
    %p302 = scmp.ne.s32.totalorder %s297, %s299
    %p303 = scmp.eq.s32.totalorder %s32, 0
    %p304 = por %p302, %p303
    %p305 = scmp.ne.s32.totalorder %s297, %s299
    %p306 = scmp.eq.s32.totalorder %s37, 3
    %p307 = por %p305, %p306
    %p308 = scmp.ne.s32.totalorder %s299, %s300
    %p309 = scmp.eq.s32.totalorder %s37, 0
    %p310 = por %p308, %p309
    %p311 = scmp.ne.s32.totalorder %s299, %s300
    %p312 = scmp.eq.s32.totalorder %s38, 3
    %p313 = por %p311, %p312
    %p315 = scmp.ne.s32.totalorder %s300, %s314
    %p316 = scmp.eq.s32.totalorder %s38, 0
    %p317 = por %p315, %p316
    %s319 = sadd.s32 %s318, 1
    %p322 = scmp.eq.s32.totalorder %s32, 3
    %p323 = scmp.ne.s32.totalorder %s318, %s320
    %p324 = scmp.eq.s32.totalorder %s32, 0
    %p325 = por %p323, %p324
    %p326 = scmp.ne.s32.totalorder %s318, %s320
    %p327 = scmp.eq.s32.totalorder %s37, 3
    %p328 = por %p326, %p327
    %p329 = scmp.ne.s32.totalorder %s320, %s321
    %p330 = scmp.eq.s32.totalorder %s37, 0
    %p331 = por %p329, %p330
    %p332 = scmp.ne.s32.totalorder %s320, %s321
    %p333 = scmp.eq.s32.totalorder %s38, 3
    %p334 = por %p332, %p333
    %p336 = scmp.ne.s32.totalorder %s321, %s335
    %p337 = scmp.eq.s32.totalorder %s38, 0
    %p338 = por %p336, %p337
    %s340 = sadd.s32 %s339, 1
    %p343 = scmp.eq.s32.totalorder %s32, 3
    %p344 = scmp.ne.s32.totalorder %s339, %s341
    %p345 = scmp.eq.s32.totalorder %s32, 0
    %p346 = por %p344, %p345
    %p347 = scmp.ne.s32.totalorder %s339, %s341
    %p348 = scmp.eq.s32.totalorder %s37, 3
    %p349 = por %p347, %p348
    %p350 = scmp.ne.s32.totalorder %s341, %s342
    %p351 = scmp.eq.s32.totalorder %s37, 0
    %p352 = por %p350, %p351
    %p353 = scmp.ne.s32.totalorder %s341, %s342
    %p354 = scmp.eq.s32.totalorder %s38, 3
    %p355 = por %p353, %p354
    %p357 = scmp.ne.s32.totalorder %s342, %s356
    %p358 = scmp.eq.s32.totalorder %s38, 0
    %p359 = por %p357, %p358
    %s361 = sadd.s32 %s360, 1
    %p364 = scmp.eq.s32.totalorder %s32, 3
    %p365 = scmp.ne.s32.totalorder %s360, %s362
    %p366 = scmp.eq.s32.totalorder %s32, 0
    %p367 = por %p365, %p366
    %p368 = scmp.ne.s32.totalorder %s360, %s362
    %p369 = scmp.eq.s32.totalorder %s37, 3
    %p370 = por %p368, %p369
    %p371 = scmp.ne.s32.totalorder %s362, %s363
    %p372 = scmp.eq.s32.totalorder %s37, 0
    %p373 = por %p371, %p372
    %p374 = scmp.ne.s32.totalorder %s362, %s363
    %p375 = scmp.eq.s32.totalorder %s38, 3
    %p376 = por %p374, %p375
    %p378 = scmp.ne.s32.totalorder %s363, %s377
    %p379 = scmp.eq.s32.totalorder %s38, 0
    %p380 = por %p378, %p379
    %s382 = sadd.s32 %s381, 1
    %p385 = scmp.eq.s32.totalorder %s32, 3
    %p386 = scmp.ne.s32.totalorder %s381, %s383
    %p387 = scmp.eq.s32.totalorder %s32, 0
    %p388 = por %p386, %p387
    %p389 = scmp.ne.s32.totalorder %s381, %s383
    %p390 = scmp.eq.s32.totalorder %s37, 3
    %p391 = por %p389, %p390
    %p392 = scmp.ne.s32.totalorder %s383, %s384
    %p393 = scmp.eq.s32.totalorder %s37, 0
    %p394 = por %p392, %p393
    %p395 = scmp.ne.s32.totalorder %s383, %s384
    %p396 = scmp.eq.s32.totalorder %s38, 3
    %p397 = por %p395, %p396
    %p399 = scmp.ne.s32.totalorder %s384, %s398
    %p400 = scmp.eq.s32.totalorder %s38, 0
    %p401 = por %p399, %p400
    %s403 = sadd.s32 %s402, 1
    %p406 = scmp.eq.s32.totalorder %s32, 3
    %p407 = scmp.ne.s32.totalorder %s402, %s404
    %p408 = scmp.eq.s32.totalorder %s32, 0
    %p409 = por %p407, %p408
    %p410 = scmp.ne.s32.totalorder %s402, %s404
    %p411 = scmp.eq.s32.totalorder %s37, 3
    %p412 = por %p410, %p411
    %p413 = scmp.ne.s32.totalorder %s404, %s405
    %p414 = scmp.eq.s32.totalorder %s37, 0
    %p415 = por %p413, %p414
    %p416 = scmp.ne.s32.totalorder %s404, %s405
    %p417 = scmp.eq.s32.totalorder %s38, 3
    %p418 = por %p416, %p417
    %p420 = scmp.ne.s32.totalorder %s405, %s419
    %p421 = scmp.eq.s32.totalorder %s38, 0
    %p422 = por %p420, %p421
    %s424 = sadd.s32 %s423, 1
    %p427 = scmp.eq.s32.totalorder %s32, 3
    %p428 = scmp.ne.s32.totalorder %s423, %s425
    %p429 = scmp.eq.s32.totalorder %s32, 0
    %p430 = por %p428, %p429
    %p431 = scmp.ne.s32.totalorder %s423, %s425
    %p432 = scmp.eq.s32.totalorder %s37, 3
    %p433 = por %p431, %p432
    %p434 = scmp.ne.s32.totalorder %s425, %s426
    %p435 = scmp.eq.s32.totalorder %s37, 0
    %p436 = por %p434, %p435
    %p437 = scmp.ne.s32.totalorder %s425, %s426
    %p438 = scmp.eq.s32.totalorder %s38, 3
    %p439 = por %p437, %p438
    %p441 = scmp.ne.s32.totalorder %s426, %s440
    %p442 = scmp.eq.s32.totalorder %s38, 0
    %p443 = por %p441, %p442
    %s445 = sadd.s32 %s444, 1
    %p448 = scmp.eq.s32.totalorder %s32, 3
    %p449 = scmp.ne.s32.totalorder %s444, %s446
    %p450 = scmp.eq.s32.totalorder %s32, 0
    %p451 = por %p449, %p450
    %p452 = scmp.ne.s32.totalorder %s444, %s446
    %p453 = scmp.eq.s32.totalorder %s37, 3
    %p454 = por %p452, %p453
    %p455 = scmp.ne.s32.totalorder %s446, %s447
    %p456 = scmp.eq.s32.totalorder %s37, 0
    %p457 = por %p455, %p456
    %p458 = scmp.ne.s32.totalorder %s446, %s447
    %p459 = scmp.eq.s32.totalorder %s38, 3
    %p460 = por %p458, %p459
    %p462 = scmp.ne.s32.totalorder %s447, %s461
    %p463 = scmp.eq.s32.totalorder %s38, 0
    %p464 = por %p462, %p463
    %s466 = sadd.s32 %s465, 1
    %p469 = scmp.eq.s32.totalorder %s32, 3
    %p470 = scmp.ne.s32.totalorder %s465, %s467
    %p471 = scmp.eq.s32.totalorder %s32, 0
    %p472 = por %p470, %p471
    %p473 = scmp.ne.s32.totalorder %s465, %s467
    %p474 = scmp.eq.s32.totalorder %s37, 3
    %p475 = por %p473, %p474
    %p476 = scmp.ne.s32.totalorder %s467, %s468
    %p477 = scmp.eq.s32.totalorder %s37, 0
    %p478 = por %p476, %p477
    %p479 = scmp.ne.s32.totalorder %s467, %s468
    %p480 = scmp.eq.s32.totalorder %s38, 3
    %p481 = por %p479, %p480
    %p483 = scmp.ne.s32.totalorder %s468, %s482
    %p484 = scmp.eq.s32.totalorder %s38, 0
    %p485 = por %p483, %p484
    %s487 = sadd.s32 %s486, 1
    %p490 = scmp.eq.s32.totalorder %s32, 3
    %p491 = scmp.ne.s32.totalorder %s486, %s488
    %p492 = scmp.eq.s32.totalorder %s32, 0
    %p493 = por %p491, %p492
    %p494 = scmp.ne.s32.totalorder %s486, %s488
    %p495 = scmp.eq.s32.totalorder %s37, 3
    %p496 = por %p494, %p495
    %p497 = scmp.ne.s32.totalorder %s488, %s489
    %p498 = scmp.eq.s32.totalorder %s37, 0
    %p499 = por %p497, %p498
    %p500 = scmp.ne.s32.totalorder %s488, %s489
    %p501 = scmp.eq.s32.totalorder %s38, 3
    %p502 = por %p500, %p501
    %p504 = scmp.ne.s32.totalorder %s489, %s503
    %p505 = scmp.eq.s32.totalorder %s38, 0
    %p506 = por %p504, %p505
    %s508 = sadd.s32 %s507, 1
    %p511 = scmp.eq.s32.totalorder %s32, 3
    %p512 = scmp.ne.s32.totalorder %s507, %s509
    %p513 = scmp.eq.s32.totalorder %s32, 0
    %p514 = por %p512, %p513
    %p515 = scmp.ne.s32.totalorder %s507, %s509
    %p516 = scmp.eq.s32.totalorder %s37, 3
    %p517 = por %p515, %p516
    %p518 = scmp.ne.s32.totalorder %s509, %s510
    %p519 = scmp.eq.s32.totalorder %s37, 0
    %p520 = por %p518, %p519
    %p521 = scmp.ne.s32.totalorder %s509, %s510
    %p522 = scmp.eq.s32.totalorder %s38, 3
    %p523 = por %p521, %p522
    %p525 = scmp.ne.s32.totalorder %s510, %s524
    %p526 = scmp.eq.s32.totalorder %s38, 0
    %p527 = por %p525, %p526
    %s529 = sadd.s32 %s528, 1
    %p532 = scmp.eq.s32.totalorder %s32, 3
    %p533 = scmp.ne.s32.totalorder %s528, %s530
    %p534 = scmp.eq.s32.totalorder %s32, 0
    %p535 = por %p533, %p534
    %p536 = scmp.ne.s32.totalorder %s528, %s530
    %p537 = scmp.eq.s32.totalorder %s37, 3
    %p538 = por %p536, %p537
    %p539 = scmp.ne.s32.totalorder %s530, %s531
    %p540 = scmp.eq.s32.totalorder %s37, 0
    %p541 = por %p539, %p540
    %p542 = scmp.ne.s32.totalorder %s530, %s531
    %p543 = scmp.eq.s32.totalorder %s38, 3
    %p544 = por %p542, %p543
    %p546 = scmp.ne.s32.totalorder %s531, %s545
    %p547 = scmp.eq.s32.totalorder %s38, 0
    %p548 = por %p546, %p547
    %s550 = sadd.s32 %s549, 1
    %p553 = scmp.eq.s32.totalorder %s32, 3
    %p554 = scmp.ne.s32.totalorder %s549, %s551
    %p555 = scmp.eq.s32.totalorder %s32, 0
    %p556 = por %p554, %p555
    %p557 = scmp.ne.s32.totalorder %s549, %s551
    %p558 = scmp.eq.s32.totalorder %s37, 3
    %p559 = por %p557, %p558
    %p560 = scmp.ne.s32.totalorder %s551, %s552
    %p561 = scmp.eq.s32.totalorder %s37, 0
    %p562 = por %p560, %p561
    %p563 = scmp.ne.s32.totalorder %s551, %s552
    %p564 = scmp.eq.s32.totalorder %s38, 3
    %p565 = por %p563, %p564
    %p567 = scmp.ne.s32.totalorder %s552, %s566
    %p568 = scmp.eq.s32.totalorder %s38, 0
    %p569 = por %p567, %p568
    %s571 = sadd.s32 %s570, 1
    %p574 = scmp.eq.s32.totalorder %s32, 3
    %p575 = scmp.ne.s32.totalorder %s570, %s572
    %p576 = scmp.eq.s32.totalorder %s32, 0
    %p577 = por %p575, %p576
    %p578 = scmp.ne.s32.totalorder %s570, %s572
    %p579 = scmp.eq.s32.totalorder %s37, 3
    %p580 = por %p578, %p579
    %p581 = scmp.ne.s32.totalorder %s572, %s573
    %p582 = scmp.eq.s32.totalorder %s37, 0
    %p583 = por %p581, %p582
    %p584 = scmp.ne.s32.totalorder %s572, %s573
    %p585 = scmp.eq.s32.totalorder %s38, 3
    %p586 = por %p584, %p585
    %p588 = scmp.ne.s32.totalorder %s573, %s587
    %p589 = scmp.eq.s32.totalorder %s38, 0
    %p590 = por %p588, %p589
    %s592 = sadd.s32 %s591, 1
    %p595 = scmp.eq.s32.totalorder %s32, 3
    %p596 = scmp.ne.s32.totalorder %s591, %s593
    %p597 = scmp.eq.s32.totalorder %s32, 0
    %p598 = por %p596, %p597
    %p599 = scmp.ne.s32.totalorder %s591, %s593
    %p600 = scmp.eq.s32.totalorder %s37, 3
    %p601 = por %p599, %p600
    %p602 = scmp.ne.s32.totalorder %s593, %s594
    %p603 = scmp.eq.s32.totalorder %s37, 0
    %p604 = por %p602, %p603
    %p605 = scmp.ne.s32.totalorder %s593, %s594
    %p606 = scmp.eq.s32.totalorder %s38, 3
    %p607 = por %p605, %p606
    %p609 = scmp.ne.s32.totalorder %s594, %s608
    %p610 = scmp.eq.s32.totalorder %s38, 0
    %p611 = por %p609, %p610
    %s612 = smul.u32 %s39, 2
    %s613 = sadd.s32 %s612, %s40
    %s614 = smul.u32 %s51, 2
    %s615 = sadd.s32 %s614, %s47
    %s616 = ssub.s32 %s613, %s615
    %p617 = scmp.eq.s32.totalorder %s616, 0
    %s619 = sadd.s32 %s618, 1
    %s620 = scalar_select %p617, %s618, %s619
    %p623 = pneg %p617
    %p624 = scmp.eq.s32.totalorder %s32, 3
    %p625 = por %p623, %p624
    %p626 = scmp.ne.s32.totalorder %s618, %s621
    %p627 = scmp.eq.s32.totalorder %s32, 0
    %p628 = por %p626, %p627
    %p629 = scmp.ne.s32.totalorder %s618, %s621
    %p630 = scmp.eq.s32.totalorder %s37, 3
    %p631 = por %p629, %p630
    %p632 = scmp.ne.s32.totalorder %s621, %s622
    %p633 = scmp.eq.s32.totalorder %s37, 0
    %p634 = por %p632, %p633
    %p635 = scmp.ne.s32.totalorder %s621, %s622
    %p636 = scmp.eq.s32.totalorder %s38, 3
    %p637 = por %p635, %p636
    %p639 = scmp.ne.s32.totalorder %s622, %s638
    %p640 = scmp.eq.s32.totalorder %s38, 0
    %p641 = por %p639, %p640
    %p642 = scmp.le.s32.totalorder 1, %s32
    %p643 = scmp.lt.s32.totalorder %s32, 5
    %p644 = pnand %p642, %p643
    %p645 = pneg %p644
    // Predicated region
    $region9: #{two_stage_attention.3} parent=5 // pred_check
      _
    $region10: #{two_stage_attention.3} parent=5 // pred_check_branch
      %647 = sbr.rel (%p644) target = $region12
    $region11: #{two_stage_attention.3} parent=5 // pred_region
      %s648 = ssub.s32 %s32, 1
      // Predicated region
      $region13: #{two_stage_attention.3} parent=11 // pred_check
        %p649 = pneg %p121
      $region14: #{two_stage_attention.3} parent=11 // pred_check_branch
        %651 = sbr.rel (%p649) target = $region16
      $region15: #{two_stage_attention.3} parent=11 // pred_region
        _
      $region16: #{two_stage_attention.3} parent=11 // pred_fallthru
        _
      // Predicated region
      $region17: #{two_stage_attention.3} parent=11 // pred_check
        %p652 = pneg %p142
      $region18: #{two_stage_attention.3} parent=11 // pred_check_branch
        %654 = sbr.rel (%p652) target = $region20
      $region19: #{two_stage_attention.3} parent=11 // pred_region
        _
      $region20: #{two_stage_attention.3} parent=11 // pred_fallthru
        _
      // Predicated region
      $region21: #{two_stage_attention.3} parent=11 // pred_check
        %p655 = pneg %p163
      $region22: #{two_stage_attention.3} parent=11 // pred_check_branch
        %657 = sbr.rel (%p655) target = $region24
      $region23: #{two_stage_attention.3} parent=11 // pred_region
        _
      $region24: #{two_stage_attention.3} parent=11 // pred_fallthru
        _
      // Predicated region
      $region25: #{two_stage_attention.3} parent=11 // pred_check
        %p658 = pneg %p184
      $region26: #{two_stage_attention.3} parent=11 // pred_check_branch
        %660 = sbr.rel (%p658) target = $region28
      $region27: #{two_stage_attention.3} parent=11 // pred_region
        _
      $region28: #{two_stage_attention.3} parent=11 // pred_fallthru
        _
      // Predicated region
      $region29: #{two_stage_attention.3} parent=11 // pred_check
        %p661 = pneg %p205
      $region30: #{two_stage_attention.3} parent=11 // pred_check_branch
        %663 = sbr.rel (%p661) target = $region32
      $region31: #{two_stage_attention.3} parent=11 // pred_region
        _
      $region32: #{two_stage_attention.3} parent=11 // pred_fallthru
        _
      // Predicated region
      $region33: #{two_stage_attention.3} parent=11 // pred_check
        %p664 = pneg %p226
      $region34: #{two_stage_attention.3} parent=11 // pred_check_branch
        %666 = sbr.rel (%p664) target = $region36
      $region35: #{two_stage_attention.3} parent=11 // pred_region
        _
      $region36: #{two_stage_attention.3} parent=11 // pred_fallthru
        _
      // Predicated region
      $region37: #{two_stage_attention.3} parent=11 // pred_check
        %p667 = pneg %p247
      $region38: #{two_stage_attention.3} parent=11 // pred_check_branch
        %669 = sbr.rel (%p667) target = $region40
      $region39: #{two_stage_attention.3} parent=11 // pred_region
        _
      $region40: #{two_stage_attention.3} parent=11 // pred_fallthru
        _
      // Predicated region
      $region41: #{two_stage_attention.3} parent=11 // pred_check
        %p670 = pneg %p268
      $region42: #{two_stage_attention.3} parent=11 // pred_check_branch
        %672 = sbr.rel (%p670) target = $region44
      $region43: #{two_stage_attention.3} parent=11 // pred_region
        _
      $region44: #{two_stage_attention.3} parent=11 // pred_fallthru
        _
      // Predicated region
      $region45: #{two_stage_attention.3} parent=11 // pred_check
        %p673 = pneg %p289
      $region46: #{two_stage_attention.3} parent=11 // pred_check_branch
        %675 = sbr.rel (%p673) target = $region48
      $region47: #{two_stage_attention.3} parent=11 // pred_region
        _
      $region48: #{two_stage_attention.3} parent=11 // pred_fallthru
        _
      // Predicated region
      $region49: #{two_stage_attention.3} parent=11 // pred_check
        %p676 = pneg %p310
      $region50: #{two_stage_attention.3} parent=11 // pred_check_branch
        %678 = sbr.rel (%p676) target = $region52
      $region51: #{two_stage_attention.3} parent=11 // pred_region
        _
      $region52: #{two_stage_attention.3} parent=11 // pred_fallthru
        _
      // Predicated region
      $region53: #{two_stage_attention.3} parent=11 // pred_check
        %p679 = pneg %p331
      $region54: #{two_stage_attention.3} parent=11 // pred_check_branch
        %681 = sbr.rel (%p679) target = $region56
      $region55: #{two_stage_attention.3} parent=11 // pred_region
        _
      $region56: #{two_stage_attention.3} parent=11 // pred_fallthru
        _
      // Predicated region
      $region57: #{two_stage_attention.3} parent=11 // pred_check
        %p682 = pneg %p352
      $region58: #{two_stage_attention.3} parent=11 // pred_check_branch
        %684 = sbr.rel (%p682) target = $region60
      $region59: #{two_stage_attention.3} parent=11 // pred_region
        _
      $region60: #{two_stage_attention.3} parent=11 // pred_fallthru
        _
      // Predicated region
      $region61: #{two_stage_attention.3} parent=11 // pred_check
        %p685 = pneg %p373
      $region62: #{two_stage_attention.3} parent=11 // pred_check_branch
        %687 = sbr.rel (%p685) target = $region64
      $region63: #{two_stage_attention.3} parent=11 // pred_region
        _
      $region64: #{two_stage_attention.3} parent=11 // pred_fallthru
        _
      // Predicated region
      $region65: #{two_stage_attention.3} parent=11 // pred_check
        %p688 = pneg %p394
      $region66: #{two_stage_attention.3} parent=11 // pred_check_branch
        %690 = sbr.rel (%p688) target = $region68
      $region67: #{two_stage_attention.3} parent=11 // pred_region
        _
      $region68: #{two_stage_attention.3} parent=11 // pred_fallthru
        _
      // Predicated region
      $region69: #{two_stage_attention.3} parent=11 // pred_check
        %p691 = pneg %p415
      $region70: #{two_stage_attention.3} parent=11 // pred_check_branch
        %693 = sbr.rel (%p691) target = $region72
      $region71: #{two_stage_attention.3} parent=11 // pred_region
        _
      $region72: #{two_stage_attention.3} parent=11 // pred_fallthru
        _
      // Predicated region
      $region73: #{two_stage_attention.3} parent=11 // pred_check
        %p694 = pneg %p436
      $region74: #{two_stage_attention.3} parent=11 // pred_check_branch
        %696 = sbr.rel (%p694) target = $region76
      $region75: #{two_stage_attention.3} parent=11 // pred_region
        _
      $region76: #{two_stage_attention.3} parent=11 // pred_fallthru
        _
      // Predicated region
      $region77: #{two_stage_attention.3} parent=11 // pred_check
        %p697 = pneg %p457
      $region78: #{two_stage_attention.3} parent=11 // pred_check_branch
        %699 = sbr.rel (%p697) target = $region80
      $region79: #{two_stage_attention.3} parent=11 // pred_region
        _
      $region80: #{two_stage_attention.3} parent=11 // pred_fallthru
        _
      // Predicated region
      $region81: #{two_stage_attention.3} parent=11 // pred_check
        %p700 = pneg %p478
      $region82: #{two_stage_attention.3} parent=11 // pred_check_branch
        %702 = sbr.rel (%p700) target = $region84
      $region83: #{two_stage_attention.3} parent=11 // pred_region
        _
      $region84: #{two_stage_attention.3} parent=11 // pred_fallthru
        _
      // Predicated region
      $region85: #{two_stage_attention.3} parent=11 // pred_check
        %p703 = pneg %p499
      $region86: #{two_stage_attention.3} parent=11 // pred_check_branch
        %705 = sbr.rel (%p703) target = $region88
      $region87: #{two_stage_attention.3} parent=11 // pred_region
        _
      $region88: #{two_stage_attention.3} parent=11 // pred_fallthru
        _
      // Predicated region
      $region89: #{two_stage_attention.3} parent=11 // pred_check
        %p706 = pneg %p520
      $region90: #{two_stage_attention.3} parent=11 // pred_check_branch
        %708 = sbr.rel (%p706) target = $region92
      $region91: #{two_stage_attention.3} parent=11 // pred_region
        _
      $region92: #{two_stage_attention.3} parent=11 // pred_fallthru
        _
      // Predicated region
      $region93: #{two_stage_attention.3} parent=11 // pred_check
        %p709 = pneg %p541
      $region94: #{two_stage_attention.3} parent=11 // pred_check_branch
        %711 = sbr.rel (%p709) target = $region96
      $region95: #{two_stage_attention.3} parent=11 // pred_region
        _
      $region96: #{two_stage_attention.3} parent=11 // pred_fallthru
        _
      // Predicated region
      $region97: #{two_stage_attention.3} parent=11 // pred_check
        %p712 = pneg %p562
      $region98: #{two_stage_attention.3} parent=11 // pred_check_branch
        %714 = sbr.rel (%p712) target = $region100
      $region99: #{two_stage_attention.3} parent=11 // pred_region
        _
      $region100: #{two_stage_attention.3} parent=11 // pred_fallthru
        _
      // Predicated region
      $region101: #{two_stage_attention.3} parent=11 // pred_check
        %p715 = pneg %p583
      $region102: #{two_stage_attention.3} parent=11 // pred_check_branch
        %717 = sbr.rel (%p715) target = $region104
      $region103: #{two_stage_attention.3} parent=11 // pred_region
        _
      $region104: #{two_stage_attention.3} parent=11 // pred_fallthru
        _
      // Predicated region
      $region105: #{two_stage_attention.3} parent=11 // pred_check
        %p718 = pneg %p604
      $region106: #{two_stage_attention.3} parent=11 // pred_check_branch
        %720 = sbr.rel (%p718) target = $region108
      $region107: #{two_stage_attention.3} parent=11 // pred_region
        _
      $region108: #{two_stage_attention.3} parent=11 // pred_fallthru
        _
    $region12: #{two_stage_attention.3} parent=5 // pred_fallthru
      _
    %p721 = scmp.lt.s32.totalorder %s32, 4
    // Predicated region
    $region109: #{two_stage_attention.3} parent=5 // pred_check
      %p722 = pneg %p721
    $region110: #{two_stage_attention.3} parent=5 // pred_check_branch
      %724 = sbr.rel (%p722) target = $region112
    $region111: #{two_stage_attention.3} parent=5 // pred_region
      // Predicated region
      $region113: #{two_stage_attention.3} parent=111 // pred_check
        %p725 = pneg %p68
      $region114: #{two_stage_attention.3} parent=111 // pred_check_branch
        %727 = sbr.rel (%p725) target = $region116
      $region115: #{two_stage_attention.3} parent=111 // pred_region
        %s728 = smul.u32 %s39, 2
        %s729 = sadd.s32 %s728, %s40
        %s730 = smul.u32 2, %s729
        %p731 = scmp.lt.s32.totalorder %s730, 7
        %s732 = scalar_select %p731, %s730, 7
        %s733 = smul.addr %s732, 4
        %s734 = scalar_lea.vmem %s0, %s733
        %s735 = smul.u32 %s39, 2
        %s736 = sadd.s32 %s735, %s40
        %s737 = smul.u32 2, %s736
      $region116: #{two_stage_attention.3} parent=111 // pred_fallthru
        _
      // Predicated region
      $region117: #{two_stage_attention.3} parent=111 // pred_check
        %p738 = pneg %p94
      $region118: #{two_stage_attention.3} parent=111 // pred_check_branch
        %740 = sbr.rel (%p738) target = $region120
      $region119: #{two_stage_attention.3} parent=111 // pred_region
        %p741 = scmp.lt.s32.totalorder %s40, 1
        %s742 = scalar_select %p741, %s40, 1
        %s743 = smul.addr %s742, 8
        %s744 = scalar_lea.vmem %s1, %s743
      $region120: #{two_stage_attention.3} parent=111 // pred_fallthru
        _
    $region112: #{two_stage_attention.3} parent=5 // pred_fallthru
      _
    %p745 = scmp.le.s32.totalorder 1, %s32
    %p746 = scmp.lt.s32.totalorder %s32, 5
    %p747 = pnand %p745, %p746
    %p748 = pneg %p747
    // Predicated region
    $region121: #{two_stage_attention.3} parent=5 // pred_check
      _
    $region122: #{two_stage_attention.3} parent=5 // pred_check_branch
      %750 = sbr.rel (%p747) target = $region124
    $region123: #{two_stage_attention.3} parent=5 // pred_region
      %s751 = ssub.s32 %s32, 1
      %s752 = smul.u32 %s41, 2
      %s753 = sadd.s32 %s752, %s42
      %s754 = smul.u32 2, %s753
      %p755 = scmp.lt.s32.totalorder %s754, 7
      %s756 = scalar_select %p755, %s754, 7
      %s757 = smul.addr %s756, 4
      %s758 = scalar_lea.vmem %s0, %s757
      %p759 = pneg %p74
      %p760 = pneg %p71
      %p761 = scmp.lt.s32.totalorder %s42, 1
      %s762 = scalar_select %p761, %s42, 1
      %s763 = smul.addr %s762, 8
      %s764 = scalar_lea.vmem %s1, %s763
      %p765 = pneg %p100
      %p766 = pneg %p97
      %p767 = pneg %p121
      %p768 = pneg %p118
      %p769 = pneg %p142
      %p770 = pneg %p139
      %p771 = pneg %p163
      %p772 = pneg %p160
      %p773 = pneg %p184
      %p774 = pneg %p181
      %p775 = pneg %p205
      %p776 = pneg %p202
      %p777 = pneg %p226
      %p778 = pneg %p223
      %p779 = pneg %p247
      %p780 = pneg %p244
      %p781 = pneg %p268
      %p782 = pneg %p265
      %p783 = pneg %p289
      %p784 = pneg %p286
      %p785 = pneg %p310
      %p786 = pneg %p307
      %p787 = pneg %p331
      %p788 = pneg %p328
      %p789 = pneg %p352
      %p790 = pneg %p349
      %p791 = pneg %p373
      %p792 = pneg %p370
      %p793 = pneg %p394
      %p794 = pneg %p391
      %p795 = pneg %p415
      %p796 = pneg %p412
      %p797 = pneg %p436
      %p798 = pneg %p433
      %p799 = pneg %p457
      %p800 = pneg %p454
      %p801 = pneg %p478
      %p802 = pneg %p475
      %p803 = pneg %p499
      %p804 = pneg %p496
      %p805 = pneg %p520
      %p806 = pneg %p517
      %p807 = pneg %p541
      %p808 = pneg %p538
      %p809 = pneg %p562
      %p810 = pneg %p559
      %p811 = pneg %p583
      %p812 = pneg %p580
      %p813 = pneg %p604
      %p814 = pneg %p601
      %p815 = pneg %p634
      %p816 = pneg %p631
      %s817 = smul.u32 %s41, 2
      %s818 = sadd.s32 %s817, %s42
      %s819 = smul.u32 2, %s818
      %p820 = scmp.lt.s32.totalorder %s819, 7
      %s821 = scalar_select %p820, %s819, 7
      %s822 = smul.addr %s821, 8
      %s823 = scalar_lea.vmem %s26, %s822
      %s824 = smul.u32 %s41, 2
      %s825 = sadd.s32 %s824, %s42
      %s826 = smul.u32 2, %s825
      %p827 = scmp.lt.s32.totalorder %s826, 7
      %s828 = scalar_select %p827, %s826, 7
      %s829 = smul.addr %s828, 4
      %s830 = scalar_lea.vmem %s0, %s829
      %s831 = smul.u32 %s41, 2
      %s832 = sadd.s32 %s831, %s42
      %s833 = smul.u32 2, %s832
      %p834 = scmp.lt.s32.totalorder %s42, 1
      %s835 = scalar_select %p834, %s42, 1
      %s836 = smul.addr %s835, 8
      %s837 = scalar_lea.vmem %s1, %s836
      %s838 = smul.u32 %s41, 2
      %s839 = sadd.s32 %s838, %s42
      %s840 = smul.u32 2, %s839
      %p841 = scmp.lt.s32.totalorder %s840, 7
      %s842 = scalar_select %p841, %s840, 7
      %s843 = smul.addr %s842, 8
      %s844 = scalar_lea.vmem %s26, %s843
      %s845 = smul.u32 %s41, 2
      %s846 = sadd.s32 %s845, %s42
      %s847 = smul.u32 2, %s846
      %v849 = vld [vmem:[%s2] sm:$0xf]
      %v850 = vld [vmem:[%s2 + $0x4] sm:$0xf]
      %v851 = vld [vmem:[%s2 + $0x8] sm:$0xf]
      %v852 = vld [vmem:[%s2 + $0xc] sm:$0xf]
      %v853 = vld [vmem:[%s2 + $0x10] sm:$0xf]
      %v854 = vld [vmem:[%s2 + $0x14] sm:$0xf]
      %v855 = vld [vmem:[%s2 + $0x18] sm:$0xf]
      %v856 = vld [vmem:[%s2 + $0x1c] sm:$0xf]
      %v857 = vld [vmem:[%s2 + $0x20] sm:$0xf]
      %v858 = vld [vmem:[%s2 + $0x24] sm:$0xf]
      %v859 = vld [vmem:[%s2 + $0x28] sm:$0xf]
      %v860 = vld [vmem:[%s2 + $0x2c] sm:$0xf]
      %v861 = vld [vmem:[%s2 + $0x30] sm:$0xf]
      %v862 = vld [vmem:[%s2 + $0x34] sm:$0xf]
      %v863 = vld [vmem:[%s2 + $0x38] sm:$0xf]
      %v864 = vld [vmem:[%s2 + $0x3c] sm:$0xf]
      %v865 = vld [vmem:[%s3] sm:$0x1]
      %v866 = vld [vmem:[%s3 + $0x1] sm:$0x1]
      %v867 = vld [vmem:[%s3 + $0x2] sm:$0x1]
      %v868 = vld [vmem:[%s3 + $0x3] sm:$0x1]
      %v869 = vld [vmem:[%s4] sm:$0xf]
      %v870 = vld [vmem:[%s4 + $0x4] sm:$0xf]
      %v871 = vld [vmem:[%s4 + $0x8] sm:$0xf]
      %v872 = vld [vmem:[%s4 + $0xc] sm:$0xf]
      %v873 = vld [vmem:[%s4 + $0x10] sm:$0xf]
      %v874 = vld [vmem:[%s4 + $0x14] sm:$0xf]
      %v875 = vld [vmem:[%s4 + $0x18] sm:$0xf]
      %v876 = vld [vmem:[%s4 + $0x1c] sm:$0xf]
      %v877 = vld [vmem:[%s4 + $0x20] sm:$0xf]
      %v878 = vld [vmem:[%s4 + $0x24] sm:$0xf]
      %v879 = vld [vmem:[%s4 + $0x28] sm:$0xf]
      %v880 = vld [vmem:[%s4 + $0x2c] sm:$0xf]
      %v881 = vld [vmem:[%s4 + $0x30] sm:$0xf]
      %v882 = vld [vmem:[%s4 + $0x34] sm:$0xf]
      %v883 = vld [vmem:[%s4 + $0x38] sm:$0xf]
      %v884 = vld [vmem:[%s4 + $0x3c] sm:$0xf]
      %v885 = vld [vmem:[%s5] sm:$0x1]
      %v886 = vld [vmem:[%s5 + $0x1] sm:$0x1]
      %v887 = vld [vmem:[%s5 + $0x2] sm:$0x1]
      %v888 = vld [vmem:[%s5 + $0x3] sm:$0x1]
      %v889 = vld [vmem:[%s6] sm:$0xf]
      %v890 = vld [vmem:[%s6 + $0x4] sm:$0xf]
      %v891 = vld [vmem:[%s6 + $0x8] sm:$0xf]
      %v892 = vld [vmem:[%s6 + $0xc] sm:$0xf]
      %v893 = vld [vmem:[%s6 + $0x10] sm:$0xf]
      %v894 = vld [vmem:[%s6 + $0x14] sm:$0xf]
      %v895 = vld [vmem:[%s6 + $0x18] sm:$0xf]
      %v896 = vld [vmem:[%s6 + $0x1c] sm:$0xf]
      %v897 = vld [vmem:[%s6 + $0x20] sm:$0xf]
      %v898 = vld [vmem:[%s6 + $0x24] sm:$0xf]
      %v899 = vld [vmem:[%s6 + $0x28] sm:$0xf]
      %v900 = vld [vmem:[%s6 + $0x2c] sm:$0xf]
      %v901 = vld [vmem:[%s6 + $0x30] sm:$0xf]
      %v902 = vld [vmem:[%s6 + $0x34] sm:$0xf]
      %v903 = vld [vmem:[%s6 + $0x38] sm:$0xf]
      %v904 = vld [vmem:[%s6 + $0x3c] sm:$0xf]
      %v905 = vld [vmem:[%s7] sm:$0x1]
      %v906 = vld [vmem:[%s7 + $0x1] sm:$0x1]
      %v907 = vld [vmem:[%s7 + $0x2] sm:$0x1]
      %v908 = vld [vmem:[%s7 + $0x3] sm:$0x1]
      %v909 = vld [vmem:[%s8] sm:$0xf]
      %v910 = vld [vmem:[%s8 + $0x4] sm:$0xf]
      %v911 = vld [vmem:[%s8 + $0x8] sm:$0xf]
      %v912 = vld [vmem:[%s8 + $0xc] sm:$0xf]
      %v913 = vld [vmem:[%s9] sm:$0x1]
      %v914 = vld [vmem:[%s10] sm:$0xf]
      %v915 = vld [vmem:[%s10 + $0x4] sm:$0xf]
      %v916 = vld [vmem:[%s10 + $0x8] sm:$0xf]
      %v917 = vld [vmem:[%s10 + $0xc] sm:$0xf]
      %v918 = vld [vmem:[%s10 + $0x10] sm:$0xf]
      %v919 = vld [vmem:[%s10 + $0x14] sm:$0xf]
      %v920 = vld [vmem:[%s10 + $0x18] sm:$0xf]
      %v921 = vld [vmem:[%s10 + $0x1c] sm:$0xf]
      %v922 = vld [vmem:[%s10 + $0x20] sm:$0xf]
      %v923 = vld [vmem:[%s10 + $0x24] sm:$0xf]
      %v924 = vld [vmem:[%s10 + $0x28] sm:$0xf]
      %v925 = vld [vmem:[%s10 + $0x2c] sm:$0xf]
      %v926 = vld [vmem:[%s10 + $0x30] sm:$0xf]
      %v927 = vld [vmem:[%s10 + $0x34] sm:$0xf]
      %v928 = vld [vmem:[%s10 + $0x38] sm:$0xf]
      %v929 = vld [vmem:[%s10 + $0x3c] sm:$0xf]
      %v930 = vld [vmem:[%s11] sm:$0x1]
      %v931 = vld [vmem:[%s11 + $0x1] sm:$0x1]
      %v932 = vld [vmem:[%s11 + $0x2] sm:$0x1]
      %v933 = vld [vmem:[%s11 + $0x3] sm:$0x1]
      %v934 = vld [vmem:[%s12] sm:$0xf]
      %v935 = vld [vmem:[%s12 + $0x4] sm:$0xf]
      %v936 = vld [vmem:[%s12 + $0x8] sm:$0xf]
      %v937 = vld [vmem:[%s12 + $0xc] sm:$0xf]
      %v938 = vld [vmem:[%s12 + $0x10] sm:$0xf]
      %v939 = vld [vmem:[%s12 + $0x14] sm:$0xf]
      %v940 = vld [vmem:[%s12 + $0x18] sm:$0xf]
      %v941 = vld [vmem:[%s12 + $0x1c] sm:$0xf]
      %v942 = vld [vmem:[%s12 + $0x20] sm:$0xf]
      %v943 = vld [vmem:[%s12 + $0x24] sm:$0xf]
      %v944 = vld [vmem:[%s12 + $0x28] sm:$0xf]
      %v945 = vld [vmem:[%s12 + $0x2c] sm:$0xf]
      %v946 = vld [vmem:[%s12 + $0x30] sm:$0xf]
      %v947 = vld [vmem:[%s12 + $0x34] sm:$0xf]
      %v948 = vld [vmem:[%s12 + $0x38] sm:$0xf]
      %v949 = vld [vmem:[%s12 + $0x3c] sm:$0xf]
      %v950 = vld [vmem:[%s13] sm:$0x1]
      %v951 = vld [vmem:[%s13 + $0x1] sm:$0x1]
      %v952 = vld [vmem:[%s13 + $0x2] sm:$0x1]
      %v953 = vld [vmem:[%s13 + $0x3] sm:$0x1]
      %v954 = vld [vmem:[%s14] sm:$0xf]
      %v955 = vld [vmem:[%s14 + $0x4] sm:$0xf]
      %v956 = vld [vmem:[%s14 + $0x8] sm:$0xf]
      %v957 = vld [vmem:[%s14 + $0xc] sm:$0xf]
      %v958 = vld [vmem:[%s14 + $0x10] sm:$0xf]
      %v959 = vld [vmem:[%s14 + $0x14] sm:$0xf]
      %v960 = vld [vmem:[%s14 + $0x18] sm:$0xf]
      %v961 = vld [vmem:[%s14 + $0x1c] sm:$0xf]
      %v962 = vld [vmem:[%s14 + $0x20] sm:$0xf]
      %v963 = vld [vmem:[%s14 + $0x24] sm:$0xf]
      %v964 = vld [vmem:[%s14 + $0x28] sm:$0xf]
      %v965 = vld [vmem:[%s14 + $0x2c] sm:$0xf]
      %v966 = vld [vmem:[%s14 + $0x30] sm:$0xf]
      %v967 = vld [vmem:[%s14 + $0x34] sm:$0xf]
      %v968 = vld [vmem:[%s14 + $0x38] sm:$0xf]
      %v969 = vld [vmem:[%s14 + $0x3c] sm:$0xf]
      %v970 = vld [vmem:[%s15] sm:$0x1]
      %v971 = vld [vmem:[%s15 + $0x1] sm:$0x1]
      %v972 = vld [vmem:[%s15 + $0x2] sm:$0x1]
      %v973 = vld [vmem:[%s15 + $0x3] sm:$0x1]
      %v974 = vld [vmem:[%s16] sm:$0xf]
      %v975 = vld [vmem:[%s16 + $0x4] sm:$0xf]
      %v976 = vld [vmem:[%s16 + $0x8] sm:$0xf]
      %v977 = vld [vmem:[%s16 + $0xc] sm:$0xf]
      %v978 = vld [vmem:[%s17] sm:$0x1]
      %v979 = vld [vmem:[%s18] sm:$0x1]
      %v980 = vld [vmem:[%s19] sm:$0x1]
      %v981 = vld [vmem:[%s20] sm:$0xf]
      %v982 = vld [vmem:[%s20 + $0x4] sm:$0xf]
      %v983 = vld [vmem:[%s20 + $0x8] sm:$0xf]
      %v984 = vld [vmem:[%s20 + $0xc] sm:$0xf]
      %v985 = vld [vmem:[%s21] sm:$0x1]
      %v986 = vld [vmem:[%s22] sm:$0xf]
      %v987 = vld [vmem:[%s22 + $0x4] sm:$0xf]
      %v988 = vld [vmem:[%s22 + $0x8] sm:$0xf]
      %v989 = vld [vmem:[%s22 + $0xc] sm:$0xf]
      %v990 = vld [vmem:[%s22 + $0x10] sm:$0xf]
      %v991 = vld [vmem:[%s22 + $0x14] sm:$0xf]
      %v992 = vld [vmem:[%s22 + $0x18] sm:$0xf]
      %v993 = vld [vmem:[%s22 + $0x1c] sm:$0xf]
      %v994 = vld [vmem:[%s22 + $0x20] sm:$0xf]
      %v995 = vld [vmem:[%s22 + $0x24] sm:$0xf]
      %v996 = vld [vmem:[%s22 + $0x28] sm:$0xf]
      %v997 = vld [vmem:[%s22 + $0x2c] sm:$0xf]
      %v998 = vld [vmem:[%s22 + $0x30] sm:$0xf]
      %v999 = vld [vmem:[%s22 + $0x34] sm:$0xf]
      %v1000 = vld [vmem:[%s22 + $0x38] sm:$0xf]
      %v1001 = vld [vmem:[%s22 + $0x3c] sm:$0xf]
      %v1002 = vld [vmem:[%s23] sm:$0x1]
      %v1003 = vld [vmem:[%s24] sm:$0x1]
      %v1004 = vld [vmem:[%s25] sm:$0x1]
      %v1005 = vld [vmem:[%s830] sm:$0xf]
      %v1006 = vld [vmem:[%s830 + $0x4] sm:$0xf]
      %v1007 = vunpack.c.l.bf16 %v1005
      %v1008 = vunpack.c.l.bf16 %v1006
      %v1009 = vld [vmem:[%s837] sm:$0xff]
      %v1010 = vpack.c.bf16 %v1009, %v1009
      %v1012 = vlaneseq
      %v1013 = vshrl.u32 %v1012, 7
      %v1014 = vsub.s32 0, %v1013
      %v1015 = vrot.slane %v865, %v1014
      %v1021 = vunpack.c.l.b16 %v849
      %v1022 = vunpack.c.l.b16 %v850
      %v1023 = vunpack.c.l.b16 %v851
      %v1024 = vunpack.c.l.b16 %v852
      %v1025 = vpack.c.b16 %v1022, %v1021
      %v1026 = vpack.c.b16 %v1024, %v1023
      %vm1029 = vcmask 261120
      %v1031 = vsel %vm1029, %v1010, 0
      %1033 = vmatprep.subr.bf16.mxu0 0
      %1034 = vmatpush1.bf16.msra.mxu0 0
      %1035 = vmatprep.subr.bf16.mxu0 0
      %1036 = vmatpush1.bf16.msra.mxu0 0
      %1037 = vmatprep.subr.bf16.mxu0 0
      %1038 = vmatpush1.bf16.msra.mxu0 0
      %1039 = vmatprep.subr.bf16.mxu0 0
      %1040 = vmatpush1.bf16.msra.mxu0 0
      %1041 = vmatprep.subr.bf16.mxu0 0
      %1042 = vmatpush1.bf16.msra.mxu0 0
      %1043 = vmatprep.subr.bf16.mxu0 0
      %1044 = vmatpush1.bf16.msra.mxu0 0
      %1045 = vmatprep.subr.bf16.mxu0 0
      %1046 = vmatpush1.bf16.msra.mxu0 %v1026
      %1047 = vmatprep.subr.bf16.mxu0 0
      %1048 = vmatpush1.bf16.msra.mxu0 %v1025
      %1049 = vmatprep.subr.bf16.mxu0 0
      %1050 = vmatpush2.bf16.msra.mxu0 0
      %1051 = vmatprep.subr.bf16.mxu0 0
      %1052 = vmatpush2.bf16.msra.mxu0 0
      %1053 = vmatprep.subr.bf16.mxu0 0
      %1054 = vmatpush2.bf16.msra.mxu0 0
      %1055 = vmatprep.subr.bf16.mxu0 0
      %1056 = vmatpush2.bf16.msra.mxu0 0
      %1057 = vmatprep.subr.bf16.mxu0 0
      %1058 = vmatpush2.bf16.msra.mxu0 0
      %1059 = vmatprep.subr.bf16.mxu0 0
      %1060 = vmatpush2.bf16.msra.mxu0 0
      %1061 = vmatprep.subr.bf16.mxu0 0
      %1062 = vmatpush2.bf16.msra.mxu0 0
      %1063 = vmatprep.subr.bf16.mxu0 0
      %1064 = vmatpush2.bf16.msra.mxu0 0
      %1065 = vmatprep.mubr.bf16.mxu0 0
      %1066 = vmatmul.mubr.bf16.gmra.mxu0 %v1031
      %v1067 = vpop.f32.mrf.mxu0
      %v1068 = vadd.f32 %v1015, %v1067
      %v1069 = vpop.f32.mrf.mxu0
      %v1070 = vpop.f32.mrf.mxu0
      %v1071 = vpop.f32.mrf.mxu0
      %1072 = vdwg.mxu0
      %v1073 = vpack.c.bf16 %v1068, %v1068
      %v1075 = vlaneseq
      %v1076 = vshrl.u32 %v1075, 7
      %v1077 = vsub.s32 0, %v1076
      %v1078 = vrot.slane %v885, %v1077
      %v1082 = vunpack.c.l.b16 %v1005
      %v1083 = vunpack.c.l.b16 %v1006
      %v1084 = vpack.c.b16 %v1083, %v1082
      %v1089 = vunpack.c.l.b16 %v869
      %v1090 = vunpack.c.l.b16 %v870
      %v1091 = vunpack.c.l.b16 %v871
      %v1092 = vunpack.c.l.b16 %v872
      %v1093 = vpack.c.b16 %v1090, %v1089
      %v1094 = vpack.c.b16 %v1092, %v1091
      %v1098 = vsel %vm1029, %v1084, 0
      %1100 = vmatprep.subr.bf16.mxu0 0
      %1101 = vmatpush1.bf16.msra.mxu0 0
      %1102 = vmatprep.subr.bf16.mxu0 0
      %1103 = vmatpush1.bf16.msra.mxu0 0
      %1104 = vmatprep.subr.bf16.mxu0 0
      %1105 = vmatpush1.bf16.msra.mxu0 0
      %1106 = vmatprep.subr.bf16.mxu0 0
      %1107 = vmatpush1.bf16.msra.mxu0 0
      %1108 = vmatprep.subr.bf16.mxu0 0
      %1109 = vmatpush1.bf16.msra.mxu0 0
      %1110 = vmatprep.subr.bf16.mxu0 0
      %1111 = vmatpush1.bf16.msra.mxu0 0
      %1112 = vmatprep.subr.bf16.mxu0 0
      %1113 = vmatpush1.bf16.msra.mxu0 %v1094
      %1114 = vmatprep.subr.bf16.mxu0 0
      %1115 = vmatpush1.bf16.msra.mxu0 %v1093
      %1116 = vmatprep.subr.bf16.mxu0 0
      %1117 = vmatpush2.bf16.msra.mxu0 0
      %1118 = vmatprep.subr.bf16.mxu0 0
      %1119 = vmatpush2.bf16.msra.mxu0 0
      %1120 = vmatprep.subr.bf16.mxu0 0
      %1121 = vmatpush2.bf16.msra.mxu0 0
      %1122 = vmatprep.subr.bf16.mxu0 0
      %1123 = vmatpush2.bf16.msra.mxu0 0
      %1124 = vmatprep.subr.bf16.mxu0 0
      %1125 = vmatpush2.bf16.msra.mxu0 0
      %1126 = vmatprep.subr.bf16.mxu0 0
      %1127 = vmatpush2.bf16.msra.mxu0 0
      %1128 = vmatprep.subr.bf16.mxu0 0
      %1129 = vmatpush2.bf16.msra.mxu0 0
      %1130 = vmatprep.subr.bf16.mxu0 0
      %1131 = vmatpush2.bf16.msra.mxu0 0
      %1132 = vmatprep.mubr.bf16.mxu0 0
      %1133 = vmatmul.mubr.bf16.gmra.mxu0 %v1098
      %v1134 = vpop.f32.mrf.mxu0
      %v1135 = vadd.f32 %v1078, %v1134
      %v1136 = vpop.f32.mrf.mxu0
      %v1137 = vpop.f32.mrf.mxu0
      %v1138 = vadd.f32 %v1078, %v1137
      %v1139 = vpop.f32.mrf.mxu0
      %1140 = vdwg.mxu0
      %v1141 = vpack.c.bf16 %v1138, %v1135
      %v1143 = vlaneseq
      %v1144 = vshrl.u32 %v1143, 7
      %v1145 = vsub.s32 0, %v1144
      %v1146 = vrot.slane %v905, %v1145
      %v1152 = vunpack.c.l.b16 %v889
      %v1153 = vunpack.c.l.b16 %v890
      %v1154 = vunpack.c.l.b16 %v891
      %v1155 = vunpack.c.l.b16 %v892
      %v1156 = vpack.c.b16 %v1153, %v1152
      %v1157 = vpack.c.b16 %v1155, %v1154
      %1160 = vmatprep.subr.bf16.mxu0 0
      %1161 = vmatpush1.bf16.msra.mxu0 0
      %1162 = vmatprep.subr.bf16.mxu0 0
      %1163 = vmatpush1.bf16.msra.mxu0 0
      %1164 = vmatprep.subr.bf16.mxu0 0
      %1165 = vmatpush1.bf16.msra.mxu0 0
      %1166 = vmatprep.subr.bf16.mxu0 0
      %1167 = vmatpush1.bf16.msra.mxu0 0
      %1168 = vmatprep.subr.bf16.mxu0 0
      %1169 = vmatpush1.bf16.msra.mxu0 0
      %1170 = vmatprep.subr.bf16.mxu0 0
      %1171 = vmatpush1.bf16.msra.mxu0 0
      %1172 = vmatprep.subr.bf16.mxu0 0
      %1173 = vmatpush1.bf16.msra.mxu0 %v1157
      %1174 = vmatprep.subr.bf16.mxu0 0
      %1175 = vmatpush1.bf16.msra.mxu0 %v1156
      %1176 = vmatprep.subr.bf16.mxu0 0
      %1177 = vmatpush2.bf16.msra.mxu0 0
      %1178 = vmatprep.subr.bf16.mxu0 0
      %1179 = vmatpush2.bf16.msra.mxu0 0
      %1180 = vmatprep.subr.bf16.mxu0 0
      %1181 = vmatpush2.bf16.msra.mxu0 0
      %1182 = vmatprep.subr.bf16.mxu0 0
      %1183 = vmatpush2.bf16.msra.mxu0 0
      %1184 = vmatprep.subr.bf16.mxu0 0
      %1185 = vmatpush2.bf16.msra.mxu0 0
      %1186 = vmatprep.subr.bf16.mxu0 0
      %1187 = vmatpush2.bf16.msra.mxu0 0
      %1188 = vmatprep.subr.bf16.mxu0 0
      %1189 = vmatpush2.bf16.msra.mxu0 0
      %1190 = vmatprep.subr.bf16.mxu0 0
      %1191 = vmatpush2.bf16.msra.mxu0 0
      %1192 = vmatprep.mubr.bf16.mxu0 0
      %1193 = vmatmul.mubr.bf16.gmra.mxu0 %v1098
      %v1194 = vpop.f32.mrf.mxu0
      %v1195 = vadd.f32 %v1146, %v1194
      %v1196 = vpop.f32.mrf.mxu0
      %v1197 = vpop.f32.mrf.mxu0
      %v1198 = vadd.f32 %v1146, %v1197
      %v1199 = vpop.f32.mrf.mxu0
      %1200 = vdwg.mxu0
      %v1201 = vpack.c.bf16 %v1198, %v1195
      %v1203 = vlaneseq
      %v1204 = vshrl.u32 %v1203, 7
      %v1205 = vsub.s32 0, %v1204
      %v1206 = vrot.slane %v866, %v1205
      %v1212 = vunpack.c.l.b16 %v853
      %v1213 = vunpack.c.l.b16 %v854
      %v1214 = vunpack.c.l.b16 %v855
      %v1215 = vunpack.c.l.b16 %v856
      %v1216 = vpack.c.b16 %v1213, %v1212
      %v1217 = vpack.c.b16 %v1215, %v1214
      %1220 = vmatprep.subr.bf16.mxu0 0
      %1221 = vmatpush1.bf16.msra.mxu0 0
      %1222 = vmatprep.subr.bf16.mxu0 0
      %1223 = vmatpush1.bf16.msra.mxu0 0
      %1224 = vmatprep.subr.bf16.mxu0 0
      %1225 = vmatpush1.bf16.msra.mxu0 0
      %1226 = vmatprep.subr.bf16.mxu0 0
      %1227 = vmatpush1.bf16.msra.mxu0 0
      %1228 = vmatprep.subr.bf16.mxu0 0
      %1229 = vmatpush1.bf16.msra.mxu0 0
      %1230 = vmatprep.subr.bf16.mxu0 0
      %1231 = vmatpush1.bf16.msra.mxu0 0
      %1232 = vmatprep.subr.bf16.mxu0 0
      %1233 = vmatpush1.bf16.msra.mxu0 %v1217
      %1234 = vmatprep.subr.bf16.mxu0 0
      %1235 = vmatpush1.bf16.msra.mxu0 %v1216
      %1236 = vmatprep.subr.bf16.mxu0 0
      %1237 = vmatpush2.bf16.msra.mxu0 0
      %1238 = vmatprep.subr.bf16.mxu0 0
      %1239 = vmatpush2.bf16.msra.mxu0 0
      %1240 = vmatprep.subr.bf16.mxu0 0
      %1241 = vmatpush2.bf16.msra.mxu0 0
      %1242 = vmatprep.subr.bf16.mxu0 0
      %1243 = vmatpush2.bf16.msra.mxu0 0
      %1244 = vmatprep.subr.bf16.mxu0 0
      %1245 = vmatpush2.bf16.msra.mxu0 0
      %1246 = vmatprep.subr.bf16.mxu0 0
      %1247 = vmatpush2.bf16.msra.mxu0 0
      %1248 = vmatprep.subr.bf16.mxu0 0
      %1249 = vmatpush2.bf16.msra.mxu0 0
      %1250 = vmatprep.subr.bf16.mxu0 0
      %1251 = vmatpush2.bf16.msra.mxu0 0
      %1252 = vmatprep.mubr.bf16.mxu0 0
      %1253 = vmatmul.mubr.bf16.gmra.mxu0 %v1031
      %v1254 = vpop.f32.mrf.mxu0
      %v1255 = vadd.f32 %v1206, %v1254
      %v1256 = vpop.f32.mrf.mxu0
      %v1257 = vpop.f32.mrf.mxu0
      %v1258 = vpop.f32.mrf.mxu0
      %1259 = vdwg.mxu0
      %v1260 = vpack.c.bf16 %v1255, %v1255
      %v1262 = vlaneseq
      %v1263 = vshrl.u32 %v1262, 7
      %v1264 = vsub.s32 0, %v1263
      %v1265 = vrot.slane %v886, %v1264
      %v1271 = vunpack.c.l.b16 %v873
      %v1272 = vunpack.c.l.b16 %v874
      %v1273 = vunpack.c.l.b16 %v875
      %v1274 = vunpack.c.l.b16 %v876
      %v1275 = vpack.c.b16 %v1272, %v1271
      %v1276 = vpack.c.b16 %v1274, %v1273
      %1279 = vmatprep.subr.bf16.mxu0 0
      %1280 = vmatpush1.bf16.msra.mxu0 0
      %1281 = vmatprep.subr.bf16.mxu0 0
      %1282 = vmatpush1.bf16.msra.mxu0 0
      %1283 = vmatprep.subr.bf16.mxu0 0
      %1284 = vmatpush1.bf16.msra.mxu0 0
      %1285 = vmatprep.subr.bf16.mxu0 0
      %1286 = vmatpush1.bf16.msra.mxu0 0
      %1287 = vmatprep.subr.bf16.mxu0 0
      %1288 = vmatpush1.bf16.msra.mxu0 0
      %1289 = vmatprep.subr.bf16.mxu0 0
      %1290 = vmatpush1.bf16.msra.mxu0 0
      %1291 = vmatprep.subr.bf16.mxu0 0
      %1292 = vmatpush1.bf16.msra.mxu0 %v1276
      %1293 = vmatprep.subr.bf16.mxu0 0
      %1294 = vmatpush1.bf16.msra.mxu0 %v1275
      %1295 = vmatprep.subr.bf16.mxu0 0
      %1296 = vmatpush2.bf16.msra.mxu0 0
      %1297 = vmatprep.subr.bf16.mxu0 0
      %1298 = vmatpush2.bf16.msra.mxu0 0
      %1299 = vmatprep.subr.bf16.mxu0 0
      %1300 = vmatpush2.bf16.msra.mxu0 0
      %1301 = vmatprep.subr.bf16.mxu0 0
      %1302 = vmatpush2.bf16.msra.mxu0 0
      %1303 = vmatprep.subr.bf16.mxu0 0
      %1304 = vmatpush2.bf16.msra.mxu0 0
      %1305 = vmatprep.subr.bf16.mxu0 0
      %1306 = vmatpush2.bf16.msra.mxu0 0
      %1307 = vmatprep.subr.bf16.mxu0 0
      %1308 = vmatpush2.bf16.msra.mxu0 0
      %1309 = vmatprep.subr.bf16.mxu0 0
      %1310 = vmatpush2.bf16.msra.mxu0 0
      %1311 = vmatprep.mubr.bf16.mxu0 0
      %1312 = vmatmul.mubr.bf16.gmra.mxu0 %v1098
      %v1313 = vpop.f32.mrf.mxu0
      %v1314 = vadd.f32 %v1265, %v1313
      %v1315 = vpop.f32.mrf.mxu0
      %v1316 = vpop.f32.mrf.mxu0
      %v1317 = vadd.f32 %v1265, %v1316
      %v1318 = vpop.f32.mrf.mxu0
      %1319 = vdwg.mxu0
      %v1320 = vpack.c.bf16 %v1317, %v1314
      %v1322 = vlaneseq
      %v1323 = vshrl.u32 %v1322, 7
      %v1324 = vsub.s32 0, %v1323
      %v1325 = vrot.slane %v906, %v1324
      %v1331 = vunpack.c.l.b16 %v893
      %v1332 = vunpack.c.l.b16 %v894
      %v1333 = vunpack.c.l.b16 %v895
      %v1334 = vunpack.c.l.b16 %v896
      %v1335 = vpack.c.b16 %v1332, %v1331
      %v1336 = vpack.c.b16 %v1334, %v1333
      %1339 = vmatprep.subr.bf16.mxu0 0
      %1340 = vmatpush1.bf16.msra.mxu0 0
      %1341 = vmatprep.subr.bf16.mxu0 0
      %1342 = vmatpush1.bf16.msra.mxu0 0
      %1343 = vmatprep.subr.bf16.mxu0 0
      %1344 = vmatpush1.bf16.msra.mxu0 0
      %1345 = vmatprep.subr.bf16.mxu0 0
      %1346 = vmatpush1.bf16.msra.mxu0 0
      %1347 = vmatprep.subr.bf16.mxu0 0
      %1348 = vmatpush1.bf16.msra.mxu0 0
      %1349 = vmatprep.subr.bf16.mxu0 0
      %1350 = vmatpush1.bf16.msra.mxu0 0
      %1351 = vmatprep.subr.bf16.mxu0 0
      %1352 = vmatpush1.bf16.msra.mxu0 %v1336
      %1353 = vmatprep.subr.bf16.mxu0 0
      %1354 = vmatpush1.bf16.msra.mxu0 %v1335
      %1355 = vmatprep.subr.bf16.mxu0 0
      %1356 = vmatpush2.bf16.msra.mxu0 0
      %1357 = vmatprep.subr.bf16.mxu0 0
      %1358 = vmatpush2.bf16.msra.mxu0 0
      %1359 = vmatprep.subr.bf16.mxu0 0
      %1360 = vmatpush2.bf16.msra.mxu0 0
      %1361 = vmatprep.subr.bf16.mxu0 0
      %1362 = vmatpush2.bf16.msra.mxu0 0
      %1363 = vmatprep.subr.bf16.mxu0 0
      %1364 = vmatpush2.bf16.msra.mxu0 0
      %1365 = vmatprep.subr.bf16.mxu0 0
      %1366 = vmatpush2.bf16.msra.mxu0 0
      %1367 = vmatprep.subr.bf16.mxu0 0
      %1368 = vmatpush2.bf16.msra.mxu0 0
      %1369 = vmatprep.subr.bf16.mxu0 0
      %1370 = vmatpush2.bf16.msra.mxu0 0
      %1371 = vmatprep.mubr.bf16.mxu0 0
      %1372 = vmatmul.mubr.bf16.gmra.mxu0 %v1098
      %v1373 = vpop.f32.mrf.mxu0
      %v1374 = vadd.f32 %v1325, %v1373
      %v1375 = vpop.f32.mrf.mxu0
      %v1376 = vpop.f32.mrf.mxu0
      %v1377 = vadd.f32 %v1325, %v1376
      %v1378 = vpop.f32.mrf.mxu0
      %1379 = vdwg.mxu0
      %v1380 = vpack.c.bf16 %v1377, %v1374
      %v1382 = vlaneseq
      %v1383 = vshrl.u32 %v1382, 7
      %v1384 = vsub.s32 0, %v1383
      %v1385 = vrot.slane %v867, %v1384
      %v1391 = vunpack.c.l.b16 %v857
      %v1392 = vunpack.c.l.b16 %v858
      %v1393 = vunpack.c.l.b16 %v859
      %v1394 = vunpack.c.l.b16 %v860
      %v1395 = vpack.c.b16 %v1392, %v1391
      %v1396 = vpack.c.b16 %v1394, %v1393
      %1399 = vmatprep.subr.bf16.mxu0 0
      %1400 = vmatpush1.bf16.msra.mxu0 0
      %1401 = vmatprep.subr.bf16.mxu0 0
      %1402 = vmatpush1.bf16.msra.mxu0 0
      %1403 = vmatprep.subr.bf16.mxu0 0
      %1404 = vmatpush1.bf16.msra.mxu0 0
      %1405 = vmatprep.subr.bf16.mxu0 0
      %1406 = vmatpush1.bf16.msra.mxu0 0
      %1407 = vmatprep.subr.bf16.mxu0 0
      %1408 = vmatpush1.bf16.msra.mxu0 0
      %1409 = vmatprep.subr.bf16.mxu0 0
      %1410 = vmatpush1.bf16.msra.mxu0 0
      %1411 = vmatprep.subr.bf16.mxu0 0
      %1412 = vmatpush1.bf16.msra.mxu0 %v1396
      %1413 = vmatprep.subr.bf16.mxu0 0
      %1414 = vmatpush1.bf16.msra.mxu0 %v1395
      %1415 = vmatprep.subr.bf16.mxu0 0
      %1416 = vmatpush2.bf16.msra.mxu0 0
      %1417 = vmatprep.subr.bf16.mxu0 0
      %1418 = vmatpush2.bf16.msra.mxu0 0
      %1419 = vmatprep.subr.bf16.mxu0 0
      %1420 = vmatpush2.bf16.msra.mxu0 0
      %1421 = vmatprep.subr.bf16.mxu0 0
      %1422 = vmatpush2.bf16.msra.mxu0 0
      %1423 = vmatprep.subr.bf16.mxu0 0
      %1424 = vmatpush2.bf16.msra.mxu0 0
      %1425 = vmatprep.subr.bf16.mxu0 0
      %1426 = vmatpush2.bf16.msra.mxu0 0
      %1427 = vmatprep.subr.bf16.mxu0 0
      %1428 = vmatpush2.bf16.msra.mxu0 0
      %1429 = vmatprep.subr.bf16.mxu0 0
      %1430 = vmatpush2.bf16.msra.mxu0 0
      %1431 = vmatprep.mubr.bf16.mxu0 0
      %1432 = vmatmul.mubr.bf16.gmra.mxu0 %v1031
      %v1433 = vpop.f32.mrf.mxu0
      %v1434 = vadd.f32 %v1385, %v1433
      %v1435 = vpop.f32.mrf.mxu0
      %v1436 = vpop.f32.mrf.mxu0
      %v1437 = vpop.f32.mrf.mxu0
      %1438 = vdwg.mxu0
      %v1439 = vpack.c.bf16 %v1434, %v1434
      %v1441 = vlaneseq
      %v1442 = vshrl.u32 %v1441, 7
      %v1443 = vsub.s32 0, %v1442
      %v1444 = vrot.slane %v887, %v1443
      %v1450 = vunpack.c.l.b16 %v877
      %v1451 = vunpack.c.l.b16 %v878
      %v1452 = vunpack.c.l.b16 %v879
      %v1453 = vunpack.c.l.b16 %v880
      %v1454 = vpack.c.b16 %v1451, %v1450
      %v1455 = vpack.c.b16 %v1453, %v1452
      %1458 = vmatprep.subr.bf16.mxu0 0
      %1459 = vmatpush1.bf16.msra.mxu0 0
      %1460 = vmatprep.subr.bf16.mxu0 0
      %1461 = vmatpush1.bf16.msra.mxu0 0
      %1462 = vmatprep.subr.bf16.mxu0 0
      %1463 = vmatpush1.bf16.msra.mxu0 0
      %1464 = vmatprep.subr.bf16.mxu0 0
      %1465 = vmatpush1.bf16.msra.mxu0 0
      %1466 = vmatprep.subr.bf16.mxu0 0
      %1467 = vmatpush1.bf16.msra.mxu0 0
      %1468 = vmatprep.subr.bf16.mxu0 0
      %1469 = vmatpush1.bf16.msra.mxu0 0
      %1470 = vmatprep.subr.bf16.mxu0 0
      %1471 = vmatpush1.bf16.msra.mxu0 %v1455
      %1472 = vmatprep.subr.bf16.mxu0 0
      %1473 = vmatpush1.bf16.msra.mxu0 %v1454
      %1474 = vmatprep.subr.bf16.mxu0 0
      %1475 = vmatpush2.bf16.msra.mxu0 0
      %1476 = vmatprep.subr.bf16.mxu0 0
      %1477 = vmatpush2.bf16.msra.mxu0 0
      %1478 = vmatprep.subr.bf16.mxu0 0
      %1479 = vmatpush2.bf16.msra.mxu0 0
      %1480 = vmatprep.subr.bf16.mxu0 0
      %1481 = vmatpush2.bf16.msra.mxu0 0
      %1482 = vmatprep.subr.bf16.mxu0 0
      %1483 = vmatpush2.bf16.msra.mxu0 0
      %1484 = vmatprep.subr.bf16.mxu0 0
      %1485 = vmatpush2.bf16.msra.mxu0 0
      %1486 = vmatprep.subr.bf16.mxu0 0
      %1487 = vmatpush2.bf16.msra.mxu0 0
      %1488 = vmatprep.subr.bf16.mxu0 0
      %1489 = vmatpush2.bf16.msra.mxu0 0
      %1490 = vmatprep.mubr.bf16.mxu0 0
      %1491 = vmatmul.mubr.bf16.gmra.mxu0 %v1098
      %v1492 = vpop.f32.mrf.mxu0
      %v1493 = vadd.f32 %v1444, %v1492
      %v1494 = vpop.f32.mrf.mxu0
      %v1495 = vpop.f32.mrf.mxu0
      %v1496 = vadd.f32 %v1444, %v1495
      %v1497 = vpop.f32.mrf.mxu0
      %1498 = vdwg.mxu0
      %v1499 = vpack.c.bf16 %v1496, %v1493
      %v1501 = vlaneseq
      %v1502 = vshrl.u32 %v1501, 7
      %v1503 = vsub.s32 0, %v1502
      %v1504 = vrot.slane %v907, %v1503
      %v1510 = vunpack.c.l.b16 %v897
      %v1511 = vunpack.c.l.b16 %v898
      %v1512 = vunpack.c.l.b16 %v899
      %v1513 = vunpack.c.l.b16 %v900
      %v1514 = vpack.c.b16 %v1511, %v1510
      %v1515 = vpack.c.b16 %v1513, %v1512
      %1518 = vmatprep.subr.bf16.mxu0 0
      %1519 = vmatpush1.bf16.msra.mxu0 0
      %1520 = vmatprep.subr.bf16.mxu0 0
      %1521 = vmatpush1.bf16.msra.mxu0 0
      %1522 = vmatprep.subr.bf16.mxu0 0
      %1523 = vmatpush1.bf16.msra.mxu0 0
      %1524 = vmatprep.subr.bf16.mxu0 0
      %1525 = vmatpush1.bf16.msra.mxu0 0
      %1526 = vmatprep.subr.bf16.mxu0 0
      %1527 = vmatpush1.bf16.msra.mxu0 0
      %1528 = vmatprep.subr.bf16.mxu0 0
      %1529 = vmatpush1.bf16.msra.mxu0 0
      %1530 = vmatprep.subr.bf16.mxu0 0
      %1531 = vmatpush1.bf16.msra.mxu0 %v1515
      %1532 = vmatprep.subr.bf16.mxu0 0
      %1533 = vmatpush1.bf16.msra.mxu0 %v1514
      %1534 = vmatprep.subr.bf16.mxu0 0
      %1535 = vmatpush2.bf16.msra.mxu0 0
      %1536 = vmatprep.subr.bf16.mxu0 0
      %1537 = vmatpush2.bf16.msra.mxu0 0
      %1538 = vmatprep.subr.bf16.mxu0 0
      %1539 = vmatpush2.bf16.msra.mxu0 0
      %1540 = vmatprep.subr.bf16.mxu0 0
      %1541 = vmatpush2.bf16.msra.mxu0 0
      %1542 = vmatprep.subr.bf16.mxu0 0
      %1543 = vmatpush2.bf16.msra.mxu0 0
      %1544 = vmatprep.subr.bf16.mxu0 0
      %1545 = vmatpush2.bf16.msra.mxu0 0
      %1546 = vmatprep.subr.bf16.mxu0 0
      %1547 = vmatpush2.bf16.msra.mxu0 0
      %1548 = vmatprep.subr.bf16.mxu0 0
      %1549 = vmatpush2.bf16.msra.mxu0 0
      %1550 = vmatprep.mubr.bf16.mxu0 0
      %1551 = vmatmul.mubr.bf16.gmra.mxu0 %v1098
      %v1552 = vpop.f32.mrf.mxu0
      %v1553 = vadd.f32 %v1504, %v1552
      %v1554 = vpop.f32.mrf.mxu0
      %v1555 = vpop.f32.mrf.mxu0
      %v1556 = vadd.f32 %v1504, %v1555
      %v1557 = vpop.f32.mrf.mxu0
      %1558 = vdwg.mxu0
      %v1559 = vpack.c.bf16 %v1556, %v1553
      %v1561 = vlaneseq
      %v1562 = vshrl.u32 %v1561, 7
      %v1563 = vsub.s32 0, %v1562
      %v1564 = vrot.slane %v868, %v1563
      %v1570 = vunpack.c.l.b16 %v861
      %v1571 = vunpack.c.l.b16 %v862
      %v1572 = vunpack.c.l.b16 %v863
      %v1573 = vunpack.c.l.b16 %v864
      %v1574 = vpack.c.b16 %v1571, %v1570
      %v1575 = vpack.c.b16 %v1573, %v1572
      %1578 = vmatprep.subr.bf16.mxu0 0
      %1579 = vmatpush1.bf16.msra.mxu0 0
      %1580 = vmatprep.subr.bf16.mxu0 0
      %1581 = vmatpush1.bf16.msra.mxu0 0
      %1582 = vmatprep.subr.bf16.mxu0 0
      %1583 = vmatpush1.bf16.msra.mxu0 0
      %1584 = vmatprep.subr.bf16.mxu0 0
      %1585 = vmatpush1.bf16.msra.mxu0 0
      %1586 = vmatprep.subr.bf16.mxu0 0
      %1587 = vmatpush1.bf16.msra.mxu0 0
      %1588 = vmatprep.subr.bf16.mxu0 0
      %1589 = vmatpush1.bf16.msra.mxu0 0
      %1590 = vmatprep.subr.bf16.mxu0 0
      %1591 = vmatpush1.bf16.msra.mxu0 %v1575
      %1592 = vmatprep.subr.bf16.mxu0 0
      %1593 = vmatpush1.bf16.msra.mxu0 %v1574
      %1594 = vmatprep.subr.bf16.mxu0 0
      %1595 = vmatpush2.bf16.msra.mxu0 0
      %1596 = vmatprep.subr.bf16.mxu0 0
      %1597 = vmatpush2.bf16.msra.mxu0 0
      %1598 = vmatprep.subr.bf16.mxu0 0
      %1599 = vmatpush2.bf16.msra.mxu0 0
      %1600 = vmatprep.subr.bf16.mxu0 0
      %1601 = vmatpush2.bf16.msra.mxu0 0
      %1602 = vmatprep.subr.bf16.mxu0 0
      %1603 = vmatpush2.bf16.msra.mxu0 0
      %1604 = vmatprep.subr.bf16.mxu0 0
      %1605 = vmatpush2.bf16.msra.mxu0 0
      %1606 = vmatprep.subr.bf16.mxu0 0
      %1607 = vmatpush2.bf16.msra.mxu0 0
      %1608 = vmatprep.subr.bf16.mxu0 0
      %1609 = vmatpush2.bf16.msra.mxu0 0
      %1610 = vmatprep.mubr.bf16.mxu0 0
      %1611 = vmatmul.mubr.bf16.gmra.mxu0 %v1031
      %v1612 = vpop.f32.mrf.mxu0
      %v1613 = vadd.f32 %v1564, %v1612
      %v1614 = vpop.f32.mrf.mxu0
      %v1615 = vpop.f32.mrf.mxu0
      %v1616 = vpop.f32.mrf.mxu0
      %1617 = vdwg.mxu0
      %v1618 = vpack.c.bf16 %v1613, %v1613
      %v1620 = vlaneseq
      %v1621 = vshrl.u32 %v1620, 7
      %v1622 = vsub.s32 0, %v1621
      %v1623 = vrot.slane %v888, %v1622
      %v1629 = vunpack.c.l.b16 %v881
      %v1630 = vunpack.c.l.b16 %v882
      %v1631 = vunpack.c.l.b16 %v883
      %v1632 = vunpack.c.l.b16 %v884
      %v1633 = vpack.c.b16 %v1630, %v1629
      %v1634 = vpack.c.b16 %v1632, %v1631
      %1637 = vmatprep.subr.bf16.mxu0 0
      %1638 = vmatpush1.bf16.msra.mxu0 0
      %1639 = vmatprep.subr.bf16.mxu0 0
      %1640 = vmatpush1.bf16.msra.mxu0 0
      %1641 = vmatprep.subr.bf16.mxu0 0
      %1642 = vmatpush1.bf16.msra.mxu0 0
      %1643 = vmatprep.subr.bf16.mxu0 0
      %1644 = vmatpush1.bf16.msra.mxu0 0
      %1645 = vmatprep.subr.bf16.mxu0 0
      %1646 = vmatpush1.bf16.msra.mxu0 0
      %1647 = vmatprep.subr.bf16.mxu0 0
      %1648 = vmatpush1.bf16.msra.mxu0 0
      %1649 = vmatprep.subr.bf16.mxu0 0
      %1650 = vmatpush1.bf16.msra.mxu0 %v1634
      %1651 = vmatprep.subr.bf16.mxu0 0
      %1652 = vmatpush1.bf16.msra.mxu0 %v1633
      %1653 = vmatprep.subr.bf16.mxu0 0
      %1654 = vmatpush2.bf16.msra.mxu0 0
      %1655 = vmatprep.subr.bf16.mxu0 0
      %1656 = vmatpush2.bf16.msra.mxu0 0
      %1657 = vmatprep.subr.bf16.mxu0 0
      %1658 = vmatpush2.bf16.msra.mxu0 0
      %1659 = vmatprep.subr.bf16.mxu0 0
      %1660 = vmatpush2.bf16.msra.mxu0 0
      %1661 = vmatprep.subr.bf16.mxu0 0
      %1662 = vmatpush2.bf16.msra.mxu0 0
      %1663 = vmatprep.subr.bf16.mxu0 0
      %1664 = vmatpush2.bf16.msra.mxu0 0
      %1665 = vmatprep.subr.bf16.mxu0 0
      %1666 = vmatpush2.bf16.msra.mxu0 0
      %1667 = vmatprep.subr.bf16.mxu0 0
      %1668 = vmatpush2.bf16.msra.mxu0 0
      %1669 = vmatprep.mubr.bf16.mxu0 0
      %1670 = vmatmul.mubr.bf16.gmra.mxu0 %v1098
      %v1671 = vpop.f32.mrf.mxu0
      %v1672 = vadd.f32 %v1623, %v1671
      %v1673 = vpop.f32.mrf.mxu0
      %v1674 = vpop.f32.mrf.mxu0
      %v1675 = vadd.f32 %v1623, %v1674
      %v1676 = vpop.f32.mrf.mxu0
      %1677 = vdwg.mxu0
      %v1678 = vpack.c.bf16 %v1675, %v1672
      %v1680 = vlaneseq
      %v1681 = vshrl.u32 %v1680, 7
      %v1682 = vsub.s32 0, %v1681
      %v1683 = vrot.slane %v908, %v1682
      %v1689 = vunpack.c.l.b16 %v901
      %v1690 = vunpack.c.l.b16 %v902
      %v1691 = vunpack.c.l.b16 %v903
      %v1692 = vunpack.c.l.b16 %v904
      %v1693 = vpack.c.b16 %v1690, %v1689
      %v1694 = vpack.c.b16 %v1692, %v1691
      %1697 = vmatprep.subr.bf16.mxu0 0
      %1698 = vmatpush1.bf16.msra.mxu0 0
      %1699 = vmatprep.subr.bf16.mxu0 0
      %1700 = vmatpush1.bf16.msra.mxu0 0
      %1701 = vmatprep.subr.bf16.mxu0 0
      %1702 = vmatpush1.bf16.msra.mxu0 0
      %1703 = vmatprep.subr.bf16.mxu0 0
      %1704 = vmatpush1.bf16.msra.mxu0 0
      %1705 = vmatprep.subr.bf16.mxu0 0
      %1706 = vmatpush1.bf16.msra.mxu0 0
      %1707 = vmatprep.subr.bf16.mxu0 0
      %1708 = vmatpush1.bf16.msra.mxu0 0
      %1709 = vmatprep.subr.bf16.mxu0 0
      %1710 = vmatpush1.bf16.msra.mxu0 %v1694
      %1711 = vmatprep.subr.bf16.mxu0 0
      %1712 = vmatpush1.bf16.msra.mxu0 %v1693
      %1713 = vmatprep.subr.bf16.mxu0 0
      %1714 = vmatpush2.bf16.msra.mxu0 0
      %1715 = vmatprep.subr.bf16.mxu0 0
      %1716 = vmatpush2.bf16.msra.mxu0 0
      %1717 = vmatprep.subr.bf16.mxu0 0
      %1718 = vmatpush2.bf16.msra.mxu0 0
      %1719 = vmatprep.subr.bf16.mxu0 0
      %1720 = vmatpush2.bf16.msra.mxu0 0
      %1721 = vmatprep.subr.bf16.mxu0 0
      %1722 = vmatpush2.bf16.msra.mxu0 0
      %1723 = vmatprep.subr.bf16.mxu0 0
      %1724 = vmatpush2.bf16.msra.mxu0 0
      %1725 = vmatprep.subr.bf16.mxu0 0
      %1726 = vmatpush2.bf16.msra.mxu0 0
      %1727 = vmatprep.subr.bf16.mxu0 0
      %1728 = vmatpush2.bf16.msra.mxu0 0
      %1729 = vmatprep.mubr.bf16.mxu0 0
      %1730 = vmatmul.mubr.bf16.gmra.mxu0 %v1098
      %v1731 = vpop.f32.mrf.mxu0
      %v1732 = vadd.f32 %v1683, %v1731
      %v1733 = vpop.f32.mrf.mxu0
      %v1734 = vpop.f32.mrf.mxu0
      %v1735 = vadd.f32 %v1683, %v1734
      %v1736 = vpop.f32.mrf.mxu0
      %1737 = vdwg.mxu0
      %v1738 = vpack.c.bf16 %v1735, %v1732
      %v1739 = vlaneseq
      %v1740 = vshrl.u32 %v1739, 7
      %v1741 = vlaneseq
      %v1742 = vand.u32 %v1741, 127
      %v1743 = vcvt.s32.f32 %v1740
      %v1744 = vadd.f32 %v1743, 0.5
      %v1745 = vmul.f32 %v1744, 0.5
      %v1746 = vfloor.f32 %v1745
      %v1747 = vcvt.s32.f32 %v1742
      %v1748 = vadd.f32 %v1747, 0.5
      %v1749 = vmul.f32 %v1748, 0.25
      %v1750 = vfloor.f32 %v1749
      %vm1751 = vcmp.eq.f32.partialorder %v1746, %v1750
      %v1752 = vsel %vm1751, 0.0, -1e+30
      %vm1753 = vcmask 64512
      %v1755 = vsel %vm1753, %v1073, 0
      %v1758 = vsel %vm1753, %v1141, 0
      %1760 = vmatprep.subr.bf16.mxu0 0
      %1761 = vmatpush1.bf16.xpose.msra.mxu0 0
      %1762 = vmatprep.subr.bf16.mxu0 0
      %1763 = vmatpush1.bf16.xpose.msra.mxu0 0
      %1764 = vmatprep.subr.bf16.mxu0 0
      %1765 = vmatpush1.bf16.xpose.msra.mxu0 0
      %1766 = vmatprep.subr.bf16.mxu0 0
      %1767 = vmatpush1.bf16.xpose.msra.mxu0 0
      %1768 = vmatprep.subr.bf16.mxu0 0
      %1769 = vmatpush1.bf16.xpose.msra.mxu0 0
      %1770 = vmatprep.subr.bf16.mxu0 0
      %1771 = vmatpush1.bf16.xpose.msra.mxu0 0
      %1772 = vmatprep.subr.bf16.mxu0 0
      %1773 = vmatpush1.bf16.xpose.msra.mxu0 0
      %1774 = vmatprep.subr.bf16.mxu0 0
      %1775 = vmatpush1.bf16.xpose.msra.mxu0 %v1758
      %1776 = vmatprep.subr.bf16.mxu0 0
      %1777 = vmatpush2.bf16.xpose.msra.mxu0 0
      %1778 = vmatprep.subr.bf16.mxu0 0
      %1779 = vmatpush2.bf16.xpose.msra.mxu0 0
      %1780 = vmatprep.subr.bf16.mxu0 0
      %1781 = vmatpush2.bf16.xpose.msra.mxu0 0
      %1782 = vmatprep.subr.bf16.mxu0 0
      %1783 = vmatpush2.bf16.xpose.msra.mxu0 0
      %1784 = vmatprep.subr.bf16.mxu0 0
      %1785 = vmatpush2.bf16.xpose.msra.mxu0 0
      %1786 = vmatprep.subr.bf16.mxu0 0
      %1787 = vmatpush2.bf16.xpose.msra.mxu0 0
      %1788 = vmatprep.subr.bf16.mxu0 0
      %1789 = vmatpush2.bf16.xpose.msra.mxu0 0
      %1790 = vmatprep.subr.bf16.mxu0 0
      %1791 = vmatpush2.bf16.xpose.msra.mxu0 0
      %1792 = vmatprep.mubr.bf16.mxu0 0
      %1793 = vmatmul.mubr.bf16.gmra.mxu0 %v1755
      %v1794 = vpop.f32.mrf.mxu0
      %v1795 = vadd.f32 %v1752, %v1794
      %v1796 = vpop.f32.mrf.mxu0
      %v1797 = vpop.f32.mrf.mxu0
      %v1798 = vpop.f32.mrf.mxu0
      %1799 = vdwg.mxu0
      %vm1800 = vcmask 130048
      %v1801 = vsel %vm1800, %v1795, -inf
      %1802 = vmax.xlane.f32.xlu0 %v1801
      %v1803 = vpop.xlane.xlu0 %1802
      %v1804 = vsub.f32 %v1795, %v1803
      %v1805 = vmul.f32 %v1804, 1.442695
      %v1806 = vpow.pop %v1805
      %v1807 = vsel %vm1800, %v1806, 0.0
      %1808 = vadd.xlane.f32.xlu0 %v1807
      %v1809 = vpop.xlane.xlu0 %1808
      %v1810 = vrcp.pop %v1809
      %v1811 = vmul.f32 %v1809, %v1810
      %v1812 = vsub.f32 2.0, %v1811
      %v1813 = vmul.f32 %v1810, %v1812
      %v1814 = vmul.f32 %v1806, %v1813
      %v1815 = vpack.c.bf16 %v1814, %v1814
      %v1817 = vsel %vm1800, %v1815, 0
      %1819 = vmatprep.subr.bf16.mxu0 0
      %1820 = vmatpush1.bf16.msra.mxu0 0
      %1821 = vmatprep.subr.bf16.mxu0 0
      %1822 = vmatpush1.bf16.msra.mxu0 0
      %1823 = vmatprep.subr.bf16.mxu0 0
      %1824 = vmatpush1.bf16.msra.mxu0 0
      %1825 = vmatprep.subr.bf16.mxu0 0
      %1826 = vmatpush1.bf16.msra.mxu0 0
      %1827 = vmatprep.subr.bf16.mxu0 0
      %1828 = vmatpush1.bf16.msra.mxu0 0
      %1829 = vmatprep.subr.bf16.mxu0 0
      %1830 = vmatpush1.bf16.msra.mxu0 0
      %1831 = vmatprep.subr.bf16.mxu0 0
      %1832 = vmatpush1.bf16.msra.mxu0 0
      %1833 = vmatprep.subr.bf16.mxu0 0
      %1834 = vmatpush1.bf16.msra.mxu0 %v1201
      %1835 = vmatprep.subr.bf16.mxu0 0
      %1836 = vmatpush2.bf16.msra.mxu0 0
      %1837 = vmatprep.subr.bf16.mxu0 0
      %1838 = vmatpush2.bf16.msra.mxu0 0
      %1839 = vmatprep.subr.bf16.mxu0 0
      %1840 = vmatpush2.bf16.msra.mxu0 0
      %1841 = vmatprep.subr.bf16.mxu0 0
      %1842 = vmatpush2.bf16.msra.mxu0 0
      %1843 = vmatprep.subr.bf16.mxu0 0
      %1844 = vmatpush2.bf16.msra.mxu0 0
      %1845 = vmatprep.subr.bf16.mxu0 0
      %1846 = vmatpush2.bf16.msra.mxu0 0
      %1847 = vmatprep.subr.bf16.mxu0 0
      %1848 = vmatpush2.bf16.msra.mxu0 0
      %1849 = vmatprep.subr.bf16.mxu0 0
      %1850 = vmatpush2.bf16.msra.mxu0 0
      %1851 = vmatprep.mubr.bf16.mxu0 0
      %1852 = vmatmul.mubr.bf16.gmra.mxu0 %v1817
      %v1853 = vpop.f32.mrf.mxu0
      %v1854 = vadd.f32 0.0, %v1853
      %v1855 = vpop.f32.mrf.mxu0
      %v1856 = vpop.f32.mrf.mxu0
      %v1857 = vpop.f32.mrf.mxu0
      %1858 = vdwg.mxu0
      %v1859 = vpack.c.bf16 %v1854, %v1854
      %v1861 = vsel %vm1753, %v1260, 0
      %v1864 = vsel %vm1753, %v1320, 0
      %1866 = vmatprep.subr.bf16.mxu0 0
      %1867 = vmatpush1.bf16.xpose.msra.mxu0 0
      %1868 = vmatprep.subr.bf16.mxu0 0
      %1869 = vmatpush1.bf16.xpose.msra.mxu0 0
      %1870 = vmatprep.subr.bf16.mxu0 0
      %1871 = vmatpush1.bf16.xpose.msra.mxu0 0
      %1872 = vmatprep.subr.bf16.mxu0 0
      %1873 = vmatpush1.bf16.xpose.msra.mxu0 0
      %1874 = vmatprep.subr.bf16.mxu0 0
      %1875 = vmatpush1.bf16.xpose.msra.mxu0 0
      %1876 = vmatprep.subr.bf16.mxu0 0
      %1877 = vmatpush1.bf16.xpose.msra.mxu0 0
      %1878 = vmatprep.subr.bf16.mxu0 0
      %1879 = vmatpush1.bf16.xpose.msra.mxu0 0
      %1880 = vmatprep.subr.bf16.mxu0 0
      %1881 = vmatpush1.bf16.xpose.msra.mxu0 %v1864
      %1882 = vmatprep.subr.bf16.mxu0 0
      %1883 = vmatpush2.bf16.xpose.msra.mxu0 0
      %1884 = vmatprep.subr.bf16.mxu0 0
      %1885 = vmatpush2.bf16.xpose.msra.mxu0 0
      %1886 = vmatprep.subr.bf16.mxu0 0
      %1887 = vmatpush2.bf16.xpose.msra.mxu0 0
      %1888 = vmatprep.subr.bf16.mxu0 0
      %1889 = vmatpush2.bf16.xpose.msra.mxu0 0
      %1890 = vmatprep.subr.bf16.mxu0 0
      %1891 = vmatpush2.bf16.xpose.msra.mxu0 0
      %1892 = vmatprep.subr.bf16.mxu0 0
      %1893 = vmatpush2.bf16.xpose.msra.mxu0 0
      %1894 = vmatprep.subr.bf16.mxu0 0
      %1895 = vmatpush2.bf16.xpose.msra.mxu0 0
      %1896 = vmatprep.subr.bf16.mxu0 0
      %1897 = vmatpush2.bf16.xpose.msra.mxu0 0
      %1898 = vmatprep.mubr.bf16.mxu0 0
      %1899 = vmatmul.mubr.bf16.gmra.mxu0 %v1861
      %v1900 = vpop.f32.mrf.mxu0
      %v1901 = vadd.f32 %v1752, %v1900
      %v1902 = vpop.f32.mrf.mxu0
      %v1903 = vpop.f32.mrf.mxu0
      %v1904 = vpop.f32.mrf.mxu0
      %1905 = vdwg.mxu0
      %v1906 = vsel %vm1800, %v1901, -inf
      %1907 = vmax.xlane.f32.xlu0 %v1906
      %v1908 = vpop.xlane.xlu0 %1907
      %v1909 = vsub.f32 %v1901, %v1908
      %v1910 = vmul.f32 %v1909, 1.442695
      %v1911 = vpow.pop %v1910
      %v1912 = vsel %vm1800, %v1911, 0.0
      %1913 = vadd.xlane.f32.xlu0 %v1912
      %v1914 = vpop.xlane.xlu0 %1913
      %v1915 = vrcp.pop %v1914
      %v1916 = vmul.f32 %v1914, %v1915
      %v1917 = vsub.f32 2.0, %v1916
      %v1918 = vmul.f32 %v1915, %v1917
      %v1919 = vmul.f32 %v1911, %v1918
      %v1920 = vpack.c.bf16 %v1919, %v1919
      %v1922 = vsel %vm1800, %v1920, 0
      %1924 = vmatprep.subr.bf16.mxu0 0
      %1925 = vmatpush1.bf16.msra.mxu0 0
      %1926 = vmatprep.subr.bf16.mxu0 0
      %1927 = vmatpush1.bf16.msra.mxu0 0
      %1928 = vmatprep.subr.bf16.mxu0 0
      %1929 = vmatpush1.bf16.msra.mxu0 0
      %1930 = vmatprep.subr.bf16.mxu0 0
      %1931 = vmatpush1.bf16.msra.mxu0 0
      %1932 = vmatprep.subr.bf16.mxu0 0
      %1933 = vmatpush1.bf16.msra.mxu0 0
      %1934 = vmatprep.subr.bf16.mxu0 0
      %1935 = vmatpush1.bf16.msra.mxu0 0
      %1936 = vmatprep.subr.bf16.mxu0 0
      %1937 = vmatpush1.bf16.msra.mxu0 0
      %1938 = vmatprep.subr.bf16.mxu0 0
      %1939 = vmatpush1.bf16.msra.mxu0 %v1380
      %1940 = vmatprep.subr.bf16.mxu0 0
      %1941 = vmatpush2.bf16.msra.mxu0 0
      %1942 = vmatprep.subr.bf16.mxu0 0
      %1943 = vmatpush2.bf16.msra.mxu0 0
      %1944 = vmatprep.subr.bf16.mxu0 0
      %1945 = vmatpush2.bf16.msra.mxu0 0
      %1946 = vmatprep.subr.bf16.mxu0 0
      %1947 = vmatpush2.bf16.msra.mxu0 0
      %1948 = vmatprep.subr.bf16.mxu0 0
      %1949 = vmatpush2.bf16.msra.mxu0 0
      %1950 = vmatprep.subr.bf16.mxu0 0
      %1951 = vmatpush2.bf16.msra.mxu0 0
      %1952 = vmatprep.subr.bf16.mxu0 0
      %1953 = vmatpush2.bf16.msra.mxu0 0
      %1954 = vmatprep.subr.bf16.mxu0 0
      %1955 = vmatpush2.bf16.msra.mxu0 0
      %1956 = vmatprep.mubr.bf16.mxu0 0
      %1957 = vmatmul.mubr.bf16.gmra.mxu0 %v1922
      %v1958 = vpop.f32.mrf.mxu0
      %v1959 = vadd.f32 0.0, %v1958
      %v1960 = vpop.f32.mrf.mxu0
      %v1961 = vpop.f32.mrf.mxu0
      %v1962 = vpop.f32.mrf.mxu0
      %1963 = vdwg.mxu0
      %v1964 = vpack.c.bf16 %v1959, %v1959
      %v1966 = vsel %vm1753, %v1964, 0
      %vm1968 = vcmask 1043456
      %v1970 = vsel %vm1968, %v910, 0
      %1972 = vmatprep.subr.bf16.mxu0 0
      %1973 = vmatpush1.bf16.msra.mxu0 0
      %1974 = vmatprep.subr.bf16.mxu0 0
      %1975 = vmatpush1.bf16.msra.mxu0 0
      %1976 = vmatprep.subr.bf16.mxu0 0
      %1977 = vmatpush1.bf16.msra.mxu0 0
      %1978 = vmatprep.subr.bf16.mxu0 0
      %1979 = vmatpush1.bf16.msra.mxu0 0
      %1980 = vmatprep.subr.bf16.mxu0 0
      %1981 = vmatpush1.bf16.msra.mxu0 0
      %1982 = vmatprep.subr.bf16.mxu0 0
      %1983 = vmatpush1.bf16.msra.mxu0 0
      %1984 = vmatprep.subr.bf16.mxu0 0
      %1985 = vmatpush1.bf16.msra.mxu0 0
      %1986 = vmatprep.subr.bf16.mxu0 0
      %1987 = vmatpush1.bf16.msra.mxu0 %v1970
      %1988 = vmatprep.subr.bf16.mxu0 0
      %1989 = vmatpush2.bf16.msra.mxu0 0
      %1990 = vmatprep.subr.bf16.mxu0 0
      %1991 = vmatpush2.bf16.msra.mxu0 0
      %1992 = vmatprep.subr.bf16.mxu0 0
      %1993 = vmatpush2.bf16.msra.mxu0 0
      %1994 = vmatprep.subr.bf16.mxu0 0
      %1995 = vmatpush2.bf16.msra.mxu0 0
      %1996 = vmatprep.subr.bf16.mxu0 0
      %1997 = vmatpush2.bf16.msra.mxu0 0
      %1998 = vmatprep.subr.bf16.mxu0 0
      %1999 = vmatpush2.bf16.msra.mxu0 0
      %2000 = vmatprep.subr.bf16.mxu0 0
      %2001 = vmatpush2.bf16.msra.mxu0 0
      %2002 = vmatprep.subr.bf16.mxu0 0
      %2003 = vmatpush2.bf16.msra.mxu0 0
      %2004 = vmatprep.mubr.bf16.mxu0 0
      %2005 = vmatmul.mubr.bf16.gmra.mxu0 %v1966
      %v2006 = vpop.f32.mrf.mxu0
      %v2007 = vadd.f32 0.0, %v2006
      %v2008 = vpop.f32.mrf.mxu0
      %v2009 = vpop.f32.mrf.mxu0
      %v2010 = vpop.f32.mrf.mxu0
      %2011 = vdwg.mxu0
      %v2013 = vsel %vm1753, %v1859, 0
      %v2016 = vsel %vm1968, %v909, 0
      %2018 = vmatprep.subr.bf16.mxu0 0
      %2019 = vmatpush1.bf16.msra.mxu0 0
      %2020 = vmatprep.subr.bf16.mxu0 0
      %2021 = vmatpush1.bf16.msra.mxu0 0
      %2022 = vmatprep.subr.bf16.mxu0 0
      %2023 = vmatpush1.bf16.msra.mxu0 0
      %2024 = vmatprep.subr.bf16.mxu0 0
      %2025 = vmatpush1.bf16.msra.mxu0 0
      %2026 = vmatprep.subr.bf16.mxu0 0
      %2027 = vmatpush1.bf16.msra.mxu0 0
      %2028 = vmatprep.subr.bf16.mxu0 0
      %2029 = vmatpush1.bf16.msra.mxu0 0
      %2030 = vmatprep.subr.bf16.mxu0 0
      %2031 = vmatpush1.bf16.msra.mxu0 0
      %2032 = vmatprep.subr.bf16.mxu0 0
      %2033 = vmatpush1.bf16.msra.mxu0 %v2016
      %2034 = vmatprep.subr.bf16.mxu0 0
      %2035 = vmatpush2.bf16.msra.mxu0 0
      %2036 = vmatprep.subr.bf16.mxu0 0
      %2037 = vmatpush2.bf16.msra.mxu0 0
      %2038 = vmatprep.subr.bf16.mxu0 0
      %2039 = vmatpush2.bf16.msra.mxu0 0
      %2040 = vmatprep.subr.bf16.mxu0 0
      %2041 = vmatpush2.bf16.msra.mxu0 0
      %2042 = vmatprep.subr.bf16.mxu0 0
      %2043 = vmatpush2.bf16.msra.mxu0 0
      %2044 = vmatprep.subr.bf16.mxu0 0
      %2045 = vmatpush2.bf16.msra.mxu0 0
      %2046 = vmatprep.subr.bf16.mxu0 0
      %2047 = vmatpush2.bf16.msra.mxu0 0
      %2048 = vmatprep.subr.bf16.mxu0 0
      %2049 = vmatpush2.bf16.msra.mxu0 0
      %2050 = vmatprep.mubr.bf16.mxu0 0
      %2051 = vmatmul.mubr.bf16.gmra.mxu0 %v2013
      %v2052 = vpop.f32.mrf.mxu0
      %v2053 = vadd.f32 %v2007, %v2052
      %v2054 = vpop.f32.mrf.mxu0
      %v2055 = vpop.f32.mrf.mxu0
      %v2056 = vpop.f32.mrf.mxu0
      %2057 = vdwg.mxu0
      %v2059 = vsel %vm1753, %v1439, 0
      %v2062 = vsel %vm1753, %v1499, 0
      %2064 = vmatprep.subr.bf16.mxu0 0
      %2065 = vmatpush1.bf16.xpose.msra.mxu0 0
      %2066 = vmatprep.subr.bf16.mxu0 0
      %2067 = vmatpush1.bf16.xpose.msra.mxu0 0
      %2068 = vmatprep.subr.bf16.mxu0 0
      %2069 = vmatpush1.bf16.xpose.msra.mxu0 0
      %2070 = vmatprep.subr.bf16.mxu0 0
      %2071 = vmatpush1.bf16.xpose.msra.mxu0 0
      %2072 = vmatprep.subr.bf16.mxu0 0
      %2073 = vmatpush1.bf16.xpose.msra.mxu0 0
      %2074 = vmatprep.subr.bf16.mxu0 0
      %2075 = vmatpush1.bf16.xpose.msra.mxu0 0
      %2076 = vmatprep.subr.bf16.mxu0 0
      %2077 = vmatpush1.bf16.xpose.msra.mxu0 0
      %2078 = vmatprep.subr.bf16.mxu0 0
      %2079 = vmatpush1.bf16.xpose.msra.mxu0 %v2062
      %2080 = vmatprep.subr.bf16.mxu0 0
      %2081 = vmatpush2.bf16.xpose.msra.mxu0 0
      %2082 = vmatprep.subr.bf16.mxu0 0
      %2083 = vmatpush2.bf16.xpose.msra.mxu0 0
      %2084 = vmatprep.subr.bf16.mxu0 0
      %2085 = vmatpush2.bf16.xpose.msra.mxu0 0
      %2086 = vmatprep.subr.bf16.mxu0 0
      %2087 = vmatpush2.bf16.xpose.msra.mxu0 0
      %2088 = vmatprep.subr.bf16.mxu0 0
      %2089 = vmatpush2.bf16.xpose.msra.mxu0 0
      %2090 = vmatprep.subr.bf16.mxu0 0
      %2091 = vmatpush2.bf16.xpose.msra.mxu0 0
      %2092 = vmatprep.subr.bf16.mxu0 0
      %2093 = vmatpush2.bf16.xpose.msra.mxu0 0
      %2094 = vmatprep.subr.bf16.mxu0 0
      %2095 = vmatpush2.bf16.xpose.msra.mxu0 0
      %2096 = vmatprep.mubr.bf16.mxu0 0
      %2097 = vmatmul.mubr.bf16.gmra.mxu0 %v2059
      %v2098 = vpop.f32.mrf.mxu0
      %v2099 = vadd.f32 %v1752, %v2098
      %v2100 = vpop.f32.mrf.mxu0
      %v2101 = vpop.f32.mrf.mxu0
      %v2102 = vpop.f32.mrf.mxu0
      %2103 = vdwg.mxu0
      %v2104 = vsel %vm1800, %v2099, -inf
      %2105 = vmax.xlane.f32.xlu0 %v2104
      %v2106 = vpop.xlane.xlu0 %2105
      %v2107 = vsub.f32 %v2099, %v2106
      %v2108 = vmul.f32 %v2107, 1.442695
      %v2109 = vpow.pop %v2108
      %v2110 = vsel %vm1800, %v2109, 0.0
      %2111 = vadd.xlane.f32.xlu0 %v2110
      %v2112 = vpop.xlane.xlu0 %2111
      %v2113 = vrcp.pop %v2112
      %v2114 = vmul.f32 %v2112, %v2113
      %v2115 = vsub.f32 2.0, %v2114
      %v2116 = vmul.f32 %v2113, %v2115
      %v2117 = vmul.f32 %v2109, %v2116
      %v2118 = vpack.c.bf16 %v2117, %v2117
      %v2120 = vsel %vm1800, %v2118, 0
      %2122 = vmatprep.subr.bf16.mxu0 0
      %2123 = vmatpush1.bf16.msra.mxu0 0
      %2124 = vmatprep.subr.bf16.mxu0 0
      %2125 = vmatpush1.bf16.msra.mxu0 0
      %2126 = vmatprep.subr.bf16.mxu0 0
      %2127 = vmatpush1.bf16.msra.mxu0 0
      %2128 = vmatprep.subr.bf16.mxu0 0
      %2129 = vmatpush1.bf16.msra.mxu0 0
      %2130 = vmatprep.subr.bf16.mxu0 0
      %2131 = vmatpush1.bf16.msra.mxu0 0
      %2132 = vmatprep.subr.bf16.mxu0 0
      %2133 = vmatpush1.bf16.msra.mxu0 0
      %2134 = vmatprep.subr.bf16.mxu0 0
      %2135 = vmatpush1.bf16.msra.mxu0 0
      %2136 = vmatprep.subr.bf16.mxu0 0
      %2137 = vmatpush1.bf16.msra.mxu0 %v1559
      %2138 = vmatprep.subr.bf16.mxu0 0
      %2139 = vmatpush2.bf16.msra.mxu0 0
      %2140 = vmatprep.subr.bf16.mxu0 0
      %2141 = vmatpush2.bf16.msra.mxu0 0
      %2142 = vmatprep.subr.bf16.mxu0 0
      %2143 = vmatpush2.bf16.msra.mxu0 0
      %2144 = vmatprep.subr.bf16.mxu0 0
      %2145 = vmatpush2.bf16.msra.mxu0 0
      %2146 = vmatprep.subr.bf16.mxu0 0
      %2147 = vmatpush2.bf16.msra.mxu0 0
      %2148 = vmatprep.subr.bf16.mxu0 0
      %2149 = vmatpush2.bf16.msra.mxu0 0
      %2150 = vmatprep.subr.bf16.mxu0 0
      %2151 = vmatpush2.bf16.msra.mxu0 0
      %2152 = vmatprep.subr.bf16.mxu0 0
      %2153 = vmatpush2.bf16.msra.mxu0 0
      %2154 = vmatprep.mubr.bf16.mxu0 0
      %2155 = vmatmul.mubr.bf16.gmra.mxu0 %v2120
      %v2156 = vpop.f32.mrf.mxu0
      %v2157 = vadd.f32 0.0, %v2156
      %v2158 = vpop.f32.mrf.mxu0
      %v2159 = vpop.f32.mrf.mxu0
      %v2160 = vpop.f32.mrf.mxu0
      %2161 = vdwg.mxu0
      %v2162 = vpack.c.bf16 %v2157, %v2157
      %v2164 = vsel %vm1753, %v2162, 0
      %v2167 = vsel %vm1968, %v911, 0
      %2169 = vmatprep.subr.bf16.mxu0 0
      %2170 = vmatpush1.bf16.msra.mxu0 0
      %2171 = vmatprep.subr.bf16.mxu0 0
      %2172 = vmatpush1.bf16.msra.mxu0 0
      %2173 = vmatprep.subr.bf16.mxu0 0
      %2174 = vmatpush1.bf16.msra.mxu0 0
      %2175 = vmatprep.subr.bf16.mxu0 0
      %2176 = vmatpush1.bf16.msra.mxu0 0
      %2177 = vmatprep.subr.bf16.mxu0 0
      %2178 = vmatpush1.bf16.msra.mxu0 0
      %2179 = vmatprep.subr.bf16.mxu0 0
      %2180 = vmatpush1.bf16.msra.mxu0 0
      %2181 = vmatprep.subr.bf16.mxu0 0
      %2182 = vmatpush1.bf16.msra.mxu0 0
      %2183 = vmatprep.subr.bf16.mxu0 0
      %2184 = vmatpush1.bf16.msra.mxu0 %v2167
      %2185 = vmatprep.subr.bf16.mxu0 0
      %2186 = vmatpush2.bf16.msra.mxu0 0
      %2187 = vmatprep.subr.bf16.mxu0 0
      %2188 = vmatpush2.bf16.msra.mxu0 0
      %2189 = vmatprep.subr.bf16.mxu0 0
      %2190 = vmatpush2.bf16.msra.mxu0 0
      %2191 = vmatprep.subr.bf16.mxu0 0
      %2192 = vmatpush2.bf16.msra.mxu0 0
      %2193 = vmatprep.subr.bf16.mxu0 0
      %2194 = vmatpush2.bf16.msra.mxu0 0
      %2195 = vmatprep.subr.bf16.mxu0 0
      %2196 = vmatpush2.bf16.msra.mxu0 0
      %2197 = vmatprep.subr.bf16.mxu0 0
      %2198 = vmatpush2.bf16.msra.mxu0 0
      %2199 = vmatprep.subr.bf16.mxu0 0
      %2200 = vmatpush2.bf16.msra.mxu0 0
      %2201 = vmatprep.mubr.bf16.mxu0 0
      %2202 = vmatmul.mubr.bf16.gmra.mxu0 %v2164
      %v2203 = vpop.f32.mrf.mxu0
      %v2204 = vadd.f32 0.0, %v2203
      %v2205 = vpop.f32.mrf.mxu0
      %v2206 = vpop.f32.mrf.mxu0
      %v2207 = vpop.f32.mrf.mxu0
      %2208 = vdwg.mxu0
      %v2209 = vadd.f32 %v2053, %v2204
      %v2211 = vsel %vm1753, %v1618, 0
      %v2214 = vsel %vm1753, %v1678, 0
      %2216 = vmatprep.subr.bf16.mxu0 0
      %2217 = vmatpush1.bf16.xpose.msra.mxu0 0
      %2218 = vmatprep.subr.bf16.mxu0 0
      %2219 = vmatpush1.bf16.xpose.msra.mxu0 0
      %2220 = vmatprep.subr.bf16.mxu0 0
      %2221 = vmatpush1.bf16.xpose.msra.mxu0 0
      %2222 = vmatprep.subr.bf16.mxu0 0
      %2223 = vmatpush1.bf16.xpose.msra.mxu0 0
      %2224 = vmatprep.subr.bf16.mxu0 0
      %2225 = vmatpush1.bf16.xpose.msra.mxu0 0
      %2226 = vmatprep.subr.bf16.mxu0 0
      %2227 = vmatpush1.bf16.xpose.msra.mxu0 0
      %2228 = vmatprep.subr.bf16.mxu0 0
      %2229 = vmatpush1.bf16.xpose.msra.mxu0 0
      %2230 = vmatprep.subr.bf16.mxu0 0
      %2231 = vmatpush1.bf16.xpose.msra.mxu0 %v2214
      %2232 = vmatprep.subr.bf16.mxu0 0
      %2233 = vmatpush2.bf16.xpose.msra.mxu0 0
      %2234 = vmatprep.subr.bf16.mxu0 0
      %2235 = vmatpush2.bf16.xpose.msra.mxu0 0
      %2236 = vmatprep.subr.bf16.mxu0 0
      %2237 = vmatpush2.bf16.xpose.msra.mxu0 0
      %2238 = vmatprep.subr.bf16.mxu0 0
      %2239 = vmatpush2.bf16.xpose.msra.mxu0 0
      %2240 = vmatprep.subr.bf16.mxu0 0
      %2241 = vmatpush2.bf16.xpose.msra.mxu0 0
      %2242 = vmatprep.subr.bf16.mxu0 0
      %2243 = vmatpush2.bf16.xpose.msra.mxu0 0
      %2244 = vmatprep.subr.bf16.mxu0 0
      %2245 = vmatpush2.bf16.xpose.msra.mxu0 0
      %2246 = vmatprep.subr.bf16.mxu0 0
      %2247 = vmatpush2.bf16.xpose.msra.mxu0 0
      %2248 = vmatprep.mubr.bf16.mxu0 0
      %2249 = vmatmul.mubr.bf16.gmra.mxu0 %v2211
      %v2250 = vpop.f32.mrf.mxu0
      %v2251 = vadd.f32 %v1752, %v2250
      %v2252 = vpop.f32.mrf.mxu0
      %v2253 = vpop.f32.mrf.mxu0
      %v2254 = vpop.f32.mrf.mxu0
      %2255 = vdwg.mxu0
      %v2256 = vsel %vm1800, %v2251, -inf
      %2257 = vmax.xlane.f32.xlu0 %v2256
      %v2258 = vpop.xlane.xlu0 %2257
      %v2259 = vsub.f32 %v2251, %v2258
      %v2260 = vmul.f32 %v2259, 1.442695
      %v2261 = vpow.pop %v2260
      %v2262 = vsel %vm1800, %v2261, 0.0
      %2263 = vadd.xlane.f32.xlu0 %v2262
      %v2264 = vpop.xlane.xlu0 %2263
      %v2265 = vrcp.pop %v2264
      %v2266 = vmul.f32 %v2264, %v2265
      %v2267 = vsub.f32 2.0, %v2266
      %v2268 = vmul.f32 %v2265, %v2267
      %v2269 = vmul.f32 %v2261, %v2268
      %v2270 = vpack.c.bf16 %v2269, %v2269
      %v2272 = vsel %vm1800, %v2270, 0
      %2274 = vmatprep.subr.bf16.mxu0 0
      %2275 = vmatpush1.bf16.msra.mxu0 0
      %2276 = vmatprep.subr.bf16.mxu0 0
      %2277 = vmatpush1.bf16.msra.mxu0 0
      %2278 = vmatprep.subr.bf16.mxu0 0
      %2279 = vmatpush1.bf16.msra.mxu0 0
      %2280 = vmatprep.subr.bf16.mxu0 0
      %2281 = vmatpush1.bf16.msra.mxu0 0
      %2282 = vmatprep.subr.bf16.mxu0 0
      %2283 = vmatpush1.bf16.msra.mxu0 0
      %2284 = vmatprep.subr.bf16.mxu0 0
      %2285 = vmatpush1.bf16.msra.mxu0 0
      %2286 = vmatprep.subr.bf16.mxu0 0
      %2287 = vmatpush1.bf16.msra.mxu0 0
      %2288 = vmatprep.subr.bf16.mxu0 0
      %2289 = vmatpush1.bf16.msra.mxu0 %v1738
      %2290 = vmatprep.subr.bf16.mxu0 0
      %2291 = vmatpush2.bf16.msra.mxu0 0
      %2292 = vmatprep.subr.bf16.mxu0 0
      %2293 = vmatpush2.bf16.msra.mxu0 0
      %2294 = vmatprep.subr.bf16.mxu0 0
      %2295 = vmatpush2.bf16.msra.mxu0 0
      %2296 = vmatprep.subr.bf16.mxu0 0
      %2297 = vmatpush2.bf16.msra.mxu0 0
      %2298 = vmatprep.subr.bf16.mxu0 0
      %2299 = vmatpush2.bf16.msra.mxu0 0
      %2300 = vmatprep.subr.bf16.mxu0 0
      %2301 = vmatpush2.bf16.msra.mxu0 0
      %2302 = vmatprep.subr.bf16.mxu0 0
      %2303 = vmatpush2.bf16.msra.mxu0 0
      %2304 = vmatprep.subr.bf16.mxu0 0
      %2305 = vmatpush2.bf16.msra.mxu0 0
      %2306 = vmatprep.mubr.bf16.mxu0 0
      %2307 = vmatmul.mubr.bf16.gmra.mxu0 %v2272
      %v2308 = vpop.f32.mrf.mxu0
      %v2309 = vadd.f32 0.0, %v2308
      %v2310 = vpop.f32.mrf.mxu0
      %v2311 = vpop.f32.mrf.mxu0
      %v2312 = vpop.f32.mrf.mxu0
      %2313 = vdwg.mxu0
      %v2314 = vpack.c.bf16 %v2309, %v2309
      %v2316 = vsel %vm1753, %v2314, 0
      %v2319 = vsel %vm1968, %v912, 0
      %2321 = vmatprep.subr.bf16.mxu0 0
      %2322 = vmatpush1.bf16.msra.mxu0 0
      %2323 = vmatprep.subr.bf16.mxu0 0
      %2324 = vmatpush1.bf16.msra.mxu0 0
      %2325 = vmatprep.subr.bf16.mxu0 0
      %2326 = vmatpush1.bf16.msra.mxu0 0
      %2327 = vmatprep.subr.bf16.mxu0 0
      %2328 = vmatpush1.bf16.msra.mxu0 0
      %2329 = vmatprep.subr.bf16.mxu0 0
      %2330 = vmatpush1.bf16.msra.mxu0 0
      %2331 = vmatprep.subr.bf16.mxu0 0
      %2332 = vmatpush1.bf16.msra.mxu0 0
      %2333 = vmatprep.subr.bf16.mxu0 0
      %2334 = vmatpush1.bf16.msra.mxu0 0
      %2335 = vmatprep.subr.bf16.mxu0 0
      %2336 = vmatpush1.bf16.msra.mxu0 %v2319
      %2337 = vmatprep.subr.bf16.mxu0 0
      %2338 = vmatpush2.bf16.msra.mxu0 0
      %2339 = vmatprep.subr.bf16.mxu0 0
      %2340 = vmatpush2.bf16.msra.mxu0 0
      %2341 = vmatprep.subr.bf16.mxu0 0
      %2342 = vmatpush2.bf16.msra.mxu0 0
      %2343 = vmatprep.subr.bf16.mxu0 0
      %2344 = vmatpush2.bf16.msra.mxu0 0
      %2345 = vmatprep.subr.bf16.mxu0 0
      %2346 = vmatpush2.bf16.msra.mxu0 0
      %2347 = vmatprep.subr.bf16.mxu0 0
      %2348 = vmatpush2.bf16.msra.mxu0 0
      %2349 = vmatprep.subr.bf16.mxu0 0
      %2350 = vmatpush2.bf16.msra.mxu0 0
      %2351 = vmatprep.subr.bf16.mxu0 0
      %2352 = vmatpush2.bf16.msra.mxu0 0
      %2353 = vmatprep.mubr.bf16.mxu0 0
      %2354 = vmatmul.mubr.bf16.gmra.mxu0 %v2316
      %v2355 = vpop.f32.mrf.mxu0
      %v2356 = vadd.f32 0.0, %v2355
      %v2357 = vpop.f32.mrf.mxu0
      %v2358 = vpop.f32.mrf.mxu0
      %v2359 = vpop.f32.mrf.mxu0
      %2360 = vdwg.mxu0
      %v2361 = vadd.f32 %v2209, %v2356
      %v2363 = vlaneseq
      %v2364 = vshrl.u32 %v2363, 7
      %v2365 = vsub.s32 0, %v2364
      %v2366 = vrot.slane %v913, %v2365
      %v2368 = vadd.f32 %v2361, %v2366
      %v2369 = vpack.c.bf16 %v2368, %v2368
      %v2371 = vlaneseq
      %v2372 = vshrl.u32 %v2371, 7
      %v2373 = vsub.s32 0, %v2372
      %v2374 = vrot.slane %v930, %v2373
      %v2380 = vunpack.c.l.b16 %v914
      %v2381 = vunpack.c.l.b16 %v915
      %v2382 = vunpack.c.l.b16 %v916
      %v2383 = vunpack.c.l.b16 %v917
      %v2384 = vpack.c.b16 %v2381, %v2380
      %v2385 = vpack.c.b16 %v2383, %v2382
      %2388 = vmatprep.subr.bf16.mxu0 0
      %2389 = vmatpush1.bf16.msra.mxu0 0
      %2390 = vmatprep.subr.bf16.mxu0 0
      %2391 = vmatpush1.bf16.msra.mxu0 0
      %2392 = vmatprep.subr.bf16.mxu0 0
      %2393 = vmatpush1.bf16.msra.mxu0 0
      %2394 = vmatprep.subr.bf16.mxu0 0
      %2395 = vmatpush1.bf16.msra.mxu0 0
      %2396 = vmatprep.subr.bf16.mxu0 0
      %2397 = vmatpush1.bf16.msra.mxu0 0
      %2398 = vmatprep.subr.bf16.mxu0 0
      %2399 = vmatpush1.bf16.msra.mxu0 0
      %2400 = vmatprep.subr.bf16.mxu0 0
      %2401 = vmatpush1.bf16.msra.mxu0 %v2385
      %2402 = vmatprep.subr.bf16.mxu0 0
      %2403 = vmatpush1.bf16.msra.mxu0 %v2384
      %2404 = vmatprep.subr.bf16.mxu0 0
      %2405 = vmatpush2.bf16.msra.mxu0 0
      %2406 = vmatprep.subr.bf16.mxu0 0
      %2407 = vmatpush2.bf16.msra.mxu0 0
      %2408 = vmatprep.subr.bf16.mxu0 0
      %2409 = vmatpush2.bf16.msra.mxu0 0
      %2410 = vmatprep.subr.bf16.mxu0 0
      %2411 = vmatpush2.bf16.msra.mxu0 0
      %2412 = vmatprep.subr.bf16.mxu0 0
      %2413 = vmatpush2.bf16.msra.mxu0 0
      %2414 = vmatprep.subr.bf16.mxu0 0
      %2415 = vmatpush2.bf16.msra.mxu0 0
      %2416 = vmatprep.subr.bf16.mxu0 0
      %2417 = vmatpush2.bf16.msra.mxu0 0
      %2418 = vmatprep.subr.bf16.mxu0 0
      %2419 = vmatpush2.bf16.msra.mxu0 0
      %2420 = vmatprep.mubr.bf16.mxu0 0
      %2421 = vmatmul.mubr.bf16.gmra.mxu0 %v1098
      %v2422 = vpop.f32.mrf.mxu0
      %v2423 = vadd.f32 %v2374, %v2422
      %v2424 = vpop.f32.mrf.mxu0
      %v2425 = vpop.f32.mrf.mxu0
      %v2426 = vadd.f32 %v2374, %v2425
      %v2427 = vpop.f32.mrf.mxu0
      %2428 = vdwg.mxu0
      %v2429 = vpack.c.bf16 %v2426, %v2423
      %v2431 = vlaneseq
      %v2432 = vshrl.u32 %v2431, 7
      %v2433 = vsub.s32 0, %v2432
      %v2434 = vrot.slane %v950, %v2433
      %v2440 = vunpack.c.l.b16 %v934
      %v2441 = vunpack.c.l.b16 %v935
      %v2442 = vunpack.c.l.b16 %v936
      %v2443 = vunpack.c.l.b16 %v937
      %v2444 = vpack.c.b16 %v2441, %v2440
      %v2445 = vpack.c.b16 %v2443, %v2442
      %v2449 = vsel %vm1029, %v2369, 0
      %2451 = vmatprep.subr.bf16.mxu0 0
      %2452 = vmatpush1.bf16.msra.mxu0 0
      %2453 = vmatprep.subr.bf16.mxu0 0
      %2454 = vmatpush1.bf16.msra.mxu0 0
      %2455 = vmatprep.subr.bf16.mxu0 0
      %2456 = vmatpush1.bf16.msra.mxu0 0
      %2457 = vmatprep.subr.bf16.mxu0 0
      %2458 = vmatpush1.bf16.msra.mxu0 0
      %2459 = vmatprep.subr.bf16.mxu0 0
      %2460 = vmatpush1.bf16.msra.mxu0 0
      %2461 = vmatprep.subr.bf16.mxu0 0
      %2462 = vmatpush1.bf16.msra.mxu0 0
      %2463 = vmatprep.subr.bf16.mxu0 0
      %2464 = vmatpush1.bf16.msra.mxu0 %v2445
      %2465 = vmatprep.subr.bf16.mxu0 0
      %2466 = vmatpush1.bf16.msra.mxu0 %v2444
      %2467 = vmatprep.subr.bf16.mxu0 0
      %2468 = vmatpush2.bf16.msra.mxu0 0
      %2469 = vmatprep.subr.bf16.mxu0 0
      %2470 = vmatpush2.bf16.msra.mxu0 0
      %2471 = vmatprep.subr.bf16.mxu0 0
      %2472 = vmatpush2.bf16.msra.mxu0 0
      %2473 = vmatprep.subr.bf16.mxu0 0
      %2474 = vmatpush2.bf16.msra.mxu0 0
      %2475 = vmatprep.subr.bf16.mxu0 0
      %2476 = vmatpush2.bf16.msra.mxu0 0
      %2477 = vmatprep.subr.bf16.mxu0 0
      %2478 = vmatpush2.bf16.msra.mxu0 0
      %2479 = vmatprep.subr.bf16.mxu0 0
      %2480 = vmatpush2.bf16.msra.mxu0 0
      %2481 = vmatprep.subr.bf16.mxu0 0
      %2482 = vmatpush2.bf16.msra.mxu0 0
      %2483 = vmatprep.mubr.bf16.mxu0 0
      %2484 = vmatmul.mubr.bf16.gmra.mxu0 %v2449
      %v2485 = vpop.f32.mrf.mxu0
      %v2486 = vadd.f32 %v2434, %v2485
      %v2487 = vpop.f32.mrf.mxu0
      %v2488 = vpop.f32.mrf.mxu0
      %v2489 = vpop.f32.mrf.mxu0
      %2490 = vdwg.mxu0
      %v2491 = vpack.c.bf16 %v2486, %v2486
      %v2493 = vlaneseq
      %v2494 = vshrl.u32 %v2493, 7
      %v2495 = vsub.s32 0, %v2494
      %v2496 = vrot.slane %v970, %v2495
      %v2502 = vunpack.c.l.b16 %v954
      %v2503 = vunpack.c.l.b16 %v955
      %v2504 = vunpack.c.l.b16 %v956
      %v2505 = vunpack.c.l.b16 %v957
      %v2506 = vpack.c.b16 %v2503, %v2502
      %v2507 = vpack.c.b16 %v2505, %v2504
      %2510 = vmatprep.subr.bf16.mxu0 0
      %2511 = vmatpush1.bf16.msra.mxu0 0
      %2512 = vmatprep.subr.bf16.mxu0 0
      %2513 = vmatpush1.bf16.msra.mxu0 0
      %2514 = vmatprep.subr.bf16.mxu0 0
      %2515 = vmatpush1.bf16.msra.mxu0 0
      %2516 = vmatprep.subr.bf16.mxu0 0
      %2517 = vmatpush1.bf16.msra.mxu0 0
      %2518 = vmatprep.subr.bf16.mxu0 0
      %2519 = vmatpush1.bf16.msra.mxu0 0
      %2520 = vmatprep.subr.bf16.mxu0 0
      %2521 = vmatpush1.bf16.msra.mxu0 0
      %2522 = vmatprep.subr.bf16.mxu0 0
      %2523 = vmatpush1.bf16.msra.mxu0 %v2507
      %2524 = vmatprep.subr.bf16.mxu0 0
      %2525 = vmatpush1.bf16.msra.mxu0 %v2506
      %2526 = vmatprep.subr.bf16.mxu0 0
      %2527 = vmatpush2.bf16.msra.mxu0 0
      %2528 = vmatprep.subr.bf16.mxu0 0
      %2529 = vmatpush2.bf16.msra.mxu0 0
      %2530 = vmatprep.subr.bf16.mxu0 0
      %2531 = vmatpush2.bf16.msra.mxu0 0
      %2532 = vmatprep.subr.bf16.mxu0 0
      %2533 = vmatpush2.bf16.msra.mxu0 0
      %2534 = vmatprep.subr.bf16.mxu0 0
      %2535 = vmatpush2.bf16.msra.mxu0 0
      %2536 = vmatprep.subr.bf16.mxu0 0
      %2537 = vmatpush2.bf16.msra.mxu0 0
      %2538 = vmatprep.subr.bf16.mxu0 0
      %2539 = vmatpush2.bf16.msra.mxu0 0
      %2540 = vmatprep.subr.bf16.mxu0 0
      %2541 = vmatpush2.bf16.msra.mxu0 0
      %2542 = vmatprep.mubr.bf16.mxu0 0
      %2543 = vmatmul.mubr.bf16.gmra.mxu0 %v2449
      %v2544 = vpop.f32.mrf.mxu0
      %v2545 = vadd.f32 %v2496, %v2544
      %v2546 = vpop.f32.mrf.mxu0
      %v2547 = vpop.f32.mrf.mxu0
      %v2548 = vpop.f32.mrf.mxu0
      %2549 = vdwg.mxu0
      %v2550 = vpack.c.bf16 %v2545, %v2545
      %v2552 = vlaneseq
      %v2553 = vshrl.u32 %v2552, 7
      %v2554 = vsub.s32 0, %v2553
      %v2555 = vrot.slane %v931, %v2554
      %v2561 = vunpack.c.l.b16 %v918
      %v2562 = vunpack.c.l.b16 %v919
      %v2563 = vunpack.c.l.b16 %v920
      %v2564 = vunpack.c.l.b16 %v921
      %v2565 = vpack.c.b16 %v2562, %v2561
      %v2566 = vpack.c.b16 %v2564, %v2563
      %2569 = vmatprep.subr.bf16.mxu0 0
      %2570 = vmatpush1.bf16.msra.mxu0 0
      %2571 = vmatprep.subr.bf16.mxu0 0
      %2572 = vmatpush1.bf16.msra.mxu0 0
      %2573 = vmatprep.subr.bf16.mxu0 0
      %2574 = vmatpush1.bf16.msra.mxu0 0
      %2575 = vmatprep.subr.bf16.mxu0 0
      %2576 = vmatpush1.bf16.msra.mxu0 0
      %2577 = vmatprep.subr.bf16.mxu0 0
      %2578 = vmatpush1.bf16.msra.mxu0 0
      %2579 = vmatprep.subr.bf16.mxu0 0
      %2580 = vmatpush1.bf16.msra.mxu0 0
      %2581 = vmatprep.subr.bf16.mxu0 0
      %2582 = vmatpush1.bf16.msra.mxu0 %v2566
      %2583 = vmatprep.subr.bf16.mxu0 0
      %2584 = vmatpush1.bf16.msra.mxu0 %v2565
      %2585 = vmatprep.subr.bf16.mxu0 0
      %2586 = vmatpush2.bf16.msra.mxu0 0
      %2587 = vmatprep.subr.bf16.mxu0 0
      %2588 = vmatpush2.bf16.msra.mxu0 0
      %2589 = vmatprep.subr.bf16.mxu0 0
      %2590 = vmatpush2.bf16.msra.mxu0 0
      %2591 = vmatprep.subr.bf16.mxu0 0
      %2592 = vmatpush2.bf16.msra.mxu0 0
      %2593 = vmatprep.subr.bf16.mxu0 0
      %2594 = vmatpush2.bf16.msra.mxu0 0
      %2595 = vmatprep.subr.bf16.mxu0 0
      %2596 = vmatpush2.bf16.msra.mxu0 0
      %2597 = vmatprep.subr.bf16.mxu0 0
      %2598 = vmatpush2.bf16.msra.mxu0 0
      %2599 = vmatprep.subr.bf16.mxu0 0
      %2600 = vmatpush2.bf16.msra.mxu0 0
      %2601 = vmatprep.mubr.bf16.mxu0 0
      %2602 = vmatmul.mubr.bf16.gmra.mxu0 %v1098
      %v2603 = vpop.f32.mrf.mxu0
      %v2604 = vadd.f32 %v2555, %v2603
      %v2605 = vpop.f32.mrf.mxu0
      %v2606 = vpop.f32.mrf.mxu0
      %v2607 = vadd.f32 %v2555, %v2606
      %v2608 = vpop.f32.mrf.mxu0
      %2609 = vdwg.mxu0
      %v2610 = vpack.c.bf16 %v2607, %v2604
      %v2612 = vlaneseq
      %v2613 = vshrl.u32 %v2612, 7
      %v2614 = vsub.s32 0, %v2613
      %v2615 = vrot.slane %v951, %v2614
      %v2621 = vunpack.c.l.b16 %v938
      %v2622 = vunpack.c.l.b16 %v939
      %v2623 = vunpack.c.l.b16 %v940
      %v2624 = vunpack.c.l.b16 %v941
      %v2625 = vpack.c.b16 %v2622, %v2621
      %v2626 = vpack.c.b16 %v2624, %v2623
      %2629 = vmatprep.subr.bf16.mxu0 0
      %2630 = vmatpush1.bf16.msra.mxu0 0
      %2631 = vmatprep.subr.bf16.mxu0 0
      %2632 = vmatpush1.bf16.msra.mxu0 0
      %2633 = vmatprep.subr.bf16.mxu0 0
      %2634 = vmatpush1.bf16.msra.mxu0 0
      %2635 = vmatprep.subr.bf16.mxu0 0
      %2636 = vmatpush1.bf16.msra.mxu0 0
      %2637 = vmatprep.subr.bf16.mxu0 0
      %2638 = vmatpush1.bf16.msra.mxu0 0
      %2639 = vmatprep.subr.bf16.mxu0 0
      %2640 = vmatpush1.bf16.msra.mxu0 0
      %2641 = vmatprep.subr.bf16.mxu0 0
      %2642 = vmatpush1.bf16.msra.mxu0 %v2626
      %2643 = vmatprep.subr.bf16.mxu0 0
      %2644 = vmatpush1.bf16.msra.mxu0 %v2625
      %2645 = vmatprep.subr.bf16.mxu0 0
      %2646 = vmatpush2.bf16.msra.mxu0 0
      %2647 = vmatprep.subr.bf16.mxu0 0
      %2648 = vmatpush2.bf16.msra.mxu0 0
      %2649 = vmatprep.subr.bf16.mxu0 0
      %2650 = vmatpush2.bf16.msra.mxu0 0
      %2651 = vmatprep.subr.bf16.mxu0 0
      %2652 = vmatpush2.bf16.msra.mxu0 0
      %2653 = vmatprep.subr.bf16.mxu0 0
      %2654 = vmatpush2.bf16.msra.mxu0 0
      %2655 = vmatprep.subr.bf16.mxu0 0
      %2656 = vmatpush2.bf16.msra.mxu0 0
      %2657 = vmatprep.subr.bf16.mxu0 0
      %2658 = vmatpush2.bf16.msra.mxu0 0
      %2659 = vmatprep.subr.bf16.mxu0 0
      %2660 = vmatpush2.bf16.msra.mxu0 0
      %2661 = vmatprep.mubr.bf16.mxu0 0
      %2662 = vmatmul.mubr.bf16.gmra.mxu0 %v2449
      %v2663 = vpop.f32.mrf.mxu0
      %v2664 = vadd.f32 %v2615, %v2663
      %v2665 = vpop.f32.mrf.mxu0
      %v2666 = vpop.f32.mrf.mxu0
      %v2667 = vpop.f32.mrf.mxu0
      %2668 = vdwg.mxu0
      %v2669 = vpack.c.bf16 %v2664, %v2664
      %v2671 = vlaneseq
      %v2672 = vshrl.u32 %v2671, 7
      %v2673 = vsub.s32 0, %v2672
      %v2674 = vrot.slane %v971, %v2673
      %v2680 = vunpack.c.l.b16 %v958
      %v2681 = vunpack.c.l.b16 %v959
      %v2682 = vunpack.c.l.b16 %v960
      %v2683 = vunpack.c.l.b16 %v961
      %v2684 = vpack.c.b16 %v2681, %v2680
      %v2685 = vpack.c.b16 %v2683, %v2682
      %2688 = vmatprep.subr.bf16.mxu0 0
      %2689 = vmatpush1.bf16.msra.mxu0 0
      %2690 = vmatprep.subr.bf16.mxu0 0
      %2691 = vmatpush1.bf16.msra.mxu0 0
      %2692 = vmatprep.subr.bf16.mxu0 0
      %2693 = vmatpush1.bf16.msra.mxu0 0
      %2694 = vmatprep.subr.bf16.mxu0 0
      %2695 = vmatpush1.bf16.msra.mxu0 0
      %2696 = vmatprep.subr.bf16.mxu0 0
      %2697 = vmatpush1.bf16.msra.mxu0 0
      %2698 = vmatprep.subr.bf16.mxu0 0
      %2699 = vmatpush1.bf16.msra.mxu0 0
      %2700 = vmatprep.subr.bf16.mxu0 0
      %2701 = vmatpush1.bf16.msra.mxu0 %v2685
      %2702 = vmatprep.subr.bf16.mxu0 0
      %2703 = vmatpush1.bf16.msra.mxu0 %v2684
      %2704 = vmatprep.subr.bf16.mxu0 0
      %2705 = vmatpush2.bf16.msra.mxu0 0
      %2706 = vmatprep.subr.bf16.mxu0 0
      %2707 = vmatpush2.bf16.msra.mxu0 0
      %2708 = vmatprep.subr.bf16.mxu0 0
      %2709 = vmatpush2.bf16.msra.mxu0 0
      %2710 = vmatprep.subr.bf16.mxu0 0
      %2711 = vmatpush2.bf16.msra.mxu0 0
      %2712 = vmatprep.subr.bf16.mxu0 0
      %2713 = vmatpush2.bf16.msra.mxu0 0
      %2714 = vmatprep.subr.bf16.mxu0 0
      %2715 = vmatpush2.bf16.msra.mxu0 0
      %2716 = vmatprep.subr.bf16.mxu0 0
      %2717 = vmatpush2.bf16.msra.mxu0 0
      %2718 = vmatprep.subr.bf16.mxu0 0
      %2719 = vmatpush2.bf16.msra.mxu0 0
      %2720 = vmatprep.mubr.bf16.mxu0 0
      %2721 = vmatmul.mubr.bf16.gmra.mxu0 %v2449
      %v2722 = vpop.f32.mrf.mxu0
      %v2723 = vadd.f32 %v2674, %v2722
      %v2724 = vpop.f32.mrf.mxu0
      %v2725 = vpop.f32.mrf.mxu0
      %v2726 = vpop.f32.mrf.mxu0
      %2727 = vdwg.mxu0
      %v2728 = vpack.c.bf16 %v2723, %v2723
      %v2730 = vlaneseq
      %v2731 = vshrl.u32 %v2730, 7
      %v2732 = vsub.s32 0, %v2731
      %v2733 = vrot.slane %v932, %v2732
      %v2739 = vunpack.c.l.b16 %v922
      %v2740 = vunpack.c.l.b16 %v923
      %v2741 = vunpack.c.l.b16 %v924
      %v2742 = vunpack.c.l.b16 %v925
      %v2743 = vpack.c.b16 %v2740, %v2739
      %v2744 = vpack.c.b16 %v2742, %v2741
      %2747 = vmatprep.subr.bf16.mxu0 0
      %2748 = vmatpush1.bf16.msra.mxu0 0
      %2749 = vmatprep.subr.bf16.mxu0 0
      %2750 = vmatpush1.bf16.msra.mxu0 0
      %2751 = vmatprep.subr.bf16.mxu0 0
      %2752 = vmatpush1.bf16.msra.mxu0 0
      %2753 = vmatprep.subr.bf16.mxu0 0
      %2754 = vmatpush1.bf16.msra.mxu0 0
      %2755 = vmatprep.subr.bf16.mxu0 0
      %2756 = vmatpush1.bf16.msra.mxu0 0
      %2757 = vmatprep.subr.bf16.mxu0 0
      %2758 = vmatpush1.bf16.msra.mxu0 0
      %2759 = vmatprep.subr.bf16.mxu0 0
      %2760 = vmatpush1.bf16.msra.mxu0 %v2744
      %2761 = vmatprep.subr.bf16.mxu0 0
      %2762 = vmatpush1.bf16.msra.mxu0 %v2743
      %2763 = vmatprep.subr.bf16.mxu0 0
      %2764 = vmatpush2.bf16.msra.mxu0 0
      %2765 = vmatprep.subr.bf16.mxu0 0
      %2766 = vmatpush2.bf16.msra.mxu0 0
      %2767 = vmatprep.subr.bf16.mxu0 0
      %2768 = vmatpush2.bf16.msra.mxu0 0
      %2769 = vmatprep.subr.bf16.mxu0 0
      %2770 = vmatpush2.bf16.msra.mxu0 0
      %2771 = vmatprep.subr.bf16.mxu0 0
      %2772 = vmatpush2.bf16.msra.mxu0 0
      %2773 = vmatprep.subr.bf16.mxu0 0
      %2774 = vmatpush2.bf16.msra.mxu0 0
      %2775 = vmatprep.subr.bf16.mxu0 0
      %2776 = vmatpush2.bf16.msra.mxu0 0
      %2777 = vmatprep.subr.bf16.mxu0 0
      %2778 = vmatpush2.bf16.msra.mxu0 0
      %2779 = vmatprep.mubr.bf16.mxu0 0
      %2780 = vmatmul.mubr.bf16.gmra.mxu0 %v1098
      %v2781 = vpop.f32.mrf.mxu0
      %v2782 = vadd.f32 %v2733, %v2781
      %v2783 = vpop.f32.mrf.mxu0
      %v2784 = vpop.f32.mrf.mxu0
      %v2785 = vadd.f32 %v2733, %v2784
      %v2786 = vpop.f32.mrf.mxu0
      %2787 = vdwg.mxu0
      %v2788 = vpack.c.bf16 %v2785, %v2782
      %v2790 = vlaneseq
      %v2791 = vshrl.u32 %v2790, 7
      %v2792 = vsub.s32 0, %v2791
      %v2793 = vrot.slane %v952, %v2792
      %v2799 = vunpack.c.l.b16 %v942
      %v2800 = vunpack.c.l.b16 %v943
      %v2801 = vunpack.c.l.b16 %v944
      %v2802 = vunpack.c.l.b16 %v945
      %v2803 = vpack.c.b16 %v2800, %v2799
      %v2804 = vpack.c.b16 %v2802, %v2801
      %2807 = vmatprep.subr.bf16.mxu0 0
      %2808 = vmatpush1.bf16.msra.mxu0 0
      %2809 = vmatprep.subr.bf16.mxu0 0
      %2810 = vmatpush1.bf16.msra.mxu0 0
      %2811 = vmatprep.subr.bf16.mxu0 0
      %2812 = vmatpush1.bf16.msra.mxu0 0
      %2813 = vmatprep.subr.bf16.mxu0 0
      %2814 = vmatpush1.bf16.msra.mxu0 0
      %2815 = vmatprep.subr.bf16.mxu0 0
      %2816 = vmatpush1.bf16.msra.mxu0 0
      %2817 = vmatprep.subr.bf16.mxu0 0
      %2818 = vmatpush1.bf16.msra.mxu0 0
      %2819 = vmatprep.subr.bf16.mxu0 0
      %2820 = vmatpush1.bf16.msra.mxu0 %v2804
      %2821 = vmatprep.subr.bf16.mxu0 0
      %2822 = vmatpush1.bf16.msra.mxu0 %v2803
      %2823 = vmatprep.subr.bf16.mxu0 0
      %2824 = vmatpush2.bf16.msra.mxu0 0
      %2825 = vmatprep.subr.bf16.mxu0 0
      %2826 = vmatpush2.bf16.msra.mxu0 0
      %2827 = vmatprep.subr.bf16.mxu0 0
      %2828 = vmatpush2.bf16.msra.mxu0 0
      %2829 = vmatprep.subr.bf16.mxu0 0
      %2830 = vmatpush2.bf16.msra.mxu0 0
      %2831 = vmatprep.subr.bf16.mxu0 0
      %2832 = vmatpush2.bf16.msra.mxu0 0
      %2833 = vmatprep.subr.bf16.mxu0 0
      %2834 = vmatpush2.bf16.msra.mxu0 0
      %2835 = vmatprep.subr.bf16.mxu0 0
      %2836 = vmatpush2.bf16.msra.mxu0 0
      %2837 = vmatprep.subr.bf16.mxu0 0
      %2838 = vmatpush2.bf16.msra.mxu0 0
      %2839 = vmatprep.mubr.bf16.mxu0 0
      %2840 = vmatmul.mubr.bf16.gmra.mxu0 %v2449
      %v2841 = vpop.f32.mrf.mxu0
      %v2842 = vadd.f32 %v2793, %v2841
      %v2843 = vpop.f32.mrf.mxu0
      %v2844 = vpop.f32.mrf.mxu0
      %v2845 = vpop.f32.mrf.mxu0
      %2846 = vdwg.mxu0
      %v2847 = vpack.c.bf16 %v2842, %v2842
      %v2849 = vlaneseq
      %v2850 = vshrl.u32 %v2849, 7
      %v2851 = vsub.s32 0, %v2850
      %v2852 = vrot.slane %v972, %v2851
      %v2858 = vunpack.c.l.b16 %v962
      %v2859 = vunpack.c.l.b16 %v963
      %v2860 = vunpack.c.l.b16 %v964
      %v2861 = vunpack.c.l.b16 %v965
      %v2862 = vpack.c.b16 %v2859, %v2858
      %v2863 = vpack.c.b16 %v2861, %v2860
      %2866 = vmatprep.subr.bf16.mxu0 0
      %2867 = vmatpush1.bf16.msra.mxu0 0
      %2868 = vmatprep.subr.bf16.mxu0 0
      %2869 = vmatpush1.bf16.msra.mxu0 0
      %2870 = vmatprep.subr.bf16.mxu0 0
      %2871 = vmatpush1.bf16.msra.mxu0 0
      %2872 = vmatprep.subr.bf16.mxu0 0
      %2873 = vmatpush1.bf16.msra.mxu0 0
      %2874 = vmatprep.subr.bf16.mxu0 0
      %2875 = vmatpush1.bf16.msra.mxu0 0
      %2876 = vmatprep.subr.bf16.mxu0 0
      %2877 = vmatpush1.bf16.msra.mxu0 0
      %2878 = vmatprep.subr.bf16.mxu0 0
      %2879 = vmatpush1.bf16.msra.mxu0 %v2863
      %2880 = vmatprep.subr.bf16.mxu0 0
      %2881 = vmatpush1.bf16.msra.mxu0 %v2862
      %2882 = vmatprep.subr.bf16.mxu0 0
      %2883 = vmatpush2.bf16.msra.mxu0 0
      %2884 = vmatprep.subr.bf16.mxu0 0
      %2885 = vmatpush2.bf16.msra.mxu0 0
      %2886 = vmatprep.subr.bf16.mxu0 0
      %2887 = vmatpush2.bf16.msra.mxu0 0
      %2888 = vmatprep.subr.bf16.mxu0 0
      %2889 = vmatpush2.bf16.msra.mxu0 0
      %2890 = vmatprep.subr.bf16.mxu0 0
      %2891 = vmatpush2.bf16.msra.mxu0 0
      %2892 = vmatprep.subr.bf16.mxu0 0
      %2893 = vmatpush2.bf16.msra.mxu0 0
      %2894 = vmatprep.subr.bf16.mxu0 0
      %2895 = vmatpush2.bf16.msra.mxu0 0
      %2896 = vmatprep.subr.bf16.mxu0 0
      %2897 = vmatpush2.bf16.msra.mxu0 0
      %2898 = vmatprep.mubr.bf16.mxu0 0
      %2899 = vmatmul.mubr.bf16.gmra.mxu0 %v2449
      %v2900 = vpop.f32.mrf.mxu0
      %v2901 = vadd.f32 %v2852, %v2900
      %v2902 = vpop.f32.mrf.mxu0
      %v2903 = vpop.f32.mrf.mxu0
      %v2904 = vpop.f32.mrf.mxu0
      %2905 = vdwg.mxu0
      %v2906 = vpack.c.bf16 %v2901, %v2901
      %v2908 = vlaneseq
      %v2909 = vshrl.u32 %v2908, 7
      %v2910 = vsub.s32 0, %v2909
      %v2911 = vrot.slane %v933, %v2910
      %v2917 = vunpack.c.l.b16 %v926
      %v2918 = vunpack.c.l.b16 %v927
      %v2919 = vunpack.c.l.b16 %v928
      %v2920 = vunpack.c.l.b16 %v929
      %v2921 = vpack.c.b16 %v2918, %v2917
      %v2922 = vpack.c.b16 %v2920, %v2919
      %2925 = vmatprep.subr.bf16.mxu0 0
      %2926 = vmatpush1.bf16.msra.mxu0 0
      %2927 = vmatprep.subr.bf16.mxu0 0
      %2928 = vmatpush1.bf16.msra.mxu0 0
      %2929 = vmatprep.subr.bf16.mxu0 0
      %2930 = vmatpush1.bf16.msra.mxu0 0
      %2931 = vmatprep.subr.bf16.mxu0 0
      %2932 = vmatpush1.bf16.msra.mxu0 0
      %2933 = vmatprep.subr.bf16.mxu0 0
      %2934 = vmatpush1.bf16.msra.mxu0 0
      %2935 = vmatprep.subr.bf16.mxu0 0
      %2936 = vmatpush1.bf16.msra.mxu0 0
      %2937 = vmatprep.subr.bf16.mxu0 0
      %2938 = vmatpush1.bf16.msra.mxu0 %v2922
      %2939 = vmatprep.subr.bf16.mxu0 0
      %2940 = vmatpush1.bf16.msra.mxu0 %v2921
      %2941 = vmatprep.subr.bf16.mxu0 0
      %2942 = vmatpush2.bf16.msra.mxu0 0
      %2943 = vmatprep.subr.bf16.mxu0 0
      %2944 = vmatpush2.bf16.msra.mxu0 0
      %2945 = vmatprep.subr.bf16.mxu0 0
      %2946 = vmatpush2.bf16.msra.mxu0 0
      %2947 = vmatprep.subr.bf16.mxu0 0
      %2948 = vmatpush2.bf16.msra.mxu0 0
      %2949 = vmatprep.subr.bf16.mxu0 0
      %2950 = vmatpush2.bf16.msra.mxu0 0
      %2951 = vmatprep.subr.bf16.mxu0 0
      %2952 = vmatpush2.bf16.msra.mxu0 0
      %2953 = vmatprep.subr.bf16.mxu0 0
      %2954 = vmatpush2.bf16.msra.mxu0 0
      %2955 = vmatprep.subr.bf16.mxu0 0
      %2956 = vmatpush2.bf16.msra.mxu0 0
      %2957 = vmatprep.mubr.bf16.mxu0 0
      %2958 = vmatmul.mubr.bf16.gmra.mxu0 %v1098
      %v2959 = vpop.f32.mrf.mxu0
      %v2960 = vadd.f32 %v2911, %v2959
      %v2961 = vpop.f32.mrf.mxu0
      %v2962 = vpop.f32.mrf.mxu0
      %v2963 = vadd.f32 %v2911, %v2962
      %v2964 = vpop.f32.mrf.mxu0
      %2965 = vdwg.mxu0
      %v2966 = vpack.c.bf16 %v2963, %v2960
      %v2968 = vlaneseq
      %v2969 = vshrl.u32 %v2968, 7
      %v2970 = vsub.s32 0, %v2969
      %v2971 = vrot.slane %v953, %v2970
      %v2977 = vunpack.c.l.b16 %v946
      %v2978 = vunpack.c.l.b16 %v947
      %v2979 = vunpack.c.l.b16 %v948
      %v2980 = vunpack.c.l.b16 %v949
      %v2981 = vpack.c.b16 %v2978, %v2977
      %v2982 = vpack.c.b16 %v2980, %v2979
      %2985 = vmatprep.subr.bf16.mxu0 0
      %2986 = vmatpush1.bf16.msra.mxu0 0
      %2987 = vmatprep.subr.bf16.mxu0 0
      %2988 = vmatpush1.bf16.msra.mxu0 0
      %2989 = vmatprep.subr.bf16.mxu0 0
      %2990 = vmatpush1.bf16.msra.mxu0 0
      %2991 = vmatprep.subr.bf16.mxu0 0
      %2992 = vmatpush1.bf16.msra.mxu0 0
      %2993 = vmatprep.subr.bf16.mxu0 0
      %2994 = vmatpush1.bf16.msra.mxu0 0
      %2995 = vmatprep.subr.bf16.mxu0 0
      %2996 = vmatpush1.bf16.msra.mxu0 0
      %2997 = vmatprep.subr.bf16.mxu0 0
      %2998 = vmatpush1.bf16.msra.mxu0 %v2982
      %2999 = vmatprep.subr.bf16.mxu0 0
      %3000 = vmatpush1.bf16.msra.mxu0 %v2981
      %3001 = vmatprep.subr.bf16.mxu0 0
      %3002 = vmatpush2.bf16.msra.mxu0 0
      %3003 = vmatprep.subr.bf16.mxu0 0
      %3004 = vmatpush2.bf16.msra.mxu0 0
      %3005 = vmatprep.subr.bf16.mxu0 0
      %3006 = vmatpush2.bf16.msra.mxu0 0
      %3007 = vmatprep.subr.bf16.mxu0 0
      %3008 = vmatpush2.bf16.msra.mxu0 0
      %3009 = vmatprep.subr.bf16.mxu0 0
      %3010 = vmatpush2.bf16.msra.mxu0 0
      %3011 = vmatprep.subr.bf16.mxu0 0
      %3012 = vmatpush2.bf16.msra.mxu0 0
      %3013 = vmatprep.subr.bf16.mxu0 0
      %3014 = vmatpush2.bf16.msra.mxu0 0
      %3015 = vmatprep.subr.bf16.mxu0 0
      %3016 = vmatpush2.bf16.msra.mxu0 0
      %3017 = vmatprep.mubr.bf16.mxu0 0
      %3018 = vmatmul.mubr.bf16.gmra.mxu0 %v2449
      %v3019 = vpop.f32.mrf.mxu0
      %v3020 = vadd.f32 %v2971, %v3019
      %v3021 = vpop.f32.mrf.mxu0
      %v3022 = vpop.f32.mrf.mxu0
      %v3023 = vpop.f32.mrf.mxu0
      %3024 = vdwg.mxu0
      %v3025 = vpack.c.bf16 %v3020, %v3020
      %v3027 = vlaneseq
      %v3028 = vshrl.u32 %v3027, 7
      %v3029 = vsub.s32 0, %v3028
      %v3030 = vrot.slane %v973, %v3029
      %v3036 = vunpack.c.l.b16 %v966
      %v3037 = vunpack.c.l.b16 %v967
      %v3038 = vunpack.c.l.b16 %v968
      %v3039 = vunpack.c.l.b16 %v969
      %v3040 = vpack.c.b16 %v3037, %v3036
      %v3041 = vpack.c.b16 %v3039, %v3038
      %3044 = vmatprep.subr.bf16.mxu0 0
      %3045 = vmatpush1.bf16.msra.mxu0 0
      %3046 = vmatprep.subr.bf16.mxu0 0
      %3047 = vmatpush1.bf16.msra.mxu0 0
      %3048 = vmatprep.subr.bf16.mxu0 0
      %3049 = vmatpush1.bf16.msra.mxu0 0
      %3050 = vmatprep.subr.bf16.mxu0 0
      %3051 = vmatpush1.bf16.msra.mxu0 0
      %3052 = vmatprep.subr.bf16.mxu0 0
      %3053 = vmatpush1.bf16.msra.mxu0 0
      %3054 = vmatprep.subr.bf16.mxu0 0
      %3055 = vmatpush1.bf16.msra.mxu0 0
      %3056 = vmatprep.subr.bf16.mxu0 0
      %3057 = vmatpush1.bf16.msra.mxu0 %v3041
      %3058 = vmatprep.subr.bf16.mxu0 0
      %3059 = vmatpush1.bf16.msra.mxu0 %v3040
      %3060 = vmatprep.subr.bf16.mxu0 0
      %3061 = vmatpush2.bf16.msra.mxu0 0
      %3062 = vmatprep.subr.bf16.mxu0 0
      %3063 = vmatpush2.bf16.msra.mxu0 0
      %3064 = vmatprep.subr.bf16.mxu0 0
      %3065 = vmatpush2.bf16.msra.mxu0 0
      %3066 = vmatprep.subr.bf16.mxu0 0
      %3067 = vmatpush2.bf16.msra.mxu0 0
      %3068 = vmatprep.subr.bf16.mxu0 0
      %3069 = vmatpush2.bf16.msra.mxu0 0
      %3070 = vmatprep.subr.bf16.mxu0 0
      %3071 = vmatpush2.bf16.msra.mxu0 0
      %3072 = vmatprep.subr.bf16.mxu0 0
      %3073 = vmatpush2.bf16.msra.mxu0 0
      %3074 = vmatprep.subr.bf16.mxu0 0
      %3075 = vmatpush2.bf16.msra.mxu0 0
      %3076 = vmatprep.mubr.bf16.mxu0 0
      %3077 = vmatmul.mubr.bf16.gmra.mxu0 %v2449
      %v3078 = vpop.f32.mrf.mxu0
      %v3079 = vadd.f32 %v3030, %v3078
      %v3080 = vpop.f32.mrf.mxu0
      %v3081 = vpop.f32.mrf.mxu0
      %v3082 = vpop.f32.mrf.mxu0
      %3083 = vdwg.mxu0
      %v3084 = vpack.c.bf16 %v3079, %v3079
      %v3085 = vadd.s32 %v1740, 8
      %v3086 = vcvt.s32.f32 %v3085
      %v3087 = vadd.f32 %v3086, 0.5
      %v3088 = vmul.f32 %v1744, 0.25
      %v3089 = vmul.f32 %v3087, 0.25
      %v3090 = vfloor.f32 %v3088
      %v3091 = vfloor.f32 %v3089
      %v3092 = vmul.f32 %v1748, 0.5
      %v3093 = vfloor.f32 %v3092
      %vm3094 = vcmp.eq.f32.partialorder %v3090, %v3093
      %vm3095 = vcmp.eq.f32.partialorder %v3091, %v3093
      %v3096 = vsel %vm3094, 0.0, -1e+30
      %v3097 = vsel %vm3095, 0.0, -1e+30
      %v3099 = vsel %vm1753, %v2429, 0
      %v3102 = vsel %vm1753, %v2491, 0
      %3104 = vmatprep.subr.bf16.mxu0 0
      %3105 = vmatpush1.bf16.xpose.msra.mxu0 0
      %3106 = vmatprep.subr.bf16.mxu0 0
      %3107 = vmatpush1.bf16.xpose.msra.mxu0 0
      %3108 = vmatprep.subr.bf16.mxu0 0
      %3109 = vmatpush1.bf16.xpose.msra.mxu0 0
      %3110 = vmatprep.subr.bf16.mxu0 0
      %3111 = vmatpush1.bf16.xpose.msra.mxu0 0
      %3112 = vmatprep.subr.bf16.mxu0 0
      %3113 = vmatpush1.bf16.xpose.msra.mxu0 0
      %3114 = vmatprep.subr.bf16.mxu0 0
      %3115 = vmatpush1.bf16.xpose.msra.mxu0 0
      %3116 = vmatprep.subr.bf16.mxu0 0
      %3117 = vmatpush1.bf16.xpose.msra.mxu0 0
      %3118 = vmatprep.subr.bf16.mxu0 0
      %3119 = vmatpush1.bf16.xpose.msra.mxu0 %v3102
      %3120 = vmatprep.subr.bf16.mxu0 0
      %3121 = vmatpush2.bf16.xpose.msra.mxu0 0
      %3122 = vmatprep.subr.bf16.mxu0 0
      %3123 = vmatpush2.bf16.xpose.msra.mxu0 0
      %3124 = vmatprep.subr.bf16.mxu0 0
      %3125 = vmatpush2.bf16.xpose.msra.mxu0 0
      %3126 = vmatprep.subr.bf16.mxu0 0
      %3127 = vmatpush2.bf16.xpose.msra.mxu0 0
      %3128 = vmatprep.subr.bf16.mxu0 0
      %3129 = vmatpush2.bf16.xpose.msra.mxu0 0
      %3130 = vmatprep.subr.bf16.mxu0 0
      %3131 = vmatpush2.bf16.xpose.msra.mxu0 0
      %3132 = vmatprep.subr.bf16.mxu0 0
      %3133 = vmatpush2.bf16.xpose.msra.mxu0 0
      %3134 = vmatprep.subr.bf16.mxu0 0
      %3135 = vmatpush2.bf16.xpose.msra.mxu0 0
      %3136 = vmatprep.mubr.bf16.mxu0 0
      %3137 = vmatmul.mubr.bf16.gmra.mxu0 %v3099
      %v3138 = vpop.f32.mrf.mxu0
      %v3139 = vadd.f32 %v3096, %v3138
      %v3140 = vpop.f32.mrf.mxu0
      %v3141 = vpop.f32.mrf.mxu0
      %v3142 = vadd.f32 %v3097, %v3141
      %v3143 = vpop.f32.mrf.mxu0
      %3144 = vdwg.mxu0
      %v3145 = vsel %vm1753, %v3139, -inf
      %3146 = vmax.xlane.f32.xlu0 %v3145
      %v3147 = vpop.xlane.xlu0 %3146
      %v3148 = vsel %vm1753, %v3142, -inf
      %3149 = vmax.xlane.f32.xlu0 %v3148
      %v3150 = vpop.xlane.xlu0 %3149
      %v3151 = vsub.f32 %v3139, %v3147
      %v3152 = vsub.f32 %v3142, %v3150
      %v3153 = vmul.f32 %v3151, 1.442695
      %v3154 = vpow.pop %v3153
      %v3155 = vmul.f32 %v3152, 1.442695
      %v3156 = vpow.pop %v3155
      %v3157 = vsel %vm1753, %v3154, 0.0
      %3158 = vadd.xlane.f32.xlu0 %v3157
      %v3159 = vpop.xlane.xlu0 %3158
      %v3160 = vsel %vm1753, %v3156, 0.0
      %3161 = vadd.xlane.f32.xlu0 %v3160
      %v3162 = vpop.xlane.xlu0 %3161
      %v3163 = vrcp.pop %v3159
      %v3164 = vrcp.pop %v3162
      %v3165 = vmul.f32 %v3159, %v3163
      %v3166 = vmul.f32 %v3162, %v3164
      %v3167 = vsub.f32 2.0, %v3165
      %v3168 = vsub.f32 2.0, %v3166
      %v3169 = vmul.f32 %v3163, %v3167
      %v3170 = vmul.f32 %v3164, %v3168
      %v3171 = vmul.f32 %v3154, %v3169
      %v3172 = vmul.f32 %v3156, %v3170
      %v3173 = vpack.c.bf16 %v3172, %v3171
      %v3175 = vsel %vm1753, %v3173, 0
      %v3178 = vsel %vm1968, %v2550, 0
      %3180 = vmatprep.subr.bf16.mxu0 0
      %3181 = vmatpush1.bf16.msra.mxu0 0
      %3182 = vmatprep.subr.bf16.mxu0 0
      %3183 = vmatpush1.bf16.msra.mxu0 0
      %3184 = vmatprep.subr.bf16.mxu0 0
      %3185 = vmatpush1.bf16.msra.mxu0 0
      %3186 = vmatprep.subr.bf16.mxu0 0
      %3187 = vmatpush1.bf16.msra.mxu0 0
      %3188 = vmatprep.subr.bf16.mxu0 0
      %3189 = vmatpush1.bf16.msra.mxu0 0
      %3190 = vmatprep.subr.bf16.mxu0 0
      %3191 = vmatpush1.bf16.msra.mxu0 0
      %3192 = vmatprep.subr.bf16.mxu0 0
      %3193 = vmatpush1.bf16.msra.mxu0 0
      %3194 = vmatprep.subr.bf16.mxu0 0
      %3195 = vmatpush1.bf16.msra.mxu0 %v3178
      %3196 = vmatprep.subr.bf16.mxu0 0
      %3197 = vmatpush2.bf16.msra.mxu0 0
      %3198 = vmatprep.subr.bf16.mxu0 0
      %3199 = vmatpush2.bf16.msra.mxu0 0
      %3200 = vmatprep.subr.bf16.mxu0 0
      %3201 = vmatpush2.bf16.msra.mxu0 0
      %3202 = vmatprep.subr.bf16.mxu0 0
      %3203 = vmatpush2.bf16.msra.mxu0 0
      %3204 = vmatprep.subr.bf16.mxu0 0
      %3205 = vmatpush2.bf16.msra.mxu0 0
      %3206 = vmatprep.subr.bf16.mxu0 0
      %3207 = vmatpush2.bf16.msra.mxu0 0
      %3208 = vmatprep.subr.bf16.mxu0 0
      %3209 = vmatpush2.bf16.msra.mxu0 0
      %3210 = vmatprep.subr.bf16.mxu0 0
      %3211 = vmatpush2.bf16.msra.mxu0 0
      %3212 = vmatprep.mubr.bf16.mxu0 0
      %3213 = vmatmul.mubr.bf16.gmra.mxu0 %v3175
      %v3214 = vpop.f32.mrf.mxu0
      %v3215 = vadd.f32 0.0, %v3214
      %v3216 = vpop.f32.mrf.mxu0
      %v3217 = vpop.f32.mrf.mxu0
      %v3218 = vadd.f32 0.0, %v3217
      %v3219 = vpop.f32.mrf.mxu0
      %3220 = vdwg.mxu0
      %v3221 = vpack.c.bf16 %v3218, %v3215
      %v3223 = vsel %vm1753, %v2610, 0
      %v3226 = vsel %vm1753, %v2669, 0
      %3228 = vmatprep.subr.bf16.mxu0 0
      %3229 = vmatpush1.bf16.xpose.msra.mxu0 0
      %3230 = vmatprep.subr.bf16.mxu0 0
      %3231 = vmatpush1.bf16.xpose.msra.mxu0 0
      %3232 = vmatprep.subr.bf16.mxu0 0
      %3233 = vmatpush1.bf16.xpose.msra.mxu0 0
      %3234 = vmatprep.subr.bf16.mxu0 0
      %3235 = vmatpush1.bf16.xpose.msra.mxu0 0
      %3236 = vmatprep.subr.bf16.mxu0 0
      %3237 = vmatpush1.bf16.xpose.msra.mxu0 0
      %3238 = vmatprep.subr.bf16.mxu0 0
      %3239 = vmatpush1.bf16.xpose.msra.mxu0 0
      %3240 = vmatprep.subr.bf16.mxu0 0
      %3241 = vmatpush1.bf16.xpose.msra.mxu0 0
      %3242 = vmatprep.subr.bf16.mxu0 0
      %3243 = vmatpush1.bf16.xpose.msra.mxu0 %v3226
      %3244 = vmatprep.subr.bf16.mxu0 0
      %3245 = vmatpush2.bf16.xpose.msra.mxu0 0
      %3246 = vmatprep.subr.bf16.mxu0 0
      %3247 = vmatpush2.bf16.xpose.msra.mxu0 0
      %3248 = vmatprep.subr.bf16.mxu0 0
      %3249 = vmatpush2.bf16.xpose.msra.mxu0 0
      %3250 = vmatprep.subr.bf16.mxu0 0
      %3251 = vmatpush2.bf16.xpose.msra.mxu0 0
      %3252 = vmatprep.subr.bf16.mxu0 0
      %3253 = vmatpush2.bf16.xpose.msra.mxu0 0
      %3254 = vmatprep.subr.bf16.mxu0 0
      %3255 = vmatpush2.bf16.xpose.msra.mxu0 0
      %3256 = vmatprep.subr.bf16.mxu0 0
      %3257 = vmatpush2.bf16.xpose.msra.mxu0 0
      %3258 = vmatprep.subr.bf16.mxu0 0
      %3259 = vmatpush2.bf16.xpose.msra.mxu0 0
      %3260 = vmatprep.mubr.bf16.mxu0 0
      %3261 = vmatmul.mubr.bf16.gmra.mxu0 %v3223
      %v3262 = vpop.f32.mrf.mxu0
      %v3263 = vadd.f32 %v3096, %v3262
      %v3264 = vpop.f32.mrf.mxu0
      %v3265 = vpop.f32.mrf.mxu0
      %v3266 = vadd.f32 %v3097, %v3265
      %v3267 = vpop.f32.mrf.mxu0
      %3268 = vdwg.mxu0
      %v3269 = vsel %vm1753, %v3263, -inf
      %3270 = vmax.xlane.f32.xlu0 %v3269
      %v3271 = vpop.xlane.xlu0 %3270
      %v3272 = vsel %vm1753, %v3266, -inf
      %3273 = vmax.xlane.f32.xlu0 %v3272
      %v3274 = vpop.xlane.xlu0 %3273
      %v3275 = vsub.f32 %v3263, %v3271
      %v3276 = vsub.f32 %v3266, %v3274
      %v3277 = vmul.f32 %v3275, 1.442695
      %v3278 = vpow.pop %v3277
      %v3279 = vmul.f32 %v3276, 1.442695
      %v3280 = vpow.pop %v3279
      %v3281 = vsel %vm1753, %v3278, 0.0
      %3282 = vadd.xlane.f32.xlu0 %v3281
      %v3283 = vpop.xlane.xlu0 %3282
      %v3284 = vsel %vm1753, %v3280, 0.0
      %3285 = vadd.xlane.f32.xlu0 %v3284
      %v3286 = vpop.xlane.xlu0 %3285
      %v3287 = vrcp.pop %v3283
      %v3288 = vrcp.pop %v3286
      %v3289 = vmul.f32 %v3283, %v3287
      %v3290 = vmul.f32 %v3286, %v3288
      %v3291 = vsub.f32 2.0, %v3289
      %v3292 = vsub.f32 2.0, %v3290
      %v3293 = vmul.f32 %v3287, %v3291
      %v3294 = vmul.f32 %v3288, %v3292
      %v3295 = vmul.f32 %v3278, %v3293
      %v3296 = vmul.f32 %v3280, %v3294
      %v3297 = vpack.c.bf16 %v3296, %v3295
      %v3299 = vsel %vm1753, %v3297, 0
      %v3302 = vsel %vm1968, %v2728, 0
      %3304 = vmatprep.subr.bf16.mxu0 0
      %3305 = vmatpush1.bf16.msra.mxu0 0
      %3306 = vmatprep.subr.bf16.mxu0 0
      %3307 = vmatpush1.bf16.msra.mxu0 0
      %3308 = vmatprep.subr.bf16.mxu0 0
      %3309 = vmatpush1.bf16.msra.mxu0 0
      %3310 = vmatprep.subr.bf16.mxu0 0
      %3311 = vmatpush1.bf16.msra.mxu0 0
      %3312 = vmatprep.subr.bf16.mxu0 0
      %3313 = vmatpush1.bf16.msra.mxu0 0
      %3314 = vmatprep.subr.bf16.mxu0 0
      %3315 = vmatpush1.bf16.msra.mxu0 0
      %3316 = vmatprep.subr.bf16.mxu0 0
      %3317 = vmatpush1.bf16.msra.mxu0 0
      %3318 = vmatprep.subr.bf16.mxu0 0
      %3319 = vmatpush1.bf16.msra.mxu0 %v3302
      %3320 = vmatprep.subr.bf16.mxu0 0
      %3321 = vmatpush2.bf16.msra.mxu0 0
      %3322 = vmatprep.subr.bf16.mxu0 0
      %3323 = vmatpush2.bf16.msra.mxu0 0
      %3324 = vmatprep.subr.bf16.mxu0 0
      %3325 = vmatpush2.bf16.msra.mxu0 0
      %3326 = vmatprep.subr.bf16.mxu0 0
      %3327 = vmatpush2.bf16.msra.mxu0 0
      %3328 = vmatprep.subr.bf16.mxu0 0
      %3329 = vmatpush2.bf16.msra.mxu0 0
      %3330 = vmatprep.subr.bf16.mxu0 0
      %3331 = vmatpush2.bf16.msra.mxu0 0
      %3332 = vmatprep.subr.bf16.mxu0 0
      %3333 = vmatpush2.bf16.msra.mxu0 0
      %3334 = vmatprep.subr.bf16.mxu0 0
      %3335 = vmatpush2.bf16.msra.mxu0 0
      %3336 = vmatprep.mubr.bf16.mxu0 0
      %3337 = vmatmul.mubr.bf16.gmra.mxu0 %v3299
      %v3338 = vpop.f32.mrf.mxu0
      %v3339 = vadd.f32 0.0, %v3338
      %v3340 = vpop.f32.mrf.mxu0
      %v3341 = vpop.f32.mrf.mxu0
      %v3342 = vadd.f32 0.0, %v3341
      %v3343 = vpop.f32.mrf.mxu0
      %3344 = vdwg.mxu0
      %v3345 = vpack.c.bf16 %v3342, %v3339
      %v3347 = vsel %vm1753, %v3345, 0
      %v3350 = vsel %vm1968, %v975, 0
      %3352 = vmatprep.subr.bf16.mxu0 0
      %3353 = vmatpush1.bf16.msra.mxu0 0
      %3354 = vmatprep.subr.bf16.mxu0 0
      %3355 = vmatpush1.bf16.msra.mxu0 0
      %3356 = vmatprep.subr.bf16.mxu0 0
      %3357 = vmatpush1.bf16.msra.mxu0 0
      %3358 = vmatprep.subr.bf16.mxu0 0
      %3359 = vmatpush1.bf16.msra.mxu0 0
      %3360 = vmatprep.subr.bf16.mxu0 0
      %3361 = vmatpush1.bf16.msra.mxu0 0
      %3362 = vmatprep.subr.bf16.mxu0 0
      %3363 = vmatpush1.bf16.msra.mxu0 0
      %3364 = vmatprep.subr.bf16.mxu0 0
      %3365 = vmatpush1.bf16.msra.mxu0 0
      %3366 = vmatprep.subr.bf16.mxu0 0
      %3367 = vmatpush1.bf16.msra.mxu0 %v3350
      %3368 = vmatprep.subr.bf16.mxu0 0
      %3369 = vmatpush2.bf16.msra.mxu0 0
      %3370 = vmatprep.subr.bf16.mxu0 0
      %3371 = vmatpush2.bf16.msra.mxu0 0
      %3372 = vmatprep.subr.bf16.mxu0 0
      %3373 = vmatpush2.bf16.msra.mxu0 0
      %3374 = vmatprep.subr.bf16.mxu0 0
      %3375 = vmatpush2.bf16.msra.mxu0 0
      %3376 = vmatprep.subr.bf16.mxu0 0
      %3377 = vmatpush2.bf16.msra.mxu0 0
      %3378 = vmatprep.subr.bf16.mxu0 0
      %3379 = vmatpush2.bf16.msra.mxu0 0
      %3380 = vmatprep.subr.bf16.mxu0 0
      %3381 = vmatpush2.bf16.msra.mxu0 0
      %3382 = vmatprep.subr.bf16.mxu0 0
      %3383 = vmatpush2.bf16.msra.mxu0 0
      %3384 = vmatprep.mubr.bf16.mxu0 0
      %3385 = vmatmul.mubr.bf16.gmra.mxu0 %v3347
      %v3386 = vpop.f32.mrf.mxu0
      %v3387 = vadd.f32 0.0, %v3386
      %v3388 = vpop.f32.mrf.mxu0
      %v3389 = vpop.f32.mrf.mxu0
      %v3390 = vadd.f32 0.0, %v3389
      %v3391 = vpop.f32.mrf.mxu0
      %3392 = vdwg.mxu0
      %v3394 = vsel %vm1753, %v3221, 0
      %v3397 = vsel %vm1968, %v974, 0
      %3399 = vmatprep.subr.bf16.mxu0 0
      %3400 = vmatpush1.bf16.msra.mxu0 0
      %3401 = vmatprep.subr.bf16.mxu0 0
      %3402 = vmatpush1.bf16.msra.mxu0 0
      %3403 = vmatprep.subr.bf16.mxu0 0
      %3404 = vmatpush1.bf16.msra.mxu0 0
      %3405 = vmatprep.subr.bf16.mxu0 0
      %3406 = vmatpush1.bf16.msra.mxu0 0
      %3407 = vmatprep.subr.bf16.mxu0 0
      %3408 = vmatpush1.bf16.msra.mxu0 0
      %3409 = vmatprep.subr.bf16.mxu0 0
      %3410 = vmatpush1.bf16.msra.mxu0 0
      %3411 = vmatprep.subr.bf16.mxu0 0
      %3412 = vmatpush1.bf16.msra.mxu0 0
      %3413 = vmatprep.subr.bf16.mxu0 0
      %3414 = vmatpush1.bf16.msra.mxu0 %v3397
      %3415 = vmatprep.subr.bf16.mxu0 0
      %3416 = vmatpush2.bf16.msra.mxu0 0
      %3417 = vmatprep.subr.bf16.mxu0 0
      %3418 = vmatpush2.bf16.msra.mxu0 0
      %3419 = vmatprep.subr.bf16.mxu0 0
      %3420 = vmatpush2.bf16.msra.mxu0 0
      %3421 = vmatprep.subr.bf16.mxu0 0
      %3422 = vmatpush2.bf16.msra.mxu0 0
      %3423 = vmatprep.subr.bf16.mxu0 0
      %3424 = vmatpush2.bf16.msra.mxu0 0
      %3425 = vmatprep.subr.bf16.mxu0 0
      %3426 = vmatpush2.bf16.msra.mxu0 0
      %3427 = vmatprep.subr.bf16.mxu0 0
      %3428 = vmatpush2.bf16.msra.mxu0 0
      %3429 = vmatprep.subr.bf16.mxu0 0
      %3430 = vmatpush2.bf16.msra.mxu0 0
      %3431 = vmatprep.mubr.bf16.mxu0 0
      %3432 = vmatmul.mubr.bf16.gmra.mxu0 %v3394
      %v3433 = vpop.f32.mrf.mxu0
      %v3434 = vadd.f32 %v3387, %v3433
      %v3435 = vpop.f32.mrf.mxu0
      %v3436 = vpop.f32.mrf.mxu0
      %v3437 = vadd.f32 %v3390, %v3436
      %v3438 = vpop.f32.mrf.mxu0
      %3439 = vdwg.mxu0
      %v3441 = vsel %vm1753, %v2788, 0
      %v3444 = vsel %vm1753, %v2847, 0
      %3446 = vmatprep.subr.bf16.mxu0 0
      %3447 = vmatpush1.bf16.xpose.msra.mxu0 0
      %3448 = vmatprep.subr.bf16.mxu0 0
      %3449 = vmatpush1.bf16.xpose.msra.mxu0 0
      %3450 = vmatprep.subr.bf16.mxu0 0
      %3451 = vmatpush1.bf16.xpose.msra.mxu0 0
      %3452 = vmatprep.subr.bf16.mxu0 0
      %3453 = vmatpush1.bf16.xpose.msra.mxu0 0
      %3454 = vmatprep.subr.bf16.mxu0 0
      %3455 = vmatpush1.bf16.xpose.msra.mxu0 0
      %3456 = vmatprep.subr.bf16.mxu0 0
      %3457 = vmatpush1.bf16.xpose.msra.mxu0 0
      %3458 = vmatprep.subr.bf16.mxu0 0
      %3459 = vmatpush1.bf16.xpose.msra.mxu0 0
      %3460 = vmatprep.subr.bf16.mxu0 0
      %3461 = vmatpush1.bf16.xpose.msra.mxu0 %v3444
      %3462 = vmatprep.subr.bf16.mxu0 0
      %3463 = vmatpush2.bf16.xpose.msra.mxu0 0
      %3464 = vmatprep.subr.bf16.mxu0 0
      %3465 = vmatpush2.bf16.xpose.msra.mxu0 0
      %3466 = vmatprep.subr.bf16.mxu0 0
      %3467 = vmatpush2.bf16.xpose.msra.mxu0 0
      %3468 = vmatprep.subr.bf16.mxu0 0
      %3469 = vmatpush2.bf16.xpose.msra.mxu0 0
      %3470 = vmatprep.subr.bf16.mxu0 0
      %3471 = vmatpush2.bf16.xpose.msra.mxu0 0
      %3472 = vmatprep.subr.bf16.mxu0 0
      %3473 = vmatpush2.bf16.xpose.msra.mxu0 0
      %3474 = vmatprep.subr.bf16.mxu0 0
      %3475 = vmatpush2.bf16.xpose.msra.mxu0 0
      %3476 = vmatprep.subr.bf16.mxu0 0
      %3477 = vmatpush2.bf16.xpose.msra.mxu0 0
      %3478 = vmatprep.mubr.bf16.mxu0 0
      %3479 = vmatmul.mubr.bf16.gmra.mxu0 %v3441
      %v3480 = vpop.f32.mrf.mxu0
      %v3481 = vadd.f32 %v3096, %v3480
      %v3482 = vpop.f32.mrf.mxu0
      %v3483 = vpop.f32.mrf.mxu0
      %v3484 = vadd.f32 %v3097, %v3483
      %v3485 = vpop.f32.mrf.mxu0
      %3486 = vdwg.mxu0
      %v3487 = vsel %vm1753, %v3481, -inf
      %3488 = vmax.xlane.f32.xlu0 %v3487
      %v3489 = vpop.xlane.xlu0 %3488
      %v3490 = vsel %vm1753, %v3484, -inf
      %3491 = vmax.xlane.f32.xlu0 %v3490
      %v3492 = vpop.xlane.xlu0 %3491
      %v3493 = vsub.f32 %v3481, %v3489
      %v3494 = vsub.f32 %v3484, %v3492
      %v3495 = vmul.f32 %v3493, 1.442695
      %v3496 = vpow.pop %v3495
      %v3497 = vmul.f32 %v3494, 1.442695
      %v3498 = vpow.pop %v3497
      %v3499 = vsel %vm1753, %v3496, 0.0
      %3500 = vadd.xlane.f32.xlu0 %v3499
      %v3501 = vpop.xlane.xlu0 %3500
      %v3502 = vsel %vm1753, %v3498, 0.0
      %3503 = vadd.xlane.f32.xlu0 %v3502
      %v3504 = vpop.xlane.xlu0 %3503
      %v3505 = vrcp.pop %v3501
      %v3506 = vrcp.pop %v3504
      %v3507 = vmul.f32 %v3501, %v3505
      %v3508 = vmul.f32 %v3504, %v3506
      %v3509 = vsub.f32 2.0, %v3507
      %v3510 = vsub.f32 2.0, %v3508
      %v3511 = vmul.f32 %v3505, %v3509
      %v3512 = vmul.f32 %v3506, %v3510
      %v3513 = vmul.f32 %v3496, %v3511
      %v3514 = vmul.f32 %v3498, %v3512
      %v3515 = vpack.c.bf16 %v3514, %v3513
      %v3517 = vsel %vm1753, %v3515, 0
      %v3520 = vsel %vm1968, %v2906, 0
      %3522 = vmatprep.subr.bf16.mxu0 0
      %3523 = vmatpush1.bf16.msra.mxu0 0
      %3524 = vmatprep.subr.bf16.mxu0 0
      %3525 = vmatpush1.bf16.msra.mxu0 0
      %3526 = vmatprep.subr.bf16.mxu0 0
      %3527 = vmatpush1.bf16.msra.mxu0 0
      %3528 = vmatprep.subr.bf16.mxu0 0
      %3529 = vmatpush1.bf16.msra.mxu0 0
      %3530 = vmatprep.subr.bf16.mxu0 0
      %3531 = vmatpush1.bf16.msra.mxu0 0
      %3532 = vmatprep.subr.bf16.mxu0 0
      %3533 = vmatpush1.bf16.msra.mxu0 0
      %3534 = vmatprep.subr.bf16.mxu0 0
      %3535 = vmatpush1.bf16.msra.mxu0 0
      %3536 = vmatprep.subr.bf16.mxu0 0
      %3537 = vmatpush1.bf16.msra.mxu0 %v3520
      %3538 = vmatprep.subr.bf16.mxu0 0
      %3539 = vmatpush2.bf16.msra.mxu0 0
      %3540 = vmatprep.subr.bf16.mxu0 0
      %3541 = vmatpush2.bf16.msra.mxu0 0
      %3542 = vmatprep.subr.bf16.mxu0 0
      %3543 = vmatpush2.bf16.msra.mxu0 0
      %3544 = vmatprep.subr.bf16.mxu0 0
      %3545 = vmatpush2.bf16.msra.mxu0 0
      %3546 = vmatprep.subr.bf16.mxu0 0
      %3547 = vmatpush2.bf16.msra.mxu0 0
      %3548 = vmatprep.subr.bf16.mxu0 0
      %3549 = vmatpush2.bf16.msra.mxu0 0
      %3550 = vmatprep.subr.bf16.mxu0 0
      %3551 = vmatpush2.bf16.msra.mxu0 0
      %3552 = vmatprep.subr.bf16.mxu0 0
      %3553 = vmatpush2.bf16.msra.mxu0 0
      %3554 = vmatprep.mubr.bf16.mxu0 0
      %3555 = vmatmul.mubr.bf16.gmra.mxu0 %v3517
      %v3556 = vpop.f32.mrf.mxu0
      %v3557 = vadd.f32 0.0, %v3556
      %v3558 = vpop.f32.mrf.mxu0
      %v3559 = vpop.f32.mrf.mxu0
      %v3560 = vadd.f32 0.0, %v3559
      %v3561 = vpop.f32.mrf.mxu0
      %3562 = vdwg.mxu0
      %v3563 = vpack.c.bf16 %v3560, %v3557
      %v3565 = vsel %vm1753, %v3563, 0
      %v3568 = vsel %vm1968, %v976, 0
      %3570 = vmatprep.subr.bf16.mxu0 0
      %3571 = vmatpush1.bf16.msra.mxu0 0
      %3572 = vmatprep.subr.bf16.mxu0 0
      %3573 = vmatpush1.bf16.msra.mxu0 0
      %3574 = vmatprep.subr.bf16.mxu0 0
      %3575 = vmatpush1.bf16.msra.mxu0 0
      %3576 = vmatprep.subr.bf16.mxu0 0
      %3577 = vmatpush1.bf16.msra.mxu0 0
      %3578 = vmatprep.subr.bf16.mxu0 0
      %3579 = vmatpush1.bf16.msra.mxu0 0
      %3580 = vmatprep.subr.bf16.mxu0 0
      %3581 = vmatpush1.bf16.msra.mxu0 0
      %3582 = vmatprep.subr.bf16.mxu0 0
      %3583 = vmatpush1.bf16.msra.mxu0 0
      %3584 = vmatprep.subr.bf16.mxu0 0
      %3585 = vmatpush1.bf16.msra.mxu0 %v3568
      %3586 = vmatprep.subr.bf16.mxu0 0
      %3587 = vmatpush2.bf16.msra.mxu0 0
      %3588 = vmatprep.subr.bf16.mxu0 0
      %3589 = vmatpush2.bf16.msra.mxu0 0
      %3590 = vmatprep.subr.bf16.mxu0 0
      %3591 = vmatpush2.bf16.msra.mxu0 0
      %3592 = vmatprep.subr.bf16.mxu0 0
      %3593 = vmatpush2.bf16.msra.mxu0 0
      %3594 = vmatprep.subr.bf16.mxu0 0
      %3595 = vmatpush2.bf16.msra.mxu0 0
      %3596 = vmatprep.subr.bf16.mxu0 0
      %3597 = vmatpush2.bf16.msra.mxu0 0
      %3598 = vmatprep.subr.bf16.mxu0 0
      %3599 = vmatpush2.bf16.msra.mxu0 0
      %3600 = vmatprep.subr.bf16.mxu0 0
      %3601 = vmatpush2.bf16.msra.mxu0 0
      %3602 = vmatprep.mubr.bf16.mxu0 0
      %3603 = vmatmul.mubr.bf16.gmra.mxu0 %v3565
      %v3604 = vpop.f32.mrf.mxu0
      %v3605 = vadd.f32 0.0, %v3604
      %v3606 = vpop.f32.mrf.mxu0
      %v3607 = vpop.f32.mrf.mxu0
      %v3608 = vadd.f32 0.0, %v3607
      %v3609 = vpop.f32.mrf.mxu0
      %3610 = vdwg.mxu0
      %v3611 = vadd.f32 %v3434, %v3605
      %v3612 = vadd.f32 %v3437, %v3608
      %v3614 = vsel %vm1753, %v2966, 0
      %v3617 = vsel %vm1753, %v3025, 0
      %3619 = vmatprep.subr.bf16.mxu0 0
      %3620 = vmatpush1.bf16.xpose.msra.mxu0 0
      %3621 = vmatprep.subr.bf16.mxu0 0
      %3622 = vmatpush1.bf16.xpose.msra.mxu0 0
      %3623 = vmatprep.subr.bf16.mxu0 0
      %3624 = vmatpush1.bf16.xpose.msra.mxu0 0
      %3625 = vmatprep.subr.bf16.mxu0 0
      %3626 = vmatpush1.bf16.xpose.msra.mxu0 0
      %3627 = vmatprep.subr.bf16.mxu0 0
      %3628 = vmatpush1.bf16.xpose.msra.mxu0 0
      %3629 = vmatprep.subr.bf16.mxu0 0
      %3630 = vmatpush1.bf16.xpose.msra.mxu0 0
      %3631 = vmatprep.subr.bf16.mxu0 0
      %3632 = vmatpush1.bf16.xpose.msra.mxu0 0
      %3633 = vmatprep.subr.bf16.mxu0 0
      %3634 = vmatpush1.bf16.xpose.msra.mxu0 %v3617
      %3635 = vmatprep.subr.bf16.mxu0 0
      %3636 = vmatpush2.bf16.xpose.msra.mxu0 0
      %3637 = vmatprep.subr.bf16.mxu0 0
      %3638 = vmatpush2.bf16.xpose.msra.mxu0 0
      %3639 = vmatprep.subr.bf16.mxu0 0
      %3640 = vmatpush2.bf16.xpose.msra.mxu0 0
      %3641 = vmatprep.subr.bf16.mxu0 0
      %3642 = vmatpush2.bf16.xpose.msra.mxu0 0
      %3643 = vmatprep.subr.bf16.mxu0 0
      %3644 = vmatpush2.bf16.xpose.msra.mxu0 0
      %3645 = vmatprep.subr.bf16.mxu0 0
      %3646 = vmatpush2.bf16.xpose.msra.mxu0 0
      %3647 = vmatprep.subr.bf16.mxu0 0
      %3648 = vmatpush2.bf16.xpose.msra.mxu0 0
      %3649 = vmatprep.subr.bf16.mxu0 0
      %3650 = vmatpush2.bf16.xpose.msra.mxu0 0
      %3651 = vmatprep.mubr.bf16.mxu0 0
      %3652 = vmatmul.mubr.bf16.gmra.mxu0 %v3614
      %v3653 = vpop.f32.mrf.mxu0
      %v3654 = vadd.f32 %v3096, %v3653
      %v3655 = vpop.f32.mrf.mxu0
      %v3656 = vpop.f32.mrf.mxu0
      %v3657 = vadd.f32 %v3097, %v3656
      %v3658 = vpop.f32.mrf.mxu0
      %3659 = vdwg.mxu0
      %v3660 = vsel %vm1753, %v3654, -inf
      %3661 = vmax.xlane.f32.xlu0 %v3660
      %v3662 = vpop.xlane.xlu0 %3661
      %v3663 = vsel %vm1753, %v3657, -inf
      %3664 = vmax.xlane.f32.xlu0 %v3663
      %v3665 = vpop.xlane.xlu0 %3664
      %v3666 = vsub.f32 %v3654, %v3662
      %v3667 = vsub.f32 %v3657, %v3665
      %v3668 = vmul.f32 %v3666, 1.442695
      %v3669 = vpow.pop %v3668
      %v3670 = vmul.f32 %v3667, 1.442695
      %v3671 = vpow.pop %v3670
      %v3672 = vsel %vm1753, %v3669, 0.0
      %3673 = vadd.xlane.f32.xlu0 %v3672
      %v3674 = vpop.xlane.xlu0 %3673
      %v3675 = vsel %vm1753, %v3671, 0.0
      %3676 = vadd.xlane.f32.xlu0 %v3675
      %v3677 = vpop.xlane.xlu0 %3676
      %v3678 = vrcp.pop %v3674
      %v3679 = vrcp.pop %v3677
      %v3680 = vmul.f32 %v3674, %v3678
      %v3681 = vmul.f32 %v3677, %v3679
      %v3682 = vsub.f32 2.0, %v3680
      %v3683 = vsub.f32 2.0, %v3681
      %v3684 = vmul.f32 %v3678, %v3682
      %v3685 = vmul.f32 %v3679, %v3683
      %v3686 = vmul.f32 %v3669, %v3684
      %v3687 = vmul.f32 %v3671, %v3685
      %v3688 = vpack.c.bf16 %v3687, %v3686
      %v3690 = vsel %vm1753, %v3688, 0
      %v3693 = vsel %vm1968, %v3084, 0
      %3695 = vmatprep.subr.bf16.mxu0 0
      %3696 = vmatpush1.bf16.msra.mxu0 0
      %3697 = vmatprep.subr.bf16.mxu0 0
      %3698 = vmatpush1.bf16.msra.mxu0 0
      %3699 = vmatprep.subr.bf16.mxu0 0
      %3700 = vmatpush1.bf16.msra.mxu0 0
      %3701 = vmatprep.subr.bf16.mxu0 0
      %3702 = vmatpush1.bf16.msra.mxu0 0
      %3703 = vmatprep.subr.bf16.mxu0 0
      %3704 = vmatpush1.bf16.msra.mxu0 0
      %3705 = vmatprep.subr.bf16.mxu0 0
      %3706 = vmatpush1.bf16.msra.mxu0 0
      %3707 = vmatprep.subr.bf16.mxu0 0
      %3708 = vmatpush1.bf16.msra.mxu0 0
      %3709 = vmatprep.subr.bf16.mxu0 0
      %3710 = vmatpush1.bf16.msra.mxu0 %v3693
      %3711 = vmatprep.subr.bf16.mxu0 0
      %3712 = vmatpush2.bf16.msra.mxu0 0
      %3713 = vmatprep.subr.bf16.mxu0 0
      %3714 = vmatpush2.bf16.msra.mxu0 0
      %3715 = vmatprep.subr.bf16.mxu0 0
      %3716 = vmatpush2.bf16.msra.mxu0 0
      %3717 = vmatprep.subr.bf16.mxu0 0
      %3718 = vmatpush2.bf16.msra.mxu0 0
      %3719 = vmatprep.subr.bf16.mxu0 0
      %3720 = vmatpush2.bf16.msra.mxu0 0
      %3721 = vmatprep.subr.bf16.mxu0 0
      %3722 = vmatpush2.bf16.msra.mxu0 0
      %3723 = vmatprep.subr.bf16.mxu0 0
      %3724 = vmatpush2.bf16.msra.mxu0 0
      %3725 = vmatprep.subr.bf16.mxu0 0
      %3726 = vmatpush2.bf16.msra.mxu0 0
      %3727 = vmatprep.mubr.bf16.mxu0 0
      %3728 = vmatmul.mubr.bf16.gmra.mxu0 %v3690
      %v3729 = vpop.f32.mrf.mxu0
      %v3730 = vadd.f32 0.0, %v3729
      %v3731 = vpop.f32.mrf.mxu0
      %v3732 = vpop.f32.mrf.mxu0
      %v3733 = vadd.f32 0.0, %v3732
      %v3734 = vpop.f32.mrf.mxu0
      %3735 = vdwg.mxu0
      %v3736 = vpack.c.bf16 %v3733, %v3730
      %v3738 = vsel %vm1753, %v3736, 0
      %v3741 = vsel %vm1968, %v977, 0
      %3743 = vmatprep.subr.bf16.mxu0 0
      %3744 = vmatpush1.bf16.msra.mxu0 0
      %3745 = vmatprep.subr.bf16.mxu0 0
      %3746 = vmatpush1.bf16.msra.mxu0 0
      %3747 = vmatprep.subr.bf16.mxu0 0
      %3748 = vmatpush1.bf16.msra.mxu0 0
      %3749 = vmatprep.subr.bf16.mxu0 0
      %3750 = vmatpush1.bf16.msra.mxu0 0
      %3751 = vmatprep.subr.bf16.mxu0 0
      %3752 = vmatpush1.bf16.msra.mxu0 0
      %3753 = vmatprep.subr.bf16.mxu0 0
      %3754 = vmatpush1.bf16.msra.mxu0 0
      %3755 = vmatprep.subr.bf16.mxu0 0
      %3756 = vmatpush1.bf16.msra.mxu0 0
      %3757 = vmatprep.subr.bf16.mxu0 0
      %3758 = vmatpush1.bf16.msra.mxu0 %v3741
      %3759 = vmatprep.subr.bf16.mxu0 0
      %3760 = vmatpush2.bf16.msra.mxu0 0
      %3761 = vmatprep.subr.bf16.mxu0 0
      %3762 = vmatpush2.bf16.msra.mxu0 0
      %3763 = vmatprep.subr.bf16.mxu0 0
      %3764 = vmatpush2.bf16.msra.mxu0 0
      %3765 = vmatprep.subr.bf16.mxu0 0
      %3766 = vmatpush2.bf16.msra.mxu0 0
      %3767 = vmatprep.subr.bf16.mxu0 0
      %3768 = vmatpush2.bf16.msra.mxu0 0
      %3769 = vmatprep.subr.bf16.mxu0 0
      %3770 = vmatpush2.bf16.msra.mxu0 0
      %3771 = vmatprep.subr.bf16.mxu0 0
      %3772 = vmatpush2.bf16.msra.mxu0 0
      %3773 = vmatprep.subr.bf16.mxu0 0
      %3774 = vmatpush2.bf16.msra.mxu0 0
      %3775 = vmatprep.mubr.bf16.mxu0 0
      %3776 = vmatmul.mubr.bf16.gmra.mxu0 %v3738
      %v3777 = vpop.f32.mrf.mxu0
      %v3778 = vadd.f32 0.0, %v3777
      %v3779 = vpop.f32.mrf.mxu0
      %v3780 = vpop.f32.mrf.mxu0
      %v3781 = vadd.f32 0.0, %v3780
      %v3782 = vpop.f32.mrf.mxu0
      %3783 = vdwg.mxu0
      %v3784 = vadd.f32 %v3611, %v3778
      %v3785 = vadd.f32 %v3612, %v3781
      %v3787 = vlaneseq
      %v3788 = vshrl.u32 %v3787, 7
      %v3789 = vsub.s32 0, %v3788
      %v3790 = vrot.slane %v978, %v3789
      %v3792 = vadd.f32 %v3784, %v3790
      %v3793 = vadd.f32 %v3785, %v3790
      %v3794 = vadd.f32 %v1007, %v3792
      %v3795 = vadd.f32 %v1008, %v3793
      %v3796 = vsel %vm1029, %v3794, 0.0
      %3797 = vadd.xlane.f32.xlu0 %v3796
      %v3798 = vpop.xlane.xlu0 %3797
      %v3799 = vsel %vm1029, %v3795, 0.0
      %3800 = vadd.xlane.f32.xlu0 %v3799
      %v3801 = vpop.xlane.xlu0 %3800
      %v3802 = vrcp.pop 32.0
      %v3803 = vmul.f32 %v3798, %v3802
      %v3804 = vmul.f32 %v3801, %v3802
      %v3805 = vsub.f32 %v3794, %v3803
      %v3806 = vsub.f32 %v3795, %v3804
      %v3807 = vmul.f32 %v3805, %v3805
      %v3808 = vmul.f32 %v3806, %v3806
      %v3809 = vsel %vm1029, %v3807, 0.0
      %3810 = vadd.xlane.f32.xlu0 %v3809
      %v3811 = vpop.xlane.xlu0 %3810
      %v3812 = vsel %vm1029, %v3808, 0.0
      %3813 = vadd.xlane.f32.xlu0 %v3812
      %v3814 = vpop.xlane.xlu0 %3813
      %v3815 = vmul.f32 %v3811, %v3802
      %v3816 = vmul.f32 %v3814, %v3802
      %v3817 = vadd.f32 %v3815, 1e-05
      %v3818 = vadd.f32 %v3816, 1e-05
      %v3819 = vrsqrt.pop %v3817
      %v3820 = vrsqrt.pop %v3818
      %v3821 = vmul.f32 %v3805, %v3819
      %v3822 = vmul.f32 %v3806, %v3820
      %v3824 = vlaneseq
      %v3825 = vshrl.u32 %v3824, 7
      %v3826 = vsub.s32 0, %v3825
      %v3827 = vrot.slane %v979, %v3826
      %v3829 = vmul.f32 %v3821, %v3827
      %v3830 = vmul.f32 %v3822, %v3827
      %v3832 = vlaneseq
      %v3833 = vshrl.u32 %v3832, 7
      %v3834 = vsub.s32 0, %v3833
      %v3835 = vrot.slane %v980, %v3834
      %v3837 = vadd.f32 %v3829, %v3835
      %v3838 = vadd.f32 %v3830, %v3835
      %v3839 = vpack.c.bf16 %v3838, %v3837
      %v3841 = vlaneseq
      %v3842 = vshrl.u32 %v3841, 7
      %v3843 = vsub.s32 0, %v3842
      %v3844 = vrot.slane %v985, %v3843
      %v3850 = vunpack.c.l.b16 %v981
      %v3851 = vunpack.c.l.b16 %v982
      %v3852 = vunpack.c.l.b16 %v983
      %v3853 = vunpack.c.l.b16 %v984
      %v3854 = vpack.c.b16 %v3851, %v3850
      %v3855 = vpack.c.b16 %v3853, %v3852
      %v3859 = vsel %vm1029, %v3839, 0
      %3861 = vmatprep.subr.bf16.mxu0 0
      %3862 = vmatpush1.bf16.msra.mxu0 0
      %3863 = vmatprep.subr.bf16.mxu0 0
      %3864 = vmatpush1.bf16.msra.mxu0 0
      %3865 = vmatprep.subr.bf16.mxu0 0
      %3866 = vmatpush1.bf16.msra.mxu0 0
      %3867 = vmatprep.subr.bf16.mxu0 0
      %3868 = vmatpush1.bf16.msra.mxu0 0
      %3869 = vmatprep.subr.bf16.mxu0 0
      %3870 = vmatpush1.bf16.msra.mxu0 0
      %3871 = vmatprep.subr.bf16.mxu0 0
      %3872 = vmatpush1.bf16.msra.mxu0 0
      %3873 = vmatprep.subr.bf16.mxu0 0
      %3874 = vmatpush1.bf16.msra.mxu0 %v3855
      %3875 = vmatprep.subr.bf16.mxu0 0
      %3876 = vmatpush1.bf16.msra.mxu0 %v3854
      %3877 = vmatprep.subr.bf16.mxu0 0
      %3878 = vmatpush2.bf16.msra.mxu0 0
      %3879 = vmatprep.subr.bf16.mxu0 0
      %3880 = vmatpush2.bf16.msra.mxu0 0
      %3881 = vmatprep.subr.bf16.mxu0 0
      %3882 = vmatpush2.bf16.msra.mxu0 0
      %3883 = vmatprep.subr.bf16.mxu0 0
      %3884 = vmatpush2.bf16.msra.mxu0 0
      %3885 = vmatprep.subr.bf16.mxu0 0
      %3886 = vmatpush2.bf16.msra.mxu0 0
      %3887 = vmatprep.subr.bf16.mxu0 0
      %3888 = vmatpush2.bf16.msra.mxu0 0
      %3889 = vmatprep.subr.bf16.mxu0 0
      %3890 = vmatpush2.bf16.msra.mxu0 0
      %3891 = vmatprep.subr.bf16.mxu0 0
      %3892 = vmatpush2.bf16.msra.mxu0 0
      %3893 = vmatprep.mubr.bf16.mxu0 0
      %3894 = vmatmul.mubr.bf16.gmra.mxu0 %v3859
      %v3895 = vpop.f32.mrf.mxu0
      %v3896 = vadd.f32 %v3844, %v3895
      %v3897 = vpop.f32.mrf.mxu0
      %v3898 = vpop.f32.mrf.mxu0
      %v3899 = vadd.f32 %v3844, %v3898
      %v3900 = vpop.f32.mrf.mxu0
      %3901 = vdwg.mxu0
      %v3902 = vmul.f32 %v3896, 0.70710677
      %v3903 = vmul.f32 %v3899, 0.70710677
      %v3904 = vand.u32 2147483647, %v3902
      %v3905 = vand.u32 2147483647, %v3903
      %v3906 = vmul.f32 %v3904, 0.3275911
      %v3907 = vmul.f32 %v3905, 0.3275911
      %v3908 = vadd.f32 %v3906, 1.0
      %v3909 = vadd.f32 %v3907, 1.0
      %v3910 = vrcp.pop %v3908
      %v3911 = vmul.f32 1.0, %v3910
      %v3912 = vrcp.pop %v3909
      %v3913 = vmul.f32 1.0, %v3912
      %v3914 = vmul.f32 %v3911, 1.0614054
      %v3915 = vmul.f32 %v3913, 1.0614054
      %v3916 = vsub.f32 %v3914, 1.4531521
      %v3917 = vsub.f32 %v3915, 1.4531521
      %v3918 = vmul.f32 %v3916, %v3911
      %v3919 = vmul.f32 %v3917, %v3913
      %v3920 = vadd.f32 %v3918, 1.4214138
      %v3921 = vadd.f32 %v3919, 1.4214138
      %v3922 = vmul.f32 %v3920, %v3911
      %v3923 = vmul.f32 %v3921, %v3913
      %v3924 = vsub.f32 %v3922, 0.28449672
      %v3925 = vsub.f32 %v3923, 0.28449672
      %v3926 = vmul.f32 %v3924, %v3911
      %v3927 = vmul.f32 %v3925, %v3913
      %v3928 = vadd.f32 %v3926, 0.2548296
      %v3929 = vadd.f32 %v3927, 0.2548296
      %v3930 = vmul.f32 %v3928, %v3911
      %v3931 = vmul.f32 %v3929, %v3913
      %v3932 = vsub.f32 0.0, %v3904
      %v3933 = vsub.f32 0.0, %v3905
      %v3934 = vmul.f32 %v3932, %v3904
      %v3935 = vmul.f32 %v3933, %v3905
      %v3936 = vmul.f32 %v3934, 1.442695
      %v3937 = vpow.pop %v3936
      %v3938 = vmul.f32 %v3935, 1.442695
      %v3939 = vpow.pop %v3938
      %v3940 = vmul.f32 %v3930, %v3937
      %v3941 = vmul.f32 %v3931, %v3939
      %v3942 = vsub.f32 1.0, %v3940
      %v3943 = vsub.f32 1.0, %v3941
      %vm3944 = vcmp.lt.f32.partialorder %v3902, 0.0
      %vm3945 = vcmp.lt.f32.partialorder %v3903, 0.0
      %v3946 = vsub.f32 0.0, %v3942
      %v3947 = vsub.f32 0.0, %v3943
      %v3948 = vsel %vm3944, %v3946, %v3942
      %v3949 = vsel %vm3945, %v3947, %v3943
      %v3950 = vmul.f32 %v3896, 0.5
      %v3951 = vmul.f32 %v3899, 0.5
      %v3952 = vadd.f32 %v3948, 1.0
      %v3953 = vadd.f32 %v3949, 1.0
      %v3954 = vmul.f32 %v3950, %v3952
      %v3955 = vmul.f32 %v3951, %v3953
      %v3956 = vpack.c.bf16 %v3955, %v3954
      %v3973 = vunpack.c.l.b16 %v986
      %v3974 = vunpack.c.l.b16 %v987
      %v3975 = vunpack.c.l.b16 %v988
      %v3976 = vunpack.c.l.b16 %v989
      %v3977 = vunpack.c.l.b16 %v990
      %v3978 = vunpack.c.l.b16 %v991
      %v3979 = vunpack.c.l.b16 %v992
      %v3980 = vunpack.c.l.b16 %v993
      %v3981 = vunpack.c.l.b16 %v994
      %v3982 = vunpack.c.l.b16 %v995
      %v3983 = vunpack.c.l.b16 %v996
      %v3984 = vunpack.c.l.b16 %v997
      %v3985 = vunpack.c.l.b16 %v998
      %v3986 = vunpack.c.l.b16 %v999
      %v3987 = vunpack.c.l.b16 %v1000
      %v3988 = vunpack.c.l.b16 %v1001
      %v3989 = vpack.c.b16 %v3974, %v3973
      %v3990 = vpack.c.b16 %v3976, %v3975
      %v3991 = vpack.c.b16 %v3978, %v3977
      %v3992 = vpack.c.b16 %v3980, %v3979
      %v3993 = vpack.c.b16 %v3982, %v3981
      %v3994 = vpack.c.b16 %v3984, %v3983
      %v3995 = vpack.c.b16 %v3986, %v3985
      %v3996 = vpack.c.b16 %v3988, %v3987
      %4005 = vmatprep.subr.bf16.mxu0 0
      %4006 = vmatpush1.bf16.msra.mxu0 %v3996
      %4007 = vmatprep.subr.bf16.mxu0 0
      %4008 = vmatpush1.bf16.msra.mxu0 %v3995
      %4009 = vmatprep.subr.bf16.mxu0 0
      %4010 = vmatpush1.bf16.msra.mxu0 %v3994
      %4011 = vmatprep.subr.bf16.mxu0 0
      %4012 = vmatpush1.bf16.msra.mxu0 %v3993
      %4013 = vmatprep.subr.bf16.mxu0 0
      %4014 = vmatpush1.bf16.msra.mxu0 %v3992
      %4015 = vmatprep.subr.bf16.mxu0 0
      %4016 = vmatpush1.bf16.msra.mxu0 %v3991
      %4017 = vmatprep.subr.bf16.mxu0 0
      %4018 = vmatpush1.bf16.msra.mxu0 %v3990
      %4019 = vmatprep.subr.bf16.mxu0 0
      %4020 = vmatpush1.bf16.msra.mxu0 %v3989
      %4021 = vmatprep.subr.bf16.mxu0 0
      %4022 = vmatpush2.bf16.msra.mxu0 0
      %4023 = vmatprep.subr.bf16.mxu0 0
      %4024 = vmatpush2.bf16.msra.mxu0 0
      %4025 = vmatprep.subr.bf16.mxu0 0
      %4026 = vmatpush2.bf16.msra.mxu0 0
      %4027 = vmatprep.subr.bf16.mxu0 0
      %4028 = vmatpush2.bf16.msra.mxu0 0
      %4029 = vmatprep.subr.bf16.mxu0 0
      %4030 = vmatpush2.bf16.msra.mxu0 0
      %4031 = vmatprep.subr.bf16.mxu0 0
      %4032 = vmatpush2.bf16.msra.mxu0 0
      %4033 = vmatprep.subr.bf16.mxu0 0
      %4034 = vmatpush2.bf16.msra.mxu0 0
      %4035 = vmatprep.subr.bf16.mxu0 0
      %4036 = vmatpush2.bf16.msra.mxu0 0
      %4037 = vmatprep.mubr.bf16.mxu0 0
      %4038 = vmatmul.mubr.bf16.gmra.mxu0 %v3956
      %v4039 = vpop.f32.mrf.mxu0
      %v4040 = vadd.f32 0.0, %v4039
      %v4041 = vpop.f32.mrf.mxu0
      %v4042 = vpop.f32.mrf.mxu0
      %v4043 = vadd.f32 0.0, %v4042
      %v4044 = vpop.f32.mrf.mxu0
      %4045 = vdwg.mxu0
      %v4046 = vadd.f32 %v3837, %v4040
      %v4047 = vadd.f32 %v3838, %v4043
      %v4049 = vlaneseq
      %v4050 = vshrl.u32 %v4049, 7
      %v4051 = vsub.s32 0, %v4050
      %v4052 = vrot.slane %v1002, %v4051
      %v4054 = vadd.f32 %v4046, %v4052
      %v4055 = vadd.f32 %v4047, %v4052
      %v4056 = vsel %vm1029, %v4054, 0.0
      %4057 = vadd.xlane.f32.xlu0 %v4056
      %v4058 = vpop.xlane.xlu0 %4057
      %v4059 = vsel %vm1029, %v4055, 0.0
      %4060 = vadd.xlane.f32.xlu0 %v4059
      %v4061 = vpop.xlane.xlu0 %4060
      %v4062 = vmul.f32 %v4058, %v3802
      %v4063 = vmul.f32 %v4061, %v3802
      %v4064 = vsub.f32 %v4054, %v4062
      %v4065 = vsub.f32 %v4055, %v4063
      %v4066 = vmul.f32 %v4064, %v4064
      %v4067 = vmul.f32 %v4065, %v4065
      %v4068 = vsel %vm1029, %v4066, 0.0
      %4069 = vadd.xlane.f32.xlu0 %v4068
      %v4070 = vpop.xlane.xlu0 %4069
      %v4071 = vsel %vm1029, %v4067, 0.0
      %4072 = vadd.xlane.f32.xlu0 %v4071
      %v4073 = vpop.xlane.xlu0 %4072
      %v4074 = vmul.f32 %v4070, %v3802
      %v4075 = vmul.f32 %v4073, %v3802
      %v4076 = vadd.f32 %v4074, 1e-05
      %v4077 = vadd.f32 %v4075, 1e-05
      %v4078 = vrsqrt.pop %v4076
      %v4079 = vrsqrt.pop %v4077
      %v4080 = vmul.f32 %v4064, %v4078
      %v4081 = vmul.f32 %v4065, %v4079
      %v4083 = vlaneseq
      %v4084 = vshrl.u32 %v4083, 7
      %v4085 = vsub.s32 0, %v4084
      %v4086 = vrot.slane %v1003, %v4085
      %v4088 = vmul.f32 %v4080, %v4086
      %v4089 = vmul.f32 %v4081, %v4086
      %v4091 = vlaneseq
      %v4092 = vshrl.u32 %v4091, 7
      %v4093 = vsub.s32 0, %v4092
      %v4094 = vrot.slane %v1004, %v4093
      %v4096 = vadd.f32 %v4088, %v4094
      %v4097 = vadd.f32 %v4089, %v4094
      %4098 = vst.msk [vmem:[%s844] sm:$0xff] %vm1029, %v4096
      %4099 = vst.msk [vmem:[%s844 + $0x8] sm:$0xff] %vm1029, %v4097
      %s4100 = smul.u32 %s41, 2
      %s4101 = sadd.s32 %s4100, %s42
      %s4102 = smul.u32 2, %s4101
      %p4103 = scmp.lt.s32.totalorder %s4102, 7
      %s4104 = scalar_select %p4103, %s4102, 7
      %s4105 = smul.addr %s4104, 8
      %s4106 = scalar_lea.vmem %s26, %s4105
      // Predicated region
      $region125: #{two_stage_attention.3} parent=123 // pred_check
        %p4107 = pneg %p631
      $region126: #{two_stage_attention.3} parent=123 // pred_check_branch
        %4109 = sbr.rel (%p4107) target = $region128
      $region127: #{two_stage_attention.3} parent=123 // pred_region
        %s4110 = smul.u32 %s41, 2
        %s4111 = sadd.s32 %s4110, %s42
        %s4112 = smul.u32 2, %s4111
      $region128: #{two_stage_attention.3} parent=123 // pred_fallthru
        _
    $region124: #{two_stage_attention.3} parent=5 // pred_fallthru
      _
    %p4113 = scmp.le.s32.totalorder 2, %s32
    // Predicated region
    $region129: #{two_stage_attention.3} parent=5 // pred_check
      %p4114 = pneg %p4113
    $region130: #{two_stage_attention.3} parent=5 // pred_check_branch
      %4116 = sbr.rel (%p4114) target = $region132
    $region131: #{two_stage_attention.3} parent=5 // pred_region
      %s4117 = ssub.s32 %s32, 2
      // Predicated region
      $region133: #{two_stage_attention.3} parent=131 // pred_check
        %p4118 = pneg %p637
      $region134: #{two_stage_attention.3} parent=131 // pred_check_branch
        %4120 = sbr.rel (%p4118) target = $region136
      $region135: #{two_stage_attention.3} parent=131 // pred_region
        %s4121 = smul.u32 %s43, 2
        %s4122 = sadd.s32 %s4121, %s44
        %s4123 = smul.u32 2, %s4122
        %p4124 = scmp.lt.s32.totalorder %s4123, 7
        %s4125 = scalar_select %p4124, %s4123, 7
        %s4126 = smul.addr %s4125, 8
        %s4127 = scalar_lea.vmem %s26, %s4126
      $region136: #{two_stage_attention.3} parent=131 // pred_fallthru
        _
    $region132: #{two_stage_attention.3} parent=5 // pred_fallthru
      _
  $region6: #{two_stage_attention.3} parent=0 // loop_footer
    %s36 = sadd.s32 1, %s32
  $region7: #{two_stage_attention.3} parent=0 // loop_footer_branch
    %31 = sbr.rel target = $region3
  $region8: #{two_stage_attention.3} parent=0 // loop_exit
    _

</llo_original>
